<compile_context>
chip_gen: v7x
topology: tpu7x:2x2x1
jax: 0.10.0
libtpu: 0.0.40
codegen_flags: <defaults>
</compile_context>

<pallas_src>
import jax
import jax.numpy as jnp
import numpy as np
from jax import lax
from jax.experimental import pallas as pl
from jax.experimental.pallas import tpu as pltpu

KSIZE = 5
STRIDE = 2
BN_EPS = 1e-5


def _round_up(v, m):
    return ((v + m - 1) // m) * m


# ----------------------------- parameter init ---------------------------------

def _init_conv(key, co, ci, k):
    kw, kb = jax.random.split(key)
    bound = 1.0 / float(ci * k * k) ** 0.5
    w = jax.random.uniform(kw, (co, ci, k, k), jnp.float32, -bound, bound)
    b = jax.random.uniform(kb, (co,), jnp.float32, -bound, bound)
    return w, b


def _init_convT(key, ci, co, k):
    kw, kb = jax.random.split(key)
    bound = 1.0 / float(co * k * k) ** 0.5
    w = jax.random.uniform(kw, (ci, co, k, k), jnp.float32, -bound, bound)
    b = jax.random.uniform(kb, (co,), jnp.float32, -bound, bound)
    return w, b


def _init_bn(key, c):
    k1, k2, k3, k4 = jax.random.split(key, 4)
    gamma = jax.random.uniform(k1, (c,), jnp.float32, 0.5, 1.5)
    beta = jax.random.uniform(k2, (c,), jnp.float32, -0.1, 0.1)
    mean = jax.random.uniform(k3, (c,), jnp.float32, -0.1, 0.1)
    var = jax.random.uniform(k4, (c,), jnp.float32, 0.5, 1.5)
    return gamma, beta, mean, var


def init_params(key):
    keys = jax.random.split(key, 16)
    enc_channels = [(3, 3), (3, 3), (3, 3), (3, 1)]
    encoder = []
    for i, (ci, co) in enumerate(enc_channels):
        w, b = _init_conv(keys[2 * i], co, ci, KSIZE)
        bn = _init_bn(keys[2 * i + 1], co)
        encoder.append((w, b, bn))
    dec_channels = [(1, 3, 0), (3, 3, 0), (3, 3, 1), (3, 3, 1)]
    decoder = []
    for i, (ci, co, opad) in enumerate(dec_channels):
        w, b = _init_convT(keys[8 + 2 * i], ci, co, KSIZE)
        bn = _init_bn(keys[8 + 2 * i + 1], co)
        decoder.append((w, b, bn, opad))
    return encoder, decoder


# ----------------------- one-time parameter preparation ------------------------

def _fold_bn_np(w, b, bn, eps=BN_EPS):
    """Fold eval-mode BatchNorm2d into conv weight (CO,CI,k,k) and bias (numpy)."""
    gamma, beta, mean, var = (np.asarray(t, np.float64) for t in bn)
    w = np.asarray(w, np.float64)
    b = np.asarray(b, np.float64)
    scale = gamma / np.sqrt(var + eps)
    return w * scale[:, None, None, None], (b - mean) * scale + beta


def _tap_selection(kind, in_size, out_size, k, stride):
    """sel[t, o, i] = 1 iff input index i feeds output index o through kernel tap t."""
    sel = np.zeros((k, out_size, in_size), np.float32)
    for t in range(k):
        for o in range(out_size):
            if kind == "conv":                      # stride-2 valid conv: i = 2*o + t
                i = stride * o + t
                if 0 <= i < in_size:
                    sel[t, o, i] = 1.0
            else:                                   # transposed conv: o = 2*i + (k-1-t)
                v = o + t - (k - 1)
                if v >= 0 and v % stride == 0 and v // stride < in_size:
                    sel[t, o, v // stride] = 1.0
    return sel


def prepare_params(params, in_hw, batch):
    """Lower every (conv|convT)+BN block to fused, slab-packed f32 operands.

    Activations live as a batch-stacked 2-D tensor  T[n*Hp + h, w*C + c].
    Per layer the kernel only needs:
      Rcat  (k*N*OHp, RCOLS)  height-tap row selection, block-diagonal over batch
      Ccat  (k*WCp,   OWCp)   width taps x channel mix with BN folded in
      bias row (1, BCOLS)
    All three are concatenated across layers into 4 slabs.
    """
    encoder, decoder = params
    N = batch
    H, W = in_hw
    k = KSIZE

    layer_defs = []
    for (w, b, bn) in encoder:
        w_eff, b_eff = _fold_bn_np(w, b, bn)
        CO, CI, _, _ = w_eff.shape
        OH = (H - k) // STRIDE + 1
        OW = (W - k) // STRIDE + 1
        layer_defs.append(("conv", w_eff, b_eff, CI, CO, H, W, OH, OW))
        H, W = OH, OW
    for (w_t, b, bn, opad) in decoder:
        # ConvTranspose2d == stride-1 conv over a zero-dilated input with
        # channel-swapped, spatially flipped weights; the dilation/flip is
        # absorbed into the constant selection matrices (no zeros materialized).
        w_conv = np.transpose(np.asarray(w_t), (1, 0, 2, 3))[:, :, ::-1, ::-1]
        w_eff, b_eff = _fold_bn_np(w_conv, b, bn)
        CO, CI, _, _ = w_eff.shape
        OH = (H - 1) * STRIDE + k + opad
        OW = (W - 1) * STRIDE + k + opad
        layer_defs.append(("convt", w_eff, b_eff, CI, CO, H, W, OH, OW))
        H, W = OH, OW

    r_cols = _round_up(max(N * _round_up(d[5], 8) for d in layer_defs), 128)
    b_cols = _round_up(max(_round_up(d[8] * d[4], 128) for d in layer_defs), 128)

    r_blocks, c_main, c_wide, b_rows = [], [], [], []
    layer_meta = []
    r_off = c_main_off = c_wide_off = 0
    for (kind, w_eff, b_eff, CI, CO, Hl, Wl, OH, OW) in layer_defs:
        Hp, OHp = _round_up(Hl, 8), _round_up(OH, 8)
        WCp, OWCp = _round_up(Wl * CI, 128), _round_up(OW * CO, 128)
        NHp, NOHp = N * Hp, N * OHp

        rsel = _tap_selection(kind, Hl, OH, k, STRIDE)      # (k, OH, Hl)
        wsel = _tap_selection(kind, Wl, OW, k, STRIDE)      # (k, OW, Wl)

        # Row-selection taps, tap-major, block-diagonal over the batch.
        Rcat = np.zeros((k * NOHp, r_cols), np.float32)
        for t in range(k):
            for n in range(N):
                Rcat[t * NOHp + n * OHp: t * NOHp + n * OHp + OH,
                     n * Hp: n * Hp + Hl] = rsel[t]
        r_blocks.append(Rcat)

        # Ccat[t*WCp + w*CI+ci, ow*CO+co] = sum_kw wsel[kw,ow,w] * w_eff[co,ci,t,kw]
        c6 = np.einsum("qox,ciyq->yxioc", wsel, w_eff)      # (k, Wl, CI, OW, CO)
        Ccat = np.zeros((k * WCp, OWCp), np.float32)
        for t in range(k):
            Ccat[t * WCp: t * WCp + Wl * CI, :OW * CO] = c6[t].reshape(Wl * CI, OW * CO)

        wide = OWCp > 128
        if wide:
            c_off = c_wide_off
            c_wide.append(Ccat)
            c_wide_off += k * WCp
        else:
            c_off = c_main_off
            c_main.append(Ccat)
            c_main_off += k * WCp

        brow = np.zeros((b_cols,), np.float32)
        brow[:OW * CO] = np.tile(b_eff.astype(np.float32), OW)
        b_rows.append(brow)

        layer_meta.append(dict(r_off=r_off, r_rows=k * NOHp, nhp=NHp, nohp=NOHp,
                               c_off=c_off, c_rows=k * WCp, owcp=OWCp, wide=wide))
        r_off += k * NOHp

    r_slab = jnp.asarray(np.concatenate(r_blocks, axis=0), jnp.float32)
    c_slab = (jnp.asarray(np.concatenate(c_main, axis=0), jnp.float32)
              if c_main else jnp.zeros((8, 128), jnp.float32))
    cw_slab = (jnp.asarray(np.concatenate(c_wide, axis=0), jnp.float32)
               if c_wide else jnp.zeros((8, 128), jnp.float32))
    b_slab = jnp.asarray(np.stack(b_rows, axis=0), jnp.float32)

    OHl, OWl, COl = layer_defs[-1][7], layer_defs[-1][8], layer_defs[-1][4]
    meta = dict(
        batch=N,
        hp0=_round_up(layer_defs[0][5], 8),
        wcp0=_round_up(layer_defs[0][6] * layer_defs[0][3], 128),
        ohp_last=_round_up(OHl, 8),
        owcp_last=_round_up(OWl * COl, 128),
        out_hwc=(OHl, OWl, COl),
        layer_meta=tuple(layer_meta),
    )
    return (r_slab, c_slab, cw_slab, b_slab), meta


# ------------------------------ fused Pallas kernel ----------------------------

def _make_fused_kernel(layer_meta):
    k = KSIZE

    def kernel(x_ref, r_hbm, c_hbm, cw_hbm, b_hbm, out_ref,
               r_v, c_v, cw_v, b_v, csem, bsem):

        def r_copy(m, l):
            return pltpu.make_async_copy(
                r_hbm.at[pl.ds(m["r_off"], m["r_rows"])],
                r_v.at[pl.ds(m["r_off"], m["r_rows"])],
                csem.at[l, 0])

        def c_copy(m, l):
            src, dst = (cw_hbm, cw_v) if m["wide"] else (c_hbm, c_v)
            return pltpu.make_async_copy(
                src.at[pl.ds(m["c_off"], m["c_rows"])],
                dst.at[pl.ds(m["c_off"], m["c_rows"])],
                csem.at[l, 1])

        # Launch every constant DMA up front; waits are interleaved with compute
        # below so layer-l matmuls hide the weight loads of layers l+1..
        for l, m in enumerate(layer_meta):
            r_copy(m, l).start()
            c_copy(m, l).start()
        b_cp = pltpu.make_async_copy(b_hbm, b_v, bsem.at[0])
        b_cp.start()

        T = x_ref[...]                                     # (N*Hp0, WCp0) f32
        b_cp.wait()
        for l, m in enumerate(layer_meta):
            r_copy(m, l).wait()
            c_copy(m, l).wait()
            nohp = m["nohp"]
            # Height taps: ONE (k*N*OHp, N*Hp) @ (N*Hp, WCp) matmul.
            R = r_v[m["r_off"]:m["r_off"] + m["r_rows"], :m["nhp"]]
            M = jnp.dot(R, T, preferred_element_type=jnp.float32)
            # Re-tile tap blocks along lanes (static 8-aligned slices + lane concat).
            rows_cat = jnp.concatenate(
                [M[t * nohp:(t + 1) * nohp, :] for t in range(k)], axis=1)
            # Width taps + channel mix (+ folded BN) in ONE deep-K matmul.
            cv = cw_v if m["wide"] else c_v
            C = cv[m["c_off"]:m["c_off"] + m["c_rows"], :m["owcp"]]
            T = jnp.dot(rows_cat, C, preferred_element_type=jnp.float32) \
                + b_v[l:l + 1, :m["owcp"]]
        out_ref[...] = T

    return kernel


def forward(prepped, meta, x):
    r_slab, c_slab, cw_slab, b_slab = prepped
    lm = meta["layer_meta"]
    N, CI, H, W = x.shape
    hp0, wcp0 = meta["hp0"], meta["wcp0"]
    nohp_f = N * meta["ohp_last"]
    owcp_f = meta["owcp_last"]

    # NCHW -> batch-stacked 2-D "T layout" T[n*Hp + h, w*C + c], (8,128)-padded.
    t0 = jnp.transpose(x, (0, 2, 3, 1)).reshape(N, H, W * CI)
    t0 = jnp.pad(t0, ((0, 0), (0, hp0 - H), (0, wcp0 - W * CI)))
    t0 = t0.reshape(N * hp0, wcp0)

    out2d = pl.pallas_call(
        _make_fused_kernel(lm),
        out_shape=jax.ShapeDtypeStruct((nohp_f, owcp_f), jnp.float32),
        grid=(1,),
        in_specs=[
            pl.BlockSpec((N * hp0, wcp0), lambda i: (0, 0)),
            pl.BlockSpec(memory_space=pl.ANY),   # R slab (manual per-layer DMA)
            pl.BlockSpec(memory_space=pl.ANY),   # C slab (128-lane layers)
            pl.BlockSpec(memory_space=pl.ANY),   # C slab (wide last layer)
            pl.BlockSpec(memory_space=pl.ANY),   # bias slab
        ],
        out_specs=pl.BlockSpec((nohp_f, owcp_f), lambda i: (0, 0)),
        scratch_shapes=[
            pltpu.VMEM(r_slab.shape, jnp.float32),
            pltpu.VMEM(c_slab.shape, jnp.float32),
            pltpu.VMEM(cw_slab.shape, jnp.float32),
            pltpu.VMEM(b_slab.shape, jnp.float32),
            pltpu.SemaphoreType.DMA((len(lm), 2)),
            pltpu.SemaphoreType.DMA((1,)),
        ],
        compiler_params=pltpu.CompilerParams(
            dimension_semantics=("arbitrary",),
            vmem_limit_bytes=32 * 1024 * 1024),
    )(t0, r_slab, c_slab, cw_slab, b_slab)

    OH, OW, CO = meta["out_hwc"]
    y = out2d.reshape(N, meta["ohp_last"], owcp_f)[:, :OH, :OW * CO]
    y = y.reshape(N, OH, OW, CO)
    return jnp.transpose(y, (0, 3, 1, 2))                  # back to NCHW


# --------------------------- pure-JAX f32 reference ----------------------------

def _bn_eval(y, bn, eps=BN_EPS):
    gamma, beta, mean, var = bn
    inv = gamma / jnp.sqrt(var + eps)
    return (y - mean[None, :, None, None]) * inv[None, :, None, None] \
        + beta[None, :, None, None]


def reference_forward(params, x):
    encoder, decoder = params
    y = x
    dn = ("NCHW", "OIHW", "NCHW")
    for (w, b, bn) in encoder:
        y = lax.conv_general_dilated(y, w, (STRIDE, STRIDE), "VALID",
                                     dimension_numbers=dn,
                                     precision=lax.Precision.HIGHEST)
        y = y + b[None, :, None, None]
        y = _bn_eval(y, bn)
    for (w_t, b, bn, opad) in decoder:
        w_conv = jnp.transpose(w_t, (1, 0, 2, 3))[:, :, ::-1, ::-1]
        pad = KSIZE - 1
        y = lax.conv_general_dilated(y, w_conv, (1, 1),
                                     padding=[(pad, pad + opad), (pad, pad + opad)],
                                     lhs_dilation=(STRIDE, STRIDE),
                                     dimension_numbers=dn,
                                     precision=lax.Precision.HIGHEST)
        y = y + b[None, :, None, None]
        y = _bn_eval(y, bn)
    return y


# ------------------------------------ main --------------------------------------

if __name__ == "__main__":
    key = jax.random.PRNGKey(0)
    pkey, xkey = jax.random.split(key)
    params = init_params(pkey)
    # 64x64 input: encoder 64 -> 30 -> 13 -> 5 -> 1 ; decoder 1 -> 5 -> 13 -> 30 -> 64
    x = jax.random.normal(xkey, (2, 3, 64, 64), jnp.float32)

    prepped, meta = prepare_params(params, in_hw=(64, 64), batch=2)  # one-time prep

    fwd = jax.jit(lambda xx: forward(prepped, meta, xx))
    y = jax.block_until_ready(fwd(x))

    assert y.shape == (2, 3, 64, 64), y.shape
    assert bool(jnp.all(jnp.isfinite(y)))

    # Numerical check against a pure-JAX f32 reference (f32 MXU operands -> tight tol).
    y_ref = reference_forward(params, x)
    err = float(jnp.max(jnp.abs(y - y_ref)))
    scale = float(jnp.max(jnp.abs(y_ref)))
    assert err <= 5e-2 * scale + 1e-3, (err, scale)

    print("KERNEL_OK")
</pallas_src>

<mosaic_0001>
module attributes {stable_mosaic.version = 11 : i64} {
  func.func @kernel(%arg0: i32, %arg1: memref<128x256xf32, #tpu.memory_space<vmem>>, %arg2: memref<1840x128xf32, #tpu.memory_space<any>>, %arg3: memref<5120x128xf32, #tpu.memory_space<any>>, %arg4: memref<640x256xf32, #tpu.memory_space<any>>, %arg5: memref<8x256xf32, #tpu.memory_space<any>>, %arg6: memref<128x256xf32, #tpu.memory_space<vmem>>, %arg7: memref<1840x128xf32, #tpu.memory_space<vmem>>, %arg8: memref<5120x128xf32, #tpu.memory_space<vmem>>, %arg9: memref<640x256xf32, #tpu.memory_space<vmem>>, %arg10: memref<8x256xf32, #tpu.memory_space<vmem>>, %arg11: memref<8x2x!tpu.dma_semaphore, #tpu.memory_space<semaphore_mem>>, %arg12: memref<1x!tpu.dma_semaphore, #tpu.memory_space<semaphore_mem>>) attributes {dimension_semantics = [#tpu.dimension_semantics<arbitrary>], iteration_bounds = array<i64: 1>, scalar_prefetch = 0 : i64, scratch_operands = 6 : i64, tpu.core_type = #tpu.core_type<tc>, window_params = [{pipeline_mode = #tpu.pipeline_mode<synchronous>, transform_indices = @transform_0, window_bounds = array<i64: 128, 256>}, {}, {}, {}, {}, {pipeline_mode = #tpu.pipeline_mode<synchronous>, transform_indices = @transform_5, window_bounds = array<i64: 128, 256>}]} {
    %c0_i32 = arith.constant 0 : i32
    %c0_i32_0 = arith.constant 0 : i32
    %c0_i32_1 = arith.constant 0 : i32
    %c0_i32_2 = arith.constant 0 : i32
    %0 = tpu.memref_slice %arg2[%c0_i32_1, %c0_i32_2] : memref<1840x128xf32, #tpu.memory_space<any>> -> memref<320x128xf32, #tpu.memory_space<any>>
    %c0_i32_3 = arith.constant 0 : i32
    %c0_i32_4 = arith.constant 0 : i32
    %1 = tpu.memref_slice %arg7[%c0_i32_3, %c0_i32_4] : memref<1840x128xf32, #tpu.memory_space<vmem>> -> memref<320x128xf32, #tpu.memory_space<vmem>>
    %2 = tpu.memref_slice %arg11[%c0_i32, %c0_i32_0] : memref<8x2x!tpu.dma_semaphore, #tpu.memory_space<semaphore_mem>> -> memref<1x1x!tpu.dma_semaphore, #tpu.memory_space<semaphore_mem>>
    %3 = tpu.memref_squeeze %2 : memref<1x1x!tpu.dma_semaphore, #tpu.memory_space<semaphore_mem>> -> memref<!tpu.dma_semaphore, #tpu.memory_space<semaphore_mem>>
    tpu.enqueue_dma source(%0 : memref<320x128xf32, #tpu.memory_space<any>>) target(%1 : memref<320x128xf32, #tpu.memory_space<vmem>>) target_semaphore(%3 : memref<!tpu.dma_semaphore, #tpu.memory_space<semaphore_mem>>)
    %c0_i32_5 = arith.constant 0 : i32
    %c1_i32 = arith.constant 1 : i32
    %c0_i32_6 = arith.constant 0 : i32
    %c0_i32_7 = arith.constant 0 : i32
    %4 = tpu.memref_slice %arg3[%c0_i32_6, %c0_i32_7] : memref<5120x128xf32, #tpu.memory_space<any>> -> memref<1280x128xf32, #tpu.memory_space<any>>
    %c0_i32_8 = arith.constant 0 : i32
    %c0_i32_9 = arith.constant 0 : i32
    %5 = tpu.memref_slice %arg8[%c0_i32_8, %c0_i32_9] : memref<5120x128xf32, #tpu.memory_space<vmem>> -> memref<1280x128xf32, #tpu.memory_space<vmem>>
    %6 = tpu.memref_slice %arg11[%c0_i32_5, %c1_i32] : memref<8x2x!tpu.dma_semaphore, #tpu.memory_space<semaphore_mem>> -> memref<1x1x!tpu.dma_semaphore, #tpu.memory_space<semaphore_mem>>
    %7 = tpu.memref_squeeze %6 : memref<1x1x!tpu.dma_semaphore, #tpu.memory_space<semaphore_mem>> -> memref<!tpu.dma_semaphore, #tpu.memory_space<semaphore_mem>>
    tpu.enqueue_dma source(%4 : memref<1280x128xf32, #tpu.memory_space<any>>) target(%5 : memref<1280x128xf32, #tpu.memory_space<vmem>>) target_semaphore(%7 : memref<!tpu.dma_semaphore, #tpu.memory_space<semaphore_mem>>)
    %c1_i32_10 = arith.constant 1 : i32
    %c0_i32_11 = arith.constant 0 : i32
    %c320_i32 = arith.constant 320 : i32
    %c0_i32_12 = arith.constant 0 : i32
    %8 = tpu.memref_slice %arg2[%c320_i32, %c0_i32_12] : memref<1840x128xf32, #tpu.memory_space<any>> -> memref<160x128xf32, #tpu.memory_space<any>>
    %c320_i32_13 = arith.constant 320 : i32
    %c0_i32_14 = arith.constant 0 : i32
    %9 = tpu.memref_slice %arg7[%c320_i32_13, %c0_i32_14] : memref<1840x128xf32, #tpu.memory_space<vmem>> -> memref<160x128xf32, #tpu.memory_space<vmem>>
    %10 = tpu.memref_slice %arg11[%c1_i32_10, %c0_i32_11] : memref<8x2x!tpu.dma_semaphore, #tpu.memory_space<semaphore_mem>> -> memref<1x1x!tpu.dma_semaphore, #tpu.memory_space<semaphore_mem>>
    %11 = tpu.memref_squeeze %10 : memref<1x1x!tpu.dma_semaphore, #tpu.memory_space<semaphore_mem>> -> memref<!tpu.dma_semaphore, #tpu.memory_space<semaphore_mem>>
    tpu.enqueue_dma source(%8 : memref<160x128xf32, #tpu.memory_space<any>>) target(%9 : memref<160x128xf32, #tpu.memory_space<vmem>>) target_semaphore(%11 : memref<!tpu.dma_semaphore, #tpu.memory_space<semaphore_mem>>)
    %c1_i32_15 = arith.constant 1 : i32
    %c1_i32_16 = arith.constant 1 : i32
    %c1280_i32 = arith.constant 1280 : i32
    %c0_i32_17 = arith.constant 0 : i32
    %12 = tpu.memref_slice %arg3[%c1280_i32, %c0_i32_17] : memref<5120x128xf32, #tpu.memory_space<any>> -> memref<640x128xf32, #tpu.memory_space<any>>
    %c1280_i32_18 = arith.constant 1280 : i32
    %c0_i32_19 = arith.constant 0 : i32
    %13 = tpu.memref_slice %arg8[%c1280_i32_18, %c0_i32_19] : memref<5120x128xf32, #tpu.memory_space<vmem>> -> memref<640x128xf32, #tpu.memory_space<vmem>>
    %14 = tpu.memref_slice %arg11[%c1_i32_15, %c1_i32_16] : memref<8x2x!tpu.dma_semaphore, #tpu.memory_space<semaphore_mem>> -> memref<1x1x!tpu.dma_semaphore, #tpu.memory_space<semaphore_mem>>
    %15 = tpu.memref_squeeze %14 : memref<1x1x!tpu.dma_semaphore, #tpu.memory_space<semaphore_mem>> -> memref<!tpu.dma_semaphore, #tpu.memory_space<semaphore_mem>>
    tpu.enqueue_dma source(%12 : memref<640x128xf32, #tpu.memory_space<any>>) target(%13 : memref<640x128xf32, #tpu.memory_space<vmem>>) target_semaphore(%15 : memref<!tpu.dma_semaphore, #tpu.memory_space<semaphore_mem>>)
    %c2_i32 = arith.constant 2 : i32
    %c0_i32_20 = arith.constant 0 : i32
    %c480_i32 = arith.constant 480 : i32
    %c0_i32_21 = arith.constant 0 : i32
    %16 = tpu.memref_slice %arg2[%c480_i32, %c0_i32_21] : memref<1840x128xf32, #tpu.memory_space<any>> -> memref<80x128xf32, #tpu.memory_space<any>>
    %c480_i32_22 = arith.constant 480 : i32
    %c0_i32_23 = arith.constant 0 : i32
    %17 = tpu.memref_slice %arg7[%c480_i32_22, %c0_i32_23] : memref<1840x128xf32, #tpu.memory_space<vmem>> -> memref<80x128xf32, #tpu.memory_space<vmem>>
    %18 = tpu.memref_slice %arg11[%c2_i32, %c0_i32_20] : memref<8x2x!tpu.dma_semaphore, #tpu.memory_space<semaphore_mem>> -> memref<1x1x!tpu.dma_semaphore, #tpu.memory_space<semaphore_mem>>
    %19 = tpu.memref_squeeze %18 : memref<1x1x!tpu.dma_semaphore, #tpu.memory_space<semaphore_mem>> -> memref<!tpu.dma_semaphore, #tpu.memory_space<semaphore_mem>>
    tpu.enqueue_dma source(%16 : memref<80x128xf32, #tpu.memory_space<any>>) target(%17 : memref<80x128xf32, #tpu.memory_space<vmem>>) target_semaphore(%19 : memref<!tpu.dma_semaphore, #tpu.memory_space<semaphore_mem>>)
    %c2_i32_24 = arith.constant 2 : i32
    %c1_i32_25 = arith.constant 1 : i32
    %c1920_i32 = arith.constant 1920 : i32
    %c0_i32_26 = arith.constant 0 : i32
    %20 = tpu.memref_slice %arg3[%c1920_i32, %c0_i32_26] : memref<5120x128xf32, #tpu.memory_space<any>> -> memref<640x128xf32, #tpu.memory_space<any>>
    %c1920_i32_27 = arith.constant 1920 : i32
    %c0_i32_28 = arith.constant 0 : i32
    %21 = tpu.memref_slice %arg8[%c1920_i32_27, %c0_i32_28] : memref<5120x128xf32, #tpu.memory_space<vmem>> -> memref<640x128xf32, #tpu.memory_space<vmem>>
    %22 = tpu.memref_slice %arg11[%c2_i32_24, %c1_i32_25] : memref<8x2x!tpu.dma_semaphore, #tpu.memory_space<semaphore_mem>> -> memref<1x1x!tpu.dma_semaphore, #tpu.memory_space<semaphore_mem>>
    %23 = tpu.memref_squeeze %22 : memref<1x1x!tpu.dma_semaphore, #tpu.memory_space<semaphore_mem>> -> memref<!tpu.dma_semaphore, #tpu.memory_space<semaphore_mem>>
    tpu.enqueue_dma source(%20 : memref<640x128xf32, #tpu.memory_space<any>>) target(%21 : memref<640x128xf32, #tpu.memory_space<vmem>>) target_semaphore(%23 : memref<!tpu.dma_semaphore, #tpu.memory_space<semaphore_mem>>)
    %c3_i32 = arith.constant 3 : i32
    %c0_i32_29 = arith.constant 0 : i32
    %c560_i32 = arith.constant 560 : i32
    %c0_i32_30 = arith.constant 0 : i32
    %24 = tpu.memref_slice %arg2[%c560_i32, %c0_i32_30] : memref<1840x128xf32, #tpu.memory_space<any>> -> memref<80x128xf32, #tpu.memory_space<any>>
    %c560_i32_31 = arith.constant 560 : i32
    %c0_i32_32 = arith.constant 0 : i32
    %25 = tpu.memref_slice %arg7[%c560_i32_31, %c0_i32_32] : memref<1840x128xf32, #tpu.memory_space<vmem>> -> memref<80x128xf32, #tpu.memory_space<vmem>>
    %26 = tpu.memref_slice %arg11[%c3_i32, %c0_i32_29] : memref<8x2x!tpu.dma_semaphore, #tpu.memory_space<semaphore_mem>> -> memref<1x1x!tpu.dma_semaphore, #tpu.memory_space<semaphore_mem>>
    %27 = tpu.memref_squeeze %26 : memref<1x1x!tpu.dma_semaphore, #tpu.memory_space<semaphore_mem>> -> memref<!tpu.dma_semaphore, #tpu.memory_space<semaphore_mem>>
    tpu.enqueue_dma source(%24 : memref<80x128xf32, #tpu.memory_space<any>>) target(%25 : memref<80x128xf32, #tpu.memory_space<vmem>>) target_semaphore(%27 : memref<!tpu.dma_semaphore, #tpu.memory_space<semaphore_mem>>)
    %c3_i32_33 = arith.constant 3 : i32
    %c1_i32_34 = arith.constant 1 : i32
    %c2560_i32 = arith.constant 2560 : i32
    %c0_i32_35 = arith.constant 0 : i32
    %28 = tpu.memref_slice %arg3[%c2560_i32, %c0_i32_35] : memref<5120x128xf32, #tpu.memory_space<any>> -> memref<640x128xf32, #tpu.memory_space<any>>
    %c2560_i32_36 = arith.constant 2560 : i32
    %c0_i32_37 = arith.constant 0 : i32
    %29 = tpu.memref_slice %arg8[%c2560_i32_36, %c0_i32_37] : memref<5120x128xf32, #tpu.memory_space<vmem>> -> memref<640x128xf32, #tpu.memory_space<vmem>>
    %30 = tpu.memref_slice %arg11[%c3_i32_33, %c1_i32_34] : memref<8x2x!tpu.dma_semaphore, #tpu.memory_space<semaphore_mem>> -> memref<1x1x!tpu.dma_semaphore, #tpu.memory_space<semaphore_mem>>
    %31 = tpu.memref_squeeze %30 : memref<1x1x!tpu.dma_semaphore, #tpu.memory_space<semaphore_mem>> -> memref<!tpu.dma_semaphore, #tpu.memory_space<semaphore_mem>>
    tpu.enqueue_dma source(%28 : memref<640x128xf32, #tpu.memory_space<any>>) target(%29 : memref<640x128xf32, #tpu.memory_space<vmem>>) target_semaphore(%31 : memref<!tpu.dma_semaphore, #tpu.memory_space<semaphore_mem>>)
    %c4_i32 = arith.constant 4 : i32
    %c0_i32_38 = arith.constant 0 : i32
    %c640_i32 = arith.constant 640 : i32
    %c0_i32_39 = arith.constant 0 : i32
    %32 = tpu.memref_slice %arg2[%c640_i32, %c0_i32_39] : memref<1840x128xf32, #tpu.memory_space<any>> -> memref<80x128xf32, #tpu.memory_space<any>>
    %c640_i32_40 = arith.constant 640 : i32
    %c0_i32_41 = arith.constant 0 : i32
    %33 = tpu.memref_slice %arg7[%c640_i32_40, %c0_i32_41] : memref<1840x128xf32, #tpu.memory_space<vmem>> -> memref<80x128xf32, #tpu.memory_space<vmem>>
    %34 = tpu.memref_slice %arg11[%c4_i32, %c0_i32_38] : memref<8x2x!tpu.dma_semaphore, #tpu.memory_space<semaphore_mem>> -> memref<1x1x!tpu.dma_semaphore, #tpu.memory_space<semaphore_mem>>
    %35 = tpu.memref_squeeze %34 : memref<1x1x!tpu.dma_semaphore, #tpu.memory_space<semaphore_mem>> -> memref<!tpu.dma_semaphore, #tpu.memory_space<semaphore_mem>>
    tpu.enqueue_dma source(%32 : memref<80x128xf32, #tpu.memory_space<any>>) target(%33 : memref<80x128xf32, #tpu.memory_space<vmem>>) target_semaphore(%35 : memref<!tpu.dma_semaphore, #tpu.memory_space<semaphore_mem>>)
    %c4_i32_42 = arith.constant 4 : i32
    %c1_i32_43 = arith.constant 1 : i32
    %c3200_i32 = arith.constant 3200 : i32
    %c0_i32_44 = arith.constant 0 : i32
    %36 = tpu.memref_slice %arg3[%c3200_i32, %c0_i32_44] : memref<5120x128xf32, #tpu.memory_space<any>> -> memref<640x128xf32, #tpu.memory_space<any>>
    %c3200_i32_45 = arith.constant 3200 : i32
    %c0_i32_46 = arith.constant 0 : i32
    %37 = tpu.memref_slice %arg8[%c3200_i32_45, %c0_i32_46] : memref<5120x128xf32, #tpu.memory_space<vmem>> -> memref<640x128xf32, #tpu.memory_space<vmem>>
    %38 = tpu.memref_slice %arg11[%c4_i32_42, %c1_i32_43] : memref<8x2x!tpu.dma_semaphore, #tpu.memory_space<semaphore_mem>> -> memref<1x1x!tpu.dma_semaphore, #tpu.memory_space<semaphore_mem>>
    %39 = tpu.memref_squeeze %38 : memref<1x1x!tpu.dma_semaphore, #tpu.memory_space<semaphore_mem>> -> memref<!tpu.dma_semaphore, #tpu.memory_space<semaphore_mem>>
    tpu.enqueue_dma source(%36 : memref<640x128xf32, #tpu.memory_space<any>>) target(%37 : memref<640x128xf32, #tpu.memory_space<vmem>>) target_semaphore(%39 : memref<!tpu.dma_semaphore, #tpu.memory_space<semaphore_mem>>)
    %c5_i32 = arith.constant 5 : i32
    %c0_i32_47 = arith.constant 0 : i32
    %c720_i32 = arith.constant 720 : i32
    %c0_i32_48 = arith.constant 0 : i32
    %40 = tpu.memref_slice %arg2[%c720_i32, %c0_i32_48] : memref<1840x128xf32, #tpu.memory_space<any>> -> memref<160x128xf32, #tpu.memory_space<any>>
    %c720_i32_49 = arith.constant 720 : i32
    %c0_i32_50 = arith.constant 0 : i32
    %41 = tpu.memref_slice %arg7[%c720_i32_49, %c0_i32_50] : memref<1840x128xf32, #tpu.memory_space<vmem>> -> memref<160x128xf32, #tpu.memory_space<vmem>>
    %42 = tpu.memref_slice %arg11[%c5_i32, %c0_i32_47] : memref<8x2x!tpu.dma_semaphore, #tpu.memory_space<semaphore_mem>> -> memref<1x1x!tpu.dma_semaphore, #tpu.memory_space<semaphore_mem>>
    %43 = tpu.memref_squeeze %42 : memref<1x1x!tpu.dma_semaphore, #tpu.memory_space<semaphore_mem>> -> memref<!tpu.dma_semaphore, #tpu.memory_space<semaphore_mem>>
    tpu.enqueue_dma source(%40 : memref<160x128xf32, #tpu.memory_space<any>>) target(%41 : memref<160x128xf32, #tpu.memory_space<vmem>>) target_semaphore(%43 : memref<!tpu.dma_semaphore, #tpu.memory_space<semaphore_mem>>)
    %c5_i32_51 = arith.constant 5 : i32
    %c1_i32_52 = arith.constant 1 : i32
    %c3840_i32 = arith.constant 3840 : i32
    %c0_i32_53 = arith.constant 0 : i32
    %44 = tpu.memref_slice %arg3[%c3840_i32, %c0_i32_53] : memref<5120x128xf32, #tpu.memory_space<any>> -> memref<640x128xf32, #tpu.memory_space<any>>
    %c3840_i32_54 = arith.constant 3840 : i32
    %c0_i32_55 = arith.constant 0 : i32
    %45 = tpu.memref_slice %arg8[%c3840_i32_54, %c0_i32_55] : memref<5120x128xf32, #tpu.memory_space<vmem>> -> memref<640x128xf32, #tpu.memory_space<vmem>>
    %46 = tpu.memref_slice %arg11[%c5_i32_51, %c1_i32_52] : memref<8x2x!tpu.dma_semaphore, #tpu.memory_space<semaphore_mem>> -> memref<1x1x!tpu.dma_semaphore, #tpu.memory_space<semaphore_mem>>
    %47 = tpu.memref_squeeze %46 : memref<1x1x!tpu.dma_semaphore, #tpu.memory_space<semaphore_mem>> -> memref<!tpu.dma_semaphore, #tpu.memory_space<semaphore_mem>>
    tpu.enqueue_dma source(%44 : memref<640x128xf32, #tpu.memory_space<any>>) target(%45 : memref<640x128xf32, #tpu.memory_space<vmem>>) target_semaphore(%47 : memref<!tpu.dma_semaphore, #tpu.memory_space<semaphore_mem>>)
    %c6_i32 = arith.constant 6 : i32
    %c0_i32_56 = arith.constant 0 : i32
    %c880_i32 = arith.constant 880 : i32
    %c0_i32_57 = arith.constant 0 : i32
    %48 = tpu.memref_slice %arg2[%c880_i32, %c0_i32_57] : memref<1840x128xf32, #tpu.memory_space<any>> -> memref<320x128xf32, #tpu.memory_space<any>>
    %c880_i32_58 = arith.constant 880 : i32
    %c0_i32_59 = arith.constant 0 : i32
    %49 = tpu.memref_slice %arg7[%c880_i32_58, %c0_i32_59] : memref<1840x128xf32, #tpu.memory_space<vmem>> -> memref<320x128xf32, #tpu.memory_space<vmem>>
    %50 = tpu.memref_slice %arg11[%c6_i32, %c0_i32_56] : memref<8x2x!tpu.dma_semaphore, #tpu.memory_space<semaphore_mem>> -> memref<1x1x!tpu.dma_semaphore, #tpu.memory_space<semaphore_mem>>
    %51 = tpu.memref_squeeze %50 : memref<1x1x!tpu.dma_semaphore, #tpu.memory_space<semaphore_mem>> -> memref<!tpu.dma_semaphore, #tpu.memory_space<semaphore_mem>>
    tpu.enqueue_dma source(%48 : memref<320x128xf32, #tpu.memory_space<any>>) target(%49 : memref<320x128xf32, #tpu.memory_space<vmem>>) target_semaphore(%51 : memref<!tpu.dma_semaphore, #tpu.memory_space<semaphore_mem>>)
    %c6_i32_60 = arith.constant 6 : i32
    %c1_i32_61 = arith.constant 1 : i32
    %c4480_i32 = arith.constant 4480 : i32
    %c0_i32_62 = arith.constant 0 : i32
    %52 = tpu.memref_slice %arg3[%c4480_i32, %c0_i32_62] : memref<5120x128xf32, #tpu.memory_space<any>> -> memref<640x128xf32, #tpu.memory_space<any>>
    %c4480_i32_63 = arith.constant 4480 : i32
    %c0_i32_64 = arith.constant 0 : i32
    %53 = tpu.memref_slice %arg8[%c4480_i32_63, %c0_i32_64] : memref<5120x128xf32, #tpu.memory_space<vmem>> -> memref<640x128xf32, #tpu.memory_space<vmem>>
    %54 = tpu.memref_slice %arg11[%c6_i32_60, %c1_i32_61] : memref<8x2x!tpu.dma_semaphore, #tpu.memory_space<semaphore_mem>> -> memref<1x1x!tpu.dma_semaphore, #tpu.memory_space<semaphore_mem>>
    %55 = tpu.memref_squeeze %54 : memref<1x1x!tpu.dma_semaphore, #tpu.memory_space<semaphore_mem>> -> memref<!tpu.dma_semaphore, #tpu.memory_space<semaphore_mem>>
    tpu.enqueue_dma source(%52 : memref<640x128xf32, #tpu.memory_space<any>>) target(%53 : memref<640x128xf32, #tpu.memory_space<vmem>>) target_semaphore(%55 : memref<!tpu.dma_semaphore, #tpu.memory_space<semaphore_mem>>)
    %c7_i32 = arith.constant 7 : i32
    %c0_i32_65 = arith.constant 0 : i32
    %c1200_i32 = arith.constant 1200 : i32
    %c0_i32_66 = arith.constant 0 : i32
    %56 = tpu.memref_slice %arg2[%c1200_i32, %c0_i32_66] : memref<1840x128xf32, #tpu.memory_space<any>> -> memref<640x128xf32, #tpu.memory_space<any>>
    %c1200_i32_67 = arith.constant 1200 : i32
    %c0_i32_68 = arith.constant 0 : i32
    %57 = tpu.memref_slice %arg7[%c1200_i32_67, %c0_i32_68] : memref<1840x128xf32, #tpu.memory_space<vmem>> -> memref<640x128xf32, #tpu.memory_space<vmem>>
    %58 = tpu.memref_slice %arg11[%c7_i32, %c0_i32_65] : memref<8x2x!tpu.dma_semaphore, #tpu.memory_space<semaphore_mem>> -> memref<1x1x!tpu.dma_semaphore, #tpu.memory_space<semaphore_mem>>
    %59 = tpu.memref_squeeze %58 : memref<1x1x!tpu.dma_semaphore, #tpu.memory_space<semaphore_mem>> -> memref<!tpu.dma_semaphore, #tpu.memory_space<semaphore_mem>>
    tpu.enqueue_dma source(%56 : memref<640x128xf32, #tpu.memory_space<any>>) target(%57 : memref<640x128xf32, #tpu.memory_space<vmem>>) target_semaphore(%59 : memref<!tpu.dma_semaphore, #tpu.memory_space<semaphore_mem>>)
    %c7_i32_69 = arith.constant 7 : i32
    %c1_i32_70 = arith.constant 1 : i32
    %c0_i32_71 = arith.constant 0 : i32
    %c0_i32_72 = arith.constant 0 : i32
    %60 = tpu.memref_slice %arg4[%c0_i32_71, %c0_i32_72] : memref<640x256xf32, #tpu.memory_space<any>> -> memref<640x256xf32, #tpu.memory_space<any>>
    %c0_i32_73 = arith.constant 0 : i32
    %c0_i32_74 = arith.constant 0 : i32
    %61 = tpu.memref_slice %arg9[%c0_i32_73, %c0_i32_74] : memref<640x256xf32, #tpu.memory_space<vmem>> -> memref<640x256xf32, #tpu.memory_space<vmem>>
    %62 = tpu.memref_slice %arg11[%c7_i32_69, %c1_i32_70] : memref<8x2x!tpu.dma_semaphore, #tpu.memory_space<semaphore_mem>> -> memref<1x1x!tpu.dma_semaphore, #tpu.memory_space<semaphore_mem>>
    %63 = tpu.memref_squeeze %62 : memref<1x1x!tpu.dma_semaphore, #tpu.memory_space<semaphore_mem>> -> memref<!tpu.dma_semaphore, #tpu.memory_space<semaphore_mem>>
    tpu.enqueue_dma source(%60 : memref<640x256xf32, #tpu.memory_space<any>>) target(%61 : memref<640x256xf32, #tpu.memory_space<vmem>>) target_semaphore(%63 : memref<!tpu.dma_semaphore, #tpu.memory_space<semaphore_mem>>)
    %c0_i32_75 = arith.constant 0 : i32
    %64 = tpu.memref_slice %arg12[%c0_i32_75] : memref<1x!tpu.dma_semaphore, #tpu.memory_space<semaphore_mem>> -> memref<1x!tpu.dma_semaphore, #tpu.memory_space<semaphore_mem>>
    %65 = tpu.memref_squeeze %64 : memref<1x!tpu.dma_semaphore, #tpu.memory_space<semaphore_mem>> -> memref<!tpu.dma_semaphore, #tpu.memory_space<semaphore_mem>>
    tpu.enqueue_dma source(%arg5 : memref<8x256xf32, #tpu.memory_space<any>>) target(%arg10 : memref<8x256xf32, #tpu.memory_space<vmem>>) target_semaphore(%65 : memref<!tpu.dma_semaphore, #tpu.memory_space<semaphore_mem>>)
    %c0 = arith.constant 0 : index
    %c0_76 = arith.constant 0 : index
    %66 = vector.load %arg1[%c0, %c0_76] : memref<128x256xf32, #tpu.memory_space<vmem>>, vector<128x256xf32>
    %c0_i32_77 = arith.constant 0 : i32
    %67 = tpu.memref_slice %arg12[%c0_i32_77] : memref<1x!tpu.dma_semaphore, #tpu.memory_space<semaphore_mem>> -> memref<1x!tpu.dma_semaphore, #tpu.memory_space<semaphore_mem>>
    %68 = tpu.memref_squeeze %67 : memref<1x!tpu.dma_semaphore, #tpu.memory_space<semaphore_mem>> -> memref<!tpu.dma_semaphore, #tpu.memory_space<semaphore_mem>>
    tpu.wait_dma2 semaphore(%68 : memref<!tpu.dma_semaphore, #tpu.memory_space<semaphore_mem>>) src(%arg5 : memref<8x256xf32, #tpu.memory_space<any>>) dst(%arg10 : memref<8x256xf32, #tpu.memory_space<vmem>>)
    %c0_i32_78 = arith.constant 0 : i32
    %c0_i32_79 = arith.constant 0 : i32
    %c0_i32_80 = arith.constant 0 : i32
    %c0_i32_81 = arith.constant 0 : i32
    %69 = tpu.memref_slice %arg2[%c0_i32_80, %c0_i32_81] : memref<1840x128xf32, #tpu.memory_space<any>> -> memref<320x128xf32, #tpu.memory_space<any>>
    %c0_i32_82 = arith.constant 0 : i32
    %c0_i32_83 = arith.constant 0 : i32
    %70 = tpu.memref_slice %arg7[%c0_i32_82, %c0_i32_83] : memref<1840x128xf32, #tpu.memory_space<vmem>> -> memref<320x128xf32, #tpu.memory_space<vmem>>
    %71 = tpu.memref_slice %arg11[%c0_i32_78, %c0_i32_79] : memref<8x2x!tpu.dma_semaphore, #tpu.memory_space<semaphore_mem>> -> memref<1x1x!tpu.dma_semaphore, #tpu.memory_space<semaphore_mem>>
    %72 = tpu.memref_squeeze %71 : memref<1x1x!tpu.dma_semaphore, #tpu.memory_space<semaphore_mem>> -> memref<!tpu.dma_semaphore, #tpu.memory_space<semaphore_mem>>
    tpu.wait_dma2 semaphore(%72 : memref<!tpu.dma_semaphore, #tpu.memory_space<semaphore_mem>>) src(%69 : memref<320x128xf32, #tpu.memory_space<any>>) dst(%70 : memref<320x128xf32, #tpu.memory_space<vmem>>)
    %c0_i32_84 = arith.constant 0 : i32
    %c1_i32_85 = arith.constant 1 : i32
    %c0_i32_86 = arith.constant 0 : i32
    %c0_i32_87 = arith.constant 0 : i32
    %73 = tpu.memref_slice %arg3[%c0_i32_86, %c0_i32_87] : memref<5120x128xf32, #tpu.memory_space<any>> -> memref<1280x128xf32, #tpu.memory_space<any>>
    %c0_i32_88 = arith.constant 0 : i32
    %c0_i32_89 = arith.constant 0 : i32
    %74 = tpu.memref_slice %arg8[%c0_i32_88, %c0_i32_89] : memref<5120x128xf32, #tpu.memory_space<vmem>> -> memref<1280x128xf32, #tpu.memory_space<vmem>>
    %75 = tpu.memref_slice %arg11[%c0_i32_84, %c1_i32_85] : memref<8x2x!tpu.dma_semaphore, #tpu.memory_space<semaphore_mem>> -> memref<1x1x!tpu.dma_semaphore, #tpu.memory_space<semaphore_mem>>
    %76 = tpu.memref_squeeze %75 : memref<1x1x!tpu.dma_semaphore, #tpu.memory_space<semaphore_mem>> -> memref<!tpu.dma_semaphore, #tpu.memory_space<semaphore_mem>>
    tpu.wait_dma2 semaphore(%76 : memref<!tpu.dma_semaphore, #tpu.memory_space<semaphore_mem>>) src(%73 : memref<1280x128xf32, #tpu.memory_space<any>>) dst(%74 : memref<1280x128xf32, #tpu.memory_space<vmem>>)
    %c0_90 = arith.constant 0 : index
    %c0_91 = arith.constant 0 : index
    %77 = vector.load %arg7[%c0_90, %c0_91] : memref<1840x128xf32, #tpu.memory_space<vmem>>, vector<320x128xf32>
    %cst = arith.constant dense<0.000000e+00> : vector<320x256xf32>
    %78 = tpu.matmul %77, %66, %cst {dimension_numbers = #tpu.dot_dimension_numbers<[1], [0], [0], [1], [0, 0, 1, 1], [], []>} : vector<320x128xf32>, vector<128x256xf32>, vector<320x256xf32> -> vector<320x256xf32>
    %79 = vector.extract_strided_slice %78 {offsets = [0, 0], sizes = [64, 256], strides = [1, 1]} : vector<320x256xf32> to vector<64x256xf32>
    %80 = vector.extract_strided_slice %78 {offsets = [64, 0], sizes = [64, 256], strides = [1, 1]} : vector<320x256xf32> to vector<64x256xf32>
    %81 = vector.extract_strided_slice %78 {offsets = [128, 0], sizes = [64, 256], strides = [1, 1]} : vector<320x256xf32> to vector<64x256xf32>
    %82 = vector.extract_strided_slice %78 {offsets = [192, 0], sizes = [64, 256], strides = [1, 1]} : vector<320x256xf32> to vector<64x256xf32>
    %83 = vector.extract_strided_slice %78 {offsets = [256, 0], sizes = [64, 256], strides = [1, 1]} : vector<320x256xf32> to vector<64x256xf32>
    %84 = tpu.concatenate %79, %80, %81, %82, %83 in 1 : vector<64x256xf32>, vector<64x256xf32>, vector<64x256xf32>, vector<64x256xf32>, vector<64x256xf32> -> vector<64x1280xf32>
    %c0_92 = arith.constant 0 : index
    %c0_93 = arith.constant 0 : index
    %85 = vector.load %arg8[%c0_92, %c0_93] : memref<5120x128xf32, #tpu.memory_space<vmem>>, vector<1280x128xf32>
    %cst_94 = arith.constant dense<0.000000e+00> : vector<64x128xf32>
    %86 = tpu.matmul %84, %85, %cst_94 {dimension_numbers = #tpu.dot_dimension_numbers<[1], [0], [0], [1], [0, 0, 1, 1], [], []>} : vector<64x1280xf32>, vector<1280x128xf32>, vector<64x128xf32> -> vector<64x128xf32>
    %c0_95 = arith.constant 0 : index
    %c0_96 = arith.constant 0 : index
    %87 = vector.load %arg10[%c0_95, %c0_96] : memref<8x256xf32, #tpu.memory_space<vmem>>, vector<1x128xf32>
    %88 = vector.broadcast %87 : vector<1x128xf32> to vector<64x128xf32>
    %89 = arith.addf %86, %88 : vector<64x128xf32>
    %c1_i32_97 = arith.constant 1 : i32
    %c0_i32_98 = arith.constant 0 : i32
    %c320_i32_99 = arith.constant 320 : i32
    %c0_i32_100 = arith.constant 0 : i32
    %90 = tpu.memref_slice %arg2[%c320_i32_99, %c0_i32_100] : memref<1840x128xf32, #tpu.memory_space<any>> -> memref<160x128xf32, #tpu.memory_space<any>>
    %c320_i32_101 = arith.constant 320 : i32
    %c0_i32_102 = arith.constant 0 : i32
    %91 = tpu.memref_slice %arg7[%c320_i32_101, %c0_i32_102] : memref<1840x128xf32, #tpu.memory_space<vmem>> -> memref<160x128xf32, #tpu.memory_space<vmem>>
    %92 = tpu.memref_slice %arg11[%c1_i32_97, %c0_i32_98] : memref<8x2x!tpu.dma_semaphore, #tpu.memory_space<semaphore_mem>> -> memref<1x1x!tpu.dma_semaphore, #tpu.memory_space<semaphore_mem>>
    %93 = tpu.memref_squeeze %92 : memref<1x1x!tpu.dma_semaphore, #tpu.memory_space<semaphore_mem>> -> memref<!tpu.dma_semaphore, #tpu.memory_space<semaphore_mem>>
    tpu.wait_dma2 semaphore(%93 : memref<!tpu.dma_semaphore, #tpu.memory_space<semaphore_mem>>) src(%90 : memref<160x128xf32, #tpu.memory_space<any>>) dst(%91 : memref<160x128xf32, #tpu.memory_space<vmem>>)
    %c1_i32_103 = arith.constant 1 : i32
    %c1_i32_104 = arith.constant 1 : i32
    %c1280_i32_105 = arith.constant 1280 : i32
    %c0_i32_106 = arith.constant 0 : i32
    %94 = tpu.memref_slice %arg3[%c1280_i32_105, %c0_i32_106] : memref<5120x128xf32, #tpu.memory_space<any>> -> memref<640x128xf32, #tpu.memory_space<any>>
    %c1280_i32_107 = arith.constant 1280 : i32
    %c0_i32_108 = arith.constant 0 : i32
    %95 = tpu.memref_slice %arg8[%c1280_i32_107, %c0_i32_108] : memref<5120x128xf32, #tpu.memory_space<vmem>> -> memref<640x128xf32, #tpu.memory_space<vmem>>
    %96 = tpu.memref_slice %arg11[%c1_i32_103, %c1_i32_104] : memref<8x2x!tpu.dma_semaphore, #tpu.memory_space<semaphore_mem>> -> memref<1x1x!tpu.dma_semaphore, #tpu.memory_space<semaphore_mem>>
    %97 = tpu.memref_squeeze %96 : memref<1x1x!tpu.dma_semaphore, #tpu.memory_space<semaphore_mem>> -> memref<!tpu.dma_semaphore, #tpu.memory_space<semaphore_mem>>
    tpu.wait_dma2 semaphore(%97 : memref<!tpu.dma_semaphore, #tpu.memory_space<semaphore_mem>>) src(%94 : memref<640x128xf32, #tpu.memory_space<any>>) dst(%95 : memref<640x128xf32, #tpu.memory_space<vmem>>)
    %c320 = arith.constant 320 : index
    %c0_109 = arith.constant 0 : index
    %98 = vector.load %arg7[%c320, %c0_109] : memref<1840x128xf32, #tpu.memory_space<vmem>>, vector<160x64xf32>
    %cst_110 = arith.constant dense<0.000000e+00> : vector<160x128xf32>
    %99 = tpu.matmul %98, %89, %cst_110 {dimension_numbers = #tpu.dot_dimension_numbers<[1], [0], [0], [1], [0, 0, 1, 1], [], []>} : vector<160x64xf32>, vector<64x128xf32>, vector<160x128xf32> -> vector<160x128xf32>
    %100 = vector.extract_strided_slice %99 {offsets = [0, 0], sizes = [32, 128], strides = [1, 1]} : vector<160x128xf32> to vector<32x128xf32>
    %101 = vector.extract_strided_slice %99 {offsets = [32, 0], sizes = [32, 128], strides = [1, 1]} : vector<160x128xf32> to vector<32x128xf32>
    %102 = vector.extract_strided_slice %99 {offsets = [64, 0], sizes = [32, 128], strides = [1, 1]} : vector<160x128xf32> to vector<32x128xf32>
    %103 = vector.extract_strided_slice %99 {offsets = [96, 0], sizes = [32, 128], strides = [1, 1]} : vector<160x128xf32> to vector<32x128xf32>
    %104 = vector.extract_strided_slice %99 {offsets = [128, 0], sizes = [32, 128], strides = [1, 1]} : vector<160x128xf32> to vector<32x128xf32>
    %105 = tpu.concatenate %100, %101, %102, %103, %104 in 1 : vector<32x128xf32>, vector<32x128xf32>, vector<32x128xf32>, vector<32x128xf32>, vector<32x128xf32> -> vector<32x640xf32>
    %c1280 = arith.constant 1280 : index
    %c0_111 = arith.constant 0 : index
    %106 = vector.load %arg8[%c1280, %c0_111] : memref<5120x128xf32, #tpu.memory_space<vmem>>, vector<640x128xf32>
    %cst_112 = arith.constant dense<0.000000e+00> : vector<32x128xf32>
    %107 = tpu.matmul %105, %106, %cst_112 {dimension_numbers = #tpu.dot_dimension_numbers<[1], [0], [0], [1], [0, 0, 1, 1], [], []>} : vector<32x640xf32>, vector<640x128xf32>, vector<32x128xf32> -> vector<32x128xf32>
    %c1 = arith.constant 1 : index
    %c0_113 = arith.constant 0 : index
    %108 = vector.load %arg10[%c1, %c0_113] : memref<8x256xf32, #tpu.memory_space<vmem>>, vector<1x128xf32>
    %109 = vector.broadcast %108 : vector<1x128xf32> to vector<32x128xf32>
    %110 = arith.addf %107, %109 : vector<32x128xf32>
    %c2_i32_114 = arith.constant 2 : i32
    %c0_i32_115 = arith.constant 0 : i32
    %c480_i32_116 = arith.constant 480 : i32
    %c0_i32_117 = arith.constant 0 : i32
    %111 = tpu.memref_slice %arg2[%c480_i32_116, %c0_i32_117] : memref<1840x128xf32, #tpu.memory_space<any>> -> memref<80x128xf32, #tpu.memory_space<any>>
    %c480_i32_118 = arith.constant 480 : i32
    %c0_i32_119 = arith.constant 0 : i32
    %112 = tpu.memref_slice %arg7[%c480_i32_118, %c0_i32_119] : memref<1840x128xf32, #tpu.memory_space<vmem>> -> memref<80x128xf32, #tpu.memory_space<vmem>>
    %113 = tpu.memref_slice %arg11[%c2_i32_114, %c0_i32_115] : memref<8x2x!tpu.dma_semaphore, #tpu.memory_space<semaphore_mem>> -> memref<1x1x!tpu.dma_semaphore, #tpu.memory_space<semaphore_mem>>
    %114 = tpu.memref_squeeze %113 : memref<1x1x!tpu.dma_semaphore, #tpu.memory_space<semaphore_mem>> -> memref<!tpu.dma_semaphore, #tpu.memory_space<semaphore_mem>>
    tpu.wait_dma2 semaphore(%114 : memref<!tpu.dma_semaphore, #tpu.memory_space<semaphore_mem>>) src(%111 : memref<80x128xf32, #tpu.memory_space<any>>) dst(%112 : memref<80x128xf32, #tpu.memory_space<vmem>>)
    %c2_i32_120 = arith.constant 2 : i32
    %c1_i32_121 = arith.constant 1 : i32
    %c1920_i32_122 = arith.constant 1920 : i32
    %c0_i32_123 = arith.constant 0 : i32
    %115 = tpu.memref_slice %arg3[%c1920_i32_122, %c0_i32_123] : memref<5120x128xf32, #tpu.memory_space<any>> -> memref<640x128xf32, #tpu.memory_space<any>>
    %c1920_i32_124 = arith.constant 1920 : i32
    %c0_i32_125 = arith.constant 0 : i32
    %116 = tpu.memref_slice %arg8[%c1920_i32_124, %c0_i32_125] : memref<5120x128xf32, #tpu.memory_space<vmem>> -> memref<640x128xf32, #tpu.memory_space<vmem>>
    %117 = tpu.memref_slice %arg11[%c2_i32_120, %c1_i32_121] : memref<8x2x!tpu.dma_semaphore, #tpu.memory_space<semaphore_mem>> -> memref<1x1x!tpu.dma_semaphore, #tpu.memory_space<semaphore_mem>>
    %118 = tpu.memref_squeeze %117 : memref<1x1x!tpu.dma_semaphore, #tpu.memory_space<semaphore_mem>> -> memref<!tpu.dma_semaphore, #tpu.memory_space<semaphore_mem>>
    tpu.wait_dma2 semaphore(%118 : memref<!tpu.dma_semaphore, #tpu.memory_space<semaphore_mem>>) src(%115 : memref<640x128xf32, #tpu.memory_space<any>>) dst(%116 : memref<640x128xf32, #tpu.memory_space<vmem>>)
    %c480 = arith.constant 480 : index
    %c0_126 = arith.constant 0 : index
    %119 = vector.load %arg7[%c480, %c0_126] : memref<1840x128xf32, #tpu.memory_space<vmem>>, vector<80x32xf32>
    %cst_127 = arith.constant dense<0.000000e+00> : vector<80x128xf32>
    %120 = tpu.matmul %119, %110, %cst_127 {dimension_numbers = #tpu.dot_dimension_numbers<[1], [0], [0], [1], [0, 0, 1, 1], [], []>} : vector<80x32xf32>, vector<32x128xf32>, vector<80x128xf32> -> vector<80x128xf32>
    %121 = vector.extract_strided_slice %120 {offsets = [0, 0], sizes = [16, 128], strides = [1, 1]} : vector<80x128xf32> to vector<16x128xf32>
    %122 = vector.extract_strided_slice %120 {offsets = [16, 0], sizes = [16, 128], strides = [1, 1]} : vector<80x128xf32> to vector<16x128xf32>
    %123 = vector.extract_strided_slice %120 {offsets = [32, 0], sizes = [16, 128], strides = [1, 1]} : vector<80x128xf32> to vector<16x128xf32>
    %124 = vector.extract_strided_slice %120 {offsets = [48, 0], sizes = [16, 128], strides = [1, 1]} : vector<80x128xf32> to vector<16x128xf32>
    %125 = vector.extract_strided_slice %120 {offsets = [64, 0], sizes = [16, 128], strides = [1, 1]} : vector<80x128xf32> to vector<16x128xf32>
    %126 = tpu.concatenate %121, %122, %123, %124, %125 in 1 : vector<16x128xf32>, vector<16x128xf32>, vector<16x128xf32>, vector<16x128xf32>, vector<16x128xf32> -> vector<16x640xf32>
    %c1920 = arith.constant 1920 : index
    %c0_128 = arith.constant 0 : index
    %127 = vector.load %arg8[%c1920, %c0_128] : memref<5120x128xf32, #tpu.memory_space<vmem>>, vector<640x128xf32>
    %cst_129 = arith.constant dense<0.000000e+00> : vector<16x128xf32>
    %128 = tpu.matmul %126, %127, %cst_129 {dimension_numbers = #tpu.dot_dimension_numbers<[1], [0], [0], [1], [0, 0, 1, 1], [], []>} : vector<16x640xf32>, vector<640x128xf32>, vector<16x128xf32> -> vector<16x128xf32>
    %c2 = arith.constant 2 : index
    %c0_130 = arith.constant 0 : index
    %129 = vector.load %arg10[%c2, %c0_130] : memref<8x256xf32, #tpu.memory_space<vmem>>, vector<1x128xf32>
    %130 = vector.broadcast %129 : vector<1x128xf32> to vector<16x128xf32>
    %131 = arith.addf %128, %130 : vector<16x128xf32>
    %c3_i32_131 = arith.constant 3 : i32
    %c0_i32_132 = arith.constant 0 : i32
    %c560_i32_133 = arith.constant 560 : i32
    %c0_i32_134 = arith.constant 0 : i32
    %132 = tpu.memref_slice %arg2[%c560_i32_133, %c0_i32_134] : memref<1840x128xf32, #tpu.memory_space<any>> -> memref<80x128xf32, #tpu.memory_space<any>>
    %c560_i32_135 = arith.constant 560 : i32
    %c0_i32_136 = arith.constant 0 : i32
    %133 = tpu.memref_slice %arg7[%c560_i32_135, %c0_i32_136] : memref<1840x128xf32, #tpu.memory_space<vmem>> -> memref<80x128xf32, #tpu.memory_space<vmem>>
    %134 = tpu.memref_slice %arg11[%c3_i32_131, %c0_i32_132] : memref<8x2x!tpu.dma_semaphore, #tpu.memory_space<semaphore_mem>> -> memref<1x1x!tpu.dma_semaphore, #tpu.memory_space<semaphore_mem>>
    %135 = tpu.memref_squeeze %134 : memref<1x1x!tpu.dma_semaphore, #tpu.memory_space<semaphore_mem>> -> memref<!tpu.dma_semaphore, #tpu.memory_space<semaphore_mem>>
    tpu.wait_dma2 semaphore(%135 : memref<!tpu.dma_semaphore, #tpu.memory_space<semaphore_mem>>) src(%132 : memref<80x128xf32, #tpu.memory_space<any>>) dst(%133 : memref<80x128xf32, #tpu.memory_space<vmem>>)
    %c3_i32_137 = arith.constant 3 : i32
    %c1_i32_138 = arith.constant 1 : i32
    %c2560_i32_139 = arith.constant 2560 : i32
    %c0_i32_140 = arith.constant 0 : i32
    %136 = tpu.memref_slice %arg3[%c2560_i32_139, %c0_i32_140] : memref<5120x128xf32, #tpu.memory_space<any>> -> memref<640x128xf32, #tpu.memory_space<any>>
    %c2560_i32_141 = arith.constant 2560 : i32
    %c0_i32_142 = arith.constant 0 : i32
    %137 = tpu.memref_slice %arg8[%c2560_i32_141, %c0_i32_142] : memref<5120x128xf32, #tpu.memory_space<vmem>> -> memref<640x128xf32, #tpu.memory_space<vmem>>
    %138 = tpu.memref_slice %arg11[%c3_i32_137, %c1_i32_138] : memref<8x2x!tpu.dma_semaphore, #tpu.memory_space<semaphore_mem>> -> memref<1x1x!tpu.dma_semaphore, #tpu.memory_space<semaphore_mem>>
    %139 = tpu.memref_squeeze %138 : memref<1x1x!tpu.dma_semaphore, #tpu.memory_space<semaphore_mem>> -> memref<!tpu.dma_semaphore, #tpu.memory_space<semaphore_mem>>
    tpu.wait_dma2 semaphore(%139 : memref<!tpu.dma_semaphore, #tpu.memory_space<semaphore_mem>>) src(%136 : memref<640x128xf32, #tpu.memory_space<any>>) dst(%137 : memref<640x128xf32, #tpu.memory_space<vmem>>)
    %c560 = arith.constant 560 : index
    %c0_143 = arith.constant 0 : index
    %140 = vector.load %arg7[%c560, %c0_143] : memref<1840x128xf32, #tpu.memory_space<vmem>>, vector<80x16xf32>
    %cst_144 = arith.constant dense<0.000000e+00> : vector<80x128xf32>
    %141 = tpu.matmul %140, %131, %cst_144 {dimension_numbers = #tpu.dot_dimension_numbers<[1], [0], [0], [1], [0, 0, 1, 1], [], []>} : vector<80x16xf32>, vector<16x128xf32>, vector<80x128xf32> -> vector<80x128xf32>
    %142 = vector.extract_strided_slice %141 {offsets = [0, 0], sizes = [16, 128], strides = [1, 1]} : vector<80x128xf32> to vector<16x128xf32>
    %143 = vector.extract_strided_slice %141 {offsets = [16, 0], sizes = [16, 128], strides = [1, 1]} : vector<80x128xf32> to vector<16x128xf32>
    %144 = vector.extract_strided_slice %141 {offsets = [32, 0], sizes = [16, 128], strides = [1, 1]} : vector<80x128xf32> to vector<16x128xf32>
    %145 = vector.extract_strided_slice %141 {offsets = [48, 0], sizes = [16, 128], strides = [1, 1]} : vector<80x128xf32> to vector<16x128xf32>
    %146 = vector.extract_strided_slice %141 {offsets = [64, 0], sizes = [16, 128], strides = [1, 1]} : vector<80x128xf32> to vector<16x128xf32>
    %147 = tpu.concatenate %142, %143, %144, %145, %146 in 1 : vector<16x128xf32>, vector<16x128xf32>, vector<16x128xf32>, vector<16x128xf32>, vector<16x128xf32> -> vector<16x640xf32>
    %c2560 = arith.constant 2560 : index
    %c0_145 = arith.constant 0 : index
    %148 = vector.load %arg8[%c2560, %c0_145] : memref<5120x128xf32, #tpu.memory_space<vmem>>, vector<640x128xf32>
    %cst_146 = arith.constant dense<0.000000e+00> : vector<16x128xf32>
    %149 = tpu.matmul %147, %148, %cst_146 {dimension_numbers = #tpu.dot_dimension_numbers<[1], [0], [0], [1], [0, 0, 1, 1], [], []>} : vector<16x640xf32>, vector<640x128xf32>, vector<16x128xf32> -> vector<16x128xf32>
    %c3 = arith.constant 3 : index
    %c0_147 = arith.constant 0 : index
    %150 = vector.load %arg10[%c3, %c0_147] : memref<8x256xf32, #tpu.memory_space<vmem>>, vector<1x128xf32>
    %151 = vector.broadcast %150 : vector<1x128xf32> to vector<16x128xf32>
    %152 = arith.addf %149, %151 : vector<16x128xf32>
    %c4_i32_148 = arith.constant 4 : i32
    %c0_i32_149 = arith.constant 0 : i32
    %c640_i32_150 = arith.constant 640 : i32
    %c0_i32_151 = arith.constant 0 : i32
    %153 = tpu.memref_slice %arg2[%c640_i32_150, %c0_i32_151] : memref<1840x128xf32, #tpu.memory_space<any>> -> memref<80x128xf32, #tpu.memory_space<any>>
    %c640_i32_152 = arith.constant 640 : i32
    %c0_i32_153 = arith.constant 0 : i32
    %154 = tpu.memref_slice %arg7[%c640_i32_152, %c0_i32_153] : memref<1840x128xf32, #tpu.memory_space<vmem>> -> memref<80x128xf32, #tpu.memory_space<vmem>>
    %155 = tpu.memref_slice %arg11[%c4_i32_148, %c0_i32_149] : memref<8x2x!tpu.dma_semaphore, #tpu.memory_space<semaphore_mem>> -> memref<1x1x!tpu.dma_semaphore, #tpu.memory_space<semaphore_mem>>
    %156 = tpu.memref_squeeze %155 : memref<1x1x!tpu.dma_semaphore, #tpu.memory_space<semaphore_mem>> -> memref<!tpu.dma_semaphore, #tpu.memory_space<semaphore_mem>>
    tpu.wait_dma2 semaphore(%156 : memref<!tpu.dma_semaphore, #tpu.memory_space<semaphore_mem>>) src(%153 : memref<80x128xf32, #tpu.memory_space<any>>) dst(%154 : memref<80x128xf32, #tpu.memory_space<vmem>>)
    %c4_i32_154 = arith.constant 4 : i32
    %c1_i32_155 = arith.constant 1 : i32
    %c3200_i32_156 = arith.constant 3200 : i32
    %c0_i32_157 = arith.constant 0 : i32
    %157 = tpu.memref_slice %arg3[%c3200_i32_156, %c0_i32_157] : memref<5120x128xf32, #tpu.memory_space<any>> -> memref<640x128xf32, #tpu.memory_space<any>>
    %c3200_i32_158 = arith.constant 3200 : i32
    %c0_i32_159 = arith.constant 0 : i32
    %158 = tpu.memref_slice %arg8[%c3200_i32_158, %c0_i32_159] : memref<5120x128xf32, #tpu.memory_space<vmem>> -> memref<640x128xf32, #tpu.memory_space<vmem>>
    %159 = tpu.memref_slice %arg11[%c4_i32_154, %c1_i32_155] : memref<8x2x!tpu.dma_semaphore, #tpu.memory_space<semaphore_mem>> -> memref<1x1x!tpu.dma_semaphore, #tpu.memory_space<semaphore_mem>>
    %160 = tpu.memref_squeeze %159 : memref<1x1x!tpu.dma_semaphore, #tpu.memory_space<semaphore_mem>> -> memref<!tpu.dma_semaphore, #tpu.memory_space<semaphore_mem>>
    tpu.wait_dma2 semaphore(%160 : memref<!tpu.dma_semaphore, #tpu.memory_space<semaphore_mem>>) src(%157 : memref<640x128xf32, #tpu.memory_space<any>>) dst(%158 : memref<640x128xf32, #tpu.memory_space<vmem>>)
    %c640 = arith.constant 640 : index
    %c0_160 = arith.constant 0 : index
    %161 = vector.load %arg7[%c640, %c0_160] : memref<1840x128xf32, #tpu.memory_space<vmem>>, vector<80x16xf32>
    %cst_161 = arith.constant dense<0.000000e+00> : vector<80x128xf32>
    %162 = tpu.matmul %161, %152, %cst_161 {dimension_numbers = #tpu.dot_dimension_numbers<[1], [0], [0], [1], [0, 0, 1, 1], [], []>} : vector<80x16xf32>, vector<16x128xf32>, vector<80x128xf32> -> vector<80x128xf32>
    %163 = vector.extract_strided_slice %162 {offsets = [0, 0], sizes = [16, 128], strides = [1, 1]} : vector<80x128xf32> to vector<16x128xf32>
    %164 = vector.extract_strided_slice %162 {offsets = [16, 0], sizes = [16, 128], strides = [1, 1]} : vector<80x128xf32> to vector<16x128xf32>
    %165 = vector.extract_strided_slice %162 {offsets = [32, 0], sizes = [16, 128], strides = [1, 1]} : vector<80x128xf32> to vector<16x128xf32>
    %166 = vector.extract_strided_slice %162 {offsets = [48, 0], sizes = [16, 128], strides = [1, 1]} : vector<80x128xf32> to vector<16x128xf32>
    %167 = vector.extract_strided_slice %162 {offsets = [64, 0], sizes = [16, 128], strides = [1, 1]} : vector<80x128xf32> to vector<16x128xf32>
    %168 = tpu.concatenate %163, %164, %165, %166, %167 in 1 : vector<16x128xf32>, vector<16x128xf32>, vector<16x128xf32>, vector<16x128xf32>, vector<16x128xf32> -> vector<16x640xf32>
    %c3200 = arith.constant 3200 : index
    %c0_162 = arith.constant 0 : index
    %169 = vector.load %arg8[%c3200, %c0_162] : memref<5120x128xf32, #tpu.memory_space<vmem>>, vector<640x128xf32>
    %cst_163 = arith.constant dense<0.000000e+00> : vector<16x128xf32>
    %170 = tpu.matmul %168, %169, %cst_163 {dimension_numbers = #tpu.dot_dimension_numbers<[1], [0], [0], [1], [0, 0, 1, 1], [], []>} : vector<16x640xf32>, vector<640x128xf32>, vector<16x128xf32> -> vector<16x128xf32>
    %c4 = arith.constant 4 : index
    %c0_164 = arith.constant 0 : index
    %171 = vector.load %arg10[%c4, %c0_164] : memref<8x256xf32, #tpu.memory_space<vmem>>, vector<1x128xf32>
    %172 = vector.broadcast %171 : vector<1x128xf32> to vector<16x128xf32>
    %173 = arith.addf %170, %172 : vector<16x128xf32>
    %c5_i32_165 = arith.constant 5 : i32
    %c0_i32_166 = arith.constant 0 : i32
    %c720_i32_167 = arith.constant 720 : i32
    %c0_i32_168 = arith.constant 0 : i32
    %174 = tpu.memref_slice %arg2[%c720_i32_167, %c0_i32_168] : memref<1840x128xf32, #tpu.memory_space<any>> -> memref<160x128xf32, #tpu.memory_space<any>>
    %c720_i32_169 = arith.constant 720 : i32
    %c0_i32_170 = arith.constant 0 : i32
    %175 = tpu.memref_slice %arg7[%c720_i32_169, %c0_i32_170] : memref<1840x128xf32, #tpu.memory_space<vmem>> -> memref<160x128xf32, #tpu.memory_space<vmem>>
    %176 = tpu.memref_slice %arg11[%c5_i32_165, %c0_i32_166] : memref<8x2x!tpu.dma_semaphore, #tpu.memory_space<semaphore_mem>> -> memref<1x1x!tpu.dma_semaphore, #tpu.memory_space<semaphore_mem>>
    %177 = tpu.memref_squeeze %176 : memref<1x1x!tpu.dma_semaphore, #tpu.memory_space<semaphore_mem>> -> memref<!tpu.dma_semaphore, #tpu.memory_space<semaphore_mem>>
    tpu.wait_dma2 semaphore(%177 : memref<!tpu.dma_semaphore, #tpu.memory_space<semaphore_mem>>) src(%174 : memref<160x128xf32, #tpu.memory_space<any>>) dst(%175 : memref<160x128xf32, #tpu.memory_space<vmem>>)
    %c5_i32_171 = arith.constant 5 : i32
    %c1_i32_172 = arith.constant 1 : i32
    %c3840_i32_173 = arith.constant 3840 : i32
    %c0_i32_174 = arith.constant 0 : i32
    %178 = tpu.memref_slice %arg3[%c3840_i32_173, %c0_i32_174] : memref<5120x128xf32, #tpu.memory_space<any>> -> memref<640x128xf32, #tpu.memory_space<any>>
    %c3840_i32_175 = arith.constant 3840 : i32
    %c0_i32_176 = arith.constant 0 : i32
    %179 = tpu.memref_slice %arg8[%c3840_i32_175, %c0_i32_176] : memref<5120x128xf32, #tpu.memory_space<vmem>> -> memref<640x128xf32, #tpu.memory_space<vmem>>
    %180 = tpu.memref_slice %arg11[%c5_i32_171, %c1_i32_172] : memref<8x2x!tpu.dma_semaphore, #tpu.memory_space<semaphore_mem>> -> memref<1x1x!tpu.dma_semaphore, #tpu.memory_space<semaphore_mem>>
    %181 = tpu.memref_squeeze %180 : memref<1x1x!tpu.dma_semaphore, #tpu.memory_space<semaphore_mem>> -> memref<!tpu.dma_semaphore, #tpu.memory_space<semaphore_mem>>
    tpu.wait_dma2 semaphore(%181 : memref<!tpu.dma_semaphore, #tpu.memory_space<semaphore_mem>>) src(%178 : memref<640x128xf32, #tpu.memory_space<any>>) dst(%179 : memref<640x128xf32, #tpu.memory_space<vmem>>)
    %c720 = arith.constant 720 : index
    %c0_177 = arith.constant 0 : index
    %182 = vector.load %arg7[%c720, %c0_177] : memref<1840x128xf32, #tpu.memory_space<vmem>>, vector<160x16xf32>
    %cst_178 = arith.constant dense<0.000000e+00> : vector<160x128xf32>
    %183 = tpu.matmul %182, %173, %cst_178 {dimension_numbers = #tpu.dot_dimension_numbers<[1], [0], [0], [1], [0, 0, 1, 1], [], []>} : vector<160x16xf32>, vector<16x128xf32>, vector<160x128xf32> -> vector<160x128xf32>
    %184 = vector.extract_strided_slice %183 {offsets = [0, 0], sizes = [32, 128], strides = [1, 1]} : vector<160x128xf32> to vector<32x128xf32>
    %185 = vector.extract_strided_slice %183 {offsets = [32, 0], sizes = [32, 128], strides = [1, 1]} : vector<160x128xf32> to vector<32x128xf32>
    %186 = vector.extract_strided_slice %183 {offsets = [64, 0], sizes = [32, 128], strides = [1, 1]} : vector<160x128xf32> to vector<32x128xf32>
    %187 = vector.extract_strided_slice %183 {offsets = [96, 0], sizes = [32, 128], strides = [1, 1]} : vector<160x128xf32> to vector<32x128xf32>
    %188 = vector.extract_strided_slice %183 {offsets = [128, 0], sizes = [32, 128], strides = [1, 1]} : vector<160x128xf32> to vector<32x128xf32>
    %189 = tpu.concatenate %184, %185, %186, %187, %188 in 1 : vector<32x128xf32>, vector<32x128xf32>, vector<32x128xf32>, vector<32x128xf32>, vector<32x128xf32> -> vector<32x640xf32>
    %c3840 = arith.constant 3840 : index
    %c0_179 = arith.constant 0 : index
    %190 = vector.load %arg8[%c3840, %c0_179] : memref<5120x128xf32, #tpu.memory_space<vmem>>, vector<640x128xf32>
    %cst_180 = arith.constant dense<0.000000e+00> : vector<32x128xf32>
    %191 = tpu.matmul %189, %190, %cst_180 {dimension_numbers = #tpu.dot_dimension_numbers<[1], [0], [0], [1], [0, 0, 1, 1], [], []>} : vector<32x640xf32>, vector<640x128xf32>, vector<32x128xf32> -> vector<32x128xf32>
    %c5 = arith.constant 5 : index
    %c0_181 = arith.constant 0 : index
    %192 = vector.load %arg10[%c5, %c0_181] : memref<8x256xf32, #tpu.memory_space<vmem>>, vector<1x128xf32>
    %193 = vector.broadcast %192 : vector<1x128xf32> to vector<32x128xf32>
    %194 = arith.addf %191, %193 : vector<32x128xf32>
    %c6_i32_182 = arith.constant 6 : i32
    %c0_i32_183 = arith.constant 0 : i32
    %c880_i32_184 = arith.constant 880 : i32
    %c0_i32_185 = arith.constant 0 : i32
    %195 = tpu.memref_slice %arg2[%c880_i32_184, %c0_i32_185] : memref<1840x128xf32, #tpu.memory_space<any>> -> memref<320x128xf32, #tpu.memory_space<any>>
    %c880_i32_186 = arith.constant 880 : i32
    %c0_i32_187 = arith.constant 0 : i32
    %196 = tpu.memref_slice %arg7[%c880_i32_186, %c0_i32_187] : memref<1840x128xf32, #tpu.memory_space<vmem>> -> memref<320x128xf32, #tpu.memory_space<vmem>>
    %197 = tpu.memref_slice %arg11[%c6_i32_182, %c0_i32_183] : memref<8x2x!tpu.dma_semaphore, #tpu.memory_space<semaphore_mem>> -> memref<1x1x!tpu.dma_semaphore, #tpu.memory_space<semaphore_mem>>
    %198 = tpu.memref_squeeze %197 : memref<1x1x!tpu.dma_semaphore, #tpu.memory_space<semaphore_mem>> -> memref<!tpu.dma_semaphore, #tpu.memory_space<semaphore_mem>>
    tpu.wait_dma2 semaphore(%198 : memref<!tpu.dma_semaphore, #tpu.memory_space<semaphore_mem>>) src(%195 : memref<320x128xf32, #tpu.memory_space<any>>) dst(%196 : memref<320x128xf32, #tpu.memory_space<vmem>>)
    %c6_i32_188 = arith.constant 6 : i32
    %c1_i32_189 = arith.constant 1 : i32
    %c4480_i32_190 = arith.constant 4480 : i32
    %c0_i32_191 = arith.constant 0 : i32
    %199 = tpu.memref_slice %arg3[%c4480_i32_190, %c0_i32_191] : memref<5120x128xf32, #tpu.memory_space<any>> -> memref<640x128xf32, #tpu.memory_space<any>>
    %c4480_i32_192 = arith.constant 4480 : i32
    %c0_i32_193 = arith.constant 0 : i32
    %200 = tpu.memref_slice %arg8[%c4480_i32_192, %c0_i32_193] : memref<5120x128xf32, #tpu.memory_space<vmem>> -> memref<640x128xf32, #tpu.memory_space<vmem>>
    %201 = tpu.memref_slice %arg11[%c6_i32_188, %c1_i32_189] : memref<8x2x!tpu.dma_semaphore, #tpu.memory_space<semaphore_mem>> -> memref<1x1x!tpu.dma_semaphore, #tpu.memory_space<semaphore_mem>>
    %202 = tpu.memref_squeeze %201 : memref<1x1x!tpu.dma_semaphore, #tpu.memory_space<semaphore_mem>> -> memref<!tpu.dma_semaphore, #tpu.memory_space<semaphore_mem>>
    tpu.wait_dma2 semaphore(%202 : memref<!tpu.dma_semaphore, #tpu.memory_space<semaphore_mem>>) src(%199 : memref<640x128xf32, #tpu.memory_space<any>>) dst(%200 : memref<640x128xf32, #tpu.memory_space<vmem>>)
    %c880 = arith.constant 880 : index
    %c0_194 = arith.constant 0 : index
    %203 = vector.load %arg7[%c880, %c0_194] : memref<1840x128xf32, #tpu.memory_space<vmem>>, vector<320x32xf32>
    %cst_195 = arith.constant dense<0.000000e+00> : vector<320x128xf32>
    %204 = tpu.matmul %203, %194, %cst_195 {dimension_numbers = #tpu.dot_dimension_numbers<[1], [0], [0], [1], [0, 0, 1, 1], [], []>} : vector<320x32xf32>, vector<32x128xf32>, vector<320x128xf32> -> vector<320x128xf32>
    %205 = vector.extract_strided_slice %204 {offsets = [0, 0], sizes = [64, 128], strides = [1, 1]} : vector<320x128xf32> to vector<64x128xf32>
    %206 = vector.extract_strided_slice %204 {offsets = [64, 0], sizes = [64, 128], strides = [1, 1]} : vector<320x128xf32> to vector<64x128xf32>
    %207 = vector.extract_strided_slice %204 {offsets = [128, 0], sizes = [64, 128], strides = [1, 1]} : vector<320x128xf32> to vector<64x128xf32>
    %208 = vector.extract_strided_slice %204 {offsets = [192, 0], sizes = [64, 128], strides = [1, 1]} : vector<320x128xf32> to vector<64x128xf32>
    %209 = vector.extract_strided_slice %204 {offsets = [256, 0], sizes = [64, 128], strides = [1, 1]} : vector<320x128xf32> to vector<64x128xf32>
    %210 = tpu.concatenate %205, %206, %207, %208, %209 in 1 : vector<64x128xf32>, vector<64x128xf32>, vector<64x128xf32>, vector<64x128xf32>, vector<64x128xf32> -> vector<64x640xf32>
    %c4480 = arith.constant 4480 : index
    %c0_196 = arith.constant 0 : index
    %211 = vector.load %arg8[%c4480, %c0_196] : memref<5120x128xf32, #tpu.memory_space<vmem>>, vector<640x128xf32>
    %cst_197 = arith.constant dense<0.000000e+00> : vector<64x128xf32>
    %212 = tpu.matmul %210, %211, %cst_197 {dimension_numbers = #tpu.dot_dimension_numbers<[1], [0], [0], [1], [0, 0, 1, 1], [], []>} : vector<64x640xf32>, vector<640x128xf32>, vector<64x128xf32> -> vector<64x128xf32>
    %c6 = arith.constant 6 : index
    %c0_198 = arith.constant 0 : index
    %213 = vector.load %arg10[%c6, %c0_198] : memref<8x256xf32, #tpu.memory_space<vmem>>, vector<1x128xf32>
    %214 = vector.broadcast %213 : vector<1x128xf32> to vector<64x128xf32>
    %215 = arith.addf %212, %214 : vector<64x128xf32>
    %c7_i32_199 = arith.constant 7 : i32
    %c0_i32_200 = arith.constant 0 : i32
    %c1200_i32_201 = arith.constant 1200 : i32
    %c0_i32_202 = arith.constant 0 : i32
    %216 = tpu.memref_slice %arg2[%c1200_i32_201, %c0_i32_202] : memref<1840x128xf32, #tpu.memory_space<any>> -> memref<640x128xf32, #tpu.memory_space<any>>
    %c1200_i32_203 = arith.constant 1200 : i32
    %c0_i32_204 = arith.constant 0 : i32
    %217 = tpu.memref_slice %arg7[%c1200_i32_203, %c0_i32_204] : memref<1840x128xf32, #tpu.memory_space<vmem>> -> memref<640x128xf32, #tpu.memory_space<vmem>>
    %218 = tpu.memref_slice %arg11[%c7_i32_199, %c0_i32_200] : memref<8x2x!tpu.dma_semaphore, #tpu.memory_space<semaphore_mem>> -> memref<1x1x!tpu.dma_semaphore, #tpu.memory_space<semaphore_mem>>
    %219 = tpu.memref_squeeze %218 : memref<1x1x!tpu.dma_semaphore, #tpu.memory_space<semaphore_mem>> -> memref<!tpu.dma_semaphore, #tpu.memory_space<semaphore_mem>>
    tpu.wait_dma2 semaphore(%219 : memref<!tpu.dma_semaphore, #tpu.memory_space<semaphore_mem>>) src(%216 : memref<640x128xf32, #tpu.memory_space<any>>) dst(%217 : memref<640x128xf32, #tpu.memory_space<vmem>>)
    %c7_i32_205 = arith.constant 7 : i32
    %c1_i32_206 = arith.constant 1 : i32
    %c0_i32_207 = arith.constant 0 : i32
    %c0_i32_208 = arith.constant 0 : i32
    %220 = tpu.memref_slice %arg4[%c0_i32_207, %c0_i32_208] : memref<640x256xf32, #tpu.memory_space<any>> -> memref<640x256xf32, #tpu.memory_space<any>>
    %c0_i32_209 = arith.constant 0 : i32
    %c0_i32_210 = arith.constant 0 : i32
    %221 = tpu.memref_slice %arg9[%c0_i32_209, %c0_i32_210] : memref<640x256xf32, #tpu.memory_space<vmem>> -> memref<640x256xf32, #tpu.memory_space<vmem>>
    %222 = tpu.memref_slice %arg11[%c7_i32_205, %c1_i32_206] : memref<8x2x!tpu.dma_semaphore, #tpu.memory_space<semaphore_mem>> -> memref<1x1x!tpu.dma_semaphore, #tpu.memory_space<semaphore_mem>>
    %223 = tpu.memref_squeeze %222 : memref<1x1x!tpu.dma_semaphore, #tpu.memory_space<semaphore_mem>> -> memref<!tpu.dma_semaphore, #tpu.memory_space<semaphore_mem>>
    tpu.wait_dma2 semaphore(%223 : memref<!tpu.dma_semaphore, #tpu.memory_space<semaphore_mem>>) src(%220 : memref<640x256xf32, #tpu.memory_space<any>>) dst(%221 : memref<640x256xf32, #tpu.memory_space<vmem>>)
    %c1200 = arith.constant 1200 : index
    %c0_211 = arith.constant 0 : index
    %224 = vector.load %arg7[%c1200, %c0_211] : memref<1840x128xf32, #tpu.memory_space<vmem>>, vector<640x64xf32>
    %cst_212 = arith.constant dense<0.000000e+00> : vector<640x128xf32>
    %225 = tpu.matmul %224, %215, %cst_212 {dimension_numbers = #tpu.dot_dimension_numbers<[1], [0], [0], [1], [0, 0, 1, 1], [], []>} : vector<640x64xf32>, vector<64x128xf32>, vector<640x128xf32> -> vector<640x128xf32>
    %226 = vector.extract_strided_slice %225 {offsets = [0, 0], sizes = [128, 128], strides = [1, 1]} : vector<640x128xf32> to vector<128x128xf32>
    %227 = vector.extract_strided_slice %225 {offsets = [128, 0], sizes = [128, 128], strides = [1, 1]} : vector<640x128xf32> to vector<128x128xf32>
    %228 = vector.extract_strided_slice %225 {offsets = [256, 0], sizes = [128, 128], strides = [1, 1]} : vector<640x128xf32> to vector<128x128xf32>
    %229 = vector.extract_strided_slice %225 {offsets = [384, 0], sizes = [128, 128], strides = [1, 1]} : vector<640x128xf32> to vector<128x128xf32>
    %230 = vector.extract_strided_slice %225 {offsets = [512, 0], sizes = [128, 128], strides = [1, 1]} : vector<640x128xf32> to vector<128x128xf32>
    %231 = tpu.concatenate %226, %227, %228, %229, %230 in 1 : vector<128x128xf32>, vector<128x128xf32>, vector<128x128xf32>, vector<128x128xf32>, vector<128x128xf32> -> vector<128x640xf32>
    %c0_213 = arith.constant 0 : index
    %c0_214 = arith.constant 0 : index
    %232 = vector.load %arg9[%c0_213, %c0_214] : memref<640x256xf32, #tpu.memory_space<vmem>>, vector<640x256xf32>
    %cst_215 = arith.constant dense<0.000000e+00> : vector<128x256xf32>
    %233 = tpu.matmul %231, %232, %cst_215 {dimension_numbers = #tpu.dot_dimension_numbers<[1], [0], [0], [1], [0, 0, 1, 1], [], []>} : vector<128x640xf32>, vector<640x256xf32>, vector<128x256xf32> -> vector<128x256xf32>
    %c7 = arith.constant 7 : index
    %c0_216 = arith.constant 0 : index
    %234 = vector.load %arg10[%c7, %c0_216] : memref<8x256xf32, #tpu.memory_space<vmem>>, vector<1x256xf32>
    %235 = vector.broadcast %234 : vector<1x256xf32> to vector<128x256xf32>
    %236 = arith.addf %233, %235 : vector<128x256xf32>
    %c0_217 = arith.constant 0 : index
    %c0_218 = arith.constant 0 : index
    %237 = vector.load %arg6[%c0_217, %c0_218] : memref<128x256xf32, #tpu.memory_space<vmem>>, vector<128x256xf32>
    tpu.vector_store %arg6[%c0_217, %c0_218], %236 {strides = array<i32>} : memref<128x256xf32, #tpu.memory_space<vmem>>, vector<128x256xf32>,
    return
  }
  func.func @transform_0(%arg0: i32) -> (i32, i32) {
    %c0_i32 = arith.constant 0 : i32
    %c0_i32_0 = arith.constant 0 : i32
    %c0_i32_1 = arith.constant 0 : i32
    return %c0_i32, %c0_i32_0 : i32, i32
  }
  func.func @transform_5(%arg0: i32) -> (i32, i32) {
    %c0_i32 = arith.constant 0 : i32
    %c0_i32_0 = arith.constant 0 : i32
    %c0_i32_1 = arith.constant 0 : i32
    return %c0_i32, %c0_i32_0 : i32, i32
  }
}

</mosaic_0001>

<llo_original>
// kernel: _lambda_.1
$region0: #{_lambda_.1}
  #allocation0 [shape = 'u32[]', space=smem, size = 0x4, offset = 0x4, fixed_abs, tag = 'smem constant byte address 0x4 - core index']
  #allocation1 [shape = 'u32[144,128]{1,0:T(1,128)}', space=vmem, size = 0x12000, scoped, tag = 'internal scratch']
  #allocation2 [shape = 'f32[1840,128]{1,0:T(8,128)}', space=vmem, size = 0xe6000, scoped, tag = 'scratch operand']
  #allocation3 [shape = 'f32[5120,128]{1,0:T(8,128)}', space=vmem, size = 0x280000, scoped, tag = 'scratch operand']
  #allocation4 [shape = 'f32[640,256]{1,0:T(8,128)}', space=vmem, size = 0xa0000, scoped, tag = 'scratch operand']
  #allocation5 [shape = 'f32[8,256]{1,0:T(8,128)}', space=vmem, size = 0x2000, scoped, tag = 'scratch operand']
  #allocation6 [shape = 's32[16]{0}', space=sflag, size = 0x40, scoped, tag = 'scratch operand']
  #allocation7 [shape = 's32[1]{0}', space=sflag, size = 0x4, scoped, tag = 'scratch operand']
  #allocation8 [shape = 's32[]', space=sflag, size = 0x4, offset = 0, fixed_abs, tag = 'sflag constant byte address 0x0 - dummy sync flag']
  #allocation9 [shape = 's32[]', space=sflag, size = 0x4, offset = 0, fixed_abs, tag = 'sflag constant byte address 0x0 - dummy sync flag']
  #allocation10 [shape = 'u32[]', space=smem, size = 0x4, offset = 0x44, fixed_abs, tag = 'smem constant byte address 0x44 - assertion arg 0']
  #allocation11 [shape = 'u32[]', space=smem, size = 0x4, offset = 0x48, fixed_abs, tag = 'smem constant byte address 0x48 - assertion arg 1']
  #allocation12 [shape = 's32[]', space=sflag, size = 0x4, offset = 0, fixed_abs, tag = 'sflag constant byte address 0x0 - dummy sync flag']
  #allocation13 [shape = 's32[]', space=sflag, size = 0x4, offset = 0, fixed_abs, tag = 'sflag constant byte address 0x0 - dummy sync flag']
  #allocation14 [shape = 's32[]', space=sflag, size = 0x4, offset = 0, fixed_abs, tag = 'sflag constant byte address 0x0 - dummy sync flag']
  #allocation15 [shape = 's32[]', space=sflag, size = 0x4, offset = 0, fixed_abs, tag = 'sflag constant byte address 0x0 - dummy sync flag']
  #allocation16 [shape = 's32[]', space=sflag, size = 0x4, offset = 0, fixed_abs, tag = 'sflag constant byte address 0x0 - dummy sync flag']
  #allocation17 [shape = 's32[]', space=sflag, size = 0x4, offset = 0, fixed_abs, tag = 'sflag constant byte address 0x0 - dummy sync flag']
  #allocation18 [shape = 's32[]', space=sflag, size = 0x4, offset = 0, fixed_abs, tag = 'sflag constant byte address 0x0 - dummy sync flag']
  #allocation19 [shape = 's32[]', space=sflag, size = 0x4, offset = 0, fixed_abs, tag = 'sflag constant byte address 0x0 - dummy sync flag']
  #allocation20 [shape = 's32[]', space=sflag, size = 0x4, offset = 0, fixed_abs, tag = 'sflag constant byte address 0x0 - dummy sync flag']
  #allocation21 [shape = 's32[]', space=sflag, size = 0x4, offset = 0, fixed_abs, tag = 'sflag constant byte address 0x0 - dummy sync flag']
  #allocation22 [shape = 's32[]', space=sflag, size = 0x4, offset = 0, fixed_abs, tag = 'sflag constant byte address 0x0 - dummy sync flag']
  #allocation23 [shape = 's32[]', space=sflag, size = 0x4, offset = 0, fixed_abs, tag = 'sflag constant byte address 0x0 - dummy sync flag']
  #allocation24 [shape = 's32[]', space=sflag, size = 0x4, offset = 0, fixed_abs, tag = 'sflag constant byte address 0x0 - dummy sync flag']
  #allocation25 [shape = 's32[]', space=sflag, size = 0x4, offset = 0, fixed_abs, tag = 'sflag constant byte address 0x0 - dummy sync flag']
  #allocation26 [shape = 's32[]', space=sflag, size = 0x4, offset = 0, fixed_abs, tag = 'sflag constant byte address 0x0 - dummy sync flag']
  #allocation27 [shape = 's32[]', space=sflag, size = 0x4, offset = 0, fixed_abs, tag = 'sflag constant byte address 0x0 - dummy sync flag']
  #allocation28 [shape = 's32[]', space=sflag, size = 0x4, offset = 0, fixed_abs, tag = 'sflag constant byte address 0x0 - dummy sync flag']
  #allocation29 [shape = 's32[]', space=sflag, size = 0x4, offset = 0, fixed_abs, tag = 'sflag constant byte address 0x0 - dummy sync flag']
  #allocation30 [shape = 's32[]', space=sflag, size = 0x4, offset = 0, fixed_abs, tag = 'sflag constant byte address 0x0 - dummy sync flag']
  #allocation31 [shape = 's32[]', space=sflag, size = 0x4, offset = 0, fixed_abs, tag = 'sflag constant byte address 0x0 - dummy sync flag']
  #allocation32 [shape = 's32[]', space=sflag, size = 0x4, offset = 0, fixed_abs, tag = 'sflag constant byte address 0x0 - dummy sync flag']
  #allocation33 [shape = 's32[]', space=sflag, size = 0x4, offset = 0, fixed_abs, tag = 'sflag constant byte address 0x0 - dummy sync flag']
  #allocation34 [shape = 's32[]', space=sflag, size = 0x4, offset = 0, fixed_abs, tag = 'sflag constant byte address 0x0 - dummy sync flag']
  #allocation35 [shape = 's32[]', space=sflag, size = 0x4, offset = 0, fixed_abs, tag = 'sflag constant byte address 0x0 - dummy sync flag']
  #allocation36 [shape = 's32[]', space=sflag, size = 0x4, offset = 0, fixed_abs, tag = 'sflag constant byte address 0x0 - dummy sync flag']
  #allocation37 [shape = 's32[]', space=sflag, size = 0x4, offset = 0, fixed_abs, tag = 'sflag constant byte address 0x0 - dummy sync flag']
  #allocation38 [shape = 's32[]', space=sflag, size = 0x4, offset = 0, fixed_abs, tag = 'sflag constant byte address 0x0 - dummy sync flag']
  #allocation39 [shape = 's32[]', space=sflag, size = 0x4, offset = 0, fixed_abs, tag = 'sflag constant byte address 0x0 - dummy sync flag']
  #allocation40 [shape = 's32[]', space=sflag, size = 0x4, offset = 0, fixed_abs, tag = 'sflag constant byte address 0x0 - dummy sync flag']
  #allocation41 [shape = 's32[]', space=sflag, size = 0x4, offset = 0, fixed_abs, tag = 'sflag constant byte address 0x0 - dummy sync flag']
  #allocation42 [shape = 's32[]', space=sflag, size = 0x4, offset = 0, fixed_abs, tag = 'sflag constant byte address 0x0 - dummy sync flag']
  #allocation43 [shape = 's32[]', space=sflag, size = 0x4, offset = 0, fixed_abs, tag = 'sflag constant byte address 0x0 - dummy sync flag']
  %s0 = inlined_call_operand.vmem [shape: f32[128,256], index: 0, kind: input, shape index: {}]
  %s1 = inlined_call_operand.hbm [shape: f32[1840,128], index: 1, kind: input, shape index: {}]
  %s2 = inlined_call_operand.hbm [shape: f32[5120,128], index: 2, kind: input, shape index: {}]
  %s3 = inlined_call_operand.hbm [shape: f32[640,256], index: 3, kind: input, shape index: {}]
  %s4 = inlined_call_operand.hbm [shape: f32[8,256], index: 4, kind: input, shape index: {}]
  %s5 = inlined_call_operand.vmem [shape: f32[128,256], index: 5, kind: output, shape index: {}]
  %s6 = sld [smem:[#allocation0]]
  $region82: #{_lambda_.1} parent=0
    _
  %s8 = ssub.s32 1, %s6
  %s9 = scalar_select 0, %s8, %s6
  // Predicated region
  $region2: #{_lambda_.1} parent=0 // pred_check
    _
  $region3: #{_lambda_.1} parent=0 // pred_check_branch
    %11 = sbr.rel (0) target = $region5
  $region4: #{_lambda_.1} parent=0 // pred_region
    _
  $region5: #{_lambda_.1} parent=0 // pred_fallthru
    _
  // Predicated region
  $region6: #{_lambda_.1} parent=0 // pred_check
    _
  $region7: #{_lambda_.1} parent=0 // pred_check_branch
    %13 = sbr.rel target = $region9
  $region8: #{_lambda_.1} parent=0 // pred_region
    %14 = sst [smem:[#allocation10]] [#allocation9]
    %15 = sst [smem:[#allocation11]] [#allocation8]
  $region9: #{_lambda_.1} parent=0 // pred_fallthru
    _
  %17 = shalt.err (0)
  %s19 = sshll.u32 [#allocation2], 4
  %s20 = int_to_ptr.vmem [resolvable:$true] %s19
  %22 = dma.hbm_to_vmem [thread:$0]  %s1, 5120, %s20, [#allocation6]
  %s23 = scalar_lea.sflag [#allocation6], 1
  // Predicated region
  $region10: #{_lambda_.1} parent=0 // pred_check
    _
  $region11: #{_lambda_.1} parent=0 // pred_check_branch
    %25 = sbr.rel target = $region13
  $region12: #{_lambda_.1} parent=0 // pred_region
    %26 = sst [smem:[#allocation10]] [#allocation13]
    %27 = sst [smem:[#allocation11]] [#allocation12]
  $region13: #{_lambda_.1} parent=0 // pred_fallthru
    _
  %29 = shalt.err (0)
  %s31 = sshll.u32 [#allocation3], 4
  %s32 = int_to_ptr.vmem [resolvable:$true] %s31
  %34 = dma.hbm_to_vmem [thread:$0]  %s2, 20480, %s32, %s23
  %s35 = scalar_lea.hbm %s1, 5120
  %s36 = scalar_lea.vmem [#allocation2], 320
  %s37 = scalar_lea.sflag [#allocation6], 2
  // Predicated region
  $region14: #{_lambda_.1} parent=0 // pred_check
    _
  $region15: #{_lambda_.1} parent=0 // pred_check_branch
    %39 = sbr.rel target = $region17
  $region16: #{_lambda_.1} parent=0 // pred_region
    %40 = sst [smem:[#allocation10]] [#allocation15]
    %41 = sst [smem:[#allocation11]] [#allocation14]
  $region17: #{_lambda_.1} parent=0 // pred_fallthru
    _
  %43 = shalt.err (0)
  %s45 = sshll.u32 %s36, 4
  %s46 = int_to_ptr.vmem [resolvable:$true] %s45
  %48 = dma.hbm_to_vmem [thread:$0]  %s35, 2560, %s46, %s37
  %s49 = scalar_lea.hbm %s2, 20480
  %s50 = scalar_lea.vmem [#allocation3], 1280
  %s51 = scalar_lea.sflag [#allocation6], 3
  // Predicated region
  $region18: #{_lambda_.1} parent=0 // pred_check
    _
  $region19: #{_lambda_.1} parent=0 // pred_check_branch
    %53 = sbr.rel target = $region21
  $region20: #{_lambda_.1} parent=0 // pred_region
    %54 = sst [smem:[#allocation10]] [#allocation17]
    %55 = sst [smem:[#allocation11]] [#allocation16]
  $region21: #{_lambda_.1} parent=0 // pred_fallthru
    _
  %57 = shalt.err (0)
  %s59 = sshll.u32 %s50, 4
  %s60 = int_to_ptr.vmem [resolvable:$true] %s59
  %62 = dma.hbm_to_vmem [thread:$0]  %s49, 10240, %s60, %s51
  %s63 = scalar_lea.hbm %s1, 7680
  %s64 = scalar_lea.vmem [#allocation2], 480
  %s65 = scalar_lea.sflag [#allocation6], 4
  // Predicated region
  $region22: #{_lambda_.1} parent=0 // pred_check
    _
  $region23: #{_lambda_.1} parent=0 // pred_check_branch
    %67 = sbr.rel target = $region25
  $region24: #{_lambda_.1} parent=0 // pred_region
    %68 = sst [smem:[#allocation10]] [#allocation19]
    %69 = sst [smem:[#allocation11]] [#allocation18]
  $region25: #{_lambda_.1} parent=0 // pred_fallthru
    _
  %71 = shalt.err (0)
  %s73 = sshll.u32 %s64, 4
  %s74 = int_to_ptr.vmem [resolvable:$true] %s73
  %76 = dma.hbm_to_vmem [thread:$0]  %s63, 1280, %s74, %s65
  %s77 = scalar_lea.hbm %s2, 30720
  %s78 = scalar_lea.vmem [#allocation3], 1920
  %s79 = scalar_lea.sflag [#allocation6], 5
  // Predicated region
  $region26: #{_lambda_.1} parent=0 // pred_check
    _
  $region27: #{_lambda_.1} parent=0 // pred_check_branch
    %81 = sbr.rel target = $region29
  $region28: #{_lambda_.1} parent=0 // pred_region
    %82 = sst [smem:[#allocation10]] [#allocation21]
    %83 = sst [smem:[#allocation11]] [#allocation20]
  $region29: #{_lambda_.1} parent=0 // pred_fallthru
    _
  %85 = shalt.err (0)
  %s87 = sshll.u32 %s78, 4
  %s88 = int_to_ptr.vmem [resolvable:$true] %s87
  %90 = dma.hbm_to_vmem [thread:$0]  %s77, 10240, %s88, %s79
  %s91 = scalar_lea.hbm %s1, 8960
  %s92 = scalar_lea.vmem [#allocation2], 560
  %s93 = scalar_lea.sflag [#allocation6], 6
  // Predicated region
  $region30: #{_lambda_.1} parent=0 // pred_check
    _
  $region31: #{_lambda_.1} parent=0 // pred_check_branch
    %95 = sbr.rel target = $region33
  $region32: #{_lambda_.1} parent=0 // pred_region
    %96 = sst [smem:[#allocation10]] [#allocation23]
    %97 = sst [smem:[#allocation11]] [#allocation22]
  $region33: #{_lambda_.1} parent=0 // pred_fallthru
    _
  %99 = shalt.err (0)
  %s101 = sshll.u32 %s92, 4
  %s102 = int_to_ptr.vmem [resolvable:$true] %s101
  %104 = dma.hbm_to_vmem [thread:$0]  %s91, 1280, %s102, %s93
  %s105 = scalar_lea.hbm %s2, 40960
  %s106 = scalar_lea.vmem [#allocation3], 2560
  %s107 = scalar_lea.sflag [#allocation6], 7
  // Predicated region
  $region34: #{_lambda_.1} parent=0 // pred_check
    _
  $region35: #{_lambda_.1} parent=0 // pred_check_branch
    %109 = sbr.rel target = $region37
  $region36: #{_lambda_.1} parent=0 // pred_region
    %110 = sst [smem:[#allocation10]] [#allocation25]
    %111 = sst [smem:[#allocation11]] [#allocation24]
  $region37: #{_lambda_.1} parent=0 // pred_fallthru
    _
  %113 = shalt.err (0)
  %s115 = sshll.u32 %s106, 4
  %s116 = int_to_ptr.vmem [resolvable:$true] %s115
  %118 = dma.hbm_to_vmem [thread:$0]  %s105, 10240, %s116, %s107
  %s119 = scalar_lea.hbm %s1, 10240
  %s120 = scalar_lea.vmem [#allocation2], 640
  %s121 = scalar_lea.sflag [#allocation6], 8
  // Predicated region
  $region38: #{_lambda_.1} parent=0 // pred_check
    _
  $region39: #{_lambda_.1} parent=0 // pred_check_branch
    %123 = sbr.rel target = $region41
  $region40: #{_lambda_.1} parent=0 // pred_region
    %124 = sst [smem:[#allocation10]] [#allocation27]
    %125 = sst [smem:[#allocation11]] [#allocation26]
  $region41: #{_lambda_.1} parent=0 // pred_fallthru
    _
  %127 = shalt.err (0)
  %s129 = sshll.u32 %s120, 4
  %s130 = int_to_ptr.vmem [resolvable:$true] %s129
  %132 = dma.hbm_to_vmem [thread:$0]  %s119, 1280, %s130, %s121
  %s133 = scalar_lea.hbm %s2, 51200
  %s134 = scalar_lea.vmem [#allocation3], 3200
  %s135 = scalar_lea.sflag [#allocation6], 9
  // Predicated region
  $region42: #{_lambda_.1} parent=0 // pred_check
    _
  $region43: #{_lambda_.1} parent=0 // pred_check_branch
    %137 = sbr.rel target = $region45
  $region44: #{_lambda_.1} parent=0 // pred_region
    %138 = sst [smem:[#allocation10]] [#allocation29]
    %139 = sst [smem:[#allocation11]] [#allocation28]
  $region45: #{_lambda_.1} parent=0 // pred_fallthru
    _
  %141 = shalt.err (0)
  %s143 = sshll.u32 %s134, 4
  %s144 = int_to_ptr.vmem [resolvable:$true] %s143
  %146 = dma.hbm_to_vmem [thread:$0]  %s133, 10240, %s144, %s135
  %s147 = scalar_lea.hbm %s1, 11520
  %s148 = scalar_lea.vmem [#allocation2], 720
  %s149 = scalar_lea.sflag [#allocation6], 10
  // Predicated region
  $region46: #{_lambda_.1} parent=0 // pred_check
    _
  $region47: #{_lambda_.1} parent=0 // pred_check_branch
    %151 = sbr.rel target = $region49
  $region48: #{_lambda_.1} parent=0 // pred_region
    %152 = sst [smem:[#allocation10]] [#allocation31]
    %153 = sst [smem:[#allocation11]] [#allocation30]
  $region49: #{_lambda_.1} parent=0 // pred_fallthru
    _
  %155 = shalt.err (0)
  %s157 = sshll.u32 %s148, 4
  %s158 = int_to_ptr.vmem [resolvable:$true] %s157
  %160 = dma.hbm_to_vmem [thread:$0]  %s147, 2560, %s158, %s149
  %s161 = scalar_lea.hbm %s2, 61440
  %s162 = scalar_lea.vmem [#allocation3], 3840
  %s163 = scalar_lea.sflag [#allocation6], 11
  // Predicated region
  $region50: #{_lambda_.1} parent=0 // pred_check
    _
  $region51: #{_lambda_.1} parent=0 // pred_check_branch
    %165 = sbr.rel target = $region53
  $region52: #{_lambda_.1} parent=0 // pred_region
    %166 = sst [smem:[#allocation10]] [#allocation33]
    %167 = sst [smem:[#allocation11]] [#allocation32]
  $region53: #{_lambda_.1} parent=0 // pred_fallthru
    _
  %169 = shalt.err (0)
  %s171 = sshll.u32 %s162, 4
  %s172 = int_to_ptr.vmem [resolvable:$true] %s171
  %174 = dma.hbm_to_vmem [thread:$0]  %s161, 10240, %s172, %s163
  %s175 = scalar_lea.hbm %s1, 14080
  %s176 = scalar_lea.vmem [#allocation2], 880
  %s177 = scalar_lea.sflag [#allocation6], 12
  // Predicated region
  $region54: #{_lambda_.1} parent=0 // pred_check
    _
  $region55: #{_lambda_.1} parent=0 // pred_check_branch
    %179 = sbr.rel target = $region57
  $region56: #{_lambda_.1} parent=0 // pred_region
    %180 = sst [smem:[#allocation10]] [#allocation35]
    %181 = sst [smem:[#allocation11]] [#allocation34]
  $region57: #{_lambda_.1} parent=0 // pred_fallthru
    _
  %183 = shalt.err (0)
  %s185 = sshll.u32 %s176, 4
  %s186 = int_to_ptr.vmem [resolvable:$true] %s185
  %188 = dma.hbm_to_vmem [thread:$0]  %s175, 5120, %s186, %s177
  %s189 = scalar_lea.hbm %s2, 71680
  %s190 = scalar_lea.vmem [#allocation3], 4480
  %s191 = scalar_lea.sflag [#allocation6], 13
  // Predicated region
  $region58: #{_lambda_.1} parent=0 // pred_check
    _
  $region59: #{_lambda_.1} parent=0 // pred_check_branch
    %193 = sbr.rel target = $region61
  $region60: #{_lambda_.1} parent=0 // pred_region
    %194 = sst [smem:[#allocation10]] [#allocation37]
    %195 = sst [smem:[#allocation11]] [#allocation36]
  $region61: #{_lambda_.1} parent=0 // pred_fallthru
    _
  %197 = shalt.err (0)
  %s199 = sshll.u32 %s190, 4
  %s200 = int_to_ptr.vmem [resolvable:$true] %s199
  %202 = dma.hbm_to_vmem [thread:$0]  %s189, 10240, %s200, %s191
  %s203 = scalar_lea.hbm %s1, 19200
  %s204 = scalar_lea.vmem [#allocation2], 1200
  %s205 = scalar_lea.sflag [#allocation6], 14
  // Predicated region
  $region62: #{_lambda_.1} parent=0 // pred_check
    _
  $region63: #{_lambda_.1} parent=0 // pred_check_branch
    %207 = sbr.rel target = $region65
  $region64: #{_lambda_.1} parent=0 // pred_region
    %208 = sst [smem:[#allocation10]] [#allocation39]
    %209 = sst [smem:[#allocation11]] [#allocation38]
  $region65: #{_lambda_.1} parent=0 // pred_fallthru
    _
  %211 = shalt.err (0)
  %s213 = sshll.u32 %s204, 4
  %s214 = int_to_ptr.vmem [resolvable:$true] %s213
  %216 = dma.hbm_to_vmem [thread:$0]  %s203, 10240, %s214, %s205
  %s217 = scalar_lea.sflag [#allocation6], 15
  // Predicated region
  $region66: #{_lambda_.1} parent=0 // pred_check
    _
  $region67: #{_lambda_.1} parent=0 // pred_check_branch
    %219 = sbr.rel target = $region69
  $region68: #{_lambda_.1} parent=0 // pred_region
    %220 = sst [smem:[#allocation10]] [#allocation41]
    %221 = sst [smem:[#allocation11]] [#allocation40]
  $region69: #{_lambda_.1} parent=0 // pred_fallthru
    _
  %223 = shalt.err (0)
  %s225 = sshll.u32 [#allocation4], 4
  %s226 = int_to_ptr.vmem [resolvable:$true] %s225
  %228 = dma.hbm_to_vmem [thread:$0]  %s3, 20480, %s226, %s217
  // Predicated region
  $region70: #{_lambda_.1} parent=0 // pred_check
    _
  $region71: #{_lambda_.1} parent=0 // pred_check_branch
    %230 = sbr.rel target = $region73
  $region72: #{_lambda_.1} parent=0 // pred_region
    %231 = sst [smem:[#allocation10]] [#allocation43]
    %232 = sst [smem:[#allocation11]] [#allocation42]
  $region73: #{_lambda_.1} parent=0 // pred_fallthru
    _
  %234 = shalt.err (0)
  %s236 = sshll.u32 [#allocation5], 4
  %s237 = int_to_ptr.vmem [resolvable:$true] %s236
  %239 = dma.hbm_to_vmem [thread:$0]  %s4, 256, %s237, [#allocation7]
  %v240 = vld [vmem:[%s0] sm:$0xff]
  %v241 = vld [vmem:[%s0 + $0x8] sm:$0xff]
  %v242 = vld [vmem:[%s0 + $0x10] sm:$0xff]
  %v243 = vld [vmem:[%s0 + $0x18] sm:$0xff]
  %v244 = vld [vmem:[%s0 + $0x20] sm:$0xff]
  %v245 = vld [vmem:[%s0 + $0x28] sm:$0xff]
  %v246 = vld [vmem:[%s0 + $0x30] sm:$0xff]
  %v247 = vld [vmem:[%s0 + $0x38] sm:$0xff]
  %v248 = vld [vmem:[%s0 + $0x40] sm:$0xff]
  %v249 = vld [vmem:[%s0 + $0x48] sm:$0xff]
  %v250 = vld [vmem:[%s0 + $0x50] sm:$0xff]
  %v251 = vld [vmem:[%s0 + $0x58] sm:$0xff]
  %v252 = vld [vmem:[%s0 + $0x60] sm:$0xff]
  %v253 = vld [vmem:[%s0 + $0x68] sm:$0xff]
  %v254 = vld [vmem:[%s0 + $0x70] sm:$0xff]
  %v255 = vld [vmem:[%s0 + $0x78] sm:$0xff]
  %v256 = vld [vmem:[%s0 + $0x80] sm:$0xff]
  %v257 = vld [vmem:[%s0 + $0x88] sm:$0xff]
  %v258 = vld [vmem:[%s0 + $0x90] sm:$0xff]
  %v259 = vld [vmem:[%s0 + $0x98] sm:$0xff]
  %v260 = vld [vmem:[%s0 + $0xa0] sm:$0xff]
  %v261 = vld [vmem:[%s0 + $0xa8] sm:$0xff]
  %v262 = vld [vmem:[%s0 + $0xb0] sm:$0xff]
  %v263 = vld [vmem:[%s0 + $0xb8] sm:$0xff]
  %v264 = vld [vmem:[%s0 + $0xc0] sm:$0xff]
  %v265 = vld [vmem:[%s0 + $0xc8] sm:$0xff]
  %v266 = vld [vmem:[%s0 + $0xd0] sm:$0xff]
  %v267 = vld [vmem:[%s0 + $0xd8] sm:$0xff]
  %v268 = vld [vmem:[%s0 + $0xe0] sm:$0xff]
  %v269 = vld [vmem:[%s0 + $0xe8] sm:$0xff]
  %v270 = vld [vmem:[%s0 + $0xf0] sm:$0xff]
  %v271 = vld [vmem:[%s0 + $0xf8] sm:$0xff]
  %s272 = smul.u32 8, 1
  %s273 = smul.u32 %s272, 2
  %s274 = sshll.u32 %s273, 4
  %275 = dma.done [#allocation7], %s274
  %s276 = smul.u32 320, 1
  %s277 = sshll.u32 %s276, 4
  %278 = dma.done [#allocation6], %s277
  %s279 = smul.u32 1280, 1
  %s280 = sshll.u32 %s279, 4
  %281 = dma.done %s23, %s280
  %v282 = vld [vmem:[#allocation2] sm:$0xff]
  %v283 = vld [vmem:[#allocation2 + $0x8] sm:$0xff]
  %v284 = vld [vmem:[#allocation2 + $0x10] sm:$0xff]
  %v285 = vld [vmem:[#allocation2 + $0x18] sm:$0xff]
  %v286 = vld [vmem:[#allocation2 + $0x20] sm:$0xff]
  %v287 = vld [vmem:[#allocation2 + $0x28] sm:$0xff]
  %v288 = vld [vmem:[#allocation2 + $0x30] sm:$0xff]
  %v289 = vld [vmem:[#allocation2 + $0x38] sm:$0xff]
  %v290 = vld [vmem:[#allocation2 + $0x40] sm:$0xff]
  %v291 = vld [vmem:[#allocation2 + $0x48] sm:$0xff]
  %v292 = vld [vmem:[#allocation2 + $0x50] sm:$0xff]
  %v293 = vld [vmem:[#allocation2 + $0x58] sm:$0xff]
  %v294 = vld [vmem:[#allocation2 + $0x60] sm:$0xff]
  %v295 = vld [vmem:[#allocation2 + $0x68] sm:$0xff]
  %v296 = vld [vmem:[#allocation2 + $0x70] sm:$0xff]
  %v297 = vld [vmem:[#allocation2 + $0x78] sm:$0xff]
  %v298 = vld [vmem:[#allocation2 + $0x80] sm:$0xff]
  %v299 = vld [vmem:[#allocation2 + $0x88] sm:$0xff]
  %v300 = vld [vmem:[#allocation2 + $0x90] sm:$0xff]
  %v301 = vld [vmem:[#allocation2 + $0x98] sm:$0xff]
  %v302 = vld [vmem:[#allocation2 + $0xa0] sm:$0xff]
  %v303 = vld [vmem:[#allocation2 + $0xa8] sm:$0xff]
  %v304 = vld [vmem:[#allocation2 + $0xb0] sm:$0xff]
  %v305 = vld [vmem:[#allocation2 + $0xb8] sm:$0xff]
  %v306 = vld [vmem:[#allocation2 + $0xc0] sm:$0xff]
  %v307 = vld [vmem:[#allocation2 + $0xc8] sm:$0xff]
  %v308 = vld [vmem:[#allocation2 + $0xd0] sm:$0xff]
  %v309 = vld [vmem:[#allocation2 + $0xd8] sm:$0xff]
  %v310 = vld [vmem:[#allocation2 + $0xe0] sm:$0xff]
  %v311 = vld [vmem:[#allocation2 + $0xe8] sm:$0xff]
  %v312 = vld [vmem:[#allocation2 + $0xf0] sm:$0xff]
  %v313 = vld [vmem:[#allocation2 + $0xf8] sm:$0xff]
  %v314 = vld [vmem:[#allocation2 + $0x100] sm:$0xff]
  %v315 = vld [vmem:[#allocation2 + $0x108] sm:$0xff]
  %v316 = vld [vmem:[#allocation2 + $0x110] sm:$0xff]
  %v317 = vld [vmem:[#allocation2 + $0x118] sm:$0xff]
  %v318 = vld [vmem:[#allocation2 + $0x120] sm:$0xff]
  %v319 = vld [vmem:[#allocation2 + $0x128] sm:$0xff]
  %v320 = vld [vmem:[#allocation2 + $0x130] sm:$0xff]
  %v321 = vld [vmem:[#allocation2 + $0x138] sm:$0xff]
  %322 = vmatprep.subr.mxu0 %v241
  %323 = vmatpush1.msra.mxu0 %v240
  %324 = vmatprep.subr.mxu0 %v243
  %325 = vmatpush1.msra.mxu0 %v242
  %326 = vmatprep.subr.mxu0 %v245
  %327 = vmatpush1.msra.mxu0 %v244
  %328 = vmatprep.subr.mxu0 %v247
  %329 = vmatpush1.msra.mxu0 %v246
  %330 = vmatprep.subr.mxu0 %v249
  %331 = vmatpush1.msra.mxu0 %v248
  %332 = vmatprep.subr.mxu0 %v251
  %333 = vmatpush1.msra.mxu0 %v250
  %334 = vmatprep.subr.mxu0 %v253
  %335 = vmatpush1.msra.mxu0 %v252
  %336 = vmatprep.subr.mxu0 %v255
  %337 = vmatpush1.msra.mxu0 %v254
  %338 = vmatprep.subr.mxu0 %v257
  %339 = vmatpush1.msra.mxu0 %v256
  %340 = vmatprep.subr.mxu0 %v259
  %341 = vmatpush1.msra.mxu0 %v258
  %342 = vmatprep.subr.mxu0 %v261
  %343 = vmatpush1.msra.mxu0 %v260
  %344 = vmatprep.subr.mxu0 %v263
  %345 = vmatpush1.msra.mxu0 %v262
  %346 = vmatprep.subr.mxu0 %v265
  %347 = vmatpush1.msra.mxu0 %v264
  %348 = vmatprep.subr.mxu0 %v267
  %349 = vmatpush1.msra.mxu0 %v266
  %350 = vmatprep.subr.mxu0 %v269
  %351 = vmatpush1.msra.mxu0 %v268
  %352 = vmatprep.subr.mxu0 %v271
  %353 = vmatpush1.msra.mxu0 %v270
  %354 = vmatprep.subr.mxu0 0.0
  %355 = vmatpush1.msra.mxu0 0.0
  %356 = vmatprep.subr.mxu0 0.0
  %357 = vmatpush1.msra.mxu0 0.0
  %358 = vmatprep.subr.mxu0 0.0
  %359 = vmatpush1.msra.mxu0 0.0
  %360 = vmatprep.subr.mxu0 0.0
  %361 = vmatpush1.msra.mxu0 0.0
  %362 = vmatprep.subr.mxu0 0.0
  %363 = vmatpush1.msra.mxu0 0.0
  %364 = vmatprep.subr.mxu0 0.0
  %365 = vmatpush1.msra.mxu0 0.0
  %366 = vmatprep.subr.mxu0 0.0
  %367 = vmatpush1.msra.mxu0 0.0
  %368 = vmatprep.subr.mxu0 0.0
  %369 = vmatpush1.msra.mxu0 0.0
  %370 = vmatprep.subr.mxu0 0.0
  %371 = vmatpush1.msra.mxu0 0.0
  %372 = vmatprep.subr.mxu0 0.0
  %373 = vmatpush1.msra.mxu0 0.0
  %374 = vmatprep.subr.mxu0 0.0
  %375 = vmatpush1.msra.mxu0 0.0
  %376 = vmatprep.subr.mxu0 0.0
  %377 = vmatpush1.msra.mxu0 0.0
  %378 = vmatprep.subr.mxu0 0.0
  %379 = vmatpush1.msra.mxu0 0.0
  %380 = vmatprep.subr.mxu0 0.0
  %381 = vmatpush1.msra.mxu0 0.0
  %382 = vmatprep.subr.mxu0 0.0
  %383 = vmatpush1.msra.mxu0 0.0
  %384 = vmatprep.subr.mxu0 0.0
  %385 = vmatpush1.msra.mxu0 0.0
  %386 = vmatprep.mubr.f32.mxu0 0.0
  %387 = vmatmul.mubr.f32.gmra.mrb[0].mxu0 %v282
  %v388 = vpop.f32.mrb[0].mxu0
  %v389 = vadd.f32 0.0, %v388
  %v390 = vpop.f32.mrb[0].mxu0
  %v391 = vadd.f32 0.0, %v390
  %392 = vmatprep.mubr.f32.mxu0 0.0
  %393 = vmatmul.mubr.f32.gmra.mrb[0].mxu0 %v283
  %v394 = vpop.f32.mrb[0].mxu0
  %v395 = vadd.f32 0.0, %v394
  %v396 = vpop.f32.mrb[0].mxu0
  %v397 = vadd.f32 0.0, %v396
  %398 = vmatprep.mubr.f32.mxu0 0.0
  %399 = vmatmul.mubr.f32.gmra.mrb[0].mxu0 %v284
  %v400 = vpop.f32.mrb[0].mxu0
  %v401 = vadd.f32 0.0, %v400
  %v402 = vpop.f32.mrb[0].mxu0
  %v403 = vadd.f32 0.0, %v402
  %404 = vmatprep.mubr.f32.mxu0 0.0
  %405 = vmatmul.mubr.f32.gmra.mrb[0].mxu0 %v285
  %v406 = vpop.f32.mrb[0].mxu0
  %v407 = vadd.f32 0.0, %v406
  %v408 = vpop.f32.mrb[0].mxu0
  %v409 = vadd.f32 0.0, %v408
  %410 = vmatprep.mubr.f32.mxu0 0.0
  %411 = vmatmul.mubr.f32.gmra.mrb[0].mxu0 %v286
  %v412 = vpop.f32.mrb[0].mxu0
  %v413 = vadd.f32 0.0, %v412
  %v414 = vpop.f32.mrb[0].mxu0
  %v415 = vadd.f32 0.0, %v414
  %416 = vmatprep.mubr.f32.mxu0 0.0
  %417 = vmatmul.mubr.f32.gmra.mrb[0].mxu0 %v287
  %v418 = vpop.f32.mrb[0].mxu0
  %v419 = vadd.f32 0.0, %v418
  %v420 = vpop.f32.mrb[0].mxu0
  %v421 = vadd.f32 0.0, %v420
  %422 = vmatprep.mubr.f32.mxu0 0.0
  %423 = vmatmul.mubr.f32.gmra.mrb[0].mxu0 %v288
  %v424 = vpop.f32.mrb[0].mxu0
  %v425 = vadd.f32 0.0, %v424
  %v426 = vpop.f32.mrb[0].mxu0
  %v427 = vadd.f32 0.0, %v426
  %428 = vmatprep.mubr.f32.mxu0 0.0
  %429 = vmatmul.mubr.f32.gmra.mrb[0].mxu0 %v289
  %v430 = vpop.f32.mrb[0].mxu0
  %v431 = vadd.f32 0.0, %v430
  %v432 = vpop.f32.mrb[0].mxu0
  %v433 = vadd.f32 0.0, %v432
  %434 = vmatprep.mubr.f32.mxu0 0.0
  %435 = vmatmul.mubr.f32.gmra.mrb[0].mxu0 %v290
  %v436 = vpop.f32.mrb[0].mxu0
  %v437 = vadd.f32 0.0, %v436
  %v438 = vpop.f32.mrb[0].mxu0
  %v439 = vadd.f32 0.0, %v438
  %440 = vmatprep.mubr.f32.mxu0 0.0
  %441 = vmatmul.mubr.f32.gmra.mrb[0].mxu0 %v291
  %v442 = vpop.f32.mrb[0].mxu0
  %v443 = vadd.f32 0.0, %v442
  %v444 = vpop.f32.mrb[0].mxu0
  %v445 = vadd.f32 0.0, %v444
  %446 = vmatprep.mubr.f32.mxu0 0.0
  %447 = vmatmul.mubr.f32.gmra.mrb[0].mxu0 %v292
  %v448 = vpop.f32.mrb[0].mxu0
  %v449 = vadd.f32 0.0, %v448
  %v450 = vpop.f32.mrb[0].mxu0
  %v451 = vadd.f32 0.0, %v450
  %452 = vmatprep.mubr.f32.mxu0 0.0
  %453 = vmatmul.mubr.f32.gmra.mrb[0].mxu0 %v293
  %v454 = vpop.f32.mrb[0].mxu0
  %v455 = vadd.f32 0.0, %v454
  %v456 = vpop.f32.mrb[0].mxu0
  %v457 = vadd.f32 0.0, %v456
  %458 = vmatprep.mubr.f32.mxu0 0.0
  %459 = vmatmul.mubr.f32.gmra.mrb[0].mxu0 %v294
  %v460 = vpop.f32.mrb[0].mxu0
  %v461 = vadd.f32 0.0, %v460
  %v462 = vpop.f32.mrb[0].mxu0
  %v463 = vadd.f32 0.0, %v462
  %464 = vmatprep.mubr.f32.mxu0 0.0
  %465 = vmatmul.mubr.f32.gmra.mrb[0].mxu0 %v295
  %v466 = vpop.f32.mrb[0].mxu0
  %v467 = vadd.f32 0.0, %v466
  %v468 = vpop.f32.mrb[0].mxu0
  %v469 = vadd.f32 0.0, %v468
  %470 = vmatprep.mubr.f32.mxu0 0.0
  %471 = vmatmul.mubr.f32.gmra.mrb[0].mxu0 %v296
  %v472 = vpop.f32.mrb[0].mxu0
  %v473 = vadd.f32 0.0, %v472
  %v474 = vpop.f32.mrb[0].mxu0
  %v475 = vadd.f32 0.0, %v474
  %476 = vmatprep.mubr.f32.mxu0 0.0
  %477 = vmatmul.mubr.f32.gmra.mrb[0].mxu0 %v297
  %v478 = vpop.f32.mrb[0].mxu0
  %v479 = vadd.f32 0.0, %v478
  %v480 = vpop.f32.mrb[0].mxu0
  %v481 = vadd.f32 0.0, %v480
  %482 = vmatprep.mubr.f32.mxu0 0.0
  %483 = vmatmul.mubr.f32.gmra.mrb[0].mxu0 %v298
  %v484 = vpop.f32.mrb[0].mxu0
  %v485 = vadd.f32 0.0, %v484
  %v486 = vpop.f32.mrb[0].mxu0
  %v487 = vadd.f32 0.0, %v486
  %488 = vmatprep.mubr.f32.mxu0 0.0
  %489 = vmatmul.mubr.f32.gmra.mrb[0].mxu0 %v299
  %v490 = vpop.f32.mrb[0].mxu0
  %v491 = vadd.f32 0.0, %v490
  %v492 = vpop.f32.mrb[0].mxu0
  %v493 = vadd.f32 0.0, %v492
  %494 = vmatprep.mubr.f32.mxu0 0.0
  %495 = vmatmul.mubr.f32.gmra.mrb[0].mxu0 %v300
  %v496 = vpop.f32.mrb[0].mxu0
  %v497 = vadd.f32 0.0, %v496
  %v498 = vpop.f32.mrb[0].mxu0
  %v499 = vadd.f32 0.0, %v498
  %500 = vmatprep.mubr.f32.mxu0 0.0
  %501 = vmatmul.mubr.f32.gmra.mrb[0].mxu0 %v301
  %v502 = vpop.f32.mrb[0].mxu0
  %v503 = vadd.f32 0.0, %v502
  %v504 = vpop.f32.mrb[0].mxu0
  %v505 = vadd.f32 0.0, %v504
  %506 = vmatprep.mubr.f32.mxu0 0.0
  %507 = vmatmul.mubr.f32.gmra.mrb[0].mxu0 %v302
  %v508 = vpop.f32.mrb[0].mxu0
  %v509 = vadd.f32 0.0, %v508
  %v510 = vpop.f32.mrb[0].mxu0
  %v511 = vadd.f32 0.0, %v510
  %512 = vmatprep.mubr.f32.mxu0 0.0
  %513 = vmatmul.mubr.f32.gmra.mrb[0].mxu0 %v303
  %v514 = vpop.f32.mrb[0].mxu0
  %v515 = vadd.f32 0.0, %v514
  %v516 = vpop.f32.mrb[0].mxu0
  %v517 = vadd.f32 0.0, %v516
  %518 = vmatprep.mubr.f32.mxu0 0.0
  %519 = vmatmul.mubr.f32.gmra.mrb[0].mxu0 %v304
  %v520 = vpop.f32.mrb[0].mxu0
  %v521 = vadd.f32 0.0, %v520
  %v522 = vpop.f32.mrb[0].mxu0
  %v523 = vadd.f32 0.0, %v522
  %524 = vmatprep.mubr.f32.mxu0 0.0
  %525 = vmatmul.mubr.f32.gmra.mrb[0].mxu0 %v305
  %v526 = vpop.f32.mrb[0].mxu0
  %v527 = vadd.f32 0.0, %v526
  %v528 = vpop.f32.mrb[0].mxu0
  %v529 = vadd.f32 0.0, %v528
  %530 = vmatprep.mubr.f32.mxu0 0.0
  %531 = vmatmul.mubr.f32.gmra.mrb[0].mxu0 %v306
  %v532 = vpop.f32.mrb[0].mxu0
  %v533 = vadd.f32 0.0, %v532
  %v534 = vpop.f32.mrb[0].mxu0
  %v535 = vadd.f32 0.0, %v534
  %536 = vmatprep.mubr.f32.mxu0 0.0
  %537 = vmatmul.mubr.f32.gmra.mrb[0].mxu0 %v307
  %v538 = vpop.f32.mrb[0].mxu0
  %v539 = vadd.f32 0.0, %v538
  %v540 = vpop.f32.mrb[0].mxu0
  %v541 = vadd.f32 0.0, %v540
  %542 = vmatprep.mubr.f32.mxu0 0.0
  %543 = vmatmul.mubr.f32.gmra.mrb[0].mxu0 %v308
  %v544 = vpop.f32.mrb[0].mxu0
  %v545 = vadd.f32 0.0, %v544
  %v546 = vpop.f32.mrb[0].mxu0
  %v547 = vadd.f32 0.0, %v546
  %548 = vmatprep.mubr.f32.mxu0 0.0
  %549 = vmatmul.mubr.f32.gmra.mrb[0].mxu0 %v309
  %v550 = vpop.f32.mrb[0].mxu0
  %v551 = vadd.f32 0.0, %v550
  %v552 = vpop.f32.mrb[0].mxu0
  %v553 = vadd.f32 0.0, %v552
  %554 = vmatprep.mubr.f32.mxu0 0.0
  %555 = vmatmul.mubr.f32.gmra.mrb[0].mxu0 %v310
  %v556 = vpop.f32.mrb[0].mxu0
  %v557 = vadd.f32 0.0, %v556
  %v558 = vpop.f32.mrb[0].mxu0
  %v559 = vadd.f32 0.0, %v558
  %560 = vmatprep.mubr.f32.mxu0 0.0
  %561 = vmatmul.mubr.f32.gmra.mrb[0].mxu0 %v311
  %v562 = vpop.f32.mrb[0].mxu0
  %v563 = vadd.f32 0.0, %v562
  %v564 = vpop.f32.mrb[0].mxu0
  %v565 = vadd.f32 0.0, %v564
  %566 = vmatprep.mubr.f32.mxu0 0.0
  %567 = vmatmul.mubr.f32.gmra.mrb[0].mxu0 %v312
  %v568 = vpop.f32.mrb[0].mxu0
  %v569 = vadd.f32 0.0, %v568
  %v570 = vpop.f32.mrb[0].mxu0
  %v571 = vadd.f32 0.0, %v570
  %572 = vmatprep.mubr.f32.mxu0 0.0
  %573 = vmatmul.mubr.f32.gmra.mrb[0].mxu0 %v313
  %v574 = vpop.f32.mrb[0].mxu0
  %v575 = vadd.f32 0.0, %v574
  %v576 = vpop.f32.mrb[0].mxu0
  %v577 = vadd.f32 0.0, %v576
  %578 = vmatprep.mubr.f32.mxu0 0.0
  %579 = vmatmul.mubr.f32.gmra.mrb[0].mxu0 %v314
  %v580 = vpop.f32.mrb[0].mxu0
  %v581 = vadd.f32 0.0, %v580
  %v582 = vpop.f32.mrb[0].mxu0
  %v583 = vadd.f32 0.0, %v582
  %584 = vmatprep.mubr.f32.mxu0 0.0
  %585 = vmatmul.mubr.f32.gmra.mrb[0].mxu0 %v315
  %v586 = vpop.f32.mrb[0].mxu0
  %v587 = vadd.f32 0.0, %v586
  %v588 = vpop.f32.mrb[0].mxu0
  %v589 = vadd.f32 0.0, %v588
  %590 = vmatprep.mubr.f32.mxu0 0.0
  %591 = vmatmul.mubr.f32.gmra.mrb[0].mxu0 %v316
  %v592 = vpop.f32.mrb[0].mxu0
  %v593 = vadd.f32 0.0, %v592
  %v594 = vpop.f32.mrb[0].mxu0
  %v595 = vadd.f32 0.0, %v594
  %596 = vmatprep.mubr.f32.mxu0 0.0
  %597 = vmatmul.mubr.f32.gmra.mrb[0].mxu0 %v317
  %v598 = vpop.f32.mrb[0].mxu0
  %v599 = vadd.f32 0.0, %v598
  %v600 = vpop.f32.mrb[0].mxu0
  %v601 = vadd.f32 0.0, %v600
  %602 = vmatprep.mubr.f32.mxu0 0.0
  %603 = vmatmul.mubr.f32.gmra.mrb[0].mxu0 %v318
  %v604 = vpop.f32.mrb[0].mxu0
  %v605 = vadd.f32 0.0, %v604
  %v606 = vpop.f32.mrb[0].mxu0
  %v607 = vadd.f32 0.0, %v606
  %608 = vmatprep.mubr.f32.mxu0 0.0
  %609 = vmatmul.mubr.f32.gmra.mrb[0].mxu0 %v319
  %v610 = vpop.f32.mrb[0].mxu0
  %v611 = vadd.f32 0.0, %v610
  %v612 = vpop.f32.mrb[0].mxu0
  %v613 = vadd.f32 0.0, %v612
  %614 = vmatprep.mubr.f32.mxu0 0.0
  %615 = vmatmul.mubr.f32.gmra.mrb[0].mxu0 %v320
  %v616 = vpop.f32.mrb[0].mxu0
  %v617 = vadd.f32 0.0, %v616
  %v618 = vpop.f32.mrb[0].mxu0
  %v619 = vadd.f32 0.0, %v618
  %620 = vmatprep.mubr.f32.mxu0 0.0
  %621 = vmatmul.mubr.f32.gmra.mrb[0].mxu0 %v321
  %v622 = vpop.f32.mrb[0].mxu0
  %v623 = vadd.f32 0.0, %v622
  %v624 = vpop.f32.mrb[0].mxu0
  %v625 = vadd.f32 0.0, %v624
  %626 = vdwg.mxu0
  %v627 = vld [vmem:[#allocation3] sm:$0xff]
  %v628 = vld [vmem:[#allocation3 + $0x8] sm:$0xff]
  %v629 = vld [vmem:[#allocation3 + $0x10] sm:$0xff]
  %v630 = vld [vmem:[#allocation3 + $0x18] sm:$0xff]
  %v631 = vld [vmem:[#allocation3 + $0x20] sm:$0xff]
  %v632 = vld [vmem:[#allocation3 + $0x28] sm:$0xff]
  %v633 = vld [vmem:[#allocation3 + $0x30] sm:$0xff]
  %v634 = vld [vmem:[#allocation3 + $0x38] sm:$0xff]
  %v635 = vld [vmem:[#allocation3 + $0x40] sm:$0xff]
  %v636 = vld [vmem:[#allocation3 + $0x48] sm:$0xff]
  %v637 = vld [vmem:[#allocation3 + $0x50] sm:$0xff]
  %v638 = vld [vmem:[#allocation3 + $0x58] sm:$0xff]
  %v639 = vld [vmem:[#allocation3 + $0x60] sm:$0xff]
  %v640 = vld [vmem:[#allocation3 + $0x68] sm:$0xff]
  %v641 = vld [vmem:[#allocation3 + $0x70] sm:$0xff]
  %v642 = vld [vmem:[#allocation3 + $0x78] sm:$0xff]
  %v643 = vld [vmem:[#allocation3 + $0x80] sm:$0xff]
  %v644 = vld [vmem:[#allocation3 + $0x88] sm:$0xff]
  %v645 = vld [vmem:[#allocation3 + $0x90] sm:$0xff]
  %v646 = vld [vmem:[#allocation3 + $0x98] sm:$0xff]
  %v647 = vld [vmem:[#allocation3 + $0xa0] sm:$0xff]
  %v648 = vld [vmem:[#allocation3 + $0xa8] sm:$0xff]
  %v649 = vld [vmem:[#allocation3 + $0xb0] sm:$0xff]
  %v650 = vld [vmem:[#allocation3 + $0xb8] sm:$0xff]
  %v651 = vld [vmem:[#allocation3 + $0xc0] sm:$0xff]
  %v652 = vld [vmem:[#allocation3 + $0xc8] sm:$0xff]
  %v653 = vld [vmem:[#allocation3 + $0xd0] sm:$0xff]
  %v654 = vld [vmem:[#allocation3 + $0xd8] sm:$0xff]
  %v655 = vld [vmem:[#allocation3 + $0xe0] sm:$0xff]
  %v656 = vld [vmem:[#allocation3 + $0xe8] sm:$0xff]
  %v657 = vld [vmem:[#allocation3 + $0xf0] sm:$0xff]
  %v658 = vld [vmem:[#allocation3 + $0xf8] sm:$0xff]
  %v659 = vld [vmem:[#allocation3 + $0x100] sm:$0xff]
  %v660 = vld [vmem:[#allocation3 + $0x108] sm:$0xff]
  %v661 = vld [vmem:[#allocation3 + $0x110] sm:$0xff]
  %v662 = vld [vmem:[#allocation3 + $0x118] sm:$0xff]
  %v663 = vld [vmem:[#allocation3 + $0x120] sm:$0xff]
  %v664 = vld [vmem:[#allocation3 + $0x128] sm:$0xff]
  %v665 = vld [vmem:[#allocation3 + $0x130] sm:$0xff]
  %v666 = vld [vmem:[#allocation3 + $0x138] sm:$0xff]
  %v667 = vld [vmem:[#allocation3 + $0x140] sm:$0xff]
  %v668 = vld [vmem:[#allocation3 + $0x148] sm:$0xff]
  %v669 = vld [vmem:[#allocation3 + $0x150] sm:$0xff]
  %v670 = vld [vmem:[#allocation3 + $0x158] sm:$0xff]
  %v671 = vld [vmem:[#allocation3 + $0x160] sm:$0xff]
  %v672 = vld [vmem:[#allocation3 + $0x168] sm:$0xff]
  %v673 = vld [vmem:[#allocation3 + $0x170] sm:$0xff]
  %v674 = vld [vmem:[#allocation3 + $0x178] sm:$0xff]
  %v675 = vld [vmem:[#allocation3 + $0x180] sm:$0xff]
  %v676 = vld [vmem:[#allocation3 + $0x188] sm:$0xff]
  %v677 = vld [vmem:[#allocation3 + $0x190] sm:$0xff]
  %v678 = vld [vmem:[#allocation3 + $0x198] sm:$0xff]
  %v679 = vld [vmem:[#allocation3 + $0x1a0] sm:$0xff]
  %v680 = vld [vmem:[#allocation3 + $0x1a8] sm:$0xff]
  %v681 = vld [vmem:[#allocation3 + $0x1b0] sm:$0xff]
  %v682 = vld [vmem:[#allocation3 + $0x1b8] sm:$0xff]
  %v683 = vld [vmem:[#allocation3 + $0x1c0] sm:$0xff]
  %v684 = vld [vmem:[#allocation3 + $0x1c8] sm:$0xff]
  %v685 = vld [vmem:[#allocation3 + $0x1d0] sm:$0xff]
  %v686 = vld [vmem:[#allocation3 + $0x1d8] sm:$0xff]
  %v687 = vld [vmem:[#allocation3 + $0x1e0] sm:$0xff]
  %v688 = vld [vmem:[#allocation3 + $0x1e8] sm:$0xff]
  %v689 = vld [vmem:[#allocation3 + $0x1f0] sm:$0xff]
  %v690 = vld [vmem:[#allocation3 + $0x1f8] sm:$0xff]
  %v691 = vld [vmem:[#allocation3 + $0x200] sm:$0xff]
  %v692 = vld [vmem:[#allocation3 + $0x208] sm:$0xff]
  %v693 = vld [vmem:[#allocation3 + $0x210] sm:$0xff]
  %v694 = vld [vmem:[#allocation3 + $0x218] sm:$0xff]
  %v695 = vld [vmem:[#allocation3 + $0x220] sm:$0xff]
  %v696 = vld [vmem:[#allocation3 + $0x228] sm:$0xff]
  %v697 = vld [vmem:[#allocation3 + $0x230] sm:$0xff]
  %v698 = vld [vmem:[#allocation3 + $0x238] sm:$0xff]
  %v699 = vld [vmem:[#allocation3 + $0x240] sm:$0xff]
  %v700 = vld [vmem:[#allocation3 + $0x248] sm:$0xff]
  %v701 = vld [vmem:[#allocation3 + $0x250] sm:$0xff]
  %v702 = vld [vmem:[#allocation3 + $0x258] sm:$0xff]
  %v703 = vld [vmem:[#allocation3 + $0x260] sm:$0xff]
  %v704 = vld [vmem:[#allocation3 + $0x268] sm:$0xff]
  %v705 = vld [vmem:[#allocation3 + $0x270] sm:$0xff]
  %v706 = vld [vmem:[#allocation3 + $0x278] sm:$0xff]
  %v707 = vld [vmem:[#allocation3 + $0x280] sm:$0xff]
  %v708 = vld [vmem:[#allocation3 + $0x288] sm:$0xff]
  %v709 = vld [vmem:[#allocation3 + $0x290] sm:$0xff]
  %v710 = vld [vmem:[#allocation3 + $0x298] sm:$0xff]
  %v711 = vld [vmem:[#allocation3 + $0x2a0] sm:$0xff]
  %v712 = vld [vmem:[#allocation3 + $0x2a8] sm:$0xff]
  %v713 = vld [vmem:[#allocation3 + $0x2b0] sm:$0xff]
  %v714 = vld [vmem:[#allocation3 + $0x2b8] sm:$0xff]
  %v715 = vld [vmem:[#allocation3 + $0x2c0] sm:$0xff]
  %v716 = vld [vmem:[#allocation3 + $0x2c8] sm:$0xff]
  %v717 = vld [vmem:[#allocation3 + $0x2d0] sm:$0xff]
  %v718 = vld [vmem:[#allocation3 + $0x2d8] sm:$0xff]
  %v719 = vld [vmem:[#allocation3 + $0x2e0] sm:$0xff]
  %v720 = vld [vmem:[#allocation3 + $0x2e8] sm:$0xff]
  %v721 = vld [vmem:[#allocation3 + $0x2f0] sm:$0xff]
  %v722 = vld [vmem:[#allocation3 + $0x2f8] sm:$0xff]
  %v723 = vld [vmem:[#allocation3 + $0x300] sm:$0xff]
  %v724 = vld [vmem:[#allocation3 + $0x308] sm:$0xff]
  %v725 = vld [vmem:[#allocation3 + $0x310] sm:$0xff]
  %v726 = vld [vmem:[#allocation3 + $0x318] sm:$0xff]
  %v727 = vld [vmem:[#allocation3 + $0x320] sm:$0xff]
  %v728 = vld [vmem:[#allocation3 + $0x328] sm:$0xff]
  %v729 = vld [vmem:[#allocation3 + $0x330] sm:$0xff]
  %v730 = vld [vmem:[#allocation3 + $0x338] sm:$0xff]
  %v731 = vld [vmem:[#allocation3 + $0x340] sm:$0xff]
  %v732 = vld [vmem:[#allocation3 + $0x348] sm:$0xff]
  %v733 = vld [vmem:[#allocation3 + $0x350] sm:$0xff]
  %v734 = vld [vmem:[#allocation3 + $0x358] sm:$0xff]
  %v735 = vld [vmem:[#allocation3 + $0x360] sm:$0xff]
  %v736 = vld [vmem:[#allocation3 + $0x368] sm:$0xff]
  %v737 = vld [vmem:[#allocation3 + $0x370] sm:$0xff]
  %v738 = vld [vmem:[#allocation3 + $0x378] sm:$0xff]
  %v739 = vld [vmem:[#allocation3 + $0x380] sm:$0xff]
  %v740 = vld [vmem:[#allocation3 + $0x388] sm:$0xff]
  %v741 = vld [vmem:[#allocation3 + $0x390] sm:$0xff]
  %v742 = vld [vmem:[#allocation3 + $0x398] sm:$0xff]
  %v743 = vld [vmem:[#allocation3 + $0x3a0] sm:$0xff]
  %v744 = vld [vmem:[#allocation3 + $0x3a8] sm:$0xff]
  %v745 = vld [vmem:[#allocation3 + $0x3b0] sm:$0xff]
  %v746 = vld [vmem:[#allocation3 + $0x3b8] sm:$0xff]
  %v747 = vld [vmem:[#allocation3 + $0x3c0] sm:$0xff]
  %v748 = vld [vmem:[#allocation3 + $0x3c8] sm:$0xff]
  %v749 = vld [vmem:[#allocation3 + $0x3d0] sm:$0xff]
  %v750 = vld [vmem:[#allocation3 + $0x3d8] sm:$0xff]
  %v751 = vld [vmem:[#allocation3 + $0x3e0] sm:$0xff]
  %v752 = vld [vmem:[#allocation3 + $0x3e8] sm:$0xff]
  %v753 = vld [vmem:[#allocation3 + $0x3f0] sm:$0xff]
  %v754 = vld [vmem:[#allocation3 + $0x3f8] sm:$0xff]
  %v755 = vld [vmem:[#allocation3 + $0x400] sm:$0xff]
  %v756 = vld [vmem:[#allocation3 + $0x408] sm:$0xff]
  %v757 = vld [vmem:[#allocation3 + $0x410] sm:$0xff]
  %v758 = vld [vmem:[#allocation3 + $0x418] sm:$0xff]
  %v759 = vld [vmem:[#allocation3 + $0x420] sm:$0xff]
  %v760 = vld [vmem:[#allocation3 + $0x428] sm:$0xff]
  %v761 = vld [vmem:[#allocation3 + $0x430] sm:$0xff]
  %v762 = vld [vmem:[#allocation3 + $0x438] sm:$0xff]
  %v763 = vld [vmem:[#allocation3 + $0x440] sm:$0xff]
  %v764 = vld [vmem:[#allocation3 + $0x448] sm:$0xff]
  %v765 = vld [vmem:[#allocation3 + $0x450] sm:$0xff]
  %v766 = vld [vmem:[#allocation3 + $0x458] sm:$0xff]
  %v767 = vld [vmem:[#allocation3 + $0x460] sm:$0xff]
  %v768 = vld [vmem:[#allocation3 + $0x468] sm:$0xff]
  %v769 = vld [vmem:[#allocation3 + $0x470] sm:$0xff]
  %v770 = vld [vmem:[#allocation3 + $0x478] sm:$0xff]
  %v771 = vld [vmem:[#allocation3 + $0x480] sm:$0xff]
  %v772 = vld [vmem:[#allocation3 + $0x488] sm:$0xff]
  %v773 = vld [vmem:[#allocation3 + $0x490] sm:$0xff]
  %v774 = vld [vmem:[#allocation3 + $0x498] sm:$0xff]
  %v775 = vld [vmem:[#allocation3 + $0x4a0] sm:$0xff]
  %v776 = vld [vmem:[#allocation3 + $0x4a8] sm:$0xff]
  %v777 = vld [vmem:[#allocation3 + $0x4b0] sm:$0xff]
  %v778 = vld [vmem:[#allocation3 + $0x4b8] sm:$0xff]
  %v779 = vld [vmem:[#allocation3 + $0x4c0] sm:$0xff]
  %v780 = vld [vmem:[#allocation3 + $0x4c8] sm:$0xff]
  %v781 = vld [vmem:[#allocation3 + $0x4d0] sm:$0xff]
  %v782 = vld [vmem:[#allocation3 + $0x4d8] sm:$0xff]
  %v783 = vld [vmem:[#allocation3 + $0x4e0] sm:$0xff]
  %v784 = vld [vmem:[#allocation3 + $0x4e8] sm:$0xff]
  %v785 = vld [vmem:[#allocation3 + $0x4f0] sm:$0xff]
  %v786 = vld [vmem:[#allocation3 + $0x4f8] sm:$0xff]
  %v787 = vld [vmem:[#allocation5] ss:$0 sm:$0xff]
  %788 = vmatprep.subr.mxu0 0.0
  %789 = vmatpush1.msra.mxu0 %v627
  %790 = vmatprep.subr.mxu0 0.0
  %791 = vmatpush1.msra.mxu0 %v628
  %792 = vmatprep.subr.mxu0 0.0
  %793 = vmatpush1.msra.mxu0 %v629
  %794 = vmatprep.subr.mxu0 0.0
  %795 = vmatpush1.msra.mxu0 %v630
  %796 = vmatprep.subr.mxu0 0.0
  %797 = vmatpush1.msra.mxu0 %v631
  %798 = vmatprep.subr.mxu0 0.0
  %799 = vmatpush1.msra.mxu0 %v632
  %800 = vmatprep.subr.mxu0 0.0
  %801 = vmatpush1.msra.mxu0 %v633
  %802 = vmatprep.subr.mxu0 0.0
  %803 = vmatpush1.msra.mxu0 %v634
  %804 = vmatprep.subr.mxu0 0.0
  %805 = vmatpush1.msra.mxu0 %v635
  %806 = vmatprep.subr.mxu0 0.0
  %807 = vmatpush1.msra.mxu0 %v636
  %808 = vmatprep.subr.mxu0 0.0
  %809 = vmatpush1.msra.mxu0 %v637
  %810 = vmatprep.subr.mxu0 0.0
  %811 = vmatpush1.msra.mxu0 %v638
  %812 = vmatprep.subr.mxu0 0.0
  %813 = vmatpush1.msra.mxu0 %v639
  %814 = vmatprep.subr.mxu0 0.0
  %815 = vmatpush1.msra.mxu0 %v640
  %816 = vmatprep.subr.mxu0 0.0
  %817 = vmatpush1.msra.mxu0 %v641
  %818 = vmatprep.subr.mxu0 0.0
  %819 = vmatpush1.msra.mxu0 %v642
  %820 = vmatprep.subr.mxu0 0.0
  %821 = vmatpush1.msra.mxu0 %v643
  %822 = vmatprep.subr.mxu0 0.0
  %823 = vmatpush1.msra.mxu0 %v644
  %824 = vmatprep.subr.mxu0 0.0
  %825 = vmatpush1.msra.mxu0 %v645
  %826 = vmatprep.subr.mxu0 0.0
  %827 = vmatpush1.msra.mxu0 %v646
  %828 = vmatprep.subr.mxu0 0.0
  %829 = vmatpush1.msra.mxu0 %v647
  %830 = vmatprep.subr.mxu0 0.0
  %831 = vmatpush1.msra.mxu0 %v648
  %832 = vmatprep.subr.mxu0 0.0
  %833 = vmatpush1.msra.mxu0 %v649
  %834 = vmatprep.subr.mxu0 0.0
  %835 = vmatpush1.msra.mxu0 %v650
  %836 = vmatprep.subr.mxu0 0.0
  %837 = vmatpush1.msra.mxu0 %v651
  %838 = vmatprep.subr.mxu0 0.0
  %839 = vmatpush1.msra.mxu0 %v652
  %840 = vmatprep.subr.mxu0 0.0
  %841 = vmatpush1.msra.mxu0 %v653
  %842 = vmatprep.subr.mxu0 0.0
  %843 = vmatpush1.msra.mxu0 %v654
  %844 = vmatprep.subr.mxu0 0.0
  %845 = vmatpush1.msra.mxu0 %v655
  %846 = vmatprep.subr.mxu0 0.0
  %847 = vmatpush1.msra.mxu0 %v656
  %848 = vmatprep.subr.mxu0 0.0
  %849 = vmatpush1.msra.mxu0 %v657
  %850 = vmatprep.subr.mxu0 0.0
  %851 = vmatpush1.msra.mxu0 %v658
  %852 = vmatprep.mubr.f32.mxu0 %v391
  %853 = vmatmul.mubr.f32.gmra.mrb[0].mxu0 %v389
  %v854 = vpop.f32.mrb[0].mxu0
  %v855 = vadd.f32 %v787, %v854
  %v856 = vpop.f32.mrb[0].mxu0
  %857 = vmatprep.mubr.f32.mxu0 %v397
  %858 = vmatmul.mubr.f32.gmra.mrb[0].mxu0 %v395
  %v859 = vpop.f32.mrb[0].mxu0
  %v860 = vadd.f32 %v787, %v859
  %v861 = vpop.f32.mrb[0].mxu0
  %862 = vmatprep.mubr.f32.mxu0 %v403
  %863 = vmatmul.mubr.f32.gmra.mrb[0].mxu0 %v401
  %v864 = vpop.f32.mrb[0].mxu0
  %v865 = vadd.f32 %v787, %v864
  %v866 = vpop.f32.mrb[0].mxu0
  %867 = vmatprep.mubr.f32.mxu0 %v409
  %868 = vmatmul.mubr.f32.gmra.mrb[0].mxu0 %v407
  %v869 = vpop.f32.mrb[0].mxu0
  %v870 = vadd.f32 %v787, %v869
  %v871 = vpop.f32.mrb[0].mxu0
  %872 = vmatprep.mubr.f32.mxu0 %v415
  %873 = vmatmul.mubr.f32.gmra.mrb[0].mxu0 %v413
  %v874 = vpop.f32.mrb[0].mxu0
  %v875 = vadd.f32 %v787, %v874
  %v876 = vpop.f32.mrb[0].mxu0
  %877 = vmatprep.mubr.f32.mxu0 %v421
  %878 = vmatmul.mubr.f32.gmra.mrb[0].mxu0 %v419
  %v879 = vpop.f32.mrb[0].mxu0
  %v880 = vadd.f32 %v787, %v879
  %v881 = vpop.f32.mrb[0].mxu0
  %882 = vmatprep.mubr.f32.mxu0 %v427
  %883 = vmatmul.mubr.f32.gmra.mrb[0].mxu0 %v425
  %v884 = vpop.f32.mrb[0].mxu0
  %v885 = vadd.f32 %v787, %v884
  %v886 = vpop.f32.mrb[0].mxu0
  %887 = vmatprep.mubr.f32.mxu0 %v433
  %888 = vmatmul.mubr.f32.gmra.mrb[0].mxu0 %v431
  %v889 = vpop.f32.mrb[0].mxu0
  %v890 = vadd.f32 %v787, %v889
  %v891 = vpop.f32.mrb[0].mxu0
  %892 = vdwg.mxu0
  %893 = vmatprep.subr.mxu0 0.0
  %894 = vmatpush1.msra.mxu0 %v659
  %895 = vmatprep.subr.mxu0 0.0
  %896 = vmatpush1.msra.mxu0 %v660
  %897 = vmatprep.subr.mxu0 0.0
  %898 = vmatpush1.msra.mxu0 %v661
  %899 = vmatprep.subr.mxu0 0.0
  %900 = vmatpush1.msra.mxu0 %v662
  %901 = vmatprep.subr.mxu0 0.0
  %902 = vmatpush1.msra.mxu0 %v663
  %903 = vmatprep.subr.mxu0 0.0
  %904 = vmatpush1.msra.mxu0 %v664
  %905 = vmatprep.subr.mxu0 0.0
  %906 = vmatpush1.msra.mxu0 %v665
  %907 = vmatprep.subr.mxu0 0.0
  %908 = vmatpush1.msra.mxu0 %v666
  %909 = vmatprep.subr.mxu0 0.0
  %910 = vmatpush1.msra.mxu0 %v667
  %911 = vmatprep.subr.mxu0 0.0
  %912 = vmatpush1.msra.mxu0 %v668
  %913 = vmatprep.subr.mxu0 0.0
  %914 = vmatpush1.msra.mxu0 %v669
  %915 = vmatprep.subr.mxu0 0.0
  %916 = vmatpush1.msra.mxu0 %v670
  %917 = vmatprep.subr.mxu0 0.0
  %918 = vmatpush1.msra.mxu0 %v671
  %919 = vmatprep.subr.mxu0 0.0
  %920 = vmatpush1.msra.mxu0 %v672
  %921 = vmatprep.subr.mxu0 0.0
  %922 = vmatpush1.msra.mxu0 %v673
  %923 = vmatprep.subr.mxu0 0.0
  %924 = vmatpush1.msra.mxu0 %v674
  %925 = vmatprep.subr.mxu0 0.0
  %926 = vmatpush1.msra.mxu0 %v675
  %927 = vmatprep.subr.mxu0 0.0
  %928 = vmatpush1.msra.mxu0 %v676
  %929 = vmatprep.subr.mxu0 0.0
  %930 = vmatpush1.msra.mxu0 %v677
  %931 = vmatprep.subr.mxu0 0.0
  %932 = vmatpush1.msra.mxu0 %v678
  %933 = vmatprep.subr.mxu0 0.0
  %934 = vmatpush1.msra.mxu0 %v679
  %935 = vmatprep.subr.mxu0 0.0
  %936 = vmatpush1.msra.mxu0 %v680
  %937 = vmatprep.subr.mxu0 0.0
  %938 = vmatpush1.msra.mxu0 %v681
  %939 = vmatprep.subr.mxu0 0.0
  %940 = vmatpush1.msra.mxu0 %v682
  %941 = vmatprep.subr.mxu0 0.0
  %942 = vmatpush1.msra.mxu0 %v683
  %943 = vmatprep.subr.mxu0 0.0
  %944 = vmatpush1.msra.mxu0 %v684
  %945 = vmatprep.subr.mxu0 0.0
  %946 = vmatpush1.msra.mxu0 %v685
  %947 = vmatprep.subr.mxu0 0.0
  %948 = vmatpush1.msra.mxu0 %v686
  %949 = vmatprep.subr.mxu0 0.0
  %950 = vmatpush1.msra.mxu0 %v687
  %951 = vmatprep.subr.mxu0 0.0
  %952 = vmatpush1.msra.mxu0 %v688
  %953 = vmatprep.subr.mxu0 0.0
  %954 = vmatpush1.msra.mxu0 %v689
  %955 = vmatprep.subr.mxu0 0.0
  %956 = vmatpush1.msra.mxu0 %v690
  %957 = vmatprep.mubr.f32.mxu0 %v439
  %958 = vmatmul.mubr.f32.gmra.mrb[0].mxu0 %v437
  %v959 = vpop.f32.mrb[0].mxu0
  %v960 = vadd.f32 %v855, %v959
  %v961 = vpop.f32.mrb[0].mxu0
  %962 = vmatprep.mubr.f32.mxu0 %v445
  %963 = vmatmul.mubr.f32.gmra.mrb[0].mxu0 %v443
  %v964 = vpop.f32.mrb[0].mxu0
  %v965 = vadd.f32 %v860, %v964
  %v966 = vpop.f32.mrb[0].mxu0
  %967 = vmatprep.mubr.f32.mxu0 %v451
  %968 = vmatmul.mubr.f32.gmra.mrb[0].mxu0 %v449
  %v969 = vpop.f32.mrb[0].mxu0
  %v970 = vadd.f32 %v865, %v969
  %v971 = vpop.f32.mrb[0].mxu0
  %972 = vmatprep.mubr.f32.mxu0 %v457
  %973 = vmatmul.mubr.f32.gmra.mrb[0].mxu0 %v455
  %v974 = vpop.f32.mrb[0].mxu0
  %v975 = vadd.f32 %v870, %v974
  %v976 = vpop.f32.mrb[0].mxu0
  %977 = vmatprep.mubr.f32.mxu0 %v463
  %978 = vmatmul.mubr.f32.gmra.mrb[0].mxu0 %v461
  %v979 = vpop.f32.mrb[0].mxu0
  %v980 = vadd.f32 %v875, %v979
  %v981 = vpop.f32.mrb[0].mxu0
  %982 = vmatprep.mubr.f32.mxu0 %v469
  %983 = vmatmul.mubr.f32.gmra.mrb[0].mxu0 %v467
  %v984 = vpop.f32.mrb[0].mxu0
  %v985 = vadd.f32 %v880, %v984
  %v986 = vpop.f32.mrb[0].mxu0
  %987 = vmatprep.mubr.f32.mxu0 %v475
  %988 = vmatmul.mubr.f32.gmra.mrb[0].mxu0 %v473
  %v989 = vpop.f32.mrb[0].mxu0
  %v990 = vadd.f32 %v885, %v989
  %v991 = vpop.f32.mrb[0].mxu0
  %992 = vmatprep.mubr.f32.mxu0 %v481
  %993 = vmatmul.mubr.f32.gmra.mrb[0].mxu0 %v479
  %v994 = vpop.f32.mrb[0].mxu0
  %v995 = vadd.f32 %v890, %v994
  %v996 = vpop.f32.mrb[0].mxu0
  %997 = vdwg.mxu0
  %998 = vmatprep.subr.mxu0 0.0
  %999 = vmatpush1.msra.mxu0 %v691
  %1000 = vmatprep.subr.mxu0 0.0
  %1001 = vmatpush1.msra.mxu0 %v692
  %1002 = vmatprep.subr.mxu0 0.0
  %1003 = vmatpush1.msra.mxu0 %v693
  %1004 = vmatprep.subr.mxu0 0.0
  %1005 = vmatpush1.msra.mxu0 %v694
  %1006 = vmatprep.subr.mxu0 0.0
  %1007 = vmatpush1.msra.mxu0 %v695
  %1008 = vmatprep.subr.mxu0 0.0
  %1009 = vmatpush1.msra.mxu0 %v696
  %1010 = vmatprep.subr.mxu0 0.0
  %1011 = vmatpush1.msra.mxu0 %v697
  %1012 = vmatprep.subr.mxu0 0.0
  %1013 = vmatpush1.msra.mxu0 %v698
  %1014 = vmatprep.subr.mxu0 0.0
  %1015 = vmatpush1.msra.mxu0 %v699
  %1016 = vmatprep.subr.mxu0 0.0
  %1017 = vmatpush1.msra.mxu0 %v700
  %1018 = vmatprep.subr.mxu0 0.0
  %1019 = vmatpush1.msra.mxu0 %v701
  %1020 = vmatprep.subr.mxu0 0.0
  %1021 = vmatpush1.msra.mxu0 %v702
  %1022 = vmatprep.subr.mxu0 0.0
  %1023 = vmatpush1.msra.mxu0 %v703
  %1024 = vmatprep.subr.mxu0 0.0
  %1025 = vmatpush1.msra.mxu0 %v704
  %1026 = vmatprep.subr.mxu0 0.0
  %1027 = vmatpush1.msra.mxu0 %v705
  %1028 = vmatprep.subr.mxu0 0.0
  %1029 = vmatpush1.msra.mxu0 %v706
  %1030 = vmatprep.subr.mxu0 0.0
  %1031 = vmatpush1.msra.mxu0 %v707
  %1032 = vmatprep.subr.mxu0 0.0
  %1033 = vmatpush1.msra.mxu0 %v708
  %1034 = vmatprep.subr.mxu0 0.0
  %1035 = vmatpush1.msra.mxu0 %v709
  %1036 = vmatprep.subr.mxu0 0.0
  %1037 = vmatpush1.msra.mxu0 %v710
  %1038 = vmatprep.subr.mxu0 0.0
  %1039 = vmatpush1.msra.mxu0 %v711
  %1040 = vmatprep.subr.mxu0 0.0
  %1041 = vmatpush1.msra.mxu0 %v712
  %1042 = vmatprep.subr.mxu0 0.0
  %1043 = vmatpush1.msra.mxu0 %v713
  %1044 = vmatprep.subr.mxu0 0.0
  %1045 = vmatpush1.msra.mxu0 %v714
  %1046 = vmatprep.subr.mxu0 0.0
  %1047 = vmatpush1.msra.mxu0 %v715
  %1048 = vmatprep.subr.mxu0 0.0
  %1049 = vmatpush1.msra.mxu0 %v716
  %1050 = vmatprep.subr.mxu0 0.0
  %1051 = vmatpush1.msra.mxu0 %v717
  %1052 = vmatprep.subr.mxu0 0.0
  %1053 = vmatpush1.msra.mxu0 %v718
  %1054 = vmatprep.subr.mxu0 0.0
  %1055 = vmatpush1.msra.mxu0 %v719
  %1056 = vmatprep.subr.mxu0 0.0
  %1057 = vmatpush1.msra.mxu0 %v720
  %1058 = vmatprep.subr.mxu0 0.0
  %1059 = vmatpush1.msra.mxu0 %v721
  %1060 = vmatprep.subr.mxu0 0.0
  %1061 = vmatpush1.msra.mxu0 %v722
  %1062 = vmatprep.mubr.f32.mxu0 %v487
  %1063 = vmatmul.mubr.f32.gmra.mrb[0].mxu0 %v485
  %v1064 = vpop.f32.mrb[0].mxu0
  %v1065 = vadd.f32 %v960, %v1064
  %v1066 = vpop.f32.mrb[0].mxu0
  %1067 = vmatprep.mubr.f32.mxu0 %v493
  %1068 = vmatmul.mubr.f32.gmra.mrb[0].mxu0 %v491
  %v1069 = vpop.f32.mrb[0].mxu0
  %v1070 = vadd.f32 %v965, %v1069
  %v1071 = vpop.f32.mrb[0].mxu0
  %1072 = vmatprep.mubr.f32.mxu0 %v499
  %1073 = vmatmul.mubr.f32.gmra.mrb[0].mxu0 %v497
  %v1074 = vpop.f32.mrb[0].mxu0
  %v1075 = vadd.f32 %v970, %v1074
  %v1076 = vpop.f32.mrb[0].mxu0
  %1077 = vmatprep.mubr.f32.mxu0 %v505
  %1078 = vmatmul.mubr.f32.gmra.mrb[0].mxu0 %v503
  %v1079 = vpop.f32.mrb[0].mxu0
  %v1080 = vadd.f32 %v975, %v1079
  %v1081 = vpop.f32.mrb[0].mxu0
  %1082 = vmatprep.mubr.f32.mxu0 %v511
  %1083 = vmatmul.mubr.f32.gmra.mrb[0].mxu0 %v509
  %v1084 = vpop.f32.mrb[0].mxu0
  %v1085 = vadd.f32 %v980, %v1084
  %v1086 = vpop.f32.mrb[0].mxu0
  %1087 = vmatprep.mubr.f32.mxu0 %v517
  %1088 = vmatmul.mubr.f32.gmra.mrb[0].mxu0 %v515
  %v1089 = vpop.f32.mrb[0].mxu0
  %v1090 = vadd.f32 %v985, %v1089
  %v1091 = vpop.f32.mrb[0].mxu0
  %1092 = vmatprep.mubr.f32.mxu0 %v523
  %1093 = vmatmul.mubr.f32.gmra.mrb[0].mxu0 %v521
  %v1094 = vpop.f32.mrb[0].mxu0
  %v1095 = vadd.f32 %v990, %v1094
  %v1096 = vpop.f32.mrb[0].mxu0
  %1097 = vmatprep.mubr.f32.mxu0 %v529
  %1098 = vmatmul.mubr.f32.gmra.mrb[0].mxu0 %v527
  %v1099 = vpop.f32.mrb[0].mxu0
  %v1100 = vadd.f32 %v995, %v1099
  %v1101 = vpop.f32.mrb[0].mxu0
  %1102 = vdwg.mxu0
  %1103 = vmatprep.subr.mxu0 0.0
  %1104 = vmatpush1.msra.mxu0 %v723
  %1105 = vmatprep.subr.mxu0 0.0
  %1106 = vmatpush1.msra.mxu0 %v724
  %1107 = vmatprep.subr.mxu0 0.0
  %1108 = vmatpush1.msra.mxu0 %v725
  %1109 = vmatprep.subr.mxu0 0.0
  %1110 = vmatpush1.msra.mxu0 %v726
  %1111 = vmatprep.subr.mxu0 0.0
  %1112 = vmatpush1.msra.mxu0 %v727
  %1113 = vmatprep.subr.mxu0 0.0
  %1114 = vmatpush1.msra.mxu0 %v728
  %1115 = vmatprep.subr.mxu0 0.0
  %1116 = vmatpush1.msra.mxu0 %v729
  %1117 = vmatprep.subr.mxu0 0.0
  %1118 = vmatpush1.msra.mxu0 %v730
  %1119 = vmatprep.subr.mxu0 0.0
  %1120 = vmatpush1.msra.mxu0 %v731
  %1121 = vmatprep.subr.mxu0 0.0
  %1122 = vmatpush1.msra.mxu0 %v732
  %1123 = vmatprep.subr.mxu0 0.0
  %1124 = vmatpush1.msra.mxu0 %v733
  %1125 = vmatprep.subr.mxu0 0.0
  %1126 = vmatpush1.msra.mxu0 %v734
  %1127 = vmatprep.subr.mxu0 0.0
  %1128 = vmatpush1.msra.mxu0 %v735
  %1129 = vmatprep.subr.mxu0 0.0
  %1130 = vmatpush1.msra.mxu0 %v736
  %1131 = vmatprep.subr.mxu0 0.0
  %1132 = vmatpush1.msra.mxu0 %v737
  %1133 = vmatprep.subr.mxu0 0.0
  %1134 = vmatpush1.msra.mxu0 %v738
  %1135 = vmatprep.subr.mxu0 0.0
  %1136 = vmatpush1.msra.mxu0 %v739
  %1137 = vmatprep.subr.mxu0 0.0
  %1138 = vmatpush1.msra.mxu0 %v740
  %1139 = vmatprep.subr.mxu0 0.0
  %1140 = vmatpush1.msra.mxu0 %v741
  %1141 = vmatprep.subr.mxu0 0.0
  %1142 = vmatpush1.msra.mxu0 %v742
  %1143 = vmatprep.subr.mxu0 0.0
  %1144 = vmatpush1.msra.mxu0 %v743
  %1145 = vmatprep.subr.mxu0 0.0
  %1146 = vmatpush1.msra.mxu0 %v744
  %1147 = vmatprep.subr.mxu0 0.0
  %1148 = vmatpush1.msra.mxu0 %v745
  %1149 = vmatprep.subr.mxu0 0.0
  %1150 = vmatpush1.msra.mxu0 %v746
  %1151 = vmatprep.subr.mxu0 0.0
  %1152 = vmatpush1.msra.mxu0 %v747
  %1153 = vmatprep.subr.mxu0 0.0
  %1154 = vmatpush1.msra.mxu0 %v748
  %1155 = vmatprep.subr.mxu0 0.0
  %1156 = vmatpush1.msra.mxu0 %v749
  %1157 = vmatprep.subr.mxu0 0.0
  %1158 = vmatpush1.msra.mxu0 %v750
  %1159 = vmatprep.subr.mxu0 0.0
  %1160 = vmatpush1.msra.mxu0 %v751
  %1161 = vmatprep.subr.mxu0 0.0
  %1162 = vmatpush1.msra.mxu0 %v752
  %1163 = vmatprep.subr.mxu0 0.0
  %1164 = vmatpush1.msra.mxu0 %v753
  %1165 = vmatprep.subr.mxu0 0.0
  %1166 = vmatpush1.msra.mxu0 %v754
  %1167 = vmatprep.mubr.f32.mxu0 %v535
  %1168 = vmatmul.mubr.f32.gmra.mrb[0].mxu0 %v533
  %v1169 = vpop.f32.mrb[0].mxu0
  %v1170 = vadd.f32 %v1065, %v1169
  %v1171 = vpop.f32.mrb[0].mxu0
  %1172 = vmatprep.mubr.f32.mxu0 %v541
  %1173 = vmatmul.mubr.f32.gmra.mrb[0].mxu0 %v539
  %v1174 = vpop.f32.mrb[0].mxu0
  %v1175 = vadd.f32 %v1070, %v1174
  %v1176 = vpop.f32.mrb[0].mxu0
  %1177 = vmatprep.mubr.f32.mxu0 %v547
  %1178 = vmatmul.mubr.f32.gmra.mrb[0].mxu0 %v545
  %v1179 = vpop.f32.mrb[0].mxu0
  %v1180 = vadd.f32 %v1075, %v1179
  %v1181 = vpop.f32.mrb[0].mxu0
  %1182 = vmatprep.mubr.f32.mxu0 %v553
  %1183 = vmatmul.mubr.f32.gmra.mrb[0].mxu0 %v551
  %v1184 = vpop.f32.mrb[0].mxu0
  %v1185 = vadd.f32 %v1080, %v1184
  %v1186 = vpop.f32.mrb[0].mxu0
  %1187 = vmatprep.mubr.f32.mxu0 %v559
  %1188 = vmatmul.mubr.f32.gmra.mrb[0].mxu0 %v557
  %v1189 = vpop.f32.mrb[0].mxu0
  %v1190 = vadd.f32 %v1085, %v1189
  %v1191 = vpop.f32.mrb[0].mxu0
  %1192 = vmatprep.mubr.f32.mxu0 %v565
  %1193 = vmatmul.mubr.f32.gmra.mrb[0].mxu0 %v563
  %v1194 = vpop.f32.mrb[0].mxu0
  %v1195 = vadd.f32 %v1090, %v1194
  %v1196 = vpop.f32.mrb[0].mxu0
  %1197 = vmatprep.mubr.f32.mxu0 %v571
  %1198 = vmatmul.mubr.f32.gmra.mrb[0].mxu0 %v569
  %v1199 = vpop.f32.mrb[0].mxu0
  %v1200 = vadd.f32 %v1095, %v1199
  %v1201 = vpop.f32.mrb[0].mxu0
  %1202 = vmatprep.mubr.f32.mxu0 %v577
  %1203 = vmatmul.mubr.f32.gmra.mrb[0].mxu0 %v575
  %v1204 = vpop.f32.mrb[0].mxu0
  %v1205 = vadd.f32 %v1100, %v1204
  %v1206 = vpop.f32.mrb[0].mxu0
  %1207 = vdwg.mxu0
  %1208 = vmatprep.subr.mxu0 0.0
  %1209 = vmatpush1.msra.mxu0 %v755
  %1210 = vmatprep.subr.mxu0 0.0
  %1211 = vmatpush1.msra.mxu0 %v756
  %1212 = vmatprep.subr.mxu0 0.0
  %1213 = vmatpush1.msra.mxu0 %v757
  %1214 = vmatprep.subr.mxu0 0.0
  %1215 = vmatpush1.msra.mxu0 %v758
  %1216 = vmatprep.subr.mxu0 0.0
  %1217 = vmatpush1.msra.mxu0 %v759
  %1218 = vmatprep.subr.mxu0 0.0
  %1219 = vmatpush1.msra.mxu0 %v760
  %1220 = vmatprep.subr.mxu0 0.0
  %1221 = vmatpush1.msra.mxu0 %v761
  %1222 = vmatprep.subr.mxu0 0.0
  %1223 = vmatpush1.msra.mxu0 %v762
  %1224 = vmatprep.subr.mxu0 0.0
  %1225 = vmatpush1.msra.mxu0 %v763
  %1226 = vmatprep.subr.mxu0 0.0
  %1227 = vmatpush1.msra.mxu0 %v764
  %1228 = vmatprep.subr.mxu0 0.0
  %1229 = vmatpush1.msra.mxu0 %v765
  %1230 = vmatprep.subr.mxu0 0.0
  %1231 = vmatpush1.msra.mxu0 %v766
  %1232 = vmatprep.subr.mxu0 0.0
  %1233 = vmatpush1.msra.mxu0 %v767
  %1234 = vmatprep.subr.mxu0 0.0
  %1235 = vmatpush1.msra.mxu0 %v768
  %1236 = vmatprep.subr.mxu0 0.0
  %1237 = vmatpush1.msra.mxu0 %v769
  %1238 = vmatprep.subr.mxu0 0.0
  %1239 = vmatpush1.msra.mxu0 %v770
  %1240 = vmatprep.subr.mxu0 0.0
  %1241 = vmatpush1.msra.mxu0 %v771
  %1242 = vmatprep.subr.mxu0 0.0
  %1243 = vmatpush1.msra.mxu0 %v772
  %1244 = vmatprep.subr.mxu0 0.0
  %1245 = vmatpush1.msra.mxu0 %v773
  %1246 = vmatprep.subr.mxu0 0.0
  %1247 = vmatpush1.msra.mxu0 %v774
  %1248 = vmatprep.subr.mxu0 0.0
  %1249 = vmatpush1.msra.mxu0 %v775
  %1250 = vmatprep.subr.mxu0 0.0
  %1251 = vmatpush1.msra.mxu0 %v776
  %1252 = vmatprep.subr.mxu0 0.0
  %1253 = vmatpush1.msra.mxu0 %v777
  %1254 = vmatprep.subr.mxu0 0.0
  %1255 = vmatpush1.msra.mxu0 %v778
  %1256 = vmatprep.subr.mxu0 0.0
  %1257 = vmatpush1.msra.mxu0 %v779
  %1258 = vmatprep.subr.mxu0 0.0
  %1259 = vmatpush1.msra.mxu0 %v780
  %1260 = vmatprep.subr.mxu0 0.0
  %1261 = vmatpush1.msra.mxu0 %v781
  %1262 = vmatprep.subr.mxu0 0.0
  %1263 = vmatpush1.msra.mxu0 %v782
  %1264 = vmatprep.subr.mxu0 0.0
  %1265 = vmatpush1.msra.mxu0 %v783
  %1266 = vmatprep.subr.mxu0 0.0
  %1267 = vmatpush1.msra.mxu0 %v784
  %1268 = vmatprep.subr.mxu0 0.0
  %1269 = vmatpush1.msra.mxu0 %v785
  %1270 = vmatprep.subr.mxu0 0.0
  %1271 = vmatpush1.msra.mxu0 %v786
  %1272 = vmatprep.mubr.f32.mxu0 %v583
  %1273 = vmatmul.mubr.f32.gmra.mrb[0].mxu0 %v581
  %v1274 = vpop.f32.mrb[0].mxu0
  %v1275 = vadd.f32 %v1170, %v1274
  %v1276 = vpop.f32.mrb[0].mxu0
  %1277 = vmatprep.mubr.f32.mxu0 %v589
  %1278 = vmatmul.mubr.f32.gmra.mrb[0].mxu0 %v587
  %v1279 = vpop.f32.mrb[0].mxu0
  %v1280 = vadd.f32 %v1175, %v1279
  %v1281 = vpop.f32.mrb[0].mxu0
  %1282 = vmatprep.mubr.f32.mxu0 %v595
  %1283 = vmatmul.mubr.f32.gmra.mrb[0].mxu0 %v593
  %v1284 = vpop.f32.mrb[0].mxu0
  %v1285 = vadd.f32 %v1180, %v1284
  %v1286 = vpop.f32.mrb[0].mxu0
  %1287 = vmatprep.mubr.f32.mxu0 %v601
  %1288 = vmatmul.mubr.f32.gmra.mrb[0].mxu0 %v599
  %v1289 = vpop.f32.mrb[0].mxu0
  %v1290 = vadd.f32 %v1185, %v1289
  %v1291 = vpop.f32.mrb[0].mxu0
  %1292 = vmatprep.mubr.f32.mxu0 %v607
  %1293 = vmatmul.mubr.f32.gmra.mrb[0].mxu0 %v605
  %v1294 = vpop.f32.mrb[0].mxu0
  %v1295 = vadd.f32 %v1190, %v1294
  %v1296 = vpop.f32.mrb[0].mxu0
  %1297 = vmatprep.mubr.f32.mxu0 %v613
  %1298 = vmatmul.mubr.f32.gmra.mrb[0].mxu0 %v611
  %v1299 = vpop.f32.mrb[0].mxu0
  %v1300 = vadd.f32 %v1195, %v1299
  %v1301 = vpop.f32.mrb[0].mxu0
  %1302 = vmatprep.mubr.f32.mxu0 %v619
  %1303 = vmatmul.mubr.f32.gmra.mrb[0].mxu0 %v617
  %v1304 = vpop.f32.mrb[0].mxu0
  %v1305 = vadd.f32 %v1200, %v1304
  %v1306 = vpop.f32.mrb[0].mxu0
  %1307 = vmatprep.mubr.f32.mxu0 %v625
  %1308 = vmatmul.mubr.f32.gmra.mrb[0].mxu0 %v623
  %v1309 = vpop.f32.mrb[0].mxu0
  %v1310 = vadd.f32 %v1205, %v1309
  %v1311 = vpop.f32.mrb[0].mxu0
  %1312 = vdwg.mxu0
  %s1313 = smul.u32 160, 1
  %s1314 = sshll.u32 %s1313, 4
  %1315 = dma.done %s37, %s1314
  %s1316 = smul.u32 640, 1
  %s1317 = sshll.u32 %s1316, 4
  %1318 = dma.done %s51, %s1317
  %v1319 = vld [vmem:[#allocation2 + $0x140] sm:$0xff]
  %v1320 = vld [vmem:[#allocation2 + $0x148] sm:$0xff]
  %v1321 = vld [vmem:[#allocation2 + $0x150] sm:$0xff]
  %v1322 = vld [vmem:[#allocation2 + $0x158] sm:$0xff]
  %v1323 = vld [vmem:[#allocation2 + $0x160] sm:$0xff]
  %v1324 = vld [vmem:[#allocation2 + $0x168] sm:$0xff]
  %v1325 = vld [vmem:[#allocation2 + $0x170] sm:$0xff]
  %v1326 = vld [vmem:[#allocation2 + $0x178] sm:$0xff]
  %v1327 = vld [vmem:[#allocation2 + $0x180] sm:$0xff]
  %v1328 = vld [vmem:[#allocation2 + $0x188] sm:$0xff]
  %v1329 = vld [vmem:[#allocation2 + $0x190] sm:$0xff]
  %v1330 = vld [vmem:[#allocation2 + $0x198] sm:$0xff]
  %v1331 = vld [vmem:[#allocation2 + $0x1a0] sm:$0xff]
  %v1332 = vld [vmem:[#allocation2 + $0x1a8] sm:$0xff]
  %v1333 = vld [vmem:[#allocation2 + $0x1b0] sm:$0xff]
  %v1334 = vld [vmem:[#allocation2 + $0x1b8] sm:$0xff]
  %v1335 = vld [vmem:[#allocation2 + $0x1c0] sm:$0xff]
  %v1336 = vld [vmem:[#allocation2 + $0x1c8] sm:$0xff]
  %v1337 = vld [vmem:[#allocation2 + $0x1d0] sm:$0xff]
  %v1338 = vld [vmem:[#allocation2 + $0x1d8] sm:$0xff]
  %vm1339 = vcmask 523264
  %v1341 = vsel %vm1339, %v1319, 0
  %v1344 = vsel %vm1339, %v1320, 0
  %v1347 = vsel %vm1339, %v1321, 0
  %v1350 = vsel %vm1339, %v1322, 0
  %v1353 = vsel %vm1339, %v1323, 0
  %v1356 = vsel %vm1339, %v1324, 0
  %v1359 = vsel %vm1339, %v1325, 0
  %v1362 = vsel %vm1339, %v1326, 0
  %v1365 = vsel %vm1339, %v1327, 0
  %v1368 = vsel %vm1339, %v1328, 0
  %v1371 = vsel %vm1339, %v1329, 0
  %v1374 = vsel %vm1339, %v1330, 0
  %v1377 = vsel %vm1339, %v1331, 0
  %v1380 = vsel %vm1339, %v1332, 0
  %v1383 = vsel %vm1339, %v1333, 0
  %v1386 = vsel %vm1339, %v1334, 0
  %v1389 = vsel %vm1339, %v1335, 0
  %v1392 = vsel %vm1339, %v1336, 0
  %v1395 = vsel %vm1339, %v1337, 0
  %v1398 = vsel %vm1339, %v1338, 0
  %1400 = vmatprep.subr.mxu0 0.0
  %1401 = vmatpush1.msra.mxu0 %v1275
  %1402 = vmatprep.subr.mxu0 0.0
  %1403 = vmatpush1.msra.mxu0 %v1280
  %1404 = vmatprep.subr.mxu0 0.0
  %1405 = vmatpush1.msra.mxu0 %v1285
  %1406 = vmatprep.subr.mxu0 0.0
  %1407 = vmatpush1.msra.mxu0 %v1290
  %1408 = vmatprep.subr.mxu0 0.0
  %1409 = vmatpush1.msra.mxu0 %v1295
  %1410 = vmatprep.subr.mxu0 0.0
  %1411 = vmatpush1.msra.mxu0 %v1300
  %1412 = vmatprep.subr.mxu0 0.0
  %1413 = vmatpush1.msra.mxu0 %v1305
  %1414 = vmatprep.subr.mxu0 0.0
  %1415 = vmatpush1.msra.mxu0 %v1310
  %1416 = vmatprep.subr.mxu0 0.0
  %1417 = vmatpush1.msra.mxu0 0.0
  %1418 = vmatprep.subr.mxu0 0.0
  %1419 = vmatpush1.msra.mxu0 0.0
  %1420 = vmatprep.subr.mxu0 0.0
  %1421 = vmatpush1.msra.mxu0 0.0
  %1422 = vmatprep.subr.mxu0 0.0
  %1423 = vmatpush1.msra.mxu0 0.0
  %1424 = vmatprep.subr.mxu0 0.0
  %1425 = vmatpush1.msra.mxu0 0.0
  %1426 = vmatprep.subr.mxu0 0.0
  %1427 = vmatpush1.msra.mxu0 0.0
  %1428 = vmatprep.subr.mxu0 0.0
  %1429 = vmatpush1.msra.mxu0 0.0
  %1430 = vmatprep.subr.mxu0 0.0
  %1431 = vmatpush1.msra.mxu0 0.0
  %1432 = vmatprep.subr.mxu0 0.0
  %1433 = vmatpush1.msra.mxu0 0.0
  %1434 = vmatprep.subr.mxu0 0.0
  %1435 = vmatpush1.msra.mxu0 0.0
  %1436 = vmatprep.subr.mxu0 0.0
  %1437 = vmatpush1.msra.mxu0 0.0
  %1438 = vmatprep.subr.mxu0 0.0
  %1439 = vmatpush1.msra.mxu0 0.0
  %1440 = vmatprep.subr.mxu0 0.0
  %1441 = vmatpush1.msra.mxu0 0.0
  %1442 = vmatprep.subr.mxu0 0.0
  %1443 = vmatpush1.msra.mxu0 0.0
  %1444 = vmatprep.subr.mxu0 0.0
  %1445 = vmatpush1.msra.mxu0 0.0
  %1446 = vmatprep.subr.mxu0 0.0
  %1447 = vmatpush1.msra.mxu0 0.0
  %1448 = vmatprep.subr.mxu0 0.0
  %1449 = vmatpush1.msra.mxu0 0.0
  %1450 = vmatprep.subr.mxu0 0.0
  %1451 = vmatpush1.msra.mxu0 0.0
  %1452 = vmatprep.subr.mxu0 0.0
  %1453 = vmatpush1.msra.mxu0 0.0
  %1454 = vmatprep.subr.mxu0 0.0
  %1455 = vmatpush1.msra.mxu0 0.0
  %1456 = vmatprep.subr.mxu0 0.0
  %1457 = vmatpush1.msra.mxu0 0.0
  %1458 = vmatprep.subr.mxu0 0.0
  %1459 = vmatpush1.msra.mxu0 0.0
  %1460 = vmatprep.subr.mxu0 0.0
  %1461 = vmatpush1.msra.mxu0 0.0
  %1462 = vmatprep.subr.mxu0 0.0
  %1463 = vmatpush1.msra.mxu0 0.0
  %1464 = vmatprep.mubr.f32.mxu0 0.0
  %1465 = vmatmul.mubr.f32.gmra.mrb[0].mxu0 %v1341
  %v1466 = vpop.f32.mrb[0].mxu0
  %v1467 = vadd.f32 0.0, %v1466
  %v1468 = vpop.f32.mrb[0].mxu0
  %1469 = vmatprep.mubr.f32.mxu0 0.0
  %1470 = vmatmul.mubr.f32.gmra.mrb[0].mxu0 %v1344
  %v1471 = vpop.f32.mrb[0].mxu0
  %v1472 = vadd.f32 0.0, %v1471
  %v1473 = vpop.f32.mrb[0].mxu0
  %1474 = vmatprep.mubr.f32.mxu0 0.0
  %1475 = vmatmul.mubr.f32.gmra.mrb[0].mxu0 %v1347
  %v1476 = vpop.f32.mrb[0].mxu0
  %v1477 = vadd.f32 0.0, %v1476
  %v1478 = vpop.f32.mrb[0].mxu0
  %1479 = vmatprep.mubr.f32.mxu0 0.0
  %1480 = vmatmul.mubr.f32.gmra.mrb[0].mxu0 %v1350
  %v1481 = vpop.f32.mrb[0].mxu0
  %v1482 = vadd.f32 0.0, %v1481
  %v1483 = vpop.f32.mrb[0].mxu0
  %1484 = vmatprep.mubr.f32.mxu0 0.0
  %1485 = vmatmul.mubr.f32.gmra.mrb[0].mxu0 %v1353
  %v1486 = vpop.f32.mrb[0].mxu0
  %v1487 = vadd.f32 0.0, %v1486
  %v1488 = vpop.f32.mrb[0].mxu0
  %1489 = vmatprep.mubr.f32.mxu0 0.0
  %1490 = vmatmul.mubr.f32.gmra.mrb[0].mxu0 %v1356
  %v1491 = vpop.f32.mrb[0].mxu0
  %v1492 = vadd.f32 0.0, %v1491
  %v1493 = vpop.f32.mrb[0].mxu0
  %1494 = vmatprep.mubr.f32.mxu0 0.0
  %1495 = vmatmul.mubr.f32.gmra.mrb[0].mxu0 %v1359
  %v1496 = vpop.f32.mrb[0].mxu0
  %v1497 = vadd.f32 0.0, %v1496
  %v1498 = vpop.f32.mrb[0].mxu0
  %1499 = vmatprep.mubr.f32.mxu0 0.0
  %1500 = vmatmul.mubr.f32.gmra.mrb[0].mxu0 %v1362
  %v1501 = vpop.f32.mrb[0].mxu0
  %v1502 = vadd.f32 0.0, %v1501
  %v1503 = vpop.f32.mrb[0].mxu0
  %1504 = vmatprep.mubr.f32.mxu0 0.0
  %1505 = vmatmul.mubr.f32.gmra.mrb[0].mxu0 %v1365
  %v1506 = vpop.f32.mrb[0].mxu0
  %v1507 = vadd.f32 0.0, %v1506
  %v1508 = vpop.f32.mrb[0].mxu0
  %1509 = vmatprep.mubr.f32.mxu0 0.0
  %1510 = vmatmul.mubr.f32.gmra.mrb[0].mxu0 %v1368
  %v1511 = vpop.f32.mrb[0].mxu0
  %v1512 = vadd.f32 0.0, %v1511
  %v1513 = vpop.f32.mrb[0].mxu0
  %1514 = vmatprep.mubr.f32.mxu0 0.0
  %1515 = vmatmul.mubr.f32.gmra.mrb[0].mxu0 %v1371
  %v1516 = vpop.f32.mrb[0].mxu0
  %v1517 = vadd.f32 0.0, %v1516
  %v1518 = vpop.f32.mrb[0].mxu0
  %1519 = vmatprep.mubr.f32.mxu0 0.0
  %1520 = vmatmul.mubr.f32.gmra.mrb[0].mxu0 %v1374
  %v1521 = vpop.f32.mrb[0].mxu0
  %v1522 = vadd.f32 0.0, %v1521
  %v1523 = vpop.f32.mrb[0].mxu0
  %1524 = vmatprep.mubr.f32.mxu0 0.0
  %1525 = vmatmul.mubr.f32.gmra.mrb[0].mxu0 %v1377
  %v1526 = vpop.f32.mrb[0].mxu0
  %v1527 = vadd.f32 0.0, %v1526
  %v1528 = vpop.f32.mrb[0].mxu0
  %1529 = vmatprep.mubr.f32.mxu0 0.0
  %1530 = vmatmul.mubr.f32.gmra.mrb[0].mxu0 %v1380
  %v1531 = vpop.f32.mrb[0].mxu0
  %v1532 = vadd.f32 0.0, %v1531
  %v1533 = vpop.f32.mrb[0].mxu0
  %1534 = vmatprep.mubr.f32.mxu0 0.0
  %1535 = vmatmul.mubr.f32.gmra.mrb[0].mxu0 %v1383
  %v1536 = vpop.f32.mrb[0].mxu0
  %v1537 = vadd.f32 0.0, %v1536
  %v1538 = vpop.f32.mrb[0].mxu0
  %1539 = vmatprep.mubr.f32.mxu0 0.0
  %1540 = vmatmul.mubr.f32.gmra.mrb[0].mxu0 %v1386
  %v1541 = vpop.f32.mrb[0].mxu0
  %v1542 = vadd.f32 0.0, %v1541
  %v1543 = vpop.f32.mrb[0].mxu0
  %1544 = vmatprep.mubr.f32.mxu0 0.0
  %1545 = vmatmul.mubr.f32.gmra.mrb[0].mxu0 %v1389
  %v1546 = vpop.f32.mrb[0].mxu0
  %v1547 = vadd.f32 0.0, %v1546
  %v1548 = vpop.f32.mrb[0].mxu0
  %1549 = vmatprep.mubr.f32.mxu0 0.0
  %1550 = vmatmul.mubr.f32.gmra.mrb[0].mxu0 %v1392
  %v1551 = vpop.f32.mrb[0].mxu0
  %v1552 = vadd.f32 0.0, %v1551
  %v1553 = vpop.f32.mrb[0].mxu0
  %1554 = vmatprep.mubr.f32.mxu0 0.0
  %1555 = vmatmul.mubr.f32.gmra.mrb[0].mxu0 %v1395
  %v1556 = vpop.f32.mrb[0].mxu0
  %v1557 = vadd.f32 0.0, %v1556
  %v1558 = vpop.f32.mrb[0].mxu0
  %1559 = vmatprep.mubr.f32.mxu0 0.0
  %1560 = vmatmul.mubr.f32.gmra.mrb[0].mxu0 %v1398
  %v1561 = vpop.f32.mrb[0].mxu0
  %v1562 = vadd.f32 0.0, %v1561
  %v1563 = vpop.f32.mrb[0].mxu0
  %1564 = vdwg.mxu0
  %v1565 = vld [vmem:[#allocation3 + $0x500] sm:$0xff]
  %v1566 = vld [vmem:[#allocation3 + $0x508] sm:$0xff]
  %v1567 = vld [vmem:[#allocation3 + $0x510] sm:$0xff]
  %v1568 = vld [vmem:[#allocation3 + $0x518] sm:$0xff]
  %v1569 = vld [vmem:[#allocation3 + $0x520] sm:$0xff]
  %v1570 = vld [vmem:[#allocation3 + $0x528] sm:$0xff]
  %v1571 = vld [vmem:[#allocation3 + $0x530] sm:$0xff]
  %v1572 = vld [vmem:[#allocation3 + $0x538] sm:$0xff]
  %v1573 = vld [vmem:[#allocation3 + $0x540] sm:$0xff]
  %v1574 = vld [vmem:[#allocation3 + $0x548] sm:$0xff]
  %v1575 = vld [vmem:[#allocation3 + $0x550] sm:$0xff]
  %v1576 = vld [vmem:[#allocation3 + $0x558] sm:$0xff]
  %v1577 = vld [vmem:[#allocation3 + $0x560] sm:$0xff]
  %v1578 = vld [vmem:[#allocation3 + $0x568] sm:$0xff]
  %v1579 = vld [vmem:[#allocation3 + $0x570] sm:$0xff]
  %v1580 = vld [vmem:[#allocation3 + $0x578] sm:$0xff]
  %v1581 = vld [vmem:[#allocation3 + $0x580] sm:$0xff]
  %v1582 = vld [vmem:[#allocation3 + $0x588] sm:$0xff]
  %v1583 = vld [vmem:[#allocation3 + $0x590] sm:$0xff]
  %v1584 = vld [vmem:[#allocation3 + $0x598] sm:$0xff]
  %v1585 = vld [vmem:[#allocation3 + $0x5a0] sm:$0xff]
  %v1586 = vld [vmem:[#allocation3 + $0x5a8] sm:$0xff]
  %v1587 = vld [vmem:[#allocation3 + $0x5b0] sm:$0xff]
  %v1588 = vld [vmem:[#allocation3 + $0x5b8] sm:$0xff]
  %v1589 = vld [vmem:[#allocation3 + $0x5c0] sm:$0xff]
  %v1590 = vld [vmem:[#allocation3 + $0x5c8] sm:$0xff]
  %v1591 = vld [vmem:[#allocation3 + $0x5d0] sm:$0xff]
  %v1592 = vld [vmem:[#allocation3 + $0x5d8] sm:$0xff]
  %v1593 = vld [vmem:[#allocation3 + $0x5e0] sm:$0xff]
  %v1594 = vld [vmem:[#allocation3 + $0x5e8] sm:$0xff]
  %v1595 = vld [vmem:[#allocation3 + $0x5f0] sm:$0xff]
  %v1596 = vld [vmem:[#allocation3 + $0x5f8] sm:$0xff]
  %v1597 = vld [vmem:[#allocation3 + $0x600] sm:$0xff]
  %v1598 = vld [vmem:[#allocation3 + $0x608] sm:$0xff]
  %v1599 = vld [vmem:[#allocation3 + $0x610] sm:$0xff]
  %v1600 = vld [vmem:[#allocation3 + $0x618] sm:$0xff]
  %v1601 = vld [vmem:[#allocation3 + $0x620] sm:$0xff]
  %v1602 = vld [vmem:[#allocation3 + $0x628] sm:$0xff]
  %v1603 = vld [vmem:[#allocation3 + $0x630] sm:$0xff]
  %v1604 = vld [vmem:[#allocation3 + $0x638] sm:$0xff]
  %v1605 = vld [vmem:[#allocation3 + $0x640] sm:$0xff]
  %v1606 = vld [vmem:[#allocation3 + $0x648] sm:$0xff]
  %v1607 = vld [vmem:[#allocation3 + $0x650] sm:$0xff]
  %v1608 = vld [vmem:[#allocation3 + $0x658] sm:$0xff]
  %v1609 = vld [vmem:[#allocation3 + $0x660] sm:$0xff]
  %v1610 = vld [vmem:[#allocation3 + $0x668] sm:$0xff]
  %v1611 = vld [vmem:[#allocation3 + $0x670] sm:$0xff]
  %v1612 = vld [vmem:[#allocation3 + $0x678] sm:$0xff]
  %v1613 = vld [vmem:[#allocation3 + $0x680] sm:$0xff]
  %v1614 = vld [vmem:[#allocation3 + $0x688] sm:$0xff]
  %v1615 = vld [vmem:[#allocation3 + $0x690] sm:$0xff]
  %v1616 = vld [vmem:[#allocation3 + $0x698] sm:$0xff]
  %v1617 = vld [vmem:[#allocation3 + $0x6a0] sm:$0xff]
  %v1618 = vld [vmem:[#allocation3 + $0x6a8] sm:$0xff]
  %v1619 = vld [vmem:[#allocation3 + $0x6b0] sm:$0xff]
  %v1620 = vld [vmem:[#allocation3 + $0x6b8] sm:$0xff]
  %v1621 = vld [vmem:[#allocation3 + $0x6c0] sm:$0xff]
  %v1622 = vld [vmem:[#allocation3 + $0x6c8] sm:$0xff]
  %v1623 = vld [vmem:[#allocation3 + $0x6d0] sm:$0xff]
  %v1624 = vld [vmem:[#allocation3 + $0x6d8] sm:$0xff]
  %v1625 = vld [vmem:[#allocation3 + $0x6e0] sm:$0xff]
  %v1626 = vld [vmem:[#allocation3 + $0x6e8] sm:$0xff]
  %v1627 = vld [vmem:[#allocation3 + $0x6f0] sm:$0xff]
  %v1628 = vld [vmem:[#allocation3 + $0x6f8] sm:$0xff]
  %v1629 = vld [vmem:[#allocation3 + $0x700] sm:$0xff]
  %v1630 = vld [vmem:[#allocation3 + $0x708] sm:$0xff]
  %v1631 = vld [vmem:[#allocation3 + $0x710] sm:$0xff]
  %v1632 = vld [vmem:[#allocation3 + $0x718] sm:$0xff]
  %v1633 = vld [vmem:[#allocation3 + $0x720] sm:$0xff]
  %v1634 = vld [vmem:[#allocation3 + $0x728] sm:$0xff]
  %v1635 = vld [vmem:[#allocation3 + $0x730] sm:$0xff]
  %v1636 = vld [vmem:[#allocation3 + $0x738] sm:$0xff]
  %v1637 = vld [vmem:[#allocation3 + $0x740] sm:$0xff]
  %v1638 = vld [vmem:[#allocation3 + $0x748] sm:$0xff]
  %v1639 = vld [vmem:[#allocation3 + $0x750] sm:$0xff]
  %v1640 = vld [vmem:[#allocation3 + $0x758] sm:$0xff]
  %v1641 = vld [vmem:[#allocation3 + $0x760] sm:$0xff]
  %v1642 = vld [vmem:[#allocation3 + $0x768] sm:$0xff]
  %v1643 = vld [vmem:[#allocation3 + $0x770] sm:$0xff]
  %v1644 = vld [vmem:[#allocation3 + $0x778] sm:$0xff]
  %v1645 = vld [vmem:[#allocation5 + $0x1] ss:$0 sm:$0xff]
  %1646 = vmatprep.subr.mxu0 0.0
  %1647 = vmatpush1.msra.mxu0 %v1565
  %1648 = vmatprep.subr.mxu0 0.0
  %1649 = vmatpush1.msra.mxu0 %v1566
  %1650 = vmatprep.subr.mxu0 0.0
  %1651 = vmatpush1.msra.mxu0 %v1567
  %1652 = vmatprep.subr.mxu0 0.0
  %1653 = vmatpush1.msra.mxu0 %v1568
  %1654 = vmatprep.subr.mxu0 0.0
  %1655 = vmatpush1.msra.mxu0 %v1569
  %1656 = vmatprep.subr.mxu0 0.0
  %1657 = vmatpush1.msra.mxu0 %v1570
  %1658 = vmatprep.subr.mxu0 0.0
  %1659 = vmatpush1.msra.mxu0 %v1571
  %1660 = vmatprep.subr.mxu0 0.0
  %1661 = vmatpush1.msra.mxu0 %v1572
  %1662 = vmatprep.subr.mxu0 0.0
  %1663 = vmatpush1.msra.mxu0 %v1573
  %1664 = vmatprep.subr.mxu0 0.0
  %1665 = vmatpush1.msra.mxu0 %v1574
  %1666 = vmatprep.subr.mxu0 0.0
  %1667 = vmatpush1.msra.mxu0 %v1575
  %1668 = vmatprep.subr.mxu0 0.0
  %1669 = vmatpush1.msra.mxu0 %v1576
  %1670 = vmatprep.subr.mxu0 0.0
  %1671 = vmatpush1.msra.mxu0 %v1577
  %1672 = vmatprep.subr.mxu0 0.0
  %1673 = vmatpush1.msra.mxu0 %v1578
  %1674 = vmatprep.subr.mxu0 0.0
  %1675 = vmatpush1.msra.mxu0 %v1579
  %1676 = vmatprep.subr.mxu0 0.0
  %1677 = vmatpush1.msra.mxu0 %v1580
  %1678 = vmatprep.subr.mxu0 0.0
  %1679 = vmatpush1.msra.mxu0 %v1581
  %1680 = vmatprep.subr.mxu0 0.0
  %1681 = vmatpush1.msra.mxu0 %v1582
  %1682 = vmatprep.subr.mxu0 0.0
  %1683 = vmatpush1.msra.mxu0 %v1583
  %1684 = vmatprep.subr.mxu0 0.0
  %1685 = vmatpush1.msra.mxu0 %v1584
  %1686 = vmatprep.subr.mxu0 0.0
  %1687 = vmatpush1.msra.mxu0 %v1585
  %1688 = vmatprep.subr.mxu0 0.0
  %1689 = vmatpush1.msra.mxu0 %v1586
  %1690 = vmatprep.subr.mxu0 0.0
  %1691 = vmatpush1.msra.mxu0 %v1587
  %1692 = vmatprep.subr.mxu0 0.0
  %1693 = vmatpush1.msra.mxu0 %v1588
  %1694 = vmatprep.subr.mxu0 0.0
  %1695 = vmatpush1.msra.mxu0 %v1589
  %1696 = vmatprep.subr.mxu0 0.0
  %1697 = vmatpush1.msra.mxu0 %v1590
  %1698 = vmatprep.subr.mxu0 0.0
  %1699 = vmatpush1.msra.mxu0 %v1591
  %1700 = vmatprep.subr.mxu0 0.0
  %1701 = vmatpush1.msra.mxu0 %v1592
  %1702 = vmatprep.subr.mxu0 0.0
  %1703 = vmatpush1.msra.mxu0 %v1593
  %1704 = vmatprep.subr.mxu0 0.0
  %1705 = vmatpush1.msra.mxu0 %v1594
  %1706 = vmatprep.subr.mxu0 0.0
  %1707 = vmatpush1.msra.mxu0 %v1595
  %1708 = vmatprep.subr.mxu0 0.0
  %1709 = vmatpush1.msra.mxu0 %v1596
  %1710 = vmatprep.mubr.f32.mxu0 %v1487
  %1711 = vmatmul.mubr.f32.gmra.mrb[0].mxu0 %v1467
  %v1712 = vpop.f32.mrb[0].mxu0
  %v1713 = vadd.f32 %v1645, %v1712
  %v1714 = vpop.f32.mrb[0].mxu0
  %1715 = vmatprep.mubr.f32.mxu0 %v1492
  %1716 = vmatmul.mubr.f32.gmra.mrb[0].mxu0 %v1472
  %v1717 = vpop.f32.mrb[0].mxu0
  %v1718 = vadd.f32 %v1645, %v1717
  %v1719 = vpop.f32.mrb[0].mxu0
  %1720 = vmatprep.mubr.f32.mxu0 %v1497
  %1721 = vmatmul.mubr.f32.gmra.mrb[0].mxu0 %v1477
  %v1722 = vpop.f32.mrb[0].mxu0
  %v1723 = vadd.f32 %v1645, %v1722
  %v1724 = vpop.f32.mrb[0].mxu0
  %1725 = vmatprep.mubr.f32.mxu0 %v1502
  %1726 = vmatmul.mubr.f32.gmra.mrb[0].mxu0 %v1482
  %v1727 = vpop.f32.mrb[0].mxu0
  %v1728 = vadd.f32 %v1645, %v1727
  %v1729 = vpop.f32.mrb[0].mxu0
  %1730 = vdwg.mxu0
  %1731 = vmatprep.subr.mxu0 0.0
  %1732 = vmatpush1.msra.mxu0 %v1597
  %1733 = vmatprep.subr.mxu0 0.0
  %1734 = vmatpush1.msra.mxu0 %v1598
  %1735 = vmatprep.subr.mxu0 0.0
  %1736 = vmatpush1.msra.mxu0 %v1599
  %1737 = vmatprep.subr.mxu0 0.0
  %1738 = vmatpush1.msra.mxu0 %v1600
  %1739 = vmatprep.subr.mxu0 0.0
  %1740 = vmatpush1.msra.mxu0 %v1601
  %1741 = vmatprep.subr.mxu0 0.0
  %1742 = vmatpush1.msra.mxu0 %v1602
  %1743 = vmatprep.subr.mxu0 0.0
  %1744 = vmatpush1.msra.mxu0 %v1603
  %1745 = vmatprep.subr.mxu0 0.0
  %1746 = vmatpush1.msra.mxu0 %v1604
  %1747 = vmatprep.subr.mxu0 0.0
  %1748 = vmatpush1.msra.mxu0 %v1605
  %1749 = vmatprep.subr.mxu0 0.0
  %1750 = vmatpush1.msra.mxu0 %v1606
  %1751 = vmatprep.subr.mxu0 0.0
  %1752 = vmatpush1.msra.mxu0 %v1607
  %1753 = vmatprep.subr.mxu0 0.0
  %1754 = vmatpush1.msra.mxu0 %v1608
  %1755 = vmatprep.subr.mxu0 0.0
  %1756 = vmatpush1.msra.mxu0 %v1609
  %1757 = vmatprep.subr.mxu0 0.0
  %1758 = vmatpush1.msra.mxu0 %v1610
  %1759 = vmatprep.subr.mxu0 0.0
  %1760 = vmatpush1.msra.mxu0 %v1611
  %1761 = vmatprep.subr.mxu0 0.0
  %1762 = vmatpush1.msra.mxu0 %v1612
  %1763 = vmatprep.subr.mxu0 0.0
  %1764 = vmatpush1.msra.mxu0 %v1613
  %1765 = vmatprep.subr.mxu0 0.0
  %1766 = vmatpush1.msra.mxu0 %v1614
  %1767 = vmatprep.subr.mxu0 0.0
  %1768 = vmatpush1.msra.mxu0 %v1615
  %1769 = vmatprep.subr.mxu0 0.0
  %1770 = vmatpush1.msra.mxu0 %v1616
  %1771 = vmatprep.subr.mxu0 0.0
  %1772 = vmatpush1.msra.mxu0 %v1617
  %1773 = vmatprep.subr.mxu0 0.0
  %1774 = vmatpush1.msra.mxu0 %v1618
  %1775 = vmatprep.subr.mxu0 0.0
  %1776 = vmatpush1.msra.mxu0 %v1619
  %1777 = vmatprep.subr.mxu0 0.0
  %1778 = vmatpush1.msra.mxu0 %v1620
  %1779 = vmatprep.subr.mxu0 0.0
  %1780 = vmatpush1.msra.mxu0 %v1621
  %1781 = vmatprep.subr.mxu0 0.0
  %1782 = vmatpush1.msra.mxu0 %v1622
  %1783 = vmatprep.subr.mxu0 0.0
  %1784 = vmatpush1.msra.mxu0 %v1623
  %1785 = vmatprep.subr.mxu0 0.0
  %1786 = vmatpush1.msra.mxu0 %v1624
  %1787 = vmatprep.subr.mxu0 0.0
  %1788 = vmatpush1.msra.mxu0 %v1625
  %1789 = vmatprep.subr.mxu0 0.0
  %1790 = vmatpush1.msra.mxu0 %v1626
  %1791 = vmatprep.subr.mxu0 0.0
  %1792 = vmatpush1.msra.mxu0 %v1627
  %1793 = vmatprep.subr.mxu0 0.0
  %1794 = vmatpush1.msra.mxu0 %v1628
  %1795 = vmatprep.mubr.f32.mxu0 %v1527
  %1796 = vmatmul.mubr.f32.gmra.mrb[0].mxu0 %v1507
  %v1797 = vpop.f32.mrb[0].mxu0
  %v1798 = vadd.f32 %v1713, %v1797
  %v1799 = vpop.f32.mrb[0].mxu0
  %1800 = vmatprep.mubr.f32.mxu0 %v1532
  %1801 = vmatmul.mubr.f32.gmra.mrb[0].mxu0 %v1512
  %v1802 = vpop.f32.mrb[0].mxu0
  %v1803 = vadd.f32 %v1718, %v1802
  %v1804 = vpop.f32.mrb[0].mxu0
  %1805 = vmatprep.mubr.f32.mxu0 %v1537
  %1806 = vmatmul.mubr.f32.gmra.mrb[0].mxu0 %v1517
  %v1807 = vpop.f32.mrb[0].mxu0
  %v1808 = vadd.f32 %v1723, %v1807
  %v1809 = vpop.f32.mrb[0].mxu0
  %1810 = vmatprep.mubr.f32.mxu0 %v1542
  %1811 = vmatmul.mubr.f32.gmra.mrb[0].mxu0 %v1522
  %v1812 = vpop.f32.mrb[0].mxu0
  %v1813 = vadd.f32 %v1728, %v1812
  %v1814 = vpop.f32.mrb[0].mxu0
  %1815 = vdwg.mxu0
  %1816 = vmatprep.subr.mxu0 0.0
  %1817 = vmatpush1.msra.mxu0 %v1629
  %1818 = vmatprep.subr.mxu0 0.0
  %1819 = vmatpush1.msra.mxu0 %v1630
  %1820 = vmatprep.subr.mxu0 0.0
  %1821 = vmatpush1.msra.mxu0 %v1631
  %1822 = vmatprep.subr.mxu0 0.0
  %1823 = vmatpush1.msra.mxu0 %v1632
  %1824 = vmatprep.subr.mxu0 0.0
  %1825 = vmatpush1.msra.mxu0 %v1633
  %1826 = vmatprep.subr.mxu0 0.0
  %1827 = vmatpush1.msra.mxu0 %v1634
  %1828 = vmatprep.subr.mxu0 0.0
  %1829 = vmatpush1.msra.mxu0 %v1635
  %1830 = vmatprep.subr.mxu0 0.0
  %1831 = vmatpush1.msra.mxu0 %v1636
  %1832 = vmatprep.subr.mxu0 0.0
  %1833 = vmatpush1.msra.mxu0 %v1637
  %1834 = vmatprep.subr.mxu0 0.0
  %1835 = vmatpush1.msra.mxu0 %v1638
  %1836 = vmatprep.subr.mxu0 0.0
  %1837 = vmatpush1.msra.mxu0 %v1639
  %1838 = vmatprep.subr.mxu0 0.0
  %1839 = vmatpush1.msra.mxu0 %v1640
  %1840 = vmatprep.subr.mxu0 0.0
  %1841 = vmatpush1.msra.mxu0 %v1641
  %1842 = vmatprep.subr.mxu0 0.0
  %1843 = vmatpush1.msra.mxu0 %v1642
  %1844 = vmatprep.subr.mxu0 0.0
  %1845 = vmatpush1.msra.mxu0 %v1643
  %1846 = vmatprep.subr.mxu0 0.0
  %1847 = vmatpush1.msra.mxu0 %v1644
  %1848 = vmatprep.subr.mxu0 0.0
  %1849 = vmatpush1.msra.mxu0 0.0
  %1850 = vmatprep.subr.mxu0 0.0
  %1851 = vmatpush1.msra.mxu0 0.0
  %1852 = vmatprep.subr.mxu0 0.0
  %1853 = vmatpush1.msra.mxu0 0.0
  %1854 = vmatprep.subr.mxu0 0.0
  %1855 = vmatpush1.msra.mxu0 0.0
  %1856 = vmatprep.subr.mxu0 0.0
  %1857 = vmatpush1.msra.mxu0 0.0
  %1858 = vmatprep.subr.mxu0 0.0
  %1859 = vmatpush1.msra.mxu0 0.0
  %1860 = vmatprep.subr.mxu0 0.0
  %1861 = vmatpush1.msra.mxu0 0.0
  %1862 = vmatprep.subr.mxu0 0.0
  %1863 = vmatpush1.msra.mxu0 0.0
  %1864 = vmatprep.subr.mxu0 0.0
  %1865 = vmatpush1.msra.mxu0 0.0
  %1866 = vmatprep.subr.mxu0 0.0
  %1867 = vmatpush1.msra.mxu0 0.0
  %1868 = vmatprep.subr.mxu0 0.0
  %1869 = vmatpush1.msra.mxu0 0.0
  %1870 = vmatprep.subr.mxu0 0.0
  %1871 = vmatpush1.msra.mxu0 0.0
  %1872 = vmatprep.subr.mxu0 0.0
  %1873 = vmatpush1.msra.mxu0 0.0
  %1874 = vmatprep.subr.mxu0 0.0
  %1875 = vmatpush1.msra.mxu0 0.0
  %1876 = vmatprep.subr.mxu0 0.0
  %1877 = vmatpush1.msra.mxu0 0.0
  %1878 = vmatprep.subr.mxu0 0.0
  %1879 = vmatpush1.msra.mxu0 0.0
  %1880 = vmatprep.mubr.f32.mxu0 0.0
  %1881 = vmatmul.mubr.f32.gmra.mrb[0].mxu0 %v1547
  %v1882 = vpop.f32.mrb[0].mxu0
  %v1883 = vadd.f32 %v1798, %v1882
  %v1884 = vpop.f32.mrb[0].mxu0
  %1885 = vmatprep.mubr.f32.mxu0 0.0
  %1886 = vmatmul.mubr.f32.gmra.mrb[0].mxu0 %v1552
  %v1887 = vpop.f32.mrb[0].mxu0
  %v1888 = vadd.f32 %v1803, %v1887
  %v1889 = vpop.f32.mrb[0].mxu0
  %1890 = vmatprep.mubr.f32.mxu0 0.0
  %1891 = vmatmul.mubr.f32.gmra.mrb[0].mxu0 %v1557
  %v1892 = vpop.f32.mrb[0].mxu0
  %v1893 = vadd.f32 %v1808, %v1892
  %v1894 = vpop.f32.mrb[0].mxu0
  %1895 = vmatprep.mubr.f32.mxu0 0.0
  %1896 = vmatmul.mubr.f32.gmra.mrb[0].mxu0 %v1562
  %v1897 = vpop.f32.mrb[0].mxu0
  %v1898 = vadd.f32 %v1813, %v1897
  %v1899 = vpop.f32.mrb[0].mxu0
  %1900 = vdwg.mxu0
  %s1901 = smul.u32 80, 1
  %s1902 = sshll.u32 %s1901, 4
  %1903 = dma.done %s65, %s1902
  %s1904 = sshll.u32 %s1316, 4
  %1905 = dma.done %s79, %s1904
  %v1906 = vld [vmem:[#allocation2 + $0x1e0] sm:$0xff]
  %v1907 = vld [vmem:[#allocation2 + $0x1e8] sm:$0xff]
  %v1908 = vld [vmem:[#allocation2 + $0x1f0] sm:$0xff]
  %v1909 = vld [vmem:[#allocation2 + $0x1f8] sm:$0xff]
  %v1910 = vld [vmem:[#allocation2 + $0x200] sm:$0xff]
  %v1911 = vld [vmem:[#allocation2 + $0x208] sm:$0xff]
  %v1912 = vld [vmem:[#allocation2 + $0x210] sm:$0xff]
  %v1913 = vld [vmem:[#allocation2 + $0x218] sm:$0xff]
  %v1914 = vld [vmem:[#allocation2 + $0x220] sm:$0xff]
  %v1915 = vld [vmem:[#allocation2 + $0x228] sm:$0xff]
  %vm1916 = vcmask 261120
  %v1918 = vsel %vm1916, %v1906, 0
  %v1921 = vsel %vm1916, %v1907, 0
  %v1924 = vsel %vm1916, %v1908, 0
  %v1927 = vsel %vm1916, %v1909, 0
  %v1930 = vsel %vm1916, %v1910, 0
  %v1933 = vsel %vm1916, %v1911, 0
  %v1936 = vsel %vm1916, %v1912, 0
  %v1939 = vsel %vm1916, %v1913, 0
  %v1942 = vsel %vm1916, %v1914, 0
  %v1945 = vsel %vm1916, %v1915, 0
  %1947 = vmatprep.subr.mxu0 0.0
  %1948 = vmatpush1.msra.mxu0 %v1883
  %1949 = vmatprep.subr.mxu0 0.0
  %1950 = vmatpush1.msra.mxu0 %v1888
  %1951 = vmatprep.subr.mxu0 0.0
  %1952 = vmatpush1.msra.mxu0 %v1893
  %1953 = vmatprep.subr.mxu0 0.0
  %1954 = vmatpush1.msra.mxu0 %v1898
  %1955 = vmatprep.subr.mxu0 0.0
  %1956 = vmatpush1.msra.mxu0 0.0
  %1957 = vmatprep.subr.mxu0 0.0
  %1958 = vmatpush1.msra.mxu0 0.0
  %1959 = vmatprep.subr.mxu0 0.0
  %1960 = vmatpush1.msra.mxu0 0.0
  %1961 = vmatprep.subr.mxu0 0.0
  %1962 = vmatpush1.msra.mxu0 0.0
  %1963 = vmatprep.subr.mxu0 0.0
  %1964 = vmatpush1.msra.mxu0 0.0
  %1965 = vmatprep.subr.mxu0 0.0
  %1966 = vmatpush1.msra.mxu0 0.0
  %1967 = vmatprep.subr.mxu0 0.0
  %1968 = vmatpush1.msra.mxu0 0.0
  %1969 = vmatprep.subr.mxu0 0.0
  %1970 = vmatpush1.msra.mxu0 0.0
  %1971 = vmatprep.subr.mxu0 0.0
  %1972 = vmatpush1.msra.mxu0 0.0
  %1973 = vmatprep.subr.mxu0 0.0
  %1974 = vmatpush1.msra.mxu0 0.0
  %1975 = vmatprep.subr.mxu0 0.0
  %1976 = vmatpush1.msra.mxu0 0.0
  %1977 = vmatprep.subr.mxu0 0.0
  %1978 = vmatpush1.msra.mxu0 0.0
  %1979 = vmatprep.subr.mxu0 0.0
  %1980 = vmatpush1.msra.mxu0 0.0
  %1981 = vmatprep.subr.mxu0 0.0
  %1982 = vmatpush1.msra.mxu0 0.0
  %1983 = vmatprep.subr.mxu0 0.0
  %1984 = vmatpush1.msra.mxu0 0.0
  %1985 = vmatprep.subr.mxu0 0.0
  %1986 = vmatpush1.msra.mxu0 0.0
  %1987 = vmatprep.subr.mxu0 0.0
  %1988 = vmatpush1.msra.mxu0 0.0
  %1989 = vmatprep.subr.mxu0 0.0
  %1990 = vmatpush1.msra.mxu0 0.0
  %1991 = vmatprep.subr.mxu0 0.0
  %1992 = vmatpush1.msra.mxu0 0.0
  %1993 = vmatprep.subr.mxu0 0.0
  %1994 = vmatpush1.msra.mxu0 0.0
  %1995 = vmatprep.subr.mxu0 0.0
  %1996 = vmatpush1.msra.mxu0 0.0
  %1997 = vmatprep.subr.mxu0 0.0
  %1998 = vmatpush1.msra.mxu0 0.0
  %1999 = vmatprep.subr.mxu0 0.0
  %2000 = vmatpush1.msra.mxu0 0.0
  %2001 = vmatprep.subr.mxu0 0.0
  %2002 = vmatpush1.msra.mxu0 0.0
  %2003 = vmatprep.subr.mxu0 0.0
  %2004 = vmatpush1.msra.mxu0 0.0
  %2005 = vmatprep.subr.mxu0 0.0
  %2006 = vmatpush1.msra.mxu0 0.0
  %2007 = vmatprep.subr.mxu0 0.0
  %2008 = vmatpush1.msra.mxu0 0.0
  %2009 = vmatprep.subr.mxu0 0.0
  %2010 = vmatpush1.msra.mxu0 0.0
  %2011 = vmatprep.mubr.f32.mxu0 0.0
  %2012 = vmatmul.mubr.f32.gmra.mrb[0].mxu0 %v1918
  %v2013 = vpop.f32.mrb[0].mxu0
  %v2014 = vadd.f32 0.0, %v2013
  %v2015 = vpop.f32.mrb[0].mxu0
  %2016 = vmatprep.mubr.f32.mxu0 0.0
  %2017 = vmatmul.mubr.f32.gmra.mrb[0].mxu0 %v1921
  %v2018 = vpop.f32.mrb[0].mxu0
  %v2019 = vadd.f32 0.0, %v2018
  %v2020 = vpop.f32.mrb[0].mxu0
  %2021 = vmatprep.mubr.f32.mxu0 0.0
  %2022 = vmatmul.mubr.f32.gmra.mrb[0].mxu0 %v1924
  %v2023 = vpop.f32.mrb[0].mxu0
  %v2024 = vadd.f32 0.0, %v2023
  %v2025 = vpop.f32.mrb[0].mxu0
  %2026 = vmatprep.mubr.f32.mxu0 0.0
  %2027 = vmatmul.mubr.f32.gmra.mrb[0].mxu0 %v1927
  %v2028 = vpop.f32.mrb[0].mxu0
  %v2029 = vadd.f32 0.0, %v2028
  %v2030 = vpop.f32.mrb[0].mxu0
  %2031 = vmatprep.mubr.f32.mxu0 0.0
  %2032 = vmatmul.mubr.f32.gmra.mrb[0].mxu0 %v1930
  %v2033 = vpop.f32.mrb[0].mxu0
  %v2034 = vadd.f32 0.0, %v2033
  %v2035 = vpop.f32.mrb[0].mxu0
  %2036 = vmatprep.mubr.f32.mxu0 0.0
  %2037 = vmatmul.mubr.f32.gmra.mrb[0].mxu0 %v1933
  %v2038 = vpop.f32.mrb[0].mxu0
  %v2039 = vadd.f32 0.0, %v2038
  %v2040 = vpop.f32.mrb[0].mxu0
  %2041 = vmatprep.mubr.f32.mxu0 0.0
  %2042 = vmatmul.mubr.f32.gmra.mrb[0].mxu0 %v1936
  %v2043 = vpop.f32.mrb[0].mxu0
  %v2044 = vadd.f32 0.0, %v2043
  %v2045 = vpop.f32.mrb[0].mxu0
  %2046 = vmatprep.mubr.f32.mxu0 0.0
  %2047 = vmatmul.mubr.f32.gmra.mrb[0].mxu0 %v1939
  %v2048 = vpop.f32.mrb[0].mxu0
  %v2049 = vadd.f32 0.0, %v2048
  %v2050 = vpop.f32.mrb[0].mxu0
  %2051 = vmatprep.mubr.f32.mxu0 0.0
  %2052 = vmatmul.mubr.f32.gmra.mrb[0].mxu0 %v1942
  %v2053 = vpop.f32.mrb[0].mxu0
  %v2054 = vadd.f32 0.0, %v2053
  %v2055 = vpop.f32.mrb[0].mxu0
  %2056 = vmatprep.mubr.f32.mxu0 0.0
  %2057 = vmatmul.mubr.f32.gmra.mrb[0].mxu0 %v1945
  %v2058 = vpop.f32.mrb[0].mxu0
  %v2059 = vadd.f32 0.0, %v2058
  %v2060 = vpop.f32.mrb[0].mxu0
  %2061 = vdwg.mxu0
  %v2062 = vld [vmem:[#allocation3 + $0x780] sm:$0xff]
  %v2063 = vld [vmem:[#allocation3 + $0x788] sm:$0xff]
  %v2064 = vld [vmem:[#allocation3 + $0x790] sm:$0xff]
  %v2065 = vld [vmem:[#allocation3 + $0x798] sm:$0xff]
  %v2066 = vld [vmem:[#allocation3 + $0x7a0] sm:$0xff]
  %v2067 = vld [vmem:[#allocation3 + $0x7a8] sm:$0xff]
  %v2068 = vld [vmem:[#allocation3 + $0x7b0] sm:$0xff]
  %v2069 = vld [vmem:[#allocation3 + $0x7b8] sm:$0xff]
  %v2070 = vld [vmem:[#allocation3 + $0x7c0] sm:$0xff]
  %v2071 = vld [vmem:[#allocation3 + $0x7c8] sm:$0xff]
  %v2072 = vld [vmem:[#allocation3 + $0x7d0] sm:$0xff]
  %v2073 = vld [vmem:[#allocation3 + $0x7d8] sm:$0xff]
  %v2074 = vld [vmem:[#allocation3 + $0x7e0] sm:$0xff]
  %v2075 = vld [vmem:[#allocation3 + $0x7e8] sm:$0xff]
  %v2076 = vld [vmem:[#allocation3 + $0x7f0] sm:$0xff]
  %v2077 = vld [vmem:[#allocation3 + $0x7f8] sm:$0xff]
  %v2078 = vld [vmem:[#allocation3 + $0x800] sm:$0xff]
  %v2079 = vld [vmem:[#allocation3 + $0x808] sm:$0xff]
  %v2080 = vld [vmem:[#allocation3 + $0x810] sm:$0xff]
  %v2081 = vld [vmem:[#allocation3 + $0x818] sm:$0xff]
  %v2082 = vld [vmem:[#allocation3 + $0x820] sm:$0xff]
  %v2083 = vld [vmem:[#allocation3 + $0x828] sm:$0xff]
  %v2084 = vld [vmem:[#allocation3 + $0x830] sm:$0xff]
  %v2085 = vld [vmem:[#allocation3 + $0x838] sm:$0xff]
  %v2086 = vld [vmem:[#allocation3 + $0x840] sm:$0xff]
  %v2087 = vld [vmem:[#allocation3 + $0x848] sm:$0xff]
  %v2088 = vld [vmem:[#allocation3 + $0x850] sm:$0xff]
  %v2089 = vld [vmem:[#allocation3 + $0x858] sm:$0xff]
  %v2090 = vld [vmem:[#allocation3 + $0x860] sm:$0xff]
  %v2091 = vld [vmem:[#allocation3 + $0x868] sm:$0xff]
  %v2092 = vld [vmem:[#allocation3 + $0x870] sm:$0xff]
  %v2093 = vld [vmem:[#allocation3 + $0x878] sm:$0xff]
  %v2094 = vld [vmem:[#allocation3 + $0x880] sm:$0xff]
  %v2095 = vld [vmem:[#allocation3 + $0x888] sm:$0xff]
  %v2096 = vld [vmem:[#allocation3 + $0x890] sm:$0xff]
  %v2097 = vld [vmem:[#allocation3 + $0x898] sm:$0xff]
  %v2098 = vld [vmem:[#allocation3 + $0x8a0] sm:$0xff]
  %v2099 = vld [vmem:[#allocation3 + $0x8a8] sm:$0xff]
  %v2100 = vld [vmem:[#allocation3 + $0x8b0] sm:$0xff]
  %v2101 = vld [vmem:[#allocation3 + $0x8b8] sm:$0xff]
  %v2102 = vld [vmem:[#allocation3 + $0x8c0] sm:$0xff]
  %v2103 = vld [vmem:[#allocation3 + $0x8c8] sm:$0xff]
  %v2104 = vld [vmem:[#allocation3 + $0x8d0] sm:$0xff]
  %v2105 = vld [vmem:[#allocation3 + $0x8d8] sm:$0xff]
  %v2106 = vld [vmem:[#allocation3 + $0x8e0] sm:$0xff]
  %v2107 = vld [vmem:[#allocation3 + $0x8e8] sm:$0xff]
  %v2108 = vld [vmem:[#allocation3 + $0x8f0] sm:$0xff]
  %v2109 = vld [vmem:[#allocation3 + $0x8f8] sm:$0xff]
  %v2110 = vld [vmem:[#allocation3 + $0x900] sm:$0xff]
  %v2111 = vld [vmem:[#allocation3 + $0x908] sm:$0xff]
  %v2112 = vld [vmem:[#allocation3 + $0x910] sm:$0xff]
  %v2113 = vld [vmem:[#allocation3 + $0x918] sm:$0xff]
  %v2114 = vld [vmem:[#allocation3 + $0x920] sm:$0xff]
  %v2115 = vld [vmem:[#allocation3 + $0x928] sm:$0xff]
  %v2116 = vld [vmem:[#allocation3 + $0x930] sm:$0xff]
  %v2117 = vld [vmem:[#allocation3 + $0x938] sm:$0xff]
  %v2118 = vld [vmem:[#allocation3 + $0x940] sm:$0xff]
  %v2119 = vld [vmem:[#allocation3 + $0x948] sm:$0xff]
  %v2120 = vld [vmem:[#allocation3 + $0x950] sm:$0xff]
  %v2121 = vld [vmem:[#allocation3 + $0x958] sm:$0xff]
  %v2122 = vld [vmem:[#allocation3 + $0x960] sm:$0xff]
  %v2123 = vld [vmem:[#allocation3 + $0x968] sm:$0xff]
  %v2124 = vld [vmem:[#allocation3 + $0x970] sm:$0xff]
  %v2125 = vld [vmem:[#allocation3 + $0x978] sm:$0xff]
  %v2126 = vld [vmem:[#allocation3 + $0x980] sm:$0xff]
  %v2127 = vld [vmem:[#allocation3 + $0x988] sm:$0xff]
  %v2128 = vld [vmem:[#allocation3 + $0x990] sm:$0xff]
  %v2129 = vld [vmem:[#allocation3 + $0x998] sm:$0xff]
  %v2130 = vld [vmem:[#allocation3 + $0x9a0] sm:$0xff]
  %v2131 = vld [vmem:[#allocation3 + $0x9a8] sm:$0xff]
  %v2132 = vld [vmem:[#allocation3 + $0x9b0] sm:$0xff]
  %v2133 = vld [vmem:[#allocation3 + $0x9b8] sm:$0xff]
  %v2134 = vld [vmem:[#allocation3 + $0x9c0] sm:$0xff]
  %v2135 = vld [vmem:[#allocation3 + $0x9c8] sm:$0xff]
  %v2136 = vld [vmem:[#allocation3 + $0x9d0] sm:$0xff]
  %v2137 = vld [vmem:[#allocation3 + $0x9d8] sm:$0xff]
  %v2138 = vld [vmem:[#allocation3 + $0x9e0] sm:$0xff]
  %v2139 = vld [vmem:[#allocation3 + $0x9e8] sm:$0xff]
  %v2140 = vld [vmem:[#allocation3 + $0x9f0] sm:$0xff]
  %v2141 = vld [vmem:[#allocation3 + $0x9f8] sm:$0xff]
  %v2142 = vld [vmem:[#allocation5 + $0x2] ss:$0 sm:$0xff]
  %2143 = vmatprep.subr.mxu0 0.0
  %2144 = vmatpush1.msra.mxu0 %v2062
  %2145 = vmatprep.subr.mxu0 0.0
  %2146 = vmatpush1.msra.mxu0 %v2063
  %2147 = vmatprep.subr.mxu0 0.0
  %2148 = vmatpush1.msra.mxu0 %v2064
  %2149 = vmatprep.subr.mxu0 0.0
  %2150 = vmatpush1.msra.mxu0 %v2065
  %2151 = vmatprep.subr.mxu0 0.0
  %2152 = vmatpush1.msra.mxu0 %v2066
  %2153 = vmatprep.subr.mxu0 0.0
  %2154 = vmatpush1.msra.mxu0 %v2067
  %2155 = vmatprep.subr.mxu0 0.0
  %2156 = vmatpush1.msra.mxu0 %v2068
  %2157 = vmatprep.subr.mxu0 0.0
  %2158 = vmatpush1.msra.mxu0 %v2069
  %2159 = vmatprep.subr.mxu0 0.0
  %2160 = vmatpush1.msra.mxu0 %v2070
  %2161 = vmatprep.subr.mxu0 0.0
  %2162 = vmatpush1.msra.mxu0 %v2071
  %2163 = vmatprep.subr.mxu0 0.0
  %2164 = vmatpush1.msra.mxu0 %v2072
  %2165 = vmatprep.subr.mxu0 0.0
  %2166 = vmatpush1.msra.mxu0 %v2073
  %2167 = vmatprep.subr.mxu0 0.0
  %2168 = vmatpush1.msra.mxu0 %v2074
  %2169 = vmatprep.subr.mxu0 0.0
  %2170 = vmatpush1.msra.mxu0 %v2075
  %2171 = vmatprep.subr.mxu0 0.0
  %2172 = vmatpush1.msra.mxu0 %v2076
  %2173 = vmatprep.subr.mxu0 0.0
  %2174 = vmatpush1.msra.mxu0 %v2077
  %2175 = vmatprep.subr.mxu0 0.0
  %2176 = vmatpush1.msra.mxu0 %v2078
  %2177 = vmatprep.subr.mxu0 0.0
  %2178 = vmatpush1.msra.mxu0 %v2079
  %2179 = vmatprep.subr.mxu0 0.0
  %2180 = vmatpush1.msra.mxu0 %v2080
  %2181 = vmatprep.subr.mxu0 0.0
  %2182 = vmatpush1.msra.mxu0 %v2081
  %2183 = vmatprep.subr.mxu0 0.0
  %2184 = vmatpush1.msra.mxu0 %v2082
  %2185 = vmatprep.subr.mxu0 0.0
  %2186 = vmatpush1.msra.mxu0 %v2083
  %2187 = vmatprep.subr.mxu0 0.0
  %2188 = vmatpush1.msra.mxu0 %v2084
  %2189 = vmatprep.subr.mxu0 0.0
  %2190 = vmatpush1.msra.mxu0 %v2085
  %2191 = vmatprep.subr.mxu0 0.0
  %2192 = vmatpush1.msra.mxu0 %v2086
  %2193 = vmatprep.subr.mxu0 0.0
  %2194 = vmatpush1.msra.mxu0 %v2087
  %2195 = vmatprep.subr.mxu0 0.0
  %2196 = vmatpush1.msra.mxu0 %v2088
  %2197 = vmatprep.subr.mxu0 0.0
  %2198 = vmatpush1.msra.mxu0 %v2089
  %2199 = vmatprep.subr.mxu0 0.0
  %2200 = vmatpush1.msra.mxu0 %v2090
  %2201 = vmatprep.subr.mxu0 0.0
  %2202 = vmatpush1.msra.mxu0 %v2091
  %2203 = vmatprep.subr.mxu0 0.0
  %2204 = vmatpush1.msra.mxu0 %v2092
  %2205 = vmatprep.subr.mxu0 0.0
  %2206 = vmatpush1.msra.mxu0 %v2093
  %2207 = vmatprep.mubr.f32.mxu0 %v2024
  %2208 = vmatmul.mubr.f32.gmra.mrb[0].mxu0 %v2014
  %v2209 = vpop.f32.mrb[0].mxu0
  %v2210 = vadd.f32 %v2142, %v2209
  %v2211 = vpop.f32.mrb[0].mxu0
  %2212 = vmatprep.mubr.f32.mxu0 %v2029
  %2213 = vmatmul.mubr.f32.gmra.mrb[0].mxu0 %v2019
  %v2214 = vpop.f32.mrb[0].mxu0
  %v2215 = vadd.f32 %v2142, %v2214
  %v2216 = vpop.f32.mrb[0].mxu0
  %2217 = vdwg.mxu0
  %2218 = vmatprep.subr.mxu0 0.0
  %2219 = vmatpush1.msra.mxu0 %v2094
  %2220 = vmatprep.subr.mxu0 0.0
  %2221 = vmatpush1.msra.mxu0 %v2095
  %2222 = vmatprep.subr.mxu0 0.0
  %2223 = vmatpush1.msra.mxu0 %v2096
  %2224 = vmatprep.subr.mxu0 0.0
  %2225 = vmatpush1.msra.mxu0 %v2097
  %2226 = vmatprep.subr.mxu0 0.0
  %2227 = vmatpush1.msra.mxu0 %v2098
  %2228 = vmatprep.subr.mxu0 0.0
  %2229 = vmatpush1.msra.mxu0 %v2099
  %2230 = vmatprep.subr.mxu0 0.0
  %2231 = vmatpush1.msra.mxu0 %v2100
  %2232 = vmatprep.subr.mxu0 0.0
  %2233 = vmatpush1.msra.mxu0 %v2101
  %2234 = vmatprep.subr.mxu0 0.0
  %2235 = vmatpush1.msra.mxu0 %v2102
  %2236 = vmatprep.subr.mxu0 0.0
  %2237 = vmatpush1.msra.mxu0 %v2103
  %2238 = vmatprep.subr.mxu0 0.0
  %2239 = vmatpush1.msra.mxu0 %v2104
  %2240 = vmatprep.subr.mxu0 0.0
  %2241 = vmatpush1.msra.mxu0 %v2105
  %2242 = vmatprep.subr.mxu0 0.0
  %2243 = vmatpush1.msra.mxu0 %v2106
  %2244 = vmatprep.subr.mxu0 0.0
  %2245 = vmatpush1.msra.mxu0 %v2107
  %2246 = vmatprep.subr.mxu0 0.0
  %2247 = vmatpush1.msra.mxu0 %v2108
  %2248 = vmatprep.subr.mxu0 0.0
  %2249 = vmatpush1.msra.mxu0 %v2109
  %2250 = vmatprep.subr.mxu0 0.0
  %2251 = vmatpush1.msra.mxu0 %v2110
  %2252 = vmatprep.subr.mxu0 0.0
  %2253 = vmatpush1.msra.mxu0 %v2111
  %2254 = vmatprep.subr.mxu0 0.0
  %2255 = vmatpush1.msra.mxu0 %v2112
  %2256 = vmatprep.subr.mxu0 0.0
  %2257 = vmatpush1.msra.mxu0 %v2113
  %2258 = vmatprep.subr.mxu0 0.0
  %2259 = vmatpush1.msra.mxu0 %v2114
  %2260 = vmatprep.subr.mxu0 0.0
  %2261 = vmatpush1.msra.mxu0 %v2115
  %2262 = vmatprep.subr.mxu0 0.0
  %2263 = vmatpush1.msra.mxu0 %v2116
  %2264 = vmatprep.subr.mxu0 0.0
  %2265 = vmatpush1.msra.mxu0 %v2117
  %2266 = vmatprep.subr.mxu0 0.0
  %2267 = vmatpush1.msra.mxu0 %v2118
  %2268 = vmatprep.subr.mxu0 0.0
  %2269 = vmatpush1.msra.mxu0 %v2119
  %2270 = vmatprep.subr.mxu0 0.0
  %2271 = vmatpush1.msra.mxu0 %v2120
  %2272 = vmatprep.subr.mxu0 0.0
  %2273 = vmatpush1.msra.mxu0 %v2121
  %2274 = vmatprep.subr.mxu0 0.0
  %2275 = vmatpush1.msra.mxu0 %v2122
  %2276 = vmatprep.subr.mxu0 0.0
  %2277 = vmatpush1.msra.mxu0 %v2123
  %2278 = vmatprep.subr.mxu0 0.0
  %2279 = vmatpush1.msra.mxu0 %v2124
  %2280 = vmatprep.subr.mxu0 0.0
  %2281 = vmatpush1.msra.mxu0 %v2125
  %2282 = vmatprep.mubr.f32.mxu0 %v2044
  %2283 = vmatmul.mubr.f32.gmra.mrb[0].mxu0 %v2034
  %v2284 = vpop.f32.mrb[0].mxu0
  %v2285 = vadd.f32 %v2210, %v2284
  %v2286 = vpop.f32.mrb[0].mxu0
  %2287 = vmatprep.mubr.f32.mxu0 %v2049
  %2288 = vmatmul.mubr.f32.gmra.mrb[0].mxu0 %v2039
  %v2289 = vpop.f32.mrb[0].mxu0
  %v2290 = vadd.f32 %v2215, %v2289
  %v2291 = vpop.f32.mrb[0].mxu0
  %2292 = vdwg.mxu0
  %2293 = vmatprep.subr.mxu0 0.0
  %2294 = vmatpush1.msra.mxu0 %v2126
  %2295 = vmatprep.subr.mxu0 0.0
  %2296 = vmatpush1.msra.mxu0 %v2127
  %2297 = vmatprep.subr.mxu0 0.0
  %2298 = vmatpush1.msra.mxu0 %v2128
  %2299 = vmatprep.subr.mxu0 0.0
  %2300 = vmatpush1.msra.mxu0 %v2129
  %2301 = vmatprep.subr.mxu0 0.0
  %2302 = vmatpush1.msra.mxu0 %v2130
  %2303 = vmatprep.subr.mxu0 0.0
  %2304 = vmatpush1.msra.mxu0 %v2131
  %2305 = vmatprep.subr.mxu0 0.0
  %2306 = vmatpush1.msra.mxu0 %v2132
  %2307 = vmatprep.subr.mxu0 0.0
  %2308 = vmatpush1.msra.mxu0 %v2133
  %2309 = vmatprep.subr.mxu0 0.0
  %2310 = vmatpush1.msra.mxu0 %v2134
  %2311 = vmatprep.subr.mxu0 0.0
  %2312 = vmatpush1.msra.mxu0 %v2135
  %2313 = vmatprep.subr.mxu0 0.0
  %2314 = vmatpush1.msra.mxu0 %v2136
  %2315 = vmatprep.subr.mxu0 0.0
  %2316 = vmatpush1.msra.mxu0 %v2137
  %2317 = vmatprep.subr.mxu0 0.0
  %2318 = vmatpush1.msra.mxu0 %v2138
  %2319 = vmatprep.subr.mxu0 0.0
  %2320 = vmatpush1.msra.mxu0 %v2139
  %2321 = vmatprep.subr.mxu0 0.0
  %2322 = vmatpush1.msra.mxu0 %v2140
  %2323 = vmatprep.subr.mxu0 0.0
  %2324 = vmatpush1.msra.mxu0 %v2141
  %2325 = vmatprep.subr.mxu0 0.0
  %2326 = vmatpush1.msra.mxu0 0.0
  %2327 = vmatprep.subr.mxu0 0.0
  %2328 = vmatpush1.msra.mxu0 0.0
  %2329 = vmatprep.subr.mxu0 0.0
  %2330 = vmatpush1.msra.mxu0 0.0
  %2331 = vmatprep.subr.mxu0 0.0
  %2332 = vmatpush1.msra.mxu0 0.0
  %2333 = vmatprep.subr.mxu0 0.0
  %2334 = vmatpush1.msra.mxu0 0.0
  %2335 = vmatprep.subr.mxu0 0.0
  %2336 = vmatpush1.msra.mxu0 0.0
  %2337 = vmatprep.subr.mxu0 0.0
  %2338 = vmatpush1.msra.mxu0 0.0
  %2339 = vmatprep.subr.mxu0 0.0
  %2340 = vmatpush1.msra.mxu0 0.0
  %2341 = vmatprep.subr.mxu0 0.0
  %2342 = vmatpush1.msra.mxu0 0.0
  %2343 = vmatprep.subr.mxu0 0.0
  %2344 = vmatpush1.msra.mxu0 0.0
  %2345 = vmatprep.subr.mxu0 0.0
  %2346 = vmatpush1.msra.mxu0 0.0
  %2347 = vmatprep.subr.mxu0 0.0
  %2348 = vmatpush1.msra.mxu0 0.0
  %2349 = vmatprep.subr.mxu0 0.0
  %2350 = vmatpush1.msra.mxu0 0.0
  %2351 = vmatprep.subr.mxu0 0.0
  %2352 = vmatpush1.msra.mxu0 0.0
  %2353 = vmatprep.subr.mxu0 0.0
  %2354 = vmatpush1.msra.mxu0 0.0
  %2355 = vmatprep.subr.mxu0 0.0
  %2356 = vmatpush1.msra.mxu0 0.0
  %2357 = vmatprep.mubr.f32.mxu0 0.0
  %2358 = vmatmul.mubr.f32.gmra.mrb[0].mxu0 %v2054
  %v2359 = vpop.f32.mrb[0].mxu0
  %v2360 = vadd.f32 %v2285, %v2359
  %v2361 = vpop.f32.mrb[0].mxu0
  %2362 = vmatprep.mubr.f32.mxu0 0.0
  %2363 = vmatmul.mubr.f32.gmra.mrb[0].mxu0 %v2059
  %v2364 = vpop.f32.mrb[0].mxu0
  %v2365 = vadd.f32 %v2290, %v2364
  %v2366 = vpop.f32.mrb[0].mxu0
  %2367 = vdwg.mxu0
  %s2368 = sshll.u32 %s1901, 4
  %2369 = dma.done %s93, %s2368
  %s2370 = sshll.u32 %s1316, 4
  %2371 = dma.done %s107, %s2370
  %v2372 = vld [vmem:[#allocation2 + $0x230] sm:$0xff]
  %v2373 = vld [vmem:[#allocation2 + $0x238] sm:$0xff]
  %v2374 = vld [vmem:[#allocation2 + $0x240] sm:$0xff]
  %v2375 = vld [vmem:[#allocation2 + $0x248] sm:$0xff]
  %v2376 = vld [vmem:[#allocation2 + $0x250] sm:$0xff]
  %v2377 = vld [vmem:[#allocation2 + $0x258] sm:$0xff]
  %v2378 = vld [vmem:[#allocation2 + $0x260] sm:$0xff]
  %v2379 = vld [vmem:[#allocation2 + $0x268] sm:$0xff]
  %v2380 = vld [vmem:[#allocation2 + $0x270] sm:$0xff]
  %v2381 = vld [vmem:[#allocation2 + $0x278] sm:$0xff]
  %vm2382 = vcmask 130048
  %v2384 = vsel %vm2382, %v2372, 0
  %v2387 = vsel %vm2382, %v2373, 0
  %v2390 = vsel %vm2382, %v2374, 0
  %v2393 = vsel %vm2382, %v2375, 0
  %v2396 = vsel %vm2382, %v2376, 0
  %v2399 = vsel %vm2382, %v2377, 0
  %v2402 = vsel %vm2382, %v2378, 0
  %v2405 = vsel %vm2382, %v2379, 0
  %v2408 = vsel %vm2382, %v2380, 0
  %v2411 = vsel %vm2382, %v2381, 0
  %2413 = vmatprep.subr.mxu0 0.0
  %2414 = vmatpush1.msra.mxu0 %v2360
  %2415 = vmatprep.subr.mxu0 0.0
  %2416 = vmatpush1.msra.mxu0 %v2365
  %2417 = vmatprep.subr.mxu0 0.0
  %2418 = vmatpush1.msra.mxu0 0.0
  %2419 = vmatprep.subr.mxu0 0.0
  %2420 = vmatpush1.msra.mxu0 0.0
  %2421 = vmatprep.subr.mxu0 0.0
  %2422 = vmatpush1.msra.mxu0 0.0
  %2423 = vmatprep.subr.mxu0 0.0
  %2424 = vmatpush1.msra.mxu0 0.0
  %2425 = vmatprep.subr.mxu0 0.0
  %2426 = vmatpush1.msra.mxu0 0.0
  %2427 = vmatprep.subr.mxu0 0.0
  %2428 = vmatpush1.msra.mxu0 0.0
  %2429 = vmatprep.subr.mxu0 0.0
  %2430 = vmatpush1.msra.mxu0 0.0
  %2431 = vmatprep.subr.mxu0 0.0
  %2432 = vmatpush1.msra.mxu0 0.0
  %2433 = vmatprep.subr.mxu0 0.0
  %2434 = vmatpush1.msra.mxu0 0.0
  %2435 = vmatprep.subr.mxu0 0.0
  %2436 = vmatpush1.msra.mxu0 0.0
  %2437 = vmatprep.subr.mxu0 0.0
  %2438 = vmatpush1.msra.mxu0 0.0
  %2439 = vmatprep.subr.mxu0 0.0
  %2440 = vmatpush1.msra.mxu0 0.0
  %2441 = vmatprep.subr.mxu0 0.0
  %2442 = vmatpush1.msra.mxu0 0.0
  %2443 = vmatprep.subr.mxu0 0.0
  %2444 = vmatpush1.msra.mxu0 0.0
  %2445 = vmatprep.subr.mxu0 0.0
  %2446 = vmatpush1.msra.mxu0 0.0
  %2447 = vmatprep.subr.mxu0 0.0
  %2448 = vmatpush1.msra.mxu0 0.0
  %2449 = vmatprep.subr.mxu0 0.0
  %2450 = vmatpush1.msra.mxu0 0.0
  %2451 = vmatprep.subr.mxu0 0.0
  %2452 = vmatpush1.msra.mxu0 0.0
  %2453 = vmatprep.subr.mxu0 0.0
  %2454 = vmatpush1.msra.mxu0 0.0
  %2455 = vmatprep.subr.mxu0 0.0
  %2456 = vmatpush1.msra.mxu0 0.0
  %2457 = vmatprep.subr.mxu0 0.0
  %2458 = vmatpush1.msra.mxu0 0.0
  %2459 = vmatprep.subr.mxu0 0.0
  %2460 = vmatpush1.msra.mxu0 0.0
  %2461 = vmatprep.subr.mxu0 0.0
  %2462 = vmatpush1.msra.mxu0 0.0
  %2463 = vmatprep.subr.mxu0 0.0
  %2464 = vmatpush1.msra.mxu0 0.0
  %2465 = vmatprep.subr.mxu0 0.0
  %2466 = vmatpush1.msra.mxu0 0.0
  %2467 = vmatprep.subr.mxu0 0.0
  %2468 = vmatpush1.msra.mxu0 0.0
  %2469 = vmatprep.subr.mxu0 0.0
  %2470 = vmatpush1.msra.mxu0 0.0
  %2471 = vmatprep.subr.mxu0 0.0
  %2472 = vmatpush1.msra.mxu0 0.0
  %2473 = vmatprep.subr.mxu0 0.0
  %2474 = vmatpush1.msra.mxu0 0.0
  %2475 = vmatprep.subr.mxu0 0.0
  %2476 = vmatpush1.msra.mxu0 0.0
  %2477 = vmatprep.mubr.f32.mxu0 0.0
  %2478 = vmatmul.mubr.f32.gmra.mrb[0].mxu0 %v2384
  %v2479 = vpop.f32.mrb[0].mxu0
  %v2480 = vadd.f32 0.0, %v2479
  %v2481 = vpop.f32.mrb[0].mxu0
  %2482 = vmatprep.mubr.f32.mxu0 0.0
  %2483 = vmatmul.mubr.f32.gmra.mrb[0].mxu0 %v2387
  %v2484 = vpop.f32.mrb[0].mxu0
  %v2485 = vadd.f32 0.0, %v2484
  %v2486 = vpop.f32.mrb[0].mxu0
  %2487 = vmatprep.mubr.f32.mxu0 0.0
  %2488 = vmatmul.mubr.f32.gmra.mrb[0].mxu0 %v2390
  %v2489 = vpop.f32.mrb[0].mxu0
  %v2490 = vadd.f32 0.0, %v2489
  %v2491 = vpop.f32.mrb[0].mxu0
  %2492 = vmatprep.mubr.f32.mxu0 0.0
  %2493 = vmatmul.mubr.f32.gmra.mrb[0].mxu0 %v2393
  %v2494 = vpop.f32.mrb[0].mxu0
  %v2495 = vadd.f32 0.0, %v2494
  %v2496 = vpop.f32.mrb[0].mxu0
  %2497 = vmatprep.mubr.f32.mxu0 0.0
  %2498 = vmatmul.mubr.f32.gmra.mrb[0].mxu0 %v2396
  %v2499 = vpop.f32.mrb[0].mxu0
  %v2500 = vadd.f32 0.0, %v2499
  %v2501 = vpop.f32.mrb[0].mxu0
  %2502 = vmatprep.mubr.f32.mxu0 0.0
  %2503 = vmatmul.mubr.f32.gmra.mrb[0].mxu0 %v2399
  %v2504 = vpop.f32.mrb[0].mxu0
  %v2505 = vadd.f32 0.0, %v2504
  %v2506 = vpop.f32.mrb[0].mxu0
  %2507 = vmatprep.mubr.f32.mxu0 0.0
  %2508 = vmatmul.mubr.f32.gmra.mrb[0].mxu0 %v2402
  %v2509 = vpop.f32.mrb[0].mxu0
  %v2510 = vadd.f32 0.0, %v2509
  %v2511 = vpop.f32.mrb[0].mxu0
  %2512 = vmatprep.mubr.f32.mxu0 0.0
  %2513 = vmatmul.mubr.f32.gmra.mrb[0].mxu0 %v2405
  %v2514 = vpop.f32.mrb[0].mxu0
  %v2515 = vadd.f32 0.0, %v2514
  %v2516 = vpop.f32.mrb[0].mxu0
  %2517 = vmatprep.mubr.f32.mxu0 0.0
  %2518 = vmatmul.mubr.f32.gmra.mrb[0].mxu0 %v2408
  %v2519 = vpop.f32.mrb[0].mxu0
  %v2520 = vadd.f32 0.0, %v2519
  %v2521 = vpop.f32.mrb[0].mxu0
  %2522 = vmatprep.mubr.f32.mxu0 0.0
  %2523 = vmatmul.mubr.f32.gmra.mrb[0].mxu0 %v2411
  %v2524 = vpop.f32.mrb[0].mxu0
  %v2525 = vadd.f32 0.0, %v2524
  %v2526 = vpop.f32.mrb[0].mxu0
  %2527 = vdwg.mxu0
  %v2528 = vld [vmem:[#allocation3 + $0xa00] sm:$0xff]
  %v2529 = vld [vmem:[#allocation3 + $0xa08] sm:$0xff]
  %v2530 = vld [vmem:[#allocation3 + $0xa10] sm:$0xff]
  %v2531 = vld [vmem:[#allocation3 + $0xa18] sm:$0xff]
  %v2532 = vld [vmem:[#allocation3 + $0xa20] sm:$0xff]
  %v2533 = vld [vmem:[#allocation3 + $0xa28] sm:$0xff]
  %v2534 = vld [vmem:[#allocation3 + $0xa30] sm:$0xff]
  %v2535 = vld [vmem:[#allocation3 + $0xa38] sm:$0xff]
  %v2536 = vld [vmem:[#allocation3 + $0xa40] sm:$0xff]
  %v2537 = vld [vmem:[#allocation3 + $0xa48] sm:$0xff]
  %v2538 = vld [vmem:[#allocation3 + $0xa50] sm:$0xff]
  %v2539 = vld [vmem:[#allocation3 + $0xa58] sm:$0xff]
  %v2540 = vld [vmem:[#allocation3 + $0xa60] sm:$0xff]
  %v2541 = vld [vmem:[#allocation3 + $0xa68] sm:$0xff]
  %v2542 = vld [vmem:[#allocation3 + $0xa70] sm:$0xff]
  %v2543 = vld [vmem:[#allocation3 + $0xa78] sm:$0xff]
  %v2544 = vld [vmem:[#allocation3 + $0xa80] sm:$0xff]
  %v2545 = vld [vmem:[#allocation3 + $0xa88] sm:$0xff]
  %v2546 = vld [vmem:[#allocation3 + $0xa90] sm:$0xff]
  %v2547 = vld [vmem:[#allocation3 + $0xa98] sm:$0xff]
  %v2548 = vld [vmem:[#allocation3 + $0xaa0] sm:$0xff]
  %v2549 = vld [vmem:[#allocation3 + $0xaa8] sm:$0xff]
  %v2550 = vld [vmem:[#allocation3 + $0xab0] sm:$0xff]
  %v2551 = vld [vmem:[#allocation3 + $0xab8] sm:$0xff]
  %v2552 = vld [vmem:[#allocation3 + $0xac0] sm:$0xff]
  %v2553 = vld [vmem:[#allocation3 + $0xac8] sm:$0xff]
  %v2554 = vld [vmem:[#allocation3 + $0xad0] sm:$0xff]
  %v2555 = vld [vmem:[#allocation3 + $0xad8] sm:$0xff]
  %v2556 = vld [vmem:[#allocation3 + $0xae0] sm:$0xff]
  %v2557 = vld [vmem:[#allocation3 + $0xae8] sm:$0xff]
  %v2558 = vld [vmem:[#allocation3 + $0xaf0] sm:$0xff]
  %v2559 = vld [vmem:[#allocation3 + $0xaf8] sm:$0xff]
  %v2560 = vld [vmem:[#allocation3 + $0xb00] sm:$0xff]
  %v2561 = vld [vmem:[#allocation3 + $0xb08] sm:$0xff]
  %v2562 = vld [vmem:[#allocation3 + $0xb10] sm:$0xff]
  %v2563 = vld [vmem:[#allocation3 + $0xb18] sm:$0xff]
  %v2564 = vld [vmem:[#allocation3 + $0xb20] sm:$0xff]
  %v2565 = vld [vmem:[#allocation3 + $0xb28] sm:$0xff]
  %v2566 = vld [vmem:[#allocation3 + $0xb30] sm:$0xff]
  %v2567 = vld [vmem:[#allocation3 + $0xb38] sm:$0xff]
  %v2568 = vld [vmem:[#allocation3 + $0xb40] sm:$0xff]
  %v2569 = vld [vmem:[#allocation3 + $0xb48] sm:$0xff]
  %v2570 = vld [vmem:[#allocation3 + $0xb50] sm:$0xff]
  %v2571 = vld [vmem:[#allocation3 + $0xb58] sm:$0xff]
  %v2572 = vld [vmem:[#allocation3 + $0xb60] sm:$0xff]
  %v2573 = vld [vmem:[#allocation3 + $0xb68] sm:$0xff]
  %v2574 = vld [vmem:[#allocation3 + $0xb70] sm:$0xff]
  %v2575 = vld [vmem:[#allocation3 + $0xb78] sm:$0xff]
  %v2576 = vld [vmem:[#allocation3 + $0xb80] sm:$0xff]
  %v2577 = vld [vmem:[#allocation3 + $0xb88] sm:$0xff]
  %v2578 = vld [vmem:[#allocation3 + $0xb90] sm:$0xff]
  %v2579 = vld [vmem:[#allocation3 + $0xb98] sm:$0xff]
  %v2580 = vld [vmem:[#allocation3 + $0xba0] sm:$0xff]
  %v2581 = vld [vmem:[#allocation3 + $0xba8] sm:$0xff]
  %v2582 = vld [vmem:[#allocation3 + $0xbb0] sm:$0xff]
  %v2583 = vld [vmem:[#allocation3 + $0xbb8] sm:$0xff]
  %v2584 = vld [vmem:[#allocation3 + $0xbc0] sm:$0xff]
  %v2585 = vld [vmem:[#allocation3 + $0xbc8] sm:$0xff]
  %v2586 = vld [vmem:[#allocation3 + $0xbd0] sm:$0xff]
  %v2587 = vld [vmem:[#allocation3 + $0xbd8] sm:$0xff]
  %v2588 = vld [vmem:[#allocation3 + $0xbe0] sm:$0xff]
  %v2589 = vld [vmem:[#allocation3 + $0xbe8] sm:$0xff]
  %v2590 = vld [vmem:[#allocation3 + $0xbf0] sm:$0xff]
  %v2591 = vld [vmem:[#allocation3 + $0xbf8] sm:$0xff]
  %v2592 = vld [vmem:[#allocation3 + $0xc00] sm:$0xff]
  %v2593 = vld [vmem:[#allocation3 + $0xc08] sm:$0xff]
  %v2594 = vld [vmem:[#allocation3 + $0xc10] sm:$0xff]
  %v2595 = vld [vmem:[#allocation3 + $0xc18] sm:$0xff]
  %v2596 = vld [vmem:[#allocation3 + $0xc20] sm:$0xff]
  %v2597 = vld [vmem:[#allocation3 + $0xc28] sm:$0xff]
  %v2598 = vld [vmem:[#allocation3 + $0xc30] sm:$0xff]
  %v2599 = vld [vmem:[#allocation3 + $0xc38] sm:$0xff]
  %v2600 = vld [vmem:[#allocation3 + $0xc40] sm:$0xff]
  %v2601 = vld [vmem:[#allocation3 + $0xc48] sm:$0xff]
  %v2602 = vld [vmem:[#allocation3 + $0xc50] sm:$0xff]
  %v2603 = vld [vmem:[#allocation3 + $0xc58] sm:$0xff]
  %v2604 = vld [vmem:[#allocation3 + $0xc60] sm:$0xff]
  %v2605 = vld [vmem:[#allocation3 + $0xc68] sm:$0xff]
  %v2606 = vld [vmem:[#allocation3 + $0xc70] sm:$0xff]
  %v2607 = vld [vmem:[#allocation3 + $0xc78] sm:$0xff]
  %v2608 = vld [vmem:[#allocation5 + $0x3] ss:$0 sm:$0xff]
  %2609 = vmatprep.subr.mxu0 0.0
  %2610 = vmatpush1.msra.mxu0 %v2528
  %2611 = vmatprep.subr.mxu0 0.0
  %2612 = vmatpush1.msra.mxu0 %v2529
  %2613 = vmatprep.subr.mxu0 0.0
  %2614 = vmatpush1.msra.mxu0 %v2530
  %2615 = vmatprep.subr.mxu0 0.0
  %2616 = vmatpush1.msra.mxu0 %v2531
  %2617 = vmatprep.subr.mxu0 0.0
  %2618 = vmatpush1.msra.mxu0 %v2532
  %2619 = vmatprep.subr.mxu0 0.0
  %2620 = vmatpush1.msra.mxu0 %v2533
  %2621 = vmatprep.subr.mxu0 0.0
  %2622 = vmatpush1.msra.mxu0 %v2534
  %2623 = vmatprep.subr.mxu0 0.0
  %2624 = vmatpush1.msra.mxu0 %v2535
  %2625 = vmatprep.subr.mxu0 0.0
  %2626 = vmatpush1.msra.mxu0 %v2536
  %2627 = vmatprep.subr.mxu0 0.0
  %2628 = vmatpush1.msra.mxu0 %v2537
  %2629 = vmatprep.subr.mxu0 0.0
  %2630 = vmatpush1.msra.mxu0 %v2538
  %2631 = vmatprep.subr.mxu0 0.0
  %2632 = vmatpush1.msra.mxu0 %v2539
  %2633 = vmatprep.subr.mxu0 0.0
  %2634 = vmatpush1.msra.mxu0 %v2540
  %2635 = vmatprep.subr.mxu0 0.0
  %2636 = vmatpush1.msra.mxu0 %v2541
  %2637 = vmatprep.subr.mxu0 0.0
  %2638 = vmatpush1.msra.mxu0 %v2542
  %2639 = vmatprep.subr.mxu0 0.0
  %2640 = vmatpush1.msra.mxu0 %v2543
  %2641 = vmatprep.subr.mxu0 0.0
  %2642 = vmatpush1.msra.mxu0 %v2544
  %2643 = vmatprep.subr.mxu0 0.0
  %2644 = vmatpush1.msra.mxu0 %v2545
  %2645 = vmatprep.subr.mxu0 0.0
  %2646 = vmatpush1.msra.mxu0 %v2546
  %2647 = vmatprep.subr.mxu0 0.0
  %2648 = vmatpush1.msra.mxu0 %v2547
  %2649 = vmatprep.subr.mxu0 0.0
  %2650 = vmatpush1.msra.mxu0 %v2548
  %2651 = vmatprep.subr.mxu0 0.0
  %2652 = vmatpush1.msra.mxu0 %v2549
  %2653 = vmatprep.subr.mxu0 0.0
  %2654 = vmatpush1.msra.mxu0 %v2550
  %2655 = vmatprep.subr.mxu0 0.0
  %2656 = vmatpush1.msra.mxu0 %v2551
  %2657 = vmatprep.subr.mxu0 0.0
  %2658 = vmatpush1.msra.mxu0 %v2552
  %2659 = vmatprep.subr.mxu0 0.0
  %2660 = vmatpush1.msra.mxu0 %v2553
  %2661 = vmatprep.subr.mxu0 0.0
  %2662 = vmatpush1.msra.mxu0 %v2554
  %2663 = vmatprep.subr.mxu0 0.0
  %2664 = vmatpush1.msra.mxu0 %v2555
  %2665 = vmatprep.subr.mxu0 0.0
  %2666 = vmatpush1.msra.mxu0 %v2556
  %2667 = vmatprep.subr.mxu0 0.0
  %2668 = vmatpush1.msra.mxu0 %v2557
  %2669 = vmatprep.subr.mxu0 0.0
  %2670 = vmatpush1.msra.mxu0 %v2558
  %2671 = vmatprep.subr.mxu0 0.0
  %2672 = vmatpush1.msra.mxu0 %v2559
  %2673 = vmatprep.mubr.f32.mxu0 %v2490
  %2674 = vmatmul.mubr.f32.gmra.mrb[0].mxu0 %v2480
  %v2675 = vpop.f32.mrb[0].mxu0
  %v2676 = vadd.f32 %v2608, %v2675
  %v2677 = vpop.f32.mrb[0].mxu0
  %2678 = vmatprep.mubr.f32.mxu0 %v2495
  %2679 = vmatmul.mubr.f32.gmra.mrb[0].mxu0 %v2485
  %v2680 = vpop.f32.mrb[0].mxu0
  %v2681 = vadd.f32 %v2608, %v2680
  %v2682 = vpop.f32.mrb[0].mxu0
  %2683 = vdwg.mxu0
  %2684 = vmatprep.subr.mxu0 0.0
  %2685 = vmatpush1.msra.mxu0 %v2560
  %2686 = vmatprep.subr.mxu0 0.0
  %2687 = vmatpush1.msra.mxu0 %v2561
  %2688 = vmatprep.subr.mxu0 0.0
  %2689 = vmatpush1.msra.mxu0 %v2562
  %2690 = vmatprep.subr.mxu0 0.0
  %2691 = vmatpush1.msra.mxu0 %v2563
  %2692 = vmatprep.subr.mxu0 0.0
  %2693 = vmatpush1.msra.mxu0 %v2564
  %2694 = vmatprep.subr.mxu0 0.0
  %2695 = vmatpush1.msra.mxu0 %v2565
  %2696 = vmatprep.subr.mxu0 0.0
  %2697 = vmatpush1.msra.mxu0 %v2566
  %2698 = vmatprep.subr.mxu0 0.0
  %2699 = vmatpush1.msra.mxu0 %v2567
  %2700 = vmatprep.subr.mxu0 0.0
  %2701 = vmatpush1.msra.mxu0 %v2568
  %2702 = vmatprep.subr.mxu0 0.0
  %2703 = vmatpush1.msra.mxu0 %v2569
  %2704 = vmatprep.subr.mxu0 0.0
  %2705 = vmatpush1.msra.mxu0 %v2570
  %2706 = vmatprep.subr.mxu0 0.0
  %2707 = vmatpush1.msra.mxu0 %v2571
  %2708 = vmatprep.subr.mxu0 0.0
  %2709 = vmatpush1.msra.mxu0 %v2572
  %2710 = vmatprep.subr.mxu0 0.0
  %2711 = vmatpush1.msra.mxu0 %v2573
  %2712 = vmatprep.subr.mxu0 0.0
  %2713 = vmatpush1.msra.mxu0 %v2574
  %2714 = vmatprep.subr.mxu0 0.0
  %2715 = vmatpush1.msra.mxu0 %v2575
  %2716 = vmatprep.subr.mxu0 0.0
  %2717 = vmatpush1.msra.mxu0 %v2576
  %2718 = vmatprep.subr.mxu0 0.0
  %2719 = vmatpush1.msra.mxu0 %v2577
  %2720 = vmatprep.subr.mxu0 0.0
  %2721 = vmatpush1.msra.mxu0 %v2578
  %2722 = vmatprep.subr.mxu0 0.0
  %2723 = vmatpush1.msra.mxu0 %v2579
  %2724 = vmatprep.subr.mxu0 0.0
  %2725 = vmatpush1.msra.mxu0 %v2580
  %2726 = vmatprep.subr.mxu0 0.0
  %2727 = vmatpush1.msra.mxu0 %v2581
  %2728 = vmatprep.subr.mxu0 0.0
  %2729 = vmatpush1.msra.mxu0 %v2582
  %2730 = vmatprep.subr.mxu0 0.0
  %2731 = vmatpush1.msra.mxu0 %v2583
  %2732 = vmatprep.subr.mxu0 0.0
  %2733 = vmatpush1.msra.mxu0 %v2584
  %2734 = vmatprep.subr.mxu0 0.0
  %2735 = vmatpush1.msra.mxu0 %v2585
  %2736 = vmatprep.subr.mxu0 0.0
  %2737 = vmatpush1.msra.mxu0 %v2586
  %2738 = vmatprep.subr.mxu0 0.0
  %2739 = vmatpush1.msra.mxu0 %v2587
  %2740 = vmatprep.subr.mxu0 0.0
  %2741 = vmatpush1.msra.mxu0 %v2588
  %2742 = vmatprep.subr.mxu0 0.0
  %2743 = vmatpush1.msra.mxu0 %v2589
  %2744 = vmatprep.subr.mxu0 0.0
  %2745 = vmatpush1.msra.mxu0 %v2590
  %2746 = vmatprep.subr.mxu0 0.0
  %2747 = vmatpush1.msra.mxu0 %v2591
  %2748 = vmatprep.mubr.f32.mxu0 %v2510
  %2749 = vmatmul.mubr.f32.gmra.mrb[0].mxu0 %v2500
  %v2750 = vpop.f32.mrb[0].mxu0
  %v2751 = vadd.f32 %v2676, %v2750
  %v2752 = vpop.f32.mrb[0].mxu0
  %2753 = vmatprep.mubr.f32.mxu0 %v2515
  %2754 = vmatmul.mubr.f32.gmra.mrb[0].mxu0 %v2505
  %v2755 = vpop.f32.mrb[0].mxu0
  %v2756 = vadd.f32 %v2681, %v2755
  %v2757 = vpop.f32.mrb[0].mxu0
  %2758 = vdwg.mxu0
  %2759 = vmatprep.subr.mxu0 0.0
  %2760 = vmatpush1.msra.mxu0 %v2592
  %2761 = vmatprep.subr.mxu0 0.0
  %2762 = vmatpush1.msra.mxu0 %v2593
  %2763 = vmatprep.subr.mxu0 0.0
  %2764 = vmatpush1.msra.mxu0 %v2594
  %2765 = vmatprep.subr.mxu0 0.0
  %2766 = vmatpush1.msra.mxu0 %v2595
  %2767 = vmatprep.subr.mxu0 0.0
  %2768 = vmatpush1.msra.mxu0 %v2596
  %2769 = vmatprep.subr.mxu0 0.0
  %2770 = vmatpush1.msra.mxu0 %v2597
  %2771 = vmatprep.subr.mxu0 0.0
  %2772 = vmatpush1.msra.mxu0 %v2598
  %2773 = vmatprep.subr.mxu0 0.0
  %2774 = vmatpush1.msra.mxu0 %v2599
  %2775 = vmatprep.subr.mxu0 0.0
  %2776 = vmatpush1.msra.mxu0 %v2600
  %2777 = vmatprep.subr.mxu0 0.0
  %2778 = vmatpush1.msra.mxu0 %v2601
  %2779 = vmatprep.subr.mxu0 0.0
  %2780 = vmatpush1.msra.mxu0 %v2602
  %2781 = vmatprep.subr.mxu0 0.0
  %2782 = vmatpush1.msra.mxu0 %v2603
  %2783 = vmatprep.subr.mxu0 0.0
  %2784 = vmatpush1.msra.mxu0 %v2604
  %2785 = vmatprep.subr.mxu0 0.0
  %2786 = vmatpush1.msra.mxu0 %v2605
  %2787 = vmatprep.subr.mxu0 0.0
  %2788 = vmatpush1.msra.mxu0 %v2606
  %2789 = vmatprep.subr.mxu0 0.0
  %2790 = vmatpush1.msra.mxu0 %v2607
  %2791 = vmatprep.subr.mxu0 0.0
  %2792 = vmatpush1.msra.mxu0 0.0
  %2793 = vmatprep.subr.mxu0 0.0
  %2794 = vmatpush1.msra.mxu0 0.0
  %2795 = vmatprep.subr.mxu0 0.0
  %2796 = vmatpush1.msra.mxu0 0.0
  %2797 = vmatprep.subr.mxu0 0.0
  %2798 = vmatpush1.msra.mxu0 0.0
  %2799 = vmatprep.subr.mxu0 0.0
  %2800 = vmatpush1.msra.mxu0 0.0
  %2801 = vmatprep.subr.mxu0 0.0
  %2802 = vmatpush1.msra.mxu0 0.0
  %2803 = vmatprep.subr.mxu0 0.0
  %2804 = vmatpush1.msra.mxu0 0.0
  %2805 = vmatprep.subr.mxu0 0.0
  %2806 = vmatpush1.msra.mxu0 0.0
  %2807 = vmatprep.subr.mxu0 0.0
  %2808 = vmatpush1.msra.mxu0 0.0
  %2809 = vmatprep.subr.mxu0 0.0
  %2810 = vmatpush1.msra.mxu0 0.0
  %2811 = vmatprep.subr.mxu0 0.0
  %2812 = vmatpush1.msra.mxu0 0.0
  %2813 = vmatprep.subr.mxu0 0.0
  %2814 = vmatpush1.msra.mxu0 0.0
  %2815 = vmatprep.subr.mxu0 0.0
  %2816 = vmatpush1.msra.mxu0 0.0
  %2817 = vmatprep.subr.mxu0 0.0
  %2818 = vmatpush1.msra.mxu0 0.0
  %2819 = vmatprep.subr.mxu0 0.0
  %2820 = vmatpush1.msra.mxu0 0.0
  %2821 = vmatprep.subr.mxu0 0.0
  %2822 = vmatpush1.msra.mxu0 0.0
  %2823 = vmatprep.mubr.f32.mxu0 0.0
  %2824 = vmatmul.mubr.f32.gmra.mrb[0].mxu0 %v2520
  %v2825 = vpop.f32.mrb[0].mxu0
  %v2826 = vadd.f32 %v2751, %v2825
  %v2827 = vpop.f32.mrb[0].mxu0
  %2828 = vmatprep.mubr.f32.mxu0 0.0
  %2829 = vmatmul.mubr.f32.gmra.mrb[0].mxu0 %v2525
  %v2830 = vpop.f32.mrb[0].mxu0
  %v2831 = vadd.f32 %v2756, %v2830
  %v2832 = vpop.f32.mrb[0].mxu0
  %2833 = vdwg.mxu0
  %s2834 = sshll.u32 %s1901, 4
  %2835 = dma.done %s121, %s2834
  %s2836 = sshll.u32 %s1316, 4
  %2837 = dma.done %s135, %s2836
  %v2838 = vld [vmem:[#allocation2 + $0x280] sm:$0xff]
  %v2839 = vld [vmem:[#allocation2 + $0x288] sm:$0xff]
  %v2840 = vld [vmem:[#allocation2 + $0x290] sm:$0xff]
  %v2841 = vld [vmem:[#allocation2 + $0x298] sm:$0xff]
  %v2842 = vld [vmem:[#allocation2 + $0x2a0] sm:$0xff]
  %v2843 = vld [vmem:[#allocation2 + $0x2a8] sm:$0xff]
  %v2844 = vld [vmem:[#allocation2 + $0x2b0] sm:$0xff]
  %v2845 = vld [vmem:[#allocation2 + $0x2b8] sm:$0xff]
  %v2846 = vld [vmem:[#allocation2 + $0x2c0] sm:$0xff]
  %v2847 = vld [vmem:[#allocation2 + $0x2c8] sm:$0xff]
  %v2849 = vsel %vm2382, %v2838, 0
  %v2852 = vsel %vm2382, %v2839, 0
  %v2855 = vsel %vm2382, %v2840, 0
  %v2858 = vsel %vm2382, %v2841, 0
  %v2861 = vsel %vm2382, %v2842, 0
  %v2864 = vsel %vm2382, %v2843, 0
  %v2867 = vsel %vm2382, %v2844, 0
  %v2870 = vsel %vm2382, %v2845, 0
  %v2873 = vsel %vm2382, %v2846, 0
  %v2876 = vsel %vm2382, %v2847, 0
  %2878 = vmatprep.subr.mxu0 0.0
  %2879 = vmatpush1.msra.mxu0 %v2826
  %2880 = vmatprep.subr.mxu0 0.0
  %2881 = vmatpush1.msra.mxu0 %v2831
  %2882 = vmatprep.subr.mxu0 0.0
  %2883 = vmatpush1.msra.mxu0 0.0
  %2884 = vmatprep.subr.mxu0 0.0
  %2885 = vmatpush1.msra.mxu0 0.0
  %2886 = vmatprep.subr.mxu0 0.0
  %2887 = vmatpush1.msra.mxu0 0.0
  %2888 = vmatprep.subr.mxu0 0.0
  %2889 = vmatpush1.msra.mxu0 0.0
  %2890 = vmatprep.subr.mxu0 0.0
  %2891 = vmatpush1.msra.mxu0 0.0
  %2892 = vmatprep.subr.mxu0 0.0
  %2893 = vmatpush1.msra.mxu0 0.0
  %2894 = vmatprep.subr.mxu0 0.0
  %2895 = vmatpush1.msra.mxu0 0.0
  %2896 = vmatprep.subr.mxu0 0.0
  %2897 = vmatpush1.msra.mxu0 0.0
  %2898 = vmatprep.subr.mxu0 0.0
  %2899 = vmatpush1.msra.mxu0 0.0
  %2900 = vmatprep.subr.mxu0 0.0
  %2901 = vmatpush1.msra.mxu0 0.0
  %2902 = vmatprep.subr.mxu0 0.0
  %2903 = vmatpush1.msra.mxu0 0.0
  %2904 = vmatprep.subr.mxu0 0.0
  %2905 = vmatpush1.msra.mxu0 0.0
  %2906 = vmatprep.subr.mxu0 0.0
  %2907 = vmatpush1.msra.mxu0 0.0
  %2908 = vmatprep.subr.mxu0 0.0
  %2909 = vmatpush1.msra.mxu0 0.0
  %2910 = vmatprep.subr.mxu0 0.0
  %2911 = vmatpush1.msra.mxu0 0.0
  %2912 = vmatprep.subr.mxu0 0.0
  %2913 = vmatpush1.msra.mxu0 0.0
  %2914 = vmatprep.subr.mxu0 0.0
  %2915 = vmatpush1.msra.mxu0 0.0
  %2916 = vmatprep.subr.mxu0 0.0
  %2917 = vmatpush1.msra.mxu0 0.0
  %2918 = vmatprep.subr.mxu0 0.0
  %2919 = vmatpush1.msra.mxu0 0.0
  %2920 = vmatprep.subr.mxu0 0.0
  %2921 = vmatpush1.msra.mxu0 0.0
  %2922 = vmatprep.subr.mxu0 0.0
  %2923 = vmatpush1.msra.mxu0 0.0
  %2924 = vmatprep.subr.mxu0 0.0
  %2925 = vmatpush1.msra.mxu0 0.0
  %2926 = vmatprep.subr.mxu0 0.0
  %2927 = vmatpush1.msra.mxu0 0.0
  %2928 = vmatprep.subr.mxu0 0.0
  %2929 = vmatpush1.msra.mxu0 0.0
  %2930 = vmatprep.subr.mxu0 0.0
  %2931 = vmatpush1.msra.mxu0 0.0
  %2932 = vmatprep.subr.mxu0 0.0
  %2933 = vmatpush1.msra.mxu0 0.0
  %2934 = vmatprep.subr.mxu0 0.0
  %2935 = vmatpush1.msra.mxu0 0.0
  %2936 = vmatprep.subr.mxu0 0.0
  %2937 = vmatpush1.msra.mxu0 0.0
  %2938 = vmatprep.subr.mxu0 0.0
  %2939 = vmatpush1.msra.mxu0 0.0
  %2940 = vmatprep.subr.mxu0 0.0
  %2941 = vmatpush1.msra.mxu0 0.0
  %2942 = vmatprep.mubr.f32.mxu0 0.0
  %2943 = vmatmul.mubr.f32.gmra.mrb[0].mxu0 %v2849
  %v2944 = vpop.f32.mrb[0].mxu0
  %v2945 = vadd.f32 0.0, %v2944
  %v2946 = vpop.f32.mrb[0].mxu0
  %2947 = vmatprep.mubr.f32.mxu0 0.0
  %2948 = vmatmul.mubr.f32.gmra.mrb[0].mxu0 %v2852
  %v2949 = vpop.f32.mrb[0].mxu0
  %v2950 = vadd.f32 0.0, %v2949
  %v2951 = vpop.f32.mrb[0].mxu0
  %2952 = vmatprep.mubr.f32.mxu0 0.0
  %2953 = vmatmul.mubr.f32.gmra.mrb[0].mxu0 %v2855
  %v2954 = vpop.f32.mrb[0].mxu0
  %v2955 = vadd.f32 0.0, %v2954
  %v2956 = vpop.f32.mrb[0].mxu0
  %2957 = vmatprep.mubr.f32.mxu0 0.0
  %2958 = vmatmul.mubr.f32.gmra.mrb[0].mxu0 %v2858
  %v2959 = vpop.f32.mrb[0].mxu0
  %v2960 = vadd.f32 0.0, %v2959
  %v2961 = vpop.f32.mrb[0].mxu0
  %2962 = vmatprep.mubr.f32.mxu0 0.0
  %2963 = vmatmul.mubr.f32.gmra.mrb[0].mxu0 %v2861
  %v2964 = vpop.f32.mrb[0].mxu0
  %v2965 = vadd.f32 0.0, %v2964
  %v2966 = vpop.f32.mrb[0].mxu0
  %2967 = vmatprep.mubr.f32.mxu0 0.0
  %2968 = vmatmul.mubr.f32.gmra.mrb[0].mxu0 %v2864
  %v2969 = vpop.f32.mrb[0].mxu0
  %v2970 = vadd.f32 0.0, %v2969
  %v2971 = vpop.f32.mrb[0].mxu0
  %2972 = vmatprep.mubr.f32.mxu0 0.0
  %2973 = vmatmul.mubr.f32.gmra.mrb[0].mxu0 %v2867
  %v2974 = vpop.f32.mrb[0].mxu0
  %v2975 = vadd.f32 0.0, %v2974
  %v2976 = vpop.f32.mrb[0].mxu0
  %2977 = vmatprep.mubr.f32.mxu0 0.0
  %2978 = vmatmul.mubr.f32.gmra.mrb[0].mxu0 %v2870
  %v2979 = vpop.f32.mrb[0].mxu0
  %v2980 = vadd.f32 0.0, %v2979
  %v2981 = vpop.f32.mrb[0].mxu0
  %2982 = vmatprep.mubr.f32.mxu0 0.0
  %2983 = vmatmul.mubr.f32.gmra.mrb[0].mxu0 %v2873
  %v2984 = vpop.f32.mrb[0].mxu0
  %v2985 = vadd.f32 0.0, %v2984
  %v2986 = vpop.f32.mrb[0].mxu0
  %2987 = vmatprep.mubr.f32.mxu0 0.0
  %2988 = vmatmul.mubr.f32.gmra.mrb[0].mxu0 %v2876
  %v2989 = vpop.f32.mrb[0].mxu0
  %v2990 = vadd.f32 0.0, %v2989
  %v2991 = vpop.f32.mrb[0].mxu0
  %2992 = vdwg.mxu0
  %v2993 = vld [vmem:[#allocation3 + $0xc80] sm:$0xff]
  %v2994 = vld [vmem:[#allocation3 + $0xc88] sm:$0xff]
  %v2995 = vld [vmem:[#allocation3 + $0xc90] sm:$0xff]
  %v2996 = vld [vmem:[#allocation3 + $0xc98] sm:$0xff]
  %v2997 = vld [vmem:[#allocation3 + $0xca0] sm:$0xff]
  %v2998 = vld [vmem:[#allocation3 + $0xca8] sm:$0xff]
  %v2999 = vld [vmem:[#allocation3 + $0xcb0] sm:$0xff]
  %v3000 = vld [vmem:[#allocation3 + $0xcb8] sm:$0xff]
  %v3001 = vld [vmem:[#allocation3 + $0xcc0] sm:$0xff]
  %v3002 = vld [vmem:[#allocation3 + $0xcc8] sm:$0xff]
  %v3003 = vld [vmem:[#allocation3 + $0xcd0] sm:$0xff]
  %v3004 = vld [vmem:[#allocation3 + $0xcd8] sm:$0xff]
  %v3005 = vld [vmem:[#allocation3 + $0xce0] sm:$0xff]
  %v3006 = vld [vmem:[#allocation3 + $0xce8] sm:$0xff]
  %v3007 = vld [vmem:[#allocation3 + $0xcf0] sm:$0xff]
  %v3008 = vld [vmem:[#allocation3 + $0xcf8] sm:$0xff]
  %v3009 = vld [vmem:[#allocation3 + $0xd00] sm:$0xff]
  %v3010 = vld [vmem:[#allocation3 + $0xd08] sm:$0xff]
  %v3011 = vld [vmem:[#allocation3 + $0xd10] sm:$0xff]
  %v3012 = vld [vmem:[#allocation3 + $0xd18] sm:$0xff]
  %v3013 = vld [vmem:[#allocation3 + $0xd20] sm:$0xff]
  %v3014 = vld [vmem:[#allocation3 + $0xd28] sm:$0xff]
  %v3015 = vld [vmem:[#allocation3 + $0xd30] sm:$0xff]
  %v3016 = vld [vmem:[#allocation3 + $0xd38] sm:$0xff]
  %v3017 = vld [vmem:[#allocation3 + $0xd40] sm:$0xff]
  %v3018 = vld [vmem:[#allocation3 + $0xd48] sm:$0xff]
  %v3019 = vld [vmem:[#allocation3 + $0xd50] sm:$0xff]
  %v3020 = vld [vmem:[#allocation3 + $0xd58] sm:$0xff]
  %v3021 = vld [vmem:[#allocation3 + $0xd60] sm:$0xff]
  %v3022 = vld [vmem:[#allocation3 + $0xd68] sm:$0xff]
  %v3023 = vld [vmem:[#allocation3 + $0xd70] sm:$0xff]
  %v3024 = vld [vmem:[#allocation3 + $0xd78] sm:$0xff]
  %v3025 = vld [vmem:[#allocation3 + $0xd80] sm:$0xff]
  %v3026 = vld [vmem:[#allocation3 + $0xd88] sm:$0xff]
  %v3027 = vld [vmem:[#allocation3 + $0xd90] sm:$0xff]
  %v3028 = vld [vmem:[#allocation3 + $0xd98] sm:$0xff]
  %v3029 = vld [vmem:[#allocation3 + $0xda0] sm:$0xff]
  %v3030 = vld [vmem:[#allocation3 + $0xda8] sm:$0xff]
  %v3031 = vld [vmem:[#allocation3 + $0xdb0] sm:$0xff]
  %v3032 = vld [vmem:[#allocation3 + $0xdb8] sm:$0xff]
  %v3033 = vld [vmem:[#allocation3 + $0xdc0] sm:$0xff]
  %v3034 = vld [vmem:[#allocation3 + $0xdc8] sm:$0xff]
  %v3035 = vld [vmem:[#allocation3 + $0xdd0] sm:$0xff]
  %v3036 = vld [vmem:[#allocation3 + $0xdd8] sm:$0xff]
  %v3037 = vld [vmem:[#allocation3 + $0xde0] sm:$0xff]
  %v3038 = vld [vmem:[#allocation3 + $0xde8] sm:$0xff]
  %v3039 = vld [vmem:[#allocation3 + $0xdf0] sm:$0xff]
  %v3040 = vld [vmem:[#allocation3 + $0xdf8] sm:$0xff]
  %v3041 = vld [vmem:[#allocation3 + $0xe00] sm:$0xff]
  %v3042 = vld [vmem:[#allocation3 + $0xe08] sm:$0xff]
  %v3043 = vld [vmem:[#allocation3 + $0xe10] sm:$0xff]
  %v3044 = vld [vmem:[#allocation3 + $0xe18] sm:$0xff]
  %v3045 = vld [vmem:[#allocation3 + $0xe20] sm:$0xff]
  %v3046 = vld [vmem:[#allocation3 + $0xe28] sm:$0xff]
  %v3047 = vld [vmem:[#allocation3 + $0xe30] sm:$0xff]
  %v3048 = vld [vmem:[#allocation3 + $0xe38] sm:$0xff]
  %v3049 = vld [vmem:[#allocation3 + $0xe40] sm:$0xff]
  %v3050 = vld [vmem:[#allocation3 + $0xe48] sm:$0xff]
  %v3051 = vld [vmem:[#allocation3 + $0xe50] sm:$0xff]
  %v3052 = vld [vmem:[#allocation3 + $0xe58] sm:$0xff]
  %v3053 = vld [vmem:[#allocation3 + $0xe60] sm:$0xff]
  %v3054 = vld [vmem:[#allocation3 + $0xe68] sm:$0xff]
  %v3055 = vld [vmem:[#allocation3 + $0xe70] sm:$0xff]
  %v3056 = vld [vmem:[#allocation3 + $0xe78] sm:$0xff]
  %v3057 = vld [vmem:[#allocation3 + $0xe80] sm:$0xff]
  %v3058 = vld [vmem:[#allocation3 + $0xe88] sm:$0xff]
  %v3059 = vld [vmem:[#allocation3 + $0xe90] sm:$0xff]
  %v3060 = vld [vmem:[#allocation3 + $0xe98] sm:$0xff]
  %v3061 = vld [vmem:[#allocation3 + $0xea0] sm:$0xff]
  %v3062 = vld [vmem:[#allocation3 + $0xea8] sm:$0xff]
  %v3063 = vld [vmem:[#allocation3 + $0xeb0] sm:$0xff]
  %v3064 = vld [vmem:[#allocation3 + $0xeb8] sm:$0xff]
  %v3065 = vld [vmem:[#allocation3 + $0xec0] sm:$0xff]
  %v3066 = vld [vmem:[#allocation3 + $0xec8] sm:$0xff]
  %v3067 = vld [vmem:[#allocation3 + $0xed0] sm:$0xff]
  %v3068 = vld [vmem:[#allocation3 + $0xed8] sm:$0xff]
  %v3069 = vld [vmem:[#allocation3 + $0xee0] sm:$0xff]
  %v3070 = vld [vmem:[#allocation3 + $0xee8] sm:$0xff]
  %v3071 = vld [vmem:[#allocation3 + $0xef0] sm:$0xff]
  %v3072 = vld [vmem:[#allocation3 + $0xef8] sm:$0xff]
  %v3073 = vld [vmem:[#allocation5 + $0x4] ss:$0 sm:$0xff]
  %3074 = vmatprep.subr.mxu0 0.0
  %3075 = vmatpush1.msra.mxu0 %v2993
  %3076 = vmatprep.subr.mxu0 0.0
  %3077 = vmatpush1.msra.mxu0 %v2994
  %3078 = vmatprep.subr.mxu0 0.0
  %3079 = vmatpush1.msra.mxu0 %v2995
  %3080 = vmatprep.subr.mxu0 0.0
  %3081 = vmatpush1.msra.mxu0 %v2996
  %3082 = vmatprep.subr.mxu0 0.0
  %3083 = vmatpush1.msra.mxu0 %v2997
  %3084 = vmatprep.subr.mxu0 0.0
  %3085 = vmatpush1.msra.mxu0 %v2998
  %3086 = vmatprep.subr.mxu0 0.0
  %3087 = vmatpush1.msra.mxu0 %v2999
  %3088 = vmatprep.subr.mxu0 0.0
  %3089 = vmatpush1.msra.mxu0 %v3000
  %3090 = vmatprep.subr.mxu0 0.0
  %3091 = vmatpush1.msra.mxu0 %v3001
  %3092 = vmatprep.subr.mxu0 0.0
  %3093 = vmatpush1.msra.mxu0 %v3002
  %3094 = vmatprep.subr.mxu0 0.0
  %3095 = vmatpush1.msra.mxu0 %v3003
  %3096 = vmatprep.subr.mxu0 0.0
  %3097 = vmatpush1.msra.mxu0 %v3004
  %3098 = vmatprep.subr.mxu0 0.0
  %3099 = vmatpush1.msra.mxu0 %v3005
  %3100 = vmatprep.subr.mxu0 0.0
  %3101 = vmatpush1.msra.mxu0 %v3006
  %3102 = vmatprep.subr.mxu0 0.0
  %3103 = vmatpush1.msra.mxu0 %v3007
  %3104 = vmatprep.subr.mxu0 0.0
  %3105 = vmatpush1.msra.mxu0 %v3008
  %3106 = vmatprep.subr.mxu0 0.0
  %3107 = vmatpush1.msra.mxu0 %v3009
  %3108 = vmatprep.subr.mxu0 0.0
  %3109 = vmatpush1.msra.mxu0 %v3010
  %3110 = vmatprep.subr.mxu0 0.0
  %3111 = vmatpush1.msra.mxu0 %v3011
  %3112 = vmatprep.subr.mxu0 0.0
  %3113 = vmatpush1.msra.mxu0 %v3012
  %3114 = vmatprep.subr.mxu0 0.0
  %3115 = vmatpush1.msra.mxu0 %v3013
  %3116 = vmatprep.subr.mxu0 0.0
  %3117 = vmatpush1.msra.mxu0 %v3014
  %3118 = vmatprep.subr.mxu0 0.0
  %3119 = vmatpush1.msra.mxu0 %v3015
  %3120 = vmatprep.subr.mxu0 0.0
  %3121 = vmatpush1.msra.mxu0 %v3016
  %3122 = vmatprep.subr.mxu0 0.0
  %3123 = vmatpush1.msra.mxu0 %v3017
  %3124 = vmatprep.subr.mxu0 0.0
  %3125 = vmatpush1.msra.mxu0 %v3018
  %3126 = vmatprep.subr.mxu0 0.0
  %3127 = vmatpush1.msra.mxu0 %v3019
  %3128 = vmatprep.subr.mxu0 0.0
  %3129 = vmatpush1.msra.mxu0 %v3020
  %3130 = vmatprep.subr.mxu0 0.0
  %3131 = vmatpush1.msra.mxu0 %v3021
  %3132 = vmatprep.subr.mxu0 0.0
  %3133 = vmatpush1.msra.mxu0 %v3022
  %3134 = vmatprep.subr.mxu0 0.0
  %3135 = vmatpush1.msra.mxu0 %v3023
  %3136 = vmatprep.subr.mxu0 0.0
  %3137 = vmatpush1.msra.mxu0 %v3024
  %3138 = vmatprep.mubr.f32.mxu0 %v2955
  %3139 = vmatmul.mubr.f32.gmra.mrb[0].mxu0 %v2945
  %v3140 = vpop.f32.mrb[0].mxu0
  %v3141 = vadd.f32 %v3073, %v3140
  %v3142 = vpop.f32.mrb[0].mxu0
  %3143 = vmatprep.mubr.f32.mxu0 %v2960
  %3144 = vmatmul.mubr.f32.gmra.mrb[0].mxu0 %v2950
  %v3145 = vpop.f32.mrb[0].mxu0
  %v3146 = vadd.f32 %v3073, %v3145
  %v3147 = vpop.f32.mrb[0].mxu0
  %3148 = vdwg.mxu0
  %3149 = vmatprep.subr.mxu0 0.0
  %3150 = vmatpush1.msra.mxu0 %v3025
  %3151 = vmatprep.subr.mxu0 0.0
  %3152 = vmatpush1.msra.mxu0 %v3026
  %3153 = vmatprep.subr.mxu0 0.0
  %3154 = vmatpush1.msra.mxu0 %v3027
  %3155 = vmatprep.subr.mxu0 0.0
  %3156 = vmatpush1.msra.mxu0 %v3028
  %3157 = vmatprep.subr.mxu0 0.0
  %3158 = vmatpush1.msra.mxu0 %v3029
  %3159 = vmatprep.subr.mxu0 0.0
  %3160 = vmatpush1.msra.mxu0 %v3030
  %3161 = vmatprep.subr.mxu0 0.0
  %3162 = vmatpush1.msra.mxu0 %v3031
  %3163 = vmatprep.subr.mxu0 0.0
  %3164 = vmatpush1.msra.mxu0 %v3032
  %3165 = vmatprep.subr.mxu0 0.0
  %3166 = vmatpush1.msra.mxu0 %v3033
  %3167 = vmatprep.subr.mxu0 0.0
  %3168 = vmatpush1.msra.mxu0 %v3034
  %3169 = vmatprep.subr.mxu0 0.0
  %3170 = vmatpush1.msra.mxu0 %v3035
  %3171 = vmatprep.subr.mxu0 0.0
  %3172 = vmatpush1.msra.mxu0 %v3036
  %3173 = vmatprep.subr.mxu0 0.0
  %3174 = vmatpush1.msra.mxu0 %v3037
  %3175 = vmatprep.subr.mxu0 0.0
  %3176 = vmatpush1.msra.mxu0 %v3038
  %3177 = vmatprep.subr.mxu0 0.0
  %3178 = vmatpush1.msra.mxu0 %v3039
  %3179 = vmatprep.subr.mxu0 0.0
  %3180 = vmatpush1.msra.mxu0 %v3040
  %3181 = vmatprep.subr.mxu0 0.0
  %3182 = vmatpush1.msra.mxu0 %v3041
  %3183 = vmatprep.subr.mxu0 0.0
  %3184 = vmatpush1.msra.mxu0 %v3042
  %3185 = vmatprep.subr.mxu0 0.0
  %3186 = vmatpush1.msra.mxu0 %v3043
  %3187 = vmatprep.subr.mxu0 0.0
  %3188 = vmatpush1.msra.mxu0 %v3044
  %3189 = vmatprep.subr.mxu0 0.0
  %3190 = vmatpush1.msra.mxu0 %v3045
  %3191 = vmatprep.subr.mxu0 0.0
  %3192 = vmatpush1.msra.mxu0 %v3046
  %3193 = vmatprep.subr.mxu0 0.0
  %3194 = vmatpush1.msra.mxu0 %v3047
  %3195 = vmatprep.subr.mxu0 0.0
  %3196 = vmatpush1.msra.mxu0 %v3048
  %3197 = vmatprep.subr.mxu0 0.0
  %3198 = vmatpush1.msra.mxu0 %v3049
  %3199 = vmatprep.subr.mxu0 0.0
  %3200 = vmatpush1.msra.mxu0 %v3050
  %3201 = vmatprep.subr.mxu0 0.0
  %3202 = vmatpush1.msra.mxu0 %v3051
  %3203 = vmatprep.subr.mxu0 0.0
  %3204 = vmatpush1.msra.mxu0 %v3052
  %3205 = vmatprep.subr.mxu0 0.0
  %3206 = vmatpush1.msra.mxu0 %v3053
  %3207 = vmatprep.subr.mxu0 0.0
  %3208 = vmatpush1.msra.mxu0 %v3054
  %3209 = vmatprep.subr.mxu0 0.0
  %3210 = vmatpush1.msra.mxu0 %v3055
  %3211 = vmatprep.subr.mxu0 0.0
  %3212 = vmatpush1.msra.mxu0 %v3056
  %3213 = vmatprep.mubr.f32.mxu0 %v2975
  %3214 = vmatmul.mubr.f32.gmra.mrb[0].mxu0 %v2965
  %v3215 = vpop.f32.mrb[0].mxu0
  %v3216 = vadd.f32 %v3141, %v3215
  %v3217 = vpop.f32.mrb[0].mxu0
  %3218 = vmatprep.mubr.f32.mxu0 %v2980
  %3219 = vmatmul.mubr.f32.gmra.mrb[0].mxu0 %v2970
  %v3220 = vpop.f32.mrb[0].mxu0
  %v3221 = vadd.f32 %v3146, %v3220
  %v3222 = vpop.f32.mrb[0].mxu0
  %3223 = vdwg.mxu0
  %3224 = vmatprep.subr.mxu0 0.0
  %3225 = vmatpush1.msra.mxu0 %v3057
  %3226 = vmatprep.subr.mxu0 0.0
  %3227 = vmatpush1.msra.mxu0 %v3058
  %3228 = vmatprep.subr.mxu0 0.0
  %3229 = vmatpush1.msra.mxu0 %v3059
  %3230 = vmatprep.subr.mxu0 0.0
  %3231 = vmatpush1.msra.mxu0 %v3060
  %3232 = vmatprep.subr.mxu0 0.0
  %3233 = vmatpush1.msra.mxu0 %v3061
  %3234 = vmatprep.subr.mxu0 0.0
  %3235 = vmatpush1.msra.mxu0 %v3062
  %3236 = vmatprep.subr.mxu0 0.0
  %3237 = vmatpush1.msra.mxu0 %v3063
  %3238 = vmatprep.subr.mxu0 0.0
  %3239 = vmatpush1.msra.mxu0 %v3064
  %3240 = vmatprep.subr.mxu0 0.0
  %3241 = vmatpush1.msra.mxu0 %v3065
  %3242 = vmatprep.subr.mxu0 0.0
  %3243 = vmatpush1.msra.mxu0 %v3066
  %3244 = vmatprep.subr.mxu0 0.0
  %3245 = vmatpush1.msra.mxu0 %v3067
  %3246 = vmatprep.subr.mxu0 0.0
  %3247 = vmatpush1.msra.mxu0 %v3068
  %3248 = vmatprep.subr.mxu0 0.0
  %3249 = vmatpush1.msra.mxu0 %v3069
  %3250 = vmatprep.subr.mxu0 0.0
  %3251 = vmatpush1.msra.mxu0 %v3070
  %3252 = vmatprep.subr.mxu0 0.0
  %3253 = vmatpush1.msra.mxu0 %v3071
  %3254 = vmatprep.subr.mxu0 0.0
  %3255 = vmatpush1.msra.mxu0 %v3072
  %3256 = vmatprep.subr.mxu0 0.0
  %3257 = vmatpush1.msra.mxu0 0.0
  %3258 = vmatprep.subr.mxu0 0.0
  %3259 = vmatpush1.msra.mxu0 0.0
  %3260 = vmatprep.subr.mxu0 0.0
  %3261 = vmatpush1.msra.mxu0 0.0
  %3262 = vmatprep.subr.mxu0 0.0
  %3263 = vmatpush1.msra.mxu0 0.0
  %3264 = vmatprep.subr.mxu0 0.0
  %3265 = vmatpush1.msra.mxu0 0.0
  %3266 = vmatprep.subr.mxu0 0.0
  %3267 = vmatpush1.msra.mxu0 0.0
  %3268 = vmatprep.subr.mxu0 0.0
  %3269 = vmatpush1.msra.mxu0 0.0
  %3270 = vmatprep.subr.mxu0 0.0
  %3271 = vmatpush1.msra.mxu0 0.0
  %3272 = vmatprep.subr.mxu0 0.0
  %3273 = vmatpush1.msra.mxu0 0.0
  %3274 = vmatprep.subr.mxu0 0.0
  %3275 = vmatpush1.msra.mxu0 0.0
  %3276 = vmatprep.subr.mxu0 0.0
  %3277 = vmatpush1.msra.mxu0 0.0
  %3278 = vmatprep.subr.mxu0 0.0
  %3279 = vmatpush1.msra.mxu0 0.0
  %3280 = vmatprep.subr.mxu0 0.0
  %3281 = vmatpush1.msra.mxu0 0.0
  %3282 = vmatprep.subr.mxu0 0.0
  %3283 = vmatpush1.msra.mxu0 0.0
  %3284 = vmatprep.subr.mxu0 0.0
  %3285 = vmatpush1.msra.mxu0 0.0
  %3286 = vmatprep.subr.mxu0 0.0
  %3287 = vmatpush1.msra.mxu0 0.0
  %3288 = vmatprep.mubr.f32.mxu0 0.0
  %3289 = vmatmul.mubr.f32.gmra.mrb[0].mxu0 %v2985
  %v3290 = vpop.f32.mrb[0].mxu0
  %v3291 = vadd.f32 %v3216, %v3290
  %v3292 = vpop.f32.mrb[0].mxu0
  %3293 = vmatprep.mubr.f32.mxu0 0.0
  %3294 = vmatmul.mubr.f32.gmra.mrb[0].mxu0 %v2990
  %v3295 = vpop.f32.mrb[0].mxu0
  %v3296 = vadd.f32 %v3221, %v3295
  %v3297 = vpop.f32.mrb[0].mxu0
  %3298 = vdwg.mxu0
  %s3299 = sshll.u32 %s1313, 4
  %3300 = dma.done %s149, %s3299
  %s3301 = sshll.u32 %s1316, 4
  %3302 = dma.done %s163, %s3301
  %v3303 = vld [vmem:[#allocation2 + $0x2d0] sm:$0xff]
  %v3304 = vld [vmem:[#allocation2 + $0x2d8] sm:$0xff]
  %v3305 = vld [vmem:[#allocation2 + $0x2e0] sm:$0xff]
  %v3306 = vld [vmem:[#allocation2 + $0x2e8] sm:$0xff]
  %v3307 = vld [vmem:[#allocation2 + $0x2f0] sm:$0xff]
  %v3308 = vld [vmem:[#allocation2 + $0x2f8] sm:$0xff]
  %v3309 = vld [vmem:[#allocation2 + $0x300] sm:$0xff]
  %v3310 = vld [vmem:[#allocation2 + $0x308] sm:$0xff]
  %v3311 = vld [vmem:[#allocation2 + $0x310] sm:$0xff]
  %v3312 = vld [vmem:[#allocation2 + $0x318] sm:$0xff]
  %v3313 = vld [vmem:[#allocation2 + $0x320] sm:$0xff]
  %v3314 = vld [vmem:[#allocation2 + $0x328] sm:$0xff]
  %v3315 = vld [vmem:[#allocation2 + $0x330] sm:$0xff]
  %v3316 = vld [vmem:[#allocation2 + $0x338] sm:$0xff]
  %v3317 = vld [vmem:[#allocation2 + $0x340] sm:$0xff]
  %v3318 = vld [vmem:[#allocation2 + $0x348] sm:$0xff]
  %v3319 = vld [vmem:[#allocation2 + $0x350] sm:$0xff]
  %v3320 = vld [vmem:[#allocation2 + $0x358] sm:$0xff]
  %v3321 = vld [vmem:[#allocation2 + $0x360] sm:$0xff]
  %v3322 = vld [vmem:[#allocation2 + $0x368] sm:$0xff]
  %v3324 = vsel %vm2382, %v3303, 0
  %v3327 = vsel %vm2382, %v3304, 0
  %v3330 = vsel %vm2382, %v3305, 0
  %v3333 = vsel %vm2382, %v3306, 0
  %v3336 = vsel %vm2382, %v3307, 0
  %v3339 = vsel %vm2382, %v3308, 0
  %v3342 = vsel %vm2382, %v3309, 0
  %v3345 = vsel %vm2382, %v3310, 0
  %v3348 = vsel %vm2382, %v3311, 0
  %v3351 = vsel %vm2382, %v3312, 0
  %v3354 = vsel %vm2382, %v3313, 0
  %v3357 = vsel %vm2382, %v3314, 0
  %v3360 = vsel %vm2382, %v3315, 0
  %v3363 = vsel %vm2382, %v3316, 0
  %v3366 = vsel %vm2382, %v3317, 0
  %v3369 = vsel %vm2382, %v3318, 0
  %v3372 = vsel %vm2382, %v3319, 0
  %v3375 = vsel %vm2382, %v3320, 0
  %v3378 = vsel %vm2382, %v3321, 0
  %v3381 = vsel %vm2382, %v3322, 0
  %3383 = vmatprep.subr.mxu0 0.0
  %3384 = vmatpush1.msra.mxu0 %v3291
  %3385 = vmatprep.subr.mxu0 0.0
  %3386 = vmatpush1.msra.mxu0 %v3296
  %3387 = vmatprep.subr.mxu0 0.0
  %3388 = vmatpush1.msra.mxu0 0.0
  %3389 = vmatprep.subr.mxu0 0.0
  %3390 = vmatpush1.msra.mxu0 0.0
  %3391 = vmatprep.subr.mxu0 0.0
  %3392 = vmatpush1.msra.mxu0 0.0
  %3393 = vmatprep.subr.mxu0 0.0
  %3394 = vmatpush1.msra.mxu0 0.0
  %3395 = vmatprep.subr.mxu0 0.0
  %3396 = vmatpush1.msra.mxu0 0.0
  %3397 = vmatprep.subr.mxu0 0.0
  %3398 = vmatpush1.msra.mxu0 0.0
  %3399 = vmatprep.subr.mxu0 0.0
  %3400 = vmatpush1.msra.mxu0 0.0
  %3401 = vmatprep.subr.mxu0 0.0
  %3402 = vmatpush1.msra.mxu0 0.0
  %3403 = vmatprep.subr.mxu0 0.0
  %3404 = vmatpush1.msra.mxu0 0.0
  %3405 = vmatprep.subr.mxu0 0.0
  %3406 = vmatpush1.msra.mxu0 0.0
  %3407 = vmatprep.subr.mxu0 0.0
  %3408 = vmatpush1.msra.mxu0 0.0
  %3409 = vmatprep.subr.mxu0 0.0
  %3410 = vmatpush1.msra.mxu0 0.0
  %3411 = vmatprep.subr.mxu0 0.0
  %3412 = vmatpush1.msra.mxu0 0.0
  %3413 = vmatprep.subr.mxu0 0.0
  %3414 = vmatpush1.msra.mxu0 0.0
  %3415 = vmatprep.subr.mxu0 0.0
  %3416 = vmatpush1.msra.mxu0 0.0
  %3417 = vmatprep.subr.mxu0 0.0
  %3418 = vmatpush1.msra.mxu0 0.0
  %3419 = vmatprep.subr.mxu0 0.0
  %3420 = vmatpush1.msra.mxu0 0.0
  %3421 = vmatprep.subr.mxu0 0.0
  %3422 = vmatpush1.msra.mxu0 0.0
  %3423 = vmatprep.subr.mxu0 0.0
  %3424 = vmatpush1.msra.mxu0 0.0
  %3425 = vmatprep.subr.mxu0 0.0
  %3426 = vmatpush1.msra.mxu0 0.0
  %3427 = vmatprep.subr.mxu0 0.0
  %3428 = vmatpush1.msra.mxu0 0.0
  %3429 = vmatprep.subr.mxu0 0.0
  %3430 = vmatpush1.msra.mxu0 0.0
  %3431 = vmatprep.subr.mxu0 0.0
  %3432 = vmatpush1.msra.mxu0 0.0
  %3433 = vmatprep.subr.mxu0 0.0
  %3434 = vmatpush1.msra.mxu0 0.0
  %3435 = vmatprep.subr.mxu0 0.0
  %3436 = vmatpush1.msra.mxu0 0.0
  %3437 = vmatprep.subr.mxu0 0.0
  %3438 = vmatpush1.msra.mxu0 0.0
  %3439 = vmatprep.subr.mxu0 0.0
  %3440 = vmatpush1.msra.mxu0 0.0
  %3441 = vmatprep.subr.mxu0 0.0
  %3442 = vmatpush1.msra.mxu0 0.0
  %3443 = vmatprep.subr.mxu0 0.0
  %3444 = vmatpush1.msra.mxu0 0.0
  %3445 = vmatprep.subr.mxu0 0.0
  %3446 = vmatpush1.msra.mxu0 0.0
  %3447 = vmatprep.mubr.f32.mxu0 0.0
  %3448 = vmatmul.mubr.f32.gmra.mrb[0].mxu0 %v3324
  %v3449 = vpop.f32.mrb[0].mxu0
  %v3450 = vadd.f32 0.0, %v3449
  %v3451 = vpop.f32.mrb[0].mxu0
  %3452 = vmatprep.mubr.f32.mxu0 0.0
  %3453 = vmatmul.mubr.f32.gmra.mrb[0].mxu0 %v3327
  %v3454 = vpop.f32.mrb[0].mxu0
  %v3455 = vadd.f32 0.0, %v3454
  %v3456 = vpop.f32.mrb[0].mxu0
  %3457 = vmatprep.mubr.f32.mxu0 0.0
  %3458 = vmatmul.mubr.f32.gmra.mrb[0].mxu0 %v3330
  %v3459 = vpop.f32.mrb[0].mxu0
  %v3460 = vadd.f32 0.0, %v3459
  %v3461 = vpop.f32.mrb[0].mxu0
  %3462 = vmatprep.mubr.f32.mxu0 0.0
  %3463 = vmatmul.mubr.f32.gmra.mrb[0].mxu0 %v3333
  %v3464 = vpop.f32.mrb[0].mxu0
  %v3465 = vadd.f32 0.0, %v3464
  %v3466 = vpop.f32.mrb[0].mxu0
  %3467 = vmatprep.mubr.f32.mxu0 0.0
  %3468 = vmatmul.mubr.f32.gmra.mrb[0].mxu0 %v3336
  %v3469 = vpop.f32.mrb[0].mxu0
  %v3470 = vadd.f32 0.0, %v3469
  %v3471 = vpop.f32.mrb[0].mxu0
  %3472 = vmatprep.mubr.f32.mxu0 0.0
  %3473 = vmatmul.mubr.f32.gmra.mrb[0].mxu0 %v3339
  %v3474 = vpop.f32.mrb[0].mxu0
  %v3475 = vadd.f32 0.0, %v3474
  %v3476 = vpop.f32.mrb[0].mxu0
  %3477 = vmatprep.mubr.f32.mxu0 0.0
  %3478 = vmatmul.mubr.f32.gmra.mrb[0].mxu0 %v3342
  %v3479 = vpop.f32.mrb[0].mxu0
  %v3480 = vadd.f32 0.0, %v3479
  %v3481 = vpop.f32.mrb[0].mxu0
  %3482 = vmatprep.mubr.f32.mxu0 0.0
  %3483 = vmatmul.mubr.f32.gmra.mrb[0].mxu0 %v3345
  %v3484 = vpop.f32.mrb[0].mxu0
  %v3485 = vadd.f32 0.0, %v3484
  %v3486 = vpop.f32.mrb[0].mxu0
  %3487 = vmatprep.mubr.f32.mxu0 0.0
  %3488 = vmatmul.mubr.f32.gmra.mrb[0].mxu0 %v3348
  %v3489 = vpop.f32.mrb[0].mxu0
  %v3490 = vadd.f32 0.0, %v3489
  %v3491 = vpop.f32.mrb[0].mxu0
  %3492 = vmatprep.mubr.f32.mxu0 0.0
  %3493 = vmatmul.mubr.f32.gmra.mrb[0].mxu0 %v3351
  %v3494 = vpop.f32.mrb[0].mxu0
  %v3495 = vadd.f32 0.0, %v3494
  %v3496 = vpop.f32.mrb[0].mxu0
  %3497 = vmatprep.mubr.f32.mxu0 0.0
  %3498 = vmatmul.mubr.f32.gmra.mrb[0].mxu0 %v3354
  %v3499 = vpop.f32.mrb[0].mxu0
  %v3500 = vadd.f32 0.0, %v3499
  %v3501 = vpop.f32.mrb[0].mxu0
  %3502 = vmatprep.mubr.f32.mxu0 0.0
  %3503 = vmatmul.mubr.f32.gmra.mrb[0].mxu0 %v3357
  %v3504 = vpop.f32.mrb[0].mxu0
  %v3505 = vadd.f32 0.0, %v3504
  %v3506 = vpop.f32.mrb[0].mxu0
  %3507 = vmatprep.mubr.f32.mxu0 0.0
  %3508 = vmatmul.mubr.f32.gmra.mrb[0].mxu0 %v3360
  %v3509 = vpop.f32.mrb[0].mxu0
  %v3510 = vadd.f32 0.0, %v3509
  %v3511 = vpop.f32.mrb[0].mxu0
  %3512 = vmatprep.mubr.f32.mxu0 0.0
  %3513 = vmatmul.mubr.f32.gmra.mrb[0].mxu0 %v3363
  %v3514 = vpop.f32.mrb[0].mxu0
  %v3515 = vadd.f32 0.0, %v3514
  %v3516 = vpop.f32.mrb[0].mxu0
  %3517 = vmatprep.mubr.f32.mxu0 0.0
  %3518 = vmatmul.mubr.f32.gmra.mrb[0].mxu0 %v3366
  %v3519 = vpop.f32.mrb[0].mxu0
  %v3520 = vadd.f32 0.0, %v3519
  %v3521 = vpop.f32.mrb[0].mxu0
  %3522 = vmatprep.mubr.f32.mxu0 0.0
  %3523 = vmatmul.mubr.f32.gmra.mrb[0].mxu0 %v3369
  %v3524 = vpop.f32.mrb[0].mxu0
  %v3525 = vadd.f32 0.0, %v3524
  %v3526 = vpop.f32.mrb[0].mxu0
  %3527 = vmatprep.mubr.f32.mxu0 0.0
  %3528 = vmatmul.mubr.f32.gmra.mrb[0].mxu0 %v3372
  %v3529 = vpop.f32.mrb[0].mxu0
  %v3530 = vadd.f32 0.0, %v3529
  %v3531 = vpop.f32.mrb[0].mxu0
  %3532 = vmatprep.mubr.f32.mxu0 0.0
  %3533 = vmatmul.mubr.f32.gmra.mrb[0].mxu0 %v3375
  %v3534 = vpop.f32.mrb[0].mxu0
  %v3535 = vadd.f32 0.0, %v3534
  %v3536 = vpop.f32.mrb[0].mxu0
  %3537 = vmatprep.mubr.f32.mxu0 0.0
  %3538 = vmatmul.mubr.f32.gmra.mrb[0].mxu0 %v3378
  %v3539 = vpop.f32.mrb[0].mxu0
  %v3540 = vadd.f32 0.0, %v3539
  %v3541 = vpop.f32.mrb[0].mxu0
  %3542 = vmatprep.mubr.f32.mxu0 0.0
  %3543 = vmatmul.mubr.f32.gmra.mrb[0].mxu0 %v3381
  %v3544 = vpop.f32.mrb[0].mxu0
  %v3545 = vadd.f32 0.0, %v3544
  %v3546 = vpop.f32.mrb[0].mxu0
  %3547 = vdwg.mxu0
  %v3548 = vld [vmem:[#allocation3 + $0xf00] sm:$0xff]
  %v3549 = vld [vmem:[#allocation3 + $0xf08] sm:$0xff]
  %v3550 = vld [vmem:[#allocation3 + $0xf10] sm:$0xff]
  %v3551 = vld [vmem:[#allocation3 + $0xf18] sm:$0xff]
  %v3552 = vld [vmem:[#allocation3 + $0xf20] sm:$0xff]
  %v3553 = vld [vmem:[#allocation3 + $0xf28] sm:$0xff]
  %v3554 = vld [vmem:[#allocation3 + $0xf30] sm:$0xff]
  %v3555 = vld [vmem:[#allocation3 + $0xf38] sm:$0xff]
  %v3556 = vld [vmem:[#allocation3 + $0xf40] sm:$0xff]
  %v3557 = vld [vmem:[#allocation3 + $0xf48] sm:$0xff]
  %v3558 = vld [vmem:[#allocation3 + $0xf50] sm:$0xff]
  %v3559 = vld [vmem:[#allocation3 + $0xf58] sm:$0xff]
  %v3560 = vld [vmem:[#allocation3 + $0xf60] sm:$0xff]
  %v3561 = vld [vmem:[#allocation3 + $0xf68] sm:$0xff]
  %v3562 = vld [vmem:[#allocation3 + $0xf70] sm:$0xff]
  %v3563 = vld [vmem:[#allocation3 + $0xf78] sm:$0xff]
  %v3564 = vld [vmem:[#allocation3 + $0xf80] sm:$0xff]
  %v3565 = vld [vmem:[#allocation3 + $0xf88] sm:$0xff]
  %v3566 = vld [vmem:[#allocation3 + $0xf90] sm:$0xff]
  %v3567 = vld [vmem:[#allocation3 + $0xf98] sm:$0xff]
  %v3568 = vld [vmem:[#allocation3 + $0xfa0] sm:$0xff]
  %v3569 = vld [vmem:[#allocation3 + $0xfa8] sm:$0xff]
  %v3570 = vld [vmem:[#allocation3 + $0xfb0] sm:$0xff]
  %v3571 = vld [vmem:[#allocation3 + $0xfb8] sm:$0xff]
  %v3572 = vld [vmem:[#allocation3 + $0xfc0] sm:$0xff]
  %v3573 = vld [vmem:[#allocation3 + $0xfc8] sm:$0xff]
  %v3574 = vld [vmem:[#allocation3 + $0xfd0] sm:$0xff]
  %v3575 = vld [vmem:[#allocation3 + $0xfd8] sm:$0xff]
  %v3576 = vld [vmem:[#allocation3 + $0xfe0] sm:$0xff]
  %v3577 = vld [vmem:[#allocation3 + $0xfe8] sm:$0xff]
  %v3578 = vld [vmem:[#allocation3 + $0xff0] sm:$0xff]
  %v3579 = vld [vmem:[#allocation3 + $0xff8] sm:$0xff]
  %v3580 = vld [vmem:[#allocation3 + $0x1000] sm:$0xff]
  %v3581 = vld [vmem:[#allocation3 + $0x1008] sm:$0xff]
  %v3582 = vld [vmem:[#allocation3 + $0x1010] sm:$0xff]
  %v3583 = vld [vmem:[#allocation3 + $0x1018] sm:$0xff]
  %v3584 = vld [vmem:[#allocation3 + $0x1020] sm:$0xff]
  %v3585 = vld [vmem:[#allocation3 + $0x1028] sm:$0xff]
  %v3586 = vld [vmem:[#allocation3 + $0x1030] sm:$0xff]
  %v3587 = vld [vmem:[#allocation3 + $0x1038] sm:$0xff]
  %v3588 = vld [vmem:[#allocation3 + $0x1040] sm:$0xff]
  %v3589 = vld [vmem:[#allocation3 + $0x1048] sm:$0xff]
  %v3590 = vld [vmem:[#allocation3 + $0x1050] sm:$0xff]
  %v3591 = vld [vmem:[#allocation3 + $0x1058] sm:$0xff]
  %v3592 = vld [vmem:[#allocation3 + $0x1060] sm:$0xff]
  %v3593 = vld [vmem:[#allocation3 + $0x1068] sm:$0xff]
  %v3594 = vld [vmem:[#allocation3 + $0x1070] sm:$0xff]
  %v3595 = vld [vmem:[#allocation3 + $0x1078] sm:$0xff]
  %v3596 = vld [vmem:[#allocation3 + $0x1080] sm:$0xff]
  %v3597 = vld [vmem:[#allocation3 + $0x1088] sm:$0xff]
  %v3598 = vld [vmem:[#allocation3 + $0x1090] sm:$0xff]
  %v3599 = vld [vmem:[#allocation3 + $0x1098] sm:$0xff]
  %v3600 = vld [vmem:[#allocation3 + $0x10a0] sm:$0xff]
  %v3601 = vld [vmem:[#allocation3 + $0x10a8] sm:$0xff]
  %v3602 = vld [vmem:[#allocation3 + $0x10b0] sm:$0xff]
  %v3603 = vld [vmem:[#allocation3 + $0x10b8] sm:$0xff]
  %v3604 = vld [vmem:[#allocation3 + $0x10c0] sm:$0xff]
  %v3605 = vld [vmem:[#allocation3 + $0x10c8] sm:$0xff]
  %v3606 = vld [vmem:[#allocation3 + $0x10d0] sm:$0xff]
  %v3607 = vld [vmem:[#allocation3 + $0x10d8] sm:$0xff]
  %v3608 = vld [vmem:[#allocation3 + $0x10e0] sm:$0xff]
  %v3609 = vld [vmem:[#allocation3 + $0x10e8] sm:$0xff]
  %v3610 = vld [vmem:[#allocation3 + $0x10f0] sm:$0xff]
  %v3611 = vld [vmem:[#allocation3 + $0x10f8] sm:$0xff]
  %v3612 = vld [vmem:[#allocation3 + $0x1100] sm:$0xff]
  %v3613 = vld [vmem:[#allocation3 + $0x1108] sm:$0xff]
  %v3614 = vld [vmem:[#allocation3 + $0x1110] sm:$0xff]
  %v3615 = vld [vmem:[#allocation3 + $0x1118] sm:$0xff]
  %v3616 = vld [vmem:[#allocation3 + $0x1120] sm:$0xff]
  %v3617 = vld [vmem:[#allocation3 + $0x1128] sm:$0xff]
  %v3618 = vld [vmem:[#allocation3 + $0x1130] sm:$0xff]
  %v3619 = vld [vmem:[#allocation3 + $0x1138] sm:$0xff]
  %v3620 = vld [vmem:[#allocation3 + $0x1140] sm:$0xff]
  %v3621 = vld [vmem:[#allocation3 + $0x1148] sm:$0xff]
  %v3622 = vld [vmem:[#allocation3 + $0x1150] sm:$0xff]
  %v3623 = vld [vmem:[#allocation3 + $0x1158] sm:$0xff]
  %v3624 = vld [vmem:[#allocation3 + $0x1160] sm:$0xff]
  %v3625 = vld [vmem:[#allocation3 + $0x1168] sm:$0xff]
  %v3626 = vld [vmem:[#allocation3 + $0x1170] sm:$0xff]
  %v3627 = vld [vmem:[#allocation3 + $0x1178] sm:$0xff]
  %v3628 = vld [vmem:[#allocation5 + $0x5] ss:$0 sm:$0xff]
  %3629 = vmatprep.subr.mxu0 0.0
  %3630 = vmatpush1.msra.mxu0 %v3548
  %3631 = vmatprep.subr.mxu0 0.0
  %3632 = vmatpush1.msra.mxu0 %v3549
  %3633 = vmatprep.subr.mxu0 0.0
  %3634 = vmatpush1.msra.mxu0 %v3550
  %3635 = vmatprep.subr.mxu0 0.0
  %3636 = vmatpush1.msra.mxu0 %v3551
  %3637 = vmatprep.subr.mxu0 0.0
  %3638 = vmatpush1.msra.mxu0 %v3552
  %3639 = vmatprep.subr.mxu0 0.0
  %3640 = vmatpush1.msra.mxu0 %v3553
  %3641 = vmatprep.subr.mxu0 0.0
  %3642 = vmatpush1.msra.mxu0 %v3554
  %3643 = vmatprep.subr.mxu0 0.0
  %3644 = vmatpush1.msra.mxu0 %v3555
  %3645 = vmatprep.subr.mxu0 0.0
  %3646 = vmatpush1.msra.mxu0 %v3556
  %3647 = vmatprep.subr.mxu0 0.0
  %3648 = vmatpush1.msra.mxu0 %v3557
  %3649 = vmatprep.subr.mxu0 0.0
  %3650 = vmatpush1.msra.mxu0 %v3558
  %3651 = vmatprep.subr.mxu0 0.0
  %3652 = vmatpush1.msra.mxu0 %v3559
  %3653 = vmatprep.subr.mxu0 0.0
  %3654 = vmatpush1.msra.mxu0 %v3560
  %3655 = vmatprep.subr.mxu0 0.0
  %3656 = vmatpush1.msra.mxu0 %v3561
  %3657 = vmatprep.subr.mxu0 0.0
  %3658 = vmatpush1.msra.mxu0 %v3562
  %3659 = vmatprep.subr.mxu0 0.0
  %3660 = vmatpush1.msra.mxu0 %v3563
  %3661 = vmatprep.subr.mxu0 0.0
  %3662 = vmatpush1.msra.mxu0 %v3564
  %3663 = vmatprep.subr.mxu0 0.0
  %3664 = vmatpush1.msra.mxu0 %v3565
  %3665 = vmatprep.subr.mxu0 0.0
  %3666 = vmatpush1.msra.mxu0 %v3566
  %3667 = vmatprep.subr.mxu0 0.0
  %3668 = vmatpush1.msra.mxu0 %v3567
  %3669 = vmatprep.subr.mxu0 0.0
  %3670 = vmatpush1.msra.mxu0 %v3568
  %3671 = vmatprep.subr.mxu0 0.0
  %3672 = vmatpush1.msra.mxu0 %v3569
  %3673 = vmatprep.subr.mxu0 0.0
  %3674 = vmatpush1.msra.mxu0 %v3570
  %3675 = vmatprep.subr.mxu0 0.0
  %3676 = vmatpush1.msra.mxu0 %v3571
  %3677 = vmatprep.subr.mxu0 0.0
  %3678 = vmatpush1.msra.mxu0 %v3572
  %3679 = vmatprep.subr.mxu0 0.0
  %3680 = vmatpush1.msra.mxu0 %v3573
  %3681 = vmatprep.subr.mxu0 0.0
  %3682 = vmatpush1.msra.mxu0 %v3574
  %3683 = vmatprep.subr.mxu0 0.0
  %3684 = vmatpush1.msra.mxu0 %v3575
  %3685 = vmatprep.subr.mxu0 0.0
  %3686 = vmatpush1.msra.mxu0 %v3576
  %3687 = vmatprep.subr.mxu0 0.0
  %3688 = vmatpush1.msra.mxu0 %v3577
  %3689 = vmatprep.subr.mxu0 0.0
  %3690 = vmatpush1.msra.mxu0 %v3578
  %3691 = vmatprep.subr.mxu0 0.0
  %3692 = vmatpush1.msra.mxu0 %v3579
  %3693 = vmatprep.mubr.f32.mxu0 %v3470
  %3694 = vmatmul.mubr.f32.gmra.mrb[0].mxu0 %v3450
  %v3695 = vpop.f32.mrb[0].mxu0
  %v3696 = vadd.f32 %v3628, %v3695
  %v3697 = vpop.f32.mrb[0].mxu0
  %3698 = vmatprep.mubr.f32.mxu0 %v3475
  %3699 = vmatmul.mubr.f32.gmra.mrb[0].mxu0 %v3455
  %v3700 = vpop.f32.mrb[0].mxu0
  %v3701 = vadd.f32 %v3628, %v3700
  %v3702 = vpop.f32.mrb[0].mxu0
  %3703 = vmatprep.mubr.f32.mxu0 %v3480
  %3704 = vmatmul.mubr.f32.gmra.mrb[0].mxu0 %v3460
  %v3705 = vpop.f32.mrb[0].mxu0
  %v3706 = vadd.f32 %v3628, %v3705
  %v3707 = vpop.f32.mrb[0].mxu0
  %3708 = vmatprep.mubr.f32.mxu0 %v3485
  %3709 = vmatmul.mubr.f32.gmra.mrb[0].mxu0 %v3465
  %v3710 = vpop.f32.mrb[0].mxu0
  %v3711 = vadd.f32 %v3628, %v3710
  %v3712 = vpop.f32.mrb[0].mxu0
  %3713 = vdwg.mxu0
  %3714 = vmatprep.subr.mxu0 0.0
  %3715 = vmatpush1.msra.mxu0 %v3580
  %3716 = vmatprep.subr.mxu0 0.0
  %3717 = vmatpush1.msra.mxu0 %v3581
  %3718 = vmatprep.subr.mxu0 0.0
  %3719 = vmatpush1.msra.mxu0 %v3582
  %3720 = vmatprep.subr.mxu0 0.0
  %3721 = vmatpush1.msra.mxu0 %v3583
  %3722 = vmatprep.subr.mxu0 0.0
  %3723 = vmatpush1.msra.mxu0 %v3584
  %3724 = vmatprep.subr.mxu0 0.0
  %3725 = vmatpush1.msra.mxu0 %v3585
  %3726 = vmatprep.subr.mxu0 0.0
  %3727 = vmatpush1.msra.mxu0 %v3586
  %3728 = vmatprep.subr.mxu0 0.0
  %3729 = vmatpush1.msra.mxu0 %v3587
  %3730 = vmatprep.subr.mxu0 0.0
  %3731 = vmatpush1.msra.mxu0 %v3588
  %3732 = vmatprep.subr.mxu0 0.0
  %3733 = vmatpush1.msra.mxu0 %v3589
  %3734 = vmatprep.subr.mxu0 0.0
  %3735 = vmatpush1.msra.mxu0 %v3590
  %3736 = vmatprep.subr.mxu0 0.0
  %3737 = vmatpush1.msra.mxu0 %v3591
  %3738 = vmatprep.subr.mxu0 0.0
  %3739 = vmatpush1.msra.mxu0 %v3592
  %3740 = vmatprep.subr.mxu0 0.0
  %3741 = vmatpush1.msra.mxu0 %v3593
  %3742 = vmatprep.subr.mxu0 0.0
  %3743 = vmatpush1.msra.mxu0 %v3594
  %3744 = vmatprep.subr.mxu0 0.0
  %3745 = vmatpush1.msra.mxu0 %v3595
  %3746 = vmatprep.subr.mxu0 0.0
  %3747 = vmatpush1.msra.mxu0 %v3596
  %3748 = vmatprep.subr.mxu0 0.0
  %3749 = vmatpush1.msra.mxu0 %v3597
  %3750 = vmatprep.subr.mxu0 0.0
  %3751 = vmatpush1.msra.mxu0 %v3598
  %3752 = vmatprep.subr.mxu0 0.0
  %3753 = vmatpush1.msra.mxu0 %v3599
  %3754 = vmatprep.subr.mxu0 0.0
  %3755 = vmatpush1.msra.mxu0 %v3600
  %3756 = vmatprep.subr.mxu0 0.0
  %3757 = vmatpush1.msra.mxu0 %v3601
  %3758 = vmatprep.subr.mxu0 0.0
  %3759 = vmatpush1.msra.mxu0 %v3602
  %3760 = vmatprep.subr.mxu0 0.0
  %3761 = vmatpush1.msra.mxu0 %v3603
  %3762 = vmatprep.subr.mxu0 0.0
  %3763 = vmatpush1.msra.mxu0 %v3604
  %3764 = vmatprep.subr.mxu0 0.0
  %3765 = vmatpush1.msra.mxu0 %v3605
  %3766 = vmatprep.subr.mxu0 0.0
  %3767 = vmatpush1.msra.mxu0 %v3606
  %3768 = vmatprep.subr.mxu0 0.0
  %3769 = vmatpush1.msra.mxu0 %v3607
  %3770 = vmatprep.subr.mxu0 0.0
  %3771 = vmatpush1.msra.mxu0 %v3608
  %3772 = vmatprep.subr.mxu0 0.0
  %3773 = vmatpush1.msra.mxu0 %v3609
  %3774 = vmatprep.subr.mxu0 0.0
  %3775 = vmatpush1.msra.mxu0 %v3610
  %3776 = vmatprep.subr.mxu0 0.0
  %3777 = vmatpush1.msra.mxu0 %v3611
  %3778 = vmatprep.mubr.f32.mxu0 %v3510
  %3779 = vmatmul.mubr.f32.gmra.mrb[0].mxu0 %v3490
  %v3780 = vpop.f32.mrb[0].mxu0
  %v3781 = vadd.f32 %v3696, %v3780
  %v3782 = vpop.f32.mrb[0].mxu0
  %3783 = vmatprep.mubr.f32.mxu0 %v3515
  %3784 = vmatmul.mubr.f32.gmra.mrb[0].mxu0 %v3495
  %v3785 = vpop.f32.mrb[0].mxu0
  %v3786 = vadd.f32 %v3701, %v3785
  %v3787 = vpop.f32.mrb[0].mxu0
  %3788 = vmatprep.mubr.f32.mxu0 %v3520
  %3789 = vmatmul.mubr.f32.gmra.mrb[0].mxu0 %v3500
  %v3790 = vpop.f32.mrb[0].mxu0
  %v3791 = vadd.f32 %v3706, %v3790
  %v3792 = vpop.f32.mrb[0].mxu0
  %3793 = vmatprep.mubr.f32.mxu0 %v3525
  %3794 = vmatmul.mubr.f32.gmra.mrb[0].mxu0 %v3505
  %v3795 = vpop.f32.mrb[0].mxu0
  %v3796 = vadd.f32 %v3711, %v3795
  %v3797 = vpop.f32.mrb[0].mxu0
  %3798 = vdwg.mxu0
  %3799 = vmatprep.subr.mxu0 0.0
  %3800 = vmatpush1.msra.mxu0 %v3612
  %3801 = vmatprep.subr.mxu0 0.0
  %3802 = vmatpush1.msra.mxu0 %v3613
  %3803 = vmatprep.subr.mxu0 0.0
  %3804 = vmatpush1.msra.mxu0 %v3614
  %3805 = vmatprep.subr.mxu0 0.0
  %3806 = vmatpush1.msra.mxu0 %v3615
  %3807 = vmatprep.subr.mxu0 0.0
  %3808 = vmatpush1.msra.mxu0 %v3616
  %3809 = vmatprep.subr.mxu0 0.0
  %3810 = vmatpush1.msra.mxu0 %v3617
  %3811 = vmatprep.subr.mxu0 0.0
  %3812 = vmatpush1.msra.mxu0 %v3618
  %3813 = vmatprep.subr.mxu0 0.0
  %3814 = vmatpush1.msra.mxu0 %v3619
  %3815 = vmatprep.subr.mxu0 0.0
  %3816 = vmatpush1.msra.mxu0 %v3620
  %3817 = vmatprep.subr.mxu0 0.0
  %3818 = vmatpush1.msra.mxu0 %v3621
  %3819 = vmatprep.subr.mxu0 0.0
  %3820 = vmatpush1.msra.mxu0 %v3622
  %3821 = vmatprep.subr.mxu0 0.0
  %3822 = vmatpush1.msra.mxu0 %v3623
  %3823 = vmatprep.subr.mxu0 0.0
  %3824 = vmatpush1.msra.mxu0 %v3624
  %3825 = vmatprep.subr.mxu0 0.0
  %3826 = vmatpush1.msra.mxu0 %v3625
  %3827 = vmatprep.subr.mxu0 0.0
  %3828 = vmatpush1.msra.mxu0 %v3626
  %3829 = vmatprep.subr.mxu0 0.0
  %3830 = vmatpush1.msra.mxu0 %v3627
  %3831 = vmatprep.subr.mxu0 0.0
  %3832 = vmatpush1.msra.mxu0 0.0
  %3833 = vmatprep.subr.mxu0 0.0
  %3834 = vmatpush1.msra.mxu0 0.0
  %3835 = vmatprep.subr.mxu0 0.0
  %3836 = vmatpush1.msra.mxu0 0.0
  %3837 = vmatprep.subr.mxu0 0.0
  %3838 = vmatpush1.msra.mxu0 0.0
  %3839 = vmatprep.subr.mxu0 0.0
  %3840 = vmatpush1.msra.mxu0 0.0
  %3841 = vmatprep.subr.mxu0 0.0
  %3842 = vmatpush1.msra.mxu0 0.0
  %3843 = vmatprep.subr.mxu0 0.0
  %3844 = vmatpush1.msra.mxu0 0.0
  %3845 = vmatprep.subr.mxu0 0.0
  %3846 = vmatpush1.msra.mxu0 0.0
  %3847 = vmatprep.subr.mxu0 0.0
  %3848 = vmatpush1.msra.mxu0 0.0
  %3849 = vmatprep.subr.mxu0 0.0
  %3850 = vmatpush1.msra.mxu0 0.0
  %3851 = vmatprep.subr.mxu0 0.0
  %3852 = vmatpush1.msra.mxu0 0.0
  %3853 = vmatprep.subr.mxu0 0.0
  %3854 = vmatpush1.msra.mxu0 0.0
  %3855 = vmatprep.subr.mxu0 0.0
  %3856 = vmatpush1.msra.mxu0 0.0
  %3857 = vmatprep.subr.mxu0 0.0
  %3858 = vmatpush1.msra.mxu0 0.0
  %3859 = vmatprep.subr.mxu0 0.0
  %3860 = vmatpush1.msra.mxu0 0.0
  %3861 = vmatprep.subr.mxu0 0.0
  %3862 = vmatpush1.msra.mxu0 0.0
  %3863 = vmatprep.mubr.f32.mxu0 0.0
  %3864 = vmatmul.mubr.f32.gmra.mrb[0].mxu0 %v3530
  %v3865 = vpop.f32.mrb[0].mxu0
  %v3866 = vadd.f32 %v3781, %v3865
  %v3867 = vpop.f32.mrb[0].mxu0
  %3868 = vmatprep.mubr.f32.mxu0 0.0
  %3869 = vmatmul.mubr.f32.gmra.mrb[0].mxu0 %v3535
  %v3870 = vpop.f32.mrb[0].mxu0
  %v3871 = vadd.f32 %v3786, %v3870
  %v3872 = vpop.f32.mrb[0].mxu0
  %3873 = vmatprep.mubr.f32.mxu0 0.0
  %3874 = vmatmul.mubr.f32.gmra.mrb[0].mxu0 %v3540
  %v3875 = vpop.f32.mrb[0].mxu0
  %v3876 = vadd.f32 %v3791, %v3875
  %v3877 = vpop.f32.mrb[0].mxu0
  %3878 = vmatprep.mubr.f32.mxu0 0.0
  %3879 = vmatmul.mubr.f32.gmra.mrb[0].mxu0 %v3545
  %v3880 = vpop.f32.mrb[0].mxu0
  %v3881 = vadd.f32 %v3796, %v3880
  %v3882 = vpop.f32.mrb[0].mxu0
  %3883 = vdwg.mxu0
  %s3884 = sshll.u32 %s276, 4
  %3885 = dma.done %s177, %s3884
  %s3886 = sshll.u32 %s1316, 4
  %3887 = dma.done %s191, %s3886
  %v3888 = vld [vmem:[#allocation2 + $0x370] sm:$0xff]
  %v3889 = vld [vmem:[#allocation2 + $0x378] sm:$0xff]
  %v3890 = vld [vmem:[#allocation2 + $0x380] sm:$0xff]
  %v3891 = vld [vmem:[#allocation2 + $0x388] sm:$0xff]
  %v3892 = vld [vmem:[#allocation2 + $0x390] sm:$0xff]
  %v3893 = vld [vmem:[#allocation2 + $0x398] sm:$0xff]
  %v3894 = vld [vmem:[#allocation2 + $0x3a0] sm:$0xff]
  %v3895 = vld [vmem:[#allocation2 + $0x3a8] sm:$0xff]
  %v3896 = vld [vmem:[#allocation2 + $0x3b0] sm:$0xff]
  %v3897 = vld [vmem:[#allocation2 + $0x3b8] sm:$0xff]
  %v3898 = vld [vmem:[#allocation2 + $0x3c0] sm:$0xff]
  %v3899 = vld [vmem:[#allocation2 + $0x3c8] sm:$0xff]
  %v3900 = vld [vmem:[#allocation2 + $0x3d0] sm:$0xff]
  %v3901 = vld [vmem:[#allocation2 + $0x3d8] sm:$0xff]
  %v3902 = vld [vmem:[#allocation2 + $0x3e0] sm:$0xff]
  %v3903 = vld [vmem:[#allocation2 + $0x3e8] sm:$0xff]
  %v3904 = vld [vmem:[#allocation2 + $0x3f0] sm:$0xff]
  %v3905 = vld [vmem:[#allocation2 + $0x3f8] sm:$0xff]
  %v3906 = vld [vmem:[#allocation2 + $0x400] sm:$0xff]
  %v3907 = vld [vmem:[#allocation2 + $0x408] sm:$0xff]
  %v3908 = vld [vmem:[#allocation2 + $0x410] sm:$0xff]
  %v3909 = vld [vmem:[#allocation2 + $0x418] sm:$0xff]
  %v3910 = vld [vmem:[#allocation2 + $0x420] sm:$0xff]
  %v3911 = vld [vmem:[#allocation2 + $0x428] sm:$0xff]
  %v3912 = vld [vmem:[#allocation2 + $0x430] sm:$0xff]
  %v3913 = vld [vmem:[#allocation2 + $0x438] sm:$0xff]
  %v3914 = vld [vmem:[#allocation2 + $0x440] sm:$0xff]
  %v3915 = vld [vmem:[#allocation2 + $0x448] sm:$0xff]
  %v3916 = vld [vmem:[#allocation2 + $0x450] sm:$0xff]
  %v3917 = vld [vmem:[#allocation2 + $0x458] sm:$0xff]
  %v3918 = vld [vmem:[#allocation2 + $0x460] sm:$0xff]
  %v3919 = vld [vmem:[#allocation2 + $0x468] sm:$0xff]
  %v3920 = vld [vmem:[#allocation2 + $0x470] sm:$0xff]
  %v3921 = vld [vmem:[#allocation2 + $0x478] sm:$0xff]
  %v3922 = vld [vmem:[#allocation2 + $0x480] sm:$0xff]
  %v3923 = vld [vmem:[#allocation2 + $0x488] sm:$0xff]
  %v3924 = vld [vmem:[#allocation2 + $0x490] sm:$0xff]
  %v3925 = vld [vmem:[#allocation2 + $0x498] sm:$0xff]
  %v3926 = vld [vmem:[#allocation2 + $0x4a0] sm:$0xff]
  %v3927 = vld [vmem:[#allocation2 + $0x4a8] sm:$0xff]
  %v3929 = vsel %vm1916, %v3888, 0
  %v3932 = vsel %vm1916, %v3889, 0
  %v3935 = vsel %vm1916, %v3890, 0
  %v3938 = vsel %vm1916, %v3891, 0
  %v3941 = vsel %vm1916, %v3892, 0
  %v3944 = vsel %vm1916, %v3893, 0
  %v3947 = vsel %vm1916, %v3894, 0
  %v3950 = vsel %vm1916, %v3895, 0
  %v3953 = vsel %vm1916, %v3896, 0
  %v3956 = vsel %vm1916, %v3897, 0
  %v3959 = vsel %vm1916, %v3898, 0
  %v3962 = vsel %vm1916, %v3899, 0
  %v3965 = vsel %vm1916, %v3900, 0
  %v3968 = vsel %vm1916, %v3901, 0
  %v3971 = vsel %vm1916, %v3902, 0
  %v3974 = vsel %vm1916, %v3903, 0
  %v3977 = vsel %vm1916, %v3904, 0
  %v3980 = vsel %vm1916, %v3905, 0
  %v3983 = vsel %vm1916, %v3906, 0
  %v3986 = vsel %vm1916, %v3907, 0
  %v3989 = vsel %vm1916, %v3908, 0
  %v3992 = vsel %vm1916, %v3909, 0
  %v3995 = vsel %vm1916, %v3910, 0
  %v3998 = vsel %vm1916, %v3911, 0
  %v4001 = vsel %vm1916, %v3912, 0
  %v4004 = vsel %vm1916, %v3913, 0
  %v4007 = vsel %vm1916, %v3914, 0
  %v4010 = vsel %vm1916, %v3915, 0
  %v4013 = vsel %vm1916, %v3916, 0
  %v4016 = vsel %vm1916, %v3917, 0
  %v4019 = vsel %vm1916, %v3918, 0
  %v4022 = vsel %vm1916, %v3919, 0
  %v4025 = vsel %vm1916, %v3920, 0
  %v4028 = vsel %vm1916, %v3921, 0
  %v4031 = vsel %vm1916, %v3922, 0
  %v4034 = vsel %vm1916, %v3923, 0
  %v4037 = vsel %vm1916, %v3924, 0
  %v4040 = vsel %vm1916, %v3925, 0
  %v4043 = vsel %vm1916, %v3926, 0
  %v4046 = vsel %vm1916, %v3927, 0
  %4048 = vmatprep.subr.mxu0 0.0
  %4049 = vmatpush1.msra.mxu0 %v3866
  %4050 = vmatprep.subr.mxu0 0.0
  %4051 = vmatpush1.msra.mxu0 %v3871
  %4052 = vmatprep.subr.mxu0 0.0
  %4053 = vmatpush1.msra.mxu0 %v3876
  %4054 = vmatprep.subr.mxu0 0.0
  %4055 = vmatpush1.msra.mxu0 %v3881
  %4056 = vmatprep.subr.mxu0 0.0
  %4057 = vmatpush1.msra.mxu0 0.0
  %4058 = vmatprep.subr.mxu0 0.0
  %4059 = vmatpush1.msra.mxu0 0.0
  %4060 = vmatprep.subr.mxu0 0.0
  %4061 = vmatpush1.msra.mxu0 0.0
  %4062 = vmatprep.subr.mxu0 0.0
  %4063 = vmatpush1.msra.mxu0 0.0
  %4064 = vmatprep.subr.mxu0 0.0
  %4065 = vmatpush1.msra.mxu0 0.0
  %4066 = vmatprep.subr.mxu0 0.0
  %4067 = vmatpush1.msra.mxu0 0.0
  %4068 = vmatprep.subr.mxu0 0.0
  %4069 = vmatpush1.msra.mxu0 0.0
  %4070 = vmatprep.subr.mxu0 0.0
  %4071 = vmatpush1.msra.mxu0 0.0
  %4072 = vmatprep.subr.mxu0 0.0
  %4073 = vmatpush1.msra.mxu0 0.0
  %4074 = vmatprep.subr.mxu0 0.0
  %4075 = vmatpush1.msra.mxu0 0.0
  %4076 = vmatprep.subr.mxu0 0.0
  %4077 = vmatpush1.msra.mxu0 0.0
  %4078 = vmatprep.subr.mxu0 0.0
  %4079 = vmatpush1.msra.mxu0 0.0
  %4080 = vmatprep.subr.mxu0 0.0
  %4081 = vmatpush1.msra.mxu0 0.0
  %4082 = vmatprep.subr.mxu0 0.0
  %4083 = vmatpush1.msra.mxu0 0.0
  %4084 = vmatprep.subr.mxu0 0.0
  %4085 = vmatpush1.msra.mxu0 0.0
  %4086 = vmatprep.subr.mxu0 0.0
  %4087 = vmatpush1.msra.mxu0 0.0
  %4088 = vmatprep.subr.mxu0 0.0
  %4089 = vmatpush1.msra.mxu0 0.0
  %4090 = vmatprep.subr.mxu0 0.0
  %4091 = vmatpush1.msra.mxu0 0.0
  %4092 = vmatprep.subr.mxu0 0.0
  %4093 = vmatpush1.msra.mxu0 0.0
  %4094 = vmatprep.subr.mxu0 0.0
  %4095 = vmatpush1.msra.mxu0 0.0
  %4096 = vmatprep.subr.mxu0 0.0
  %4097 = vmatpush1.msra.mxu0 0.0
  %4098 = vmatprep.subr.mxu0 0.0
  %4099 = vmatpush1.msra.mxu0 0.0
  %4100 = vmatprep.subr.mxu0 0.0
  %4101 = vmatpush1.msra.mxu0 0.0
  %4102 = vmatprep.subr.mxu0 0.0
  %4103 = vmatpush1.msra.mxu0 0.0
  %4104 = vmatprep.subr.mxu0 0.0
  %4105 = vmatpush1.msra.mxu0 0.0
  %4106 = vmatprep.subr.mxu0 0.0
  %4107 = vmatpush1.msra.mxu0 0.0
  %4108 = vmatprep.subr.mxu0 0.0
  %4109 = vmatpush1.msra.mxu0 0.0
  %4110 = vmatprep.subr.mxu0 0.0
  %4111 = vmatpush1.msra.mxu0 0.0
  %4112 = vmatprep.mubr.f32.mxu0 0.0
  %4113 = vmatmul.mubr.f32.gmra.mrb[0].mxu0 %v3929
  %v4114 = vpop.f32.mrb[0].mxu0
  %v4115 = vadd.f32 0.0, %v4114
  %v4116 = vpop.f32.mrb[0].mxu0
  %4117 = vmatprep.mubr.f32.mxu0 0.0
  %4118 = vmatmul.mubr.f32.gmra.mrb[0].mxu0 %v3932
  %v4119 = vpop.f32.mrb[0].mxu0
  %v4120 = vadd.f32 0.0, %v4119
  %v4121 = vpop.f32.mrb[0].mxu0
  %4122 = vmatprep.mubr.f32.mxu0 0.0
  %4123 = vmatmul.mubr.f32.gmra.mrb[0].mxu0 %v3935
  %v4124 = vpop.f32.mrb[0].mxu0
  %v4125 = vadd.f32 0.0, %v4124
  %v4126 = vpop.f32.mrb[0].mxu0
  %4127 = vmatprep.mubr.f32.mxu0 0.0
  %4128 = vmatmul.mubr.f32.gmra.mrb[0].mxu0 %v3938
  %v4129 = vpop.f32.mrb[0].mxu0
  %v4130 = vadd.f32 0.0, %v4129
  %v4131 = vpop.f32.mrb[0].mxu0
  %4132 = vmatprep.mubr.f32.mxu0 0.0
  %4133 = vmatmul.mubr.f32.gmra.mrb[0].mxu0 %v3941
  %v4134 = vpop.f32.mrb[0].mxu0
  %v4135 = vadd.f32 0.0, %v4134
  %v4136 = vpop.f32.mrb[0].mxu0
  %4137 = vmatprep.mubr.f32.mxu0 0.0
  %4138 = vmatmul.mubr.f32.gmra.mrb[0].mxu0 %v3944
  %v4139 = vpop.f32.mrb[0].mxu0
  %v4140 = vadd.f32 0.0, %v4139
  %v4141 = vpop.f32.mrb[0].mxu0
  %4142 = vmatprep.mubr.f32.mxu0 0.0
  %4143 = vmatmul.mubr.f32.gmra.mrb[0].mxu0 %v3947
  %v4144 = vpop.f32.mrb[0].mxu0
  %v4145 = vadd.f32 0.0, %v4144
  %v4146 = vpop.f32.mrb[0].mxu0
  %4147 = vmatprep.mubr.f32.mxu0 0.0
  %4148 = vmatmul.mubr.f32.gmra.mrb[0].mxu0 %v3950
  %v4149 = vpop.f32.mrb[0].mxu0
  %v4150 = vadd.f32 0.0, %v4149
  %v4151 = vpop.f32.mrb[0].mxu0
  %4152 = vmatprep.mubr.f32.mxu0 0.0
  %4153 = vmatmul.mubr.f32.gmra.mrb[0].mxu0 %v3953
  %v4154 = vpop.f32.mrb[0].mxu0
  %v4155 = vadd.f32 0.0, %v4154
  %v4156 = vpop.f32.mrb[0].mxu0
  %4157 = vmatprep.mubr.f32.mxu0 0.0
  %4158 = vmatmul.mubr.f32.gmra.mrb[0].mxu0 %v3956
  %v4159 = vpop.f32.mrb[0].mxu0
  %v4160 = vadd.f32 0.0, %v4159
  %v4161 = vpop.f32.mrb[0].mxu0
  %4162 = vmatprep.mubr.f32.mxu0 0.0
  %4163 = vmatmul.mubr.f32.gmra.mrb[0].mxu0 %v3959
  %v4164 = vpop.f32.mrb[0].mxu0
  %v4165 = vadd.f32 0.0, %v4164
  %v4166 = vpop.f32.mrb[0].mxu0
  %4167 = vmatprep.mubr.f32.mxu0 0.0
  %4168 = vmatmul.mubr.f32.gmra.mrb[0].mxu0 %v3962
  %v4169 = vpop.f32.mrb[0].mxu0
  %v4170 = vadd.f32 0.0, %v4169
  %v4171 = vpop.f32.mrb[0].mxu0
  %4172 = vmatprep.mubr.f32.mxu0 0.0
  %4173 = vmatmul.mubr.f32.gmra.mrb[0].mxu0 %v3965
  %v4174 = vpop.f32.mrb[0].mxu0
  %v4175 = vadd.f32 0.0, %v4174
  %v4176 = vpop.f32.mrb[0].mxu0
  %4177 = vmatprep.mubr.f32.mxu0 0.0
  %4178 = vmatmul.mubr.f32.gmra.mrb[0].mxu0 %v3968
  %v4179 = vpop.f32.mrb[0].mxu0
  %v4180 = vadd.f32 0.0, %v4179
  %v4181 = vpop.f32.mrb[0].mxu0
  %4182 = vmatprep.mubr.f32.mxu0 0.0
  %4183 = vmatmul.mubr.f32.gmra.mrb[0].mxu0 %v3971
  %v4184 = vpop.f32.mrb[0].mxu0
  %v4185 = vadd.f32 0.0, %v4184
  %v4186 = vpop.f32.mrb[0].mxu0
  %4187 = vmatprep.mubr.f32.mxu0 0.0
  %4188 = vmatmul.mubr.f32.gmra.mrb[0].mxu0 %v3974
  %v4189 = vpop.f32.mrb[0].mxu0
  %v4190 = vadd.f32 0.0, %v4189
  %v4191 = vpop.f32.mrb[0].mxu0
  %4192 = vmatprep.mubr.f32.mxu0 0.0
  %4193 = vmatmul.mubr.f32.gmra.mrb[0].mxu0 %v3977
  %v4194 = vpop.f32.mrb[0].mxu0
  %v4195 = vadd.f32 0.0, %v4194
  %v4196 = vpop.f32.mrb[0].mxu0
  %4197 = vmatprep.mubr.f32.mxu0 0.0
  %4198 = vmatmul.mubr.f32.gmra.mrb[0].mxu0 %v3980
  %v4199 = vpop.f32.mrb[0].mxu0
  %v4200 = vadd.f32 0.0, %v4199
  %v4201 = vpop.f32.mrb[0].mxu0
  %4202 = vmatprep.mubr.f32.mxu0 0.0
  %4203 = vmatmul.mubr.f32.gmra.mrb[0].mxu0 %v3983
  %v4204 = vpop.f32.mrb[0].mxu0
  %v4205 = vadd.f32 0.0, %v4204
  %v4206 = vpop.f32.mrb[0].mxu0
  %4207 = vmatprep.mubr.f32.mxu0 0.0
  %4208 = vmatmul.mubr.f32.gmra.mrb[0].mxu0 %v3986
  %v4209 = vpop.f32.mrb[0].mxu0
  %v4210 = vadd.f32 0.0, %v4209
  %v4211 = vpop.f32.mrb[0].mxu0
  %4212 = vmatprep.mubr.f32.mxu0 0.0
  %4213 = vmatmul.mubr.f32.gmra.mrb[0].mxu0 %v3989
  %v4214 = vpop.f32.mrb[0].mxu0
  %v4215 = vadd.f32 0.0, %v4214
  %v4216 = vpop.f32.mrb[0].mxu0
  %4217 = vmatprep.mubr.f32.mxu0 0.0
  %4218 = vmatmul.mubr.f32.gmra.mrb[0].mxu0 %v3992
  %v4219 = vpop.f32.mrb[0].mxu0
  %v4220 = vadd.f32 0.0, %v4219
  %v4221 = vpop.f32.mrb[0].mxu0
  %4222 = vmatprep.mubr.f32.mxu0 0.0
  %4223 = vmatmul.mubr.f32.gmra.mrb[0].mxu0 %v3995
  %v4224 = vpop.f32.mrb[0].mxu0
  %v4225 = vadd.f32 0.0, %v4224
  %v4226 = vpop.f32.mrb[0].mxu0
  %4227 = vmatprep.mubr.f32.mxu0 0.0
  %4228 = vmatmul.mubr.f32.gmra.mrb[0].mxu0 %v3998
  %v4229 = vpop.f32.mrb[0].mxu0
  %v4230 = vadd.f32 0.0, %v4229
  %v4231 = vpop.f32.mrb[0].mxu0
  %4232 = vmatprep.mubr.f32.mxu0 0.0
  %4233 = vmatmul.mubr.f32.gmra.mrb[0].mxu0 %v4001
  %v4234 = vpop.f32.mrb[0].mxu0
  %v4235 = vadd.f32 0.0, %v4234
  %v4236 = vpop.f32.mrb[0].mxu0
  %4237 = vmatprep.mubr.f32.mxu0 0.0
  %4238 = vmatmul.mubr.f32.gmra.mrb[0].mxu0 %v4004
  %v4239 = vpop.f32.mrb[0].mxu0
  %v4240 = vadd.f32 0.0, %v4239
  %v4241 = vpop.f32.mrb[0].mxu0
  %4242 = vmatprep.mubr.f32.mxu0 0.0
  %4243 = vmatmul.mubr.f32.gmra.mrb[0].mxu0 %v4007
  %v4244 = vpop.f32.mrb[0].mxu0
  %v4245 = vadd.f32 0.0, %v4244
  %v4246 = vpop.f32.mrb[0].mxu0
  %4247 = vmatprep.mubr.f32.mxu0 0.0
  %4248 = vmatmul.mubr.f32.gmra.mrb[0].mxu0 %v4010
  %v4249 = vpop.f32.mrb[0].mxu0
  %v4250 = vadd.f32 0.0, %v4249
  %v4251 = vpop.f32.mrb[0].mxu0
  %4252 = vmatprep.mubr.f32.mxu0 0.0
  %4253 = vmatmul.mubr.f32.gmra.mrb[0].mxu0 %v4013
  %v4254 = vpop.f32.mrb[0].mxu0
  %v4255 = vadd.f32 0.0, %v4254
  %v4256 = vpop.f32.mrb[0].mxu0
  %4257 = vmatprep.mubr.f32.mxu0 0.0
  %4258 = vmatmul.mubr.f32.gmra.mrb[0].mxu0 %v4016
  %v4259 = vpop.f32.mrb[0].mxu0
  %v4260 = vadd.f32 0.0, %v4259
  %v4261 = vpop.f32.mrb[0].mxu0
  %4262 = vmatprep.mubr.f32.mxu0 0.0
  %4263 = vmatmul.mubr.f32.gmra.mrb[0].mxu0 %v4019
  %v4264 = vpop.f32.mrb[0].mxu0
  %v4265 = vadd.f32 0.0, %v4264
  %v4266 = vpop.f32.mrb[0].mxu0
  %4267 = vmatprep.mubr.f32.mxu0 0.0
  %4268 = vmatmul.mubr.f32.gmra.mrb[0].mxu0 %v4022
  %v4269 = vpop.f32.mrb[0].mxu0
  %v4270 = vadd.f32 0.0, %v4269
  %v4271 = vpop.f32.mrb[0].mxu0
  %4272 = vmatprep.mubr.f32.mxu0 0.0
  %4273 = vmatmul.mubr.f32.gmra.mrb[0].mxu0 %v4025
  %v4274 = vpop.f32.mrb[0].mxu0
  %v4275 = vadd.f32 0.0, %v4274
  %v4276 = vpop.f32.mrb[0].mxu0
  %4277 = vmatprep.mubr.f32.mxu0 0.0
  %4278 = vmatmul.mubr.f32.gmra.mrb[0].mxu0 %v4028
  %v4279 = vpop.f32.mrb[0].mxu0
  %v4280 = vadd.f32 0.0, %v4279
  %v4281 = vpop.f32.mrb[0].mxu0
  %4282 = vmatprep.mubr.f32.mxu0 0.0
  %4283 = vmatmul.mubr.f32.gmra.mrb[0].mxu0 %v4031
  %v4284 = vpop.f32.mrb[0].mxu0
  %v4285 = vadd.f32 0.0, %v4284
  %v4286 = vpop.f32.mrb[0].mxu0
  %4287 = vmatprep.mubr.f32.mxu0 0.0
  %4288 = vmatmul.mubr.f32.gmra.mrb[0].mxu0 %v4034
  %v4289 = vpop.f32.mrb[0].mxu0
  %v4290 = vadd.f32 0.0, %v4289
  %v4291 = vpop.f32.mrb[0].mxu0
  %4292 = vmatprep.mubr.f32.mxu0 0.0
  %4293 = vmatmul.mubr.f32.gmra.mrb[0].mxu0 %v4037
  %v4294 = vpop.f32.mrb[0].mxu0
  %v4295 = vadd.f32 0.0, %v4294
  %v4296 = vpop.f32.mrb[0].mxu0
  %4297 = vmatprep.mubr.f32.mxu0 0.0
  %4298 = vmatmul.mubr.f32.gmra.mrb[0].mxu0 %v4040
  %v4299 = vpop.f32.mrb[0].mxu0
  %v4300 = vadd.f32 0.0, %v4299
  %v4301 = vpop.f32.mrb[0].mxu0
  %4302 = vmatprep.mubr.f32.mxu0 0.0
  %4303 = vmatmul.mubr.f32.gmra.mrb[0].mxu0 %v4043
  %v4304 = vpop.f32.mrb[0].mxu0
  %v4305 = vadd.f32 0.0, %v4304
  %v4306 = vpop.f32.mrb[0].mxu0
  %4307 = vmatprep.mubr.f32.mxu0 0.0
  %4308 = vmatmul.mubr.f32.gmra.mrb[0].mxu0 %v4046
  %v4309 = vpop.f32.mrb[0].mxu0
  %v4310 = vadd.f32 0.0, %v4309
  %v4311 = vpop.f32.mrb[0].mxu0
  %4312 = vdwg.mxu0
  %v4313 = vld [vmem:[#allocation3 + $0x1180] sm:$0xff]
  %v4314 = vld [vmem:[#allocation3 + $0x1188] sm:$0xff]
  %v4315 = vld [vmem:[#allocation3 + $0x1190] sm:$0xff]
  %v4316 = vld [vmem:[#allocation3 + $0x1198] sm:$0xff]
  %v4317 = vld [vmem:[#allocation3 + $0x11a0] sm:$0xff]
  %v4318 = vld [vmem:[#allocation3 + $0x11a8] sm:$0xff]
  %v4319 = vld [vmem:[#allocation3 + $0x11b0] sm:$0xff]
  %v4320 = vld [vmem:[#allocation3 + $0x11b8] sm:$0xff]
  %v4321 = vld [vmem:[#allocation3 + $0x11c0] sm:$0xff]
  %v4322 = vld [vmem:[#allocation3 + $0x11c8] sm:$0xff]
  %v4323 = vld [vmem:[#allocation3 + $0x11d0] sm:$0xff]
  %v4324 = vld [vmem:[#allocation3 + $0x11d8] sm:$0xff]
  %v4325 = vld [vmem:[#allocation3 + $0x11e0] sm:$0xff]
  %v4326 = vld [vmem:[#allocation3 + $0x11e8] sm:$0xff]
  %v4327 = vld [vmem:[#allocation3 + $0x11f0] sm:$0xff]
  %v4328 = vld [vmem:[#allocation3 + $0x11f8] sm:$0xff]
  %v4329 = vld [vmem:[#allocation3 + $0x1200] sm:$0xff]
  %v4330 = vld [vmem:[#allocation3 + $0x1208] sm:$0xff]
  %v4331 = vld [vmem:[#allocation3 + $0x1210] sm:$0xff]
  %v4332 = vld [vmem:[#allocation3 + $0x1218] sm:$0xff]
  %v4333 = vld [vmem:[#allocation3 + $0x1220] sm:$0xff]
  %v4334 = vld [vmem:[#allocation3 + $0x1228] sm:$0xff]
  %v4335 = vld [vmem:[#allocation3 + $0x1230] sm:$0xff]
  %v4336 = vld [vmem:[#allocation3 + $0x1238] sm:$0xff]
  %v4337 = vld [vmem:[#allocation3 + $0x1240] sm:$0xff]
  %v4338 = vld [vmem:[#allocation3 + $0x1248] sm:$0xff]
  %v4339 = vld [vmem:[#allocation3 + $0x1250] sm:$0xff]
  %v4340 = vld [vmem:[#allocation3 + $0x1258] sm:$0xff]
  %v4341 = vld [vmem:[#allocation3 + $0x1260] sm:$0xff]
  %v4342 = vld [vmem:[#allocation3 + $0x1268] sm:$0xff]
  %v4343 = vld [vmem:[#allocation3 + $0x1270] sm:$0xff]
  %v4344 = vld [vmem:[#allocation3 + $0x1278] sm:$0xff]
  %v4345 = vld [vmem:[#allocation3 + $0x1280] sm:$0xff]
  %v4346 = vld [vmem:[#allocation3 + $0x1288] sm:$0xff]
  %v4347 = vld [vmem:[#allocation3 + $0x1290] sm:$0xff]
  %v4348 = vld [vmem:[#allocation3 + $0x1298] sm:$0xff]
  %v4349 = vld [vmem:[#allocation3 + $0x12a0] sm:$0xff]
  %v4350 = vld [vmem:[#allocation3 + $0x12a8] sm:$0xff]
  %v4351 = vld [vmem:[#allocation3 + $0x12b0] sm:$0xff]
  %v4352 = vld [vmem:[#allocation3 + $0x12b8] sm:$0xff]
  %v4353 = vld [vmem:[#allocation3 + $0x12c0] sm:$0xff]
  %v4354 = vld [vmem:[#allocation3 + $0x12c8] sm:$0xff]
  %v4355 = vld [vmem:[#allocation3 + $0x12d0] sm:$0xff]
  %v4356 = vld [vmem:[#allocation3 + $0x12d8] sm:$0xff]
  %v4357 = vld [vmem:[#allocation3 + $0x12e0] sm:$0xff]
  %v4358 = vld [vmem:[#allocation3 + $0x12e8] sm:$0xff]
  %v4359 = vld [vmem:[#allocation3 + $0x12f0] sm:$0xff]
  %v4360 = vld [vmem:[#allocation3 + $0x12f8] sm:$0xff]
  %v4361 = vld [vmem:[#allocation3 + $0x1300] sm:$0xff]
  %v4362 = vld [vmem:[#allocation3 + $0x1308] sm:$0xff]
  %v4363 = vld [vmem:[#allocation3 + $0x1310] sm:$0xff]
  %v4364 = vld [vmem:[#allocation3 + $0x1318] sm:$0xff]
  %v4365 = vld [vmem:[#allocation3 + $0x1320] sm:$0xff]
  %v4366 = vld [vmem:[#allocation3 + $0x1328] sm:$0xff]
  %v4367 = vld [vmem:[#allocation3 + $0x1330] sm:$0xff]
  %v4368 = vld [vmem:[#allocation3 + $0x1338] sm:$0xff]
  %v4369 = vld [vmem:[#allocation3 + $0x1340] sm:$0xff]
  %v4370 = vld [vmem:[#allocation3 + $0x1348] sm:$0xff]
  %v4371 = vld [vmem:[#allocation3 + $0x1350] sm:$0xff]
  %v4372 = vld [vmem:[#allocation3 + $0x1358] sm:$0xff]
  %v4373 = vld [vmem:[#allocation3 + $0x1360] sm:$0xff]
  %v4374 = vld [vmem:[#allocation3 + $0x1368] sm:$0xff]
  %v4375 = vld [vmem:[#allocation3 + $0x1370] sm:$0xff]
  %v4376 = vld [vmem:[#allocation3 + $0x1378] sm:$0xff]
  %v4377 = vld [vmem:[#allocation3 + $0x1380] sm:$0xff]
  %v4378 = vld [vmem:[#allocation3 + $0x1388] sm:$0xff]
  %v4379 = vld [vmem:[#allocation3 + $0x1390] sm:$0xff]
  %v4380 = vld [vmem:[#allocation3 + $0x1398] sm:$0xff]
  %v4381 = vld [vmem:[#allocation3 + $0x13a0] sm:$0xff]
  %v4382 = vld [vmem:[#allocation3 + $0x13a8] sm:$0xff]
  %v4383 = vld [vmem:[#allocation3 + $0x13b0] sm:$0xff]
  %v4384 = vld [vmem:[#allocation3 + $0x13b8] sm:$0xff]
  %v4385 = vld [vmem:[#allocation3 + $0x13c0] sm:$0xff]
  %v4386 = vld [vmem:[#allocation3 + $0x13c8] sm:$0xff]
  %v4387 = vld [vmem:[#allocation3 + $0x13d0] sm:$0xff]
  %v4388 = vld [vmem:[#allocation3 + $0x13d8] sm:$0xff]
  %v4389 = vld [vmem:[#allocation3 + $0x13e0] sm:$0xff]
  %v4390 = vld [vmem:[#allocation3 + $0x13e8] sm:$0xff]
  %v4391 = vld [vmem:[#allocation3 + $0x13f0] sm:$0xff]
  %v4392 = vld [vmem:[#allocation3 + $0x13f8] sm:$0xff]
  %v4393 = vld [vmem:[#allocation5 + $0x6] ss:$0 sm:$0xff]
  %4394 = vmatprep.subr.mxu0 0.0
  %4395 = vmatpush1.msra.mxu0 %v4313
  %4396 = vmatprep.subr.mxu0 0.0
  %4397 = vmatpush1.msra.mxu0 %v4314
  %4398 = vmatprep.subr.mxu0 0.0
  %4399 = vmatpush1.msra.mxu0 %v4315
  %4400 = vmatprep.subr.mxu0 0.0
  %4401 = vmatpush1.msra.mxu0 %v4316
  %4402 = vmatprep.subr.mxu0 0.0
  %4403 = vmatpush1.msra.mxu0 %v4317
  %4404 = vmatprep.subr.mxu0 0.0
  %4405 = vmatpush1.msra.mxu0 %v4318
  %4406 = vmatprep.subr.mxu0 0.0
  %4407 = vmatpush1.msra.mxu0 %v4319
  %4408 = vmatprep.subr.mxu0 0.0
  %4409 = vmatpush1.msra.mxu0 %v4320
  %4410 = vmatprep.subr.mxu0 0.0
  %4411 = vmatpush1.msra.mxu0 %v4321
  %4412 = vmatprep.subr.mxu0 0.0
  %4413 = vmatpush1.msra.mxu0 %v4322
  %4414 = vmatprep.subr.mxu0 0.0
  %4415 = vmatpush1.msra.mxu0 %v4323
  %4416 = vmatprep.subr.mxu0 0.0
  %4417 = vmatpush1.msra.mxu0 %v4324
  %4418 = vmatprep.subr.mxu0 0.0
  %4419 = vmatpush1.msra.mxu0 %v4325
  %4420 = vmatprep.subr.mxu0 0.0
  %4421 = vmatpush1.msra.mxu0 %v4326
  %4422 = vmatprep.subr.mxu0 0.0
  %4423 = vmatpush1.msra.mxu0 %v4327
  %4424 = vmatprep.subr.mxu0 0.0
  %4425 = vmatpush1.msra.mxu0 %v4328
  %4426 = vmatprep.subr.mxu0 0.0
  %4427 = vmatpush1.msra.mxu0 %v4329
  %4428 = vmatprep.subr.mxu0 0.0
  %4429 = vmatpush1.msra.mxu0 %v4330
  %4430 = vmatprep.subr.mxu0 0.0
  %4431 = vmatpush1.msra.mxu0 %v4331
  %4432 = vmatprep.subr.mxu0 0.0
  %4433 = vmatpush1.msra.mxu0 %v4332
  %4434 = vmatprep.subr.mxu0 0.0
  %4435 = vmatpush1.msra.mxu0 %v4333
  %4436 = vmatprep.subr.mxu0 0.0
  %4437 = vmatpush1.msra.mxu0 %v4334
  %4438 = vmatprep.subr.mxu0 0.0
  %4439 = vmatpush1.msra.mxu0 %v4335
  %4440 = vmatprep.subr.mxu0 0.0
  %4441 = vmatpush1.msra.mxu0 %v4336
  %4442 = vmatprep.subr.mxu0 0.0
  %4443 = vmatpush1.msra.mxu0 %v4337
  %4444 = vmatprep.subr.mxu0 0.0
  %4445 = vmatpush1.msra.mxu0 %v4338
  %4446 = vmatprep.subr.mxu0 0.0
  %4447 = vmatpush1.msra.mxu0 %v4339
  %4448 = vmatprep.subr.mxu0 0.0
  %4449 = vmatpush1.msra.mxu0 %v4340
  %4450 = vmatprep.subr.mxu0 0.0
  %4451 = vmatpush1.msra.mxu0 %v4341
  %4452 = vmatprep.subr.mxu0 0.0
  %4453 = vmatpush1.msra.mxu0 %v4342
  %4454 = vmatprep.subr.mxu0 0.0
  %4455 = vmatpush1.msra.mxu0 %v4343
  %4456 = vmatprep.subr.mxu0 0.0
  %4457 = vmatpush1.msra.mxu0 %v4344
  %4458 = vmatprep.mubr.f32.mxu0 %v4155
  %4459 = vmatmul.mubr.f32.gmra.mrb[0].mxu0 %v4115
  %v4460 = vpop.f32.mrb[0].mxu0
  %v4461 = vadd.f32 %v4393, %v4460
  %v4462 = vpop.f32.mrb[0].mxu0
  %4463 = vmatprep.mubr.f32.mxu0 %v4160
  %4464 = vmatmul.mubr.f32.gmra.mrb[0].mxu0 %v4120
  %v4465 = vpop.f32.mrb[0].mxu0
  %v4466 = vadd.f32 %v4393, %v4465
  %v4467 = vpop.f32.mrb[0].mxu0
  %4468 = vmatprep.mubr.f32.mxu0 %v4165
  %4469 = vmatmul.mubr.f32.gmra.mrb[0].mxu0 %v4125
  %v4470 = vpop.f32.mrb[0].mxu0
  %v4471 = vadd.f32 %v4393, %v4470
  %v4472 = vpop.f32.mrb[0].mxu0
  %4473 = vmatprep.mubr.f32.mxu0 %v4170
  %4474 = vmatmul.mubr.f32.gmra.mrb[0].mxu0 %v4130
  %v4475 = vpop.f32.mrb[0].mxu0
  %v4476 = vadd.f32 %v4393, %v4475
  %v4477 = vpop.f32.mrb[0].mxu0
  %4478 = vmatprep.mubr.f32.mxu0 %v4175
  %4479 = vmatmul.mubr.f32.gmra.mrb[0].mxu0 %v4135
  %v4480 = vpop.f32.mrb[0].mxu0
  %v4481 = vadd.f32 %v4393, %v4480
  %v4482 = vpop.f32.mrb[0].mxu0
  %4483 = vmatprep.mubr.f32.mxu0 %v4180
  %4484 = vmatmul.mubr.f32.gmra.mrb[0].mxu0 %v4140
  %v4485 = vpop.f32.mrb[0].mxu0
  %v4486 = vadd.f32 %v4393, %v4485
  %v4487 = vpop.f32.mrb[0].mxu0
  %4488 = vmatprep.mubr.f32.mxu0 %v4185
  %4489 = vmatmul.mubr.f32.gmra.mrb[0].mxu0 %v4145
  %v4490 = vpop.f32.mrb[0].mxu0
  %v4491 = vadd.f32 %v4393, %v4490
  %v4492 = vpop.f32.mrb[0].mxu0
  %4493 = vmatprep.mubr.f32.mxu0 %v4190
  %4494 = vmatmul.mubr.f32.gmra.mrb[0].mxu0 %v4150
  %v4495 = vpop.f32.mrb[0].mxu0
  %v4496 = vadd.f32 %v4393, %v4495
  %v4497 = vpop.f32.mrb[0].mxu0
  %4498 = vdwg.mxu0
  %4499 = vmatprep.subr.mxu0 0.0
  %4500 = vmatpush1.msra.mxu0 %v4345
  %4501 = vmatprep.subr.mxu0 0.0
  %4502 = vmatpush1.msra.mxu0 %v4346
  %4503 = vmatprep.subr.mxu0 0.0
  %4504 = vmatpush1.msra.mxu0 %v4347
  %4505 = vmatprep.subr.mxu0 0.0
  %4506 = vmatpush1.msra.mxu0 %v4348
  %4507 = vmatprep.subr.mxu0 0.0
  %4508 = vmatpush1.msra.mxu0 %v4349
  %4509 = vmatprep.subr.mxu0 0.0
  %4510 = vmatpush1.msra.mxu0 %v4350
  %4511 = vmatprep.subr.mxu0 0.0
  %4512 = vmatpush1.msra.mxu0 %v4351
  %4513 = vmatprep.subr.mxu0 0.0
  %4514 = vmatpush1.msra.mxu0 %v4352
  %4515 = vmatprep.subr.mxu0 0.0
  %4516 = vmatpush1.msra.mxu0 %v4353
  %4517 = vmatprep.subr.mxu0 0.0
  %4518 = vmatpush1.msra.mxu0 %v4354
  %4519 = vmatprep.subr.mxu0 0.0
  %4520 = vmatpush1.msra.mxu0 %v4355
  %4521 = vmatprep.subr.mxu0 0.0
  %4522 = vmatpush1.msra.mxu0 %v4356
  %4523 = vmatprep.subr.mxu0 0.0
  %4524 = vmatpush1.msra.mxu0 %v4357
  %4525 = vmatprep.subr.mxu0 0.0
  %4526 = vmatpush1.msra.mxu0 %v4358
  %4527 = vmatprep.subr.mxu0 0.0
  %4528 = vmatpush1.msra.mxu0 %v4359
  %4529 = vmatprep.subr.mxu0 0.0
  %4530 = vmatpush1.msra.mxu0 %v4360
  %4531 = vmatprep.subr.mxu0 0.0
  %4532 = vmatpush1.msra.mxu0 %v4361
  %4533 = vmatprep.subr.mxu0 0.0
  %4534 = vmatpush1.msra.mxu0 %v4362
  %4535 = vmatprep.subr.mxu0 0.0
  %4536 = vmatpush1.msra.mxu0 %v4363
  %4537 = vmatprep.subr.mxu0 0.0
  %4538 = vmatpush1.msra.mxu0 %v4364
  %4539 = vmatprep.subr.mxu0 0.0
  %4540 = vmatpush1.msra.mxu0 %v4365
  %4541 = vmatprep.subr.mxu0 0.0
  %4542 = vmatpush1.msra.mxu0 %v4366
  %4543 = vmatprep.subr.mxu0 0.0
  %4544 = vmatpush1.msra.mxu0 %v4367
  %4545 = vmatprep.subr.mxu0 0.0
  %4546 = vmatpush1.msra.mxu0 %v4368
  %4547 = vmatprep.subr.mxu0 0.0
  %4548 = vmatpush1.msra.mxu0 %v4369
  %4549 = vmatprep.subr.mxu0 0.0
  %4550 = vmatpush1.msra.mxu0 %v4370
  %4551 = vmatprep.subr.mxu0 0.0
  %4552 = vmatpush1.msra.mxu0 %v4371
  %4553 = vmatprep.subr.mxu0 0.0
  %4554 = vmatpush1.msra.mxu0 %v4372
  %4555 = vmatprep.subr.mxu0 0.0
  %4556 = vmatpush1.msra.mxu0 %v4373
  %4557 = vmatprep.subr.mxu0 0.0
  %4558 = vmatpush1.msra.mxu0 %v4374
  %4559 = vmatprep.subr.mxu0 0.0
  %4560 = vmatpush1.msra.mxu0 %v4375
  %4561 = vmatprep.subr.mxu0 0.0
  %4562 = vmatpush1.msra.mxu0 %v4376
  %4563 = vmatprep.mubr.f32.mxu0 %v4235
  %4564 = vmatmul.mubr.f32.gmra.mrb[0].mxu0 %v4195
  %v4565 = vpop.f32.mrb[0].mxu0
  %v4566 = vadd.f32 %v4461, %v4565
  %v4567 = vpop.f32.mrb[0].mxu0
  %4568 = vmatprep.mubr.f32.mxu0 %v4240
  %4569 = vmatmul.mubr.f32.gmra.mrb[0].mxu0 %v4200
  %v4570 = vpop.f32.mrb[0].mxu0
  %v4571 = vadd.f32 %v4466, %v4570
  %v4572 = vpop.f32.mrb[0].mxu0
  %4573 = vmatprep.mubr.f32.mxu0 %v4245
  %4574 = vmatmul.mubr.f32.gmra.mrb[0].mxu0 %v4205
  %v4575 = vpop.f32.mrb[0].mxu0
  %v4576 = vadd.f32 %v4471, %v4575
  %v4577 = vpop.f32.mrb[0].mxu0
  %4578 = vmatprep.mubr.f32.mxu0 %v4250
  %4579 = vmatmul.mubr.f32.gmra.mrb[0].mxu0 %v4210
  %v4580 = vpop.f32.mrb[0].mxu0
  %v4581 = vadd.f32 %v4476, %v4580
  %v4582 = vpop.f32.mrb[0].mxu0
  %4583 = vmatprep.mubr.f32.mxu0 %v4255
  %4584 = vmatmul.mubr.f32.gmra.mrb[0].mxu0 %v4215
  %v4585 = vpop.f32.mrb[0].mxu0
  %v4586 = vadd.f32 %v4481, %v4585
  %v4587 = vpop.f32.mrb[0].mxu0
  %4588 = vmatprep.mubr.f32.mxu0 %v4260
  %4589 = vmatmul.mubr.f32.gmra.mrb[0].mxu0 %v4220
  %v4590 = vpop.f32.mrb[0].mxu0
  %v4591 = vadd.f32 %v4486, %v4590
  %v4592 = vpop.f32.mrb[0].mxu0
  %4593 = vmatprep.mubr.f32.mxu0 %v4265
  %4594 = vmatmul.mubr.f32.gmra.mrb[0].mxu0 %v4225
  %v4595 = vpop.f32.mrb[0].mxu0
  %v4596 = vadd.f32 %v4491, %v4595
  %v4597 = vpop.f32.mrb[0].mxu0
  %4598 = vmatprep.mubr.f32.mxu0 %v4270
  %4599 = vmatmul.mubr.f32.gmra.mrb[0].mxu0 %v4230
  %v4600 = vpop.f32.mrb[0].mxu0
  %v4601 = vadd.f32 %v4496, %v4600
  %v4602 = vpop.f32.mrb[0].mxu0
  %4603 = vdwg.mxu0
  %4604 = vmatprep.subr.mxu0 0.0
  %4605 = vmatpush1.msra.mxu0 %v4377
  %4606 = vmatprep.subr.mxu0 0.0
  %4607 = vmatpush1.msra.mxu0 %v4378
  %4608 = vmatprep.subr.mxu0 0.0
  %4609 = vmatpush1.msra.mxu0 %v4379
  %4610 = vmatprep.subr.mxu0 0.0
  %4611 = vmatpush1.msra.mxu0 %v4380
  %4612 = vmatprep.subr.mxu0 0.0
  %4613 = vmatpush1.msra.mxu0 %v4381
  %4614 = vmatprep.subr.mxu0 0.0
  %4615 = vmatpush1.msra.mxu0 %v4382
  %4616 = vmatprep.subr.mxu0 0.0
  %4617 = vmatpush1.msra.mxu0 %v4383
  %4618 = vmatprep.subr.mxu0 0.0
  %4619 = vmatpush1.msra.mxu0 %v4384
  %4620 = vmatprep.subr.mxu0 0.0
  %4621 = vmatpush1.msra.mxu0 %v4385
  %4622 = vmatprep.subr.mxu0 0.0
  %4623 = vmatpush1.msra.mxu0 %v4386
  %4624 = vmatprep.subr.mxu0 0.0
  %4625 = vmatpush1.msra.mxu0 %v4387
  %4626 = vmatprep.subr.mxu0 0.0
  %4627 = vmatpush1.msra.mxu0 %v4388
  %4628 = vmatprep.subr.mxu0 0.0
  %4629 = vmatpush1.msra.mxu0 %v4389
  %4630 = vmatprep.subr.mxu0 0.0
  %4631 = vmatpush1.msra.mxu0 %v4390
  %4632 = vmatprep.subr.mxu0 0.0
  %4633 = vmatpush1.msra.mxu0 %v4391
  %4634 = vmatprep.subr.mxu0 0.0
  %4635 = vmatpush1.msra.mxu0 %v4392
  %4636 = vmatprep.subr.mxu0 0.0
  %4637 = vmatpush1.msra.mxu0 0.0
  %4638 = vmatprep.subr.mxu0 0.0
  %4639 = vmatpush1.msra.mxu0 0.0
  %4640 = vmatprep.subr.mxu0 0.0
  %4641 = vmatpush1.msra.mxu0 0.0
  %4642 = vmatprep.subr.mxu0 0.0
  %4643 = vmatpush1.msra.mxu0 0.0
  %4644 = vmatprep.subr.mxu0 0.0
  %4645 = vmatpush1.msra.mxu0 0.0
  %4646 = vmatprep.subr.mxu0 0.0
  %4647 = vmatpush1.msra.mxu0 0.0
  %4648 = vmatprep.subr.mxu0 0.0
  %4649 = vmatpush1.msra.mxu0 0.0
  %4650 = vmatprep.subr.mxu0 0.0
  %4651 = vmatpush1.msra.mxu0 0.0
  %4652 = vmatprep.subr.mxu0 0.0
  %4653 = vmatpush1.msra.mxu0 0.0
  %4654 = vmatprep.subr.mxu0 0.0
  %4655 = vmatpush1.msra.mxu0 0.0
  %4656 = vmatprep.subr.mxu0 0.0
  %4657 = vmatpush1.msra.mxu0 0.0
  %4658 = vmatprep.subr.mxu0 0.0
  %4659 = vmatpush1.msra.mxu0 0.0
  %4660 = vmatprep.subr.mxu0 0.0
  %4661 = vmatpush1.msra.mxu0 0.0
  %4662 = vmatprep.subr.mxu0 0.0
  %4663 = vmatpush1.msra.mxu0 0.0
  %4664 = vmatprep.subr.mxu0 0.0
  %4665 = vmatpush1.msra.mxu0 0.0
  %4666 = vmatprep.subr.mxu0 0.0
  %4667 = vmatpush1.msra.mxu0 0.0
  %4668 = vmatprep.mubr.f32.mxu0 0.0
  %4669 = vmatmul.mubr.f32.gmra.mrb[0].mxu0 %v4275
  %v4670 = vpop.f32.mrb[0].mxu0
  %v4671 = vadd.f32 %v4566, %v4670
  %v4672 = vpop.f32.mrb[0].mxu0
  %4673 = vmatprep.mubr.f32.mxu0 0.0
  %4674 = vmatmul.mubr.f32.gmra.mrb[0].mxu0 %v4280
  %v4675 = vpop.f32.mrb[0].mxu0
  %v4676 = vadd.f32 %v4571, %v4675
  %v4677 = vpop.f32.mrb[0].mxu0
  %4678 = vmatprep.mubr.f32.mxu0 0.0
  %4679 = vmatmul.mubr.f32.gmra.mrb[0].mxu0 %v4285
  %v4680 = vpop.f32.mrb[0].mxu0
  %v4681 = vadd.f32 %v4576, %v4680
  %v4682 = vpop.f32.mrb[0].mxu0
  %4683 = vmatprep.mubr.f32.mxu0 0.0
  %4684 = vmatmul.mubr.f32.gmra.mrb[0].mxu0 %v4290
  %v4685 = vpop.f32.mrb[0].mxu0
  %v4686 = vadd.f32 %v4581, %v4685
  %v4687 = vpop.f32.mrb[0].mxu0
  %4688 = vmatprep.mubr.f32.mxu0 0.0
  %4689 = vmatmul.mubr.f32.gmra.mrb[0].mxu0 %v4295
  %v4690 = vpop.f32.mrb[0].mxu0
  %v4691 = vadd.f32 %v4586, %v4690
  %v4692 = vpop.f32.mrb[0].mxu0
  %4693 = vmatprep.mubr.f32.mxu0 0.0
  %4694 = vmatmul.mubr.f32.gmra.mrb[0].mxu0 %v4300
  %v4695 = vpop.f32.mrb[0].mxu0
  %v4696 = vadd.f32 %v4591, %v4695
  %v4697 = vpop.f32.mrb[0].mxu0
  %4698 = vmatprep.mubr.f32.mxu0 0.0
  %4699 = vmatmul.mubr.f32.gmra.mrb[0].mxu0 %v4305
  %v4700 = vpop.f32.mrb[0].mxu0
  %v4701 = vadd.f32 %v4596, %v4700
  %v4702 = vpop.f32.mrb[0].mxu0
  %4703 = vmatprep.mubr.f32.mxu0 0.0
  %4704 = vmatmul.mubr.f32.gmra.mrb[0].mxu0 %v4310
  %v4705 = vpop.f32.mrb[0].mxu0
  %v4706 = vadd.f32 %v4601, %v4705
  %v4707 = vpop.f32.mrb[0].mxu0
  %4708 = vdwg.mxu0
  %s4709 = sshll.u32 %s1316, 4
  %4710 = dma.done %s205, %s4709
  %s4711 = smul.u32 8, 80
  %s4712 = smul.u32 %s4711, 2
  %s4713 = sshll.u32 %s4712, 4
  %4714 = dma.done %s217, %s4713
  %v4715 = vld [vmem:[#allocation2 + $0x4b0] sm:$0xff]
  %v4716 = vld [vmem:[#allocation2 + $0x4b8] sm:$0xff]
  %v4717 = vld [vmem:[#allocation2 + $0x4c0] sm:$0xff]
  %v4718 = vld [vmem:[#allocation2 + $0x4c8] sm:$0xff]
  %v4719 = vld [vmem:[#allocation2 + $0x4d0] sm:$0xff]
  %v4720 = vld [vmem:[#allocation2 + $0x4d8] sm:$0xff]
  %v4721 = vld [vmem:[#allocation2 + $0x4e0] sm:$0xff]
  %v4722 = vld [vmem:[#allocation2 + $0x4e8] sm:$0xff]
  %v4723 = vld [vmem:[#allocation2 + $0x4f0] sm:$0xff]
  %v4724 = vld [vmem:[#allocation2 + $0x4f8] sm:$0xff]
  %v4725 = vld [vmem:[#allocation2 + $0x500] sm:$0xff]
  %v4726 = vld [vmem:[#allocation2 + $0x508] sm:$0xff]
  %v4727 = vld [vmem:[#allocation2 + $0x510] sm:$0xff]
  %v4728 = vld [vmem:[#allocation2 + $0x518] sm:$0xff]
  %v4729 = vld [vmem:[#allocation2 + $0x520] sm:$0xff]
  %v4730 = vld [vmem:[#allocation2 + $0x528] sm:$0xff]
  %v4731 = vld [vmem:[#allocation2 + $0x530] sm:$0xff]
  %v4732 = vld [vmem:[#allocation2 + $0x538] sm:$0xff]
  %v4733 = vld [vmem:[#allocation2 + $0x540] sm:$0xff]
  %v4734 = vld [vmem:[#allocation2 + $0x548] sm:$0xff]
  %v4735 = vld [vmem:[#allocation2 + $0x550] sm:$0xff]
  %v4736 = vld [vmem:[#allocation2 + $0x558] sm:$0xff]
  %v4737 = vld [vmem:[#allocation2 + $0x560] sm:$0xff]
  %v4738 = vld [vmem:[#allocation2 + $0x568] sm:$0xff]
  %v4739 = vld [vmem:[#allocation2 + $0x570] sm:$0xff]
  %v4740 = vld [vmem:[#allocation2 + $0x578] sm:$0xff]
  %v4741 = vld [vmem:[#allocation2 + $0x580] sm:$0xff]
  %v4742 = vld [vmem:[#allocation2 + $0x588] sm:$0xff]
  %v4743 = vld [vmem:[#allocation2 + $0x590] sm:$0xff]
  %v4744 = vld [vmem:[#allocation2 + $0x598] sm:$0xff]
  %v4745 = vld [vmem:[#allocation2 + $0x5a0] sm:$0xff]
  %v4746 = vld [vmem:[#allocation2 + $0x5a8] sm:$0xff]
  %v4747 = vld [vmem:[#allocation2 + $0x5b0] sm:$0xff]
  %v4748 = vld [vmem:[#allocation2 + $0x5b8] sm:$0xff]
  %v4749 = vld [vmem:[#allocation2 + $0x5c0] sm:$0xff]
  %v4750 = vld [vmem:[#allocation2 + $0x5c8] sm:$0xff]
  %v4751 = vld [vmem:[#allocation2 + $0x5d0] sm:$0xff]
  %v4752 = vld [vmem:[#allocation2 + $0x5d8] sm:$0xff]
  %v4753 = vld [vmem:[#allocation2 + $0x5e0] sm:$0xff]
  %v4754 = vld [vmem:[#allocation2 + $0x5e8] sm:$0xff]
  %v4755 = vld [vmem:[#allocation2 + $0x5f0] sm:$0xff]
  %v4756 = vld [vmem:[#allocation2 + $0x5f8] sm:$0xff]
  %v4757 = vld [vmem:[#allocation2 + $0x600] sm:$0xff]
  %v4758 = vld [vmem:[#allocation2 + $0x608] sm:$0xff]
  %v4759 = vld [vmem:[#allocation2 + $0x610] sm:$0xff]
  %v4760 = vld [vmem:[#allocation2 + $0x618] sm:$0xff]
  %v4761 = vld [vmem:[#allocation2 + $0x620] sm:$0xff]
  %v4762 = vld [vmem:[#allocation2 + $0x628] sm:$0xff]
  %v4763 = vld [vmem:[#allocation2 + $0x630] sm:$0xff]
  %v4764 = vld [vmem:[#allocation2 + $0x638] sm:$0xff]
  %v4765 = vld [vmem:[#allocation2 + $0x640] sm:$0xff]
  %v4766 = vld [vmem:[#allocation2 + $0x648] sm:$0xff]
  %v4767 = vld [vmem:[#allocation2 + $0x650] sm:$0xff]
  %v4768 = vld [vmem:[#allocation2 + $0x658] sm:$0xff]
  %v4769 = vld [vmem:[#allocation2 + $0x660] sm:$0xff]
  %v4770 = vld [vmem:[#allocation2 + $0x668] sm:$0xff]
  %v4771 = vld [vmem:[#allocation2 + $0x670] sm:$0xff]
  %v4772 = vld [vmem:[#allocation2 + $0x678] sm:$0xff]
  %v4773 = vld [vmem:[#allocation2 + $0x680] sm:$0xff]
  %v4774 = vld [vmem:[#allocation2 + $0x688] sm:$0xff]
  %v4775 = vld [vmem:[#allocation2 + $0x690] sm:$0xff]
  %v4776 = vld [vmem:[#allocation2 + $0x698] sm:$0xff]
  %v4777 = vld [vmem:[#allocation2 + $0x6a0] sm:$0xff]
  %v4778 = vld [vmem:[#allocation2 + $0x6a8] sm:$0xff]
  %v4779 = vld [vmem:[#allocation2 + $0x6b0] sm:$0xff]
  %v4780 = vld [vmem:[#allocation2 + $0x6b8] sm:$0xff]
  %v4781 = vld [vmem:[#allocation2 + $0x6c0] sm:$0xff]
  %v4782 = vld [vmem:[#allocation2 + $0x6c8] sm:$0xff]
  %v4783 = vld [vmem:[#allocation2 + $0x6d0] sm:$0xff]
  %v4784 = vld [vmem:[#allocation2 + $0x6d8] sm:$0xff]
  %v4785 = vld [vmem:[#allocation2 + $0x6e0] sm:$0xff]
  %v4786 = vld [vmem:[#allocation2 + $0x6e8] sm:$0xff]
  %v4787 = vld [vmem:[#allocation2 + $0x6f0] sm:$0xff]
  %v4788 = vld [vmem:[#allocation2 + $0x6f8] sm:$0xff]
  %v4789 = vld [vmem:[#allocation2 + $0x700] sm:$0xff]
  %v4790 = vld [vmem:[#allocation2 + $0x708] sm:$0xff]
  %v4791 = vld [vmem:[#allocation2 + $0x710] sm:$0xff]
  %v4792 = vld [vmem:[#allocation2 + $0x718] sm:$0xff]
  %v4793 = vld [vmem:[#allocation2 + $0x720] sm:$0xff]
  %v4794 = vld [vmem:[#allocation2 + $0x728] sm:$0xff]
  %v4796 = vsel %vm1339, %v4715, 0
  %v4799 = vsel %vm1339, %v4716, 0
  %v4802 = vsel %vm1339, %v4717, 0
  %v4805 = vsel %vm1339, %v4718, 0
  %v4808 = vsel %vm1339, %v4719, 0
  %v4811 = vsel %vm1339, %v4720, 0
  %v4814 = vsel %vm1339, %v4721, 0
  %v4817 = vsel %vm1339, %v4722, 0
  %v4820 = vsel %vm1339, %v4723, 0
  %v4823 = vsel %vm1339, %v4724, 0
  %v4826 = vsel %vm1339, %v4725, 0
  %v4829 = vsel %vm1339, %v4726, 0
  %v4832 = vsel %vm1339, %v4727, 0
  %v4835 = vsel %vm1339, %v4728, 0
  %v4838 = vsel %vm1339, %v4729, 0
  %v4841 = vsel %vm1339, %v4730, 0
  %v4844 = vsel %vm1339, %v4731, 0
  %v4847 = vsel %vm1339, %v4732, 0
  %v4850 = vsel %vm1339, %v4733, 0
  %v4853 = vsel %vm1339, %v4734, 0
  %v4856 = vsel %vm1339, %v4735, 0
  %v4859 = vsel %vm1339, %v4736, 0
  %v4862 = vsel %vm1339, %v4737, 0
  %v4865 = vsel %vm1339, %v4738, 0
  %v4868 = vsel %vm1339, %v4739, 0
  %v4871 = vsel %vm1339, %v4740, 0
  %v4874 = vsel %vm1339, %v4741, 0
  %v4877 = vsel %vm1339, %v4742, 0
  %v4880 = vsel %vm1339, %v4743, 0
  %v4883 = vsel %vm1339, %v4744, 0
  %v4886 = vsel %vm1339, %v4745, 0
  %v4889 = vsel %vm1339, %v4746, 0
  %v4892 = vsel %vm1339, %v4747, 0
  %v4895 = vsel %vm1339, %v4748, 0
  %v4898 = vsel %vm1339, %v4749, 0
  %v4901 = vsel %vm1339, %v4750, 0
  %v4904 = vsel %vm1339, %v4751, 0
  %v4907 = vsel %vm1339, %v4752, 0
  %v4910 = vsel %vm1339, %v4753, 0
  %v4913 = vsel %vm1339, %v4754, 0
  %v4916 = vsel %vm1339, %v4755, 0
  %v4919 = vsel %vm1339, %v4756, 0
  %v4922 = vsel %vm1339, %v4757, 0
  %v4925 = vsel %vm1339, %v4758, 0
  %v4928 = vsel %vm1339, %v4759, 0
  %v4931 = vsel %vm1339, %v4760, 0
  %v4934 = vsel %vm1339, %v4761, 0
  %v4937 = vsel %vm1339, %v4762, 0
  %v4940 = vsel %vm1339, %v4763, 0
  %v4943 = vsel %vm1339, %v4764, 0
  %v4946 = vsel %vm1339, %v4765, 0
  %v4949 = vsel %vm1339, %v4766, 0
  %v4952 = vsel %vm1339, %v4767, 0
  %v4955 = vsel %vm1339, %v4768, 0
  %v4958 = vsel %vm1339, %v4769, 0
  %v4961 = vsel %vm1339, %v4770, 0
  %v4964 = vsel %vm1339, %v4771, 0
  %v4967 = vsel %vm1339, %v4772, 0
  %v4970 = vsel %vm1339, %v4773, 0
  %v4973 = vsel %vm1339, %v4774, 0
  %v4976 = vsel %vm1339, %v4775, 0
  %v4979 = vsel %vm1339, %v4776, 0
  %v4982 = vsel %vm1339, %v4777, 0
  %v4985 = vsel %vm1339, %v4778, 0
  %v4988 = vsel %vm1339, %v4779, 0
  %v4991 = vsel %vm1339, %v4780, 0
  %v4994 = vsel %vm1339, %v4781, 0
  %v4997 = vsel %vm1339, %v4782, 0
  %v5000 = vsel %vm1339, %v4783, 0
  %v5003 = vsel %vm1339, %v4784, 0
  %v5006 = vsel %vm1339, %v4785, 0
  %v5009 = vsel %vm1339, %v4786, 0
  %v5012 = vsel %vm1339, %v4787, 0
  %v5015 = vsel %vm1339, %v4788, 0
  %v5018 = vsel %vm1339, %v4789, 0
  %v5021 = vsel %vm1339, %v4790, 0
  %v5024 = vsel %vm1339, %v4791, 0
  %v5027 = vsel %vm1339, %v4792, 0
  %v5030 = vsel %vm1339, %v4793, 0
  %v5033 = vsel %vm1339, %v4794, 0
  %5035 = vmatprep.subr.mxu0 0.0
  %5036 = vmatpush1.msra.mxu0 %v4671
  %5037 = vmatprep.subr.mxu0 0.0
  %5038 = vmatpush1.msra.mxu0 %v4676
  %5039 = vmatprep.subr.mxu0 0.0
  %5040 = vmatpush1.msra.mxu0 %v4681
  %5041 = vmatprep.subr.mxu0 0.0
  %5042 = vmatpush1.msra.mxu0 %v4686
  %5043 = vmatprep.subr.mxu0 0.0
  %5044 = vmatpush1.msra.mxu0 %v4691
  %5045 = vmatprep.subr.mxu0 0.0
  %5046 = vmatpush1.msra.mxu0 %v4696
  %5047 = vmatprep.subr.mxu0 0.0
  %5048 = vmatpush1.msra.mxu0 %v4701
  %5049 = vmatprep.subr.mxu0 0.0
  %5050 = vmatpush1.msra.mxu0 %v4706
  %5051 = vmatprep.subr.mxu0 0.0
  %5052 = vmatpush1.msra.mxu0 0.0
  %5053 = vmatprep.subr.mxu0 0.0
  %5054 = vmatpush1.msra.mxu0 0.0
  %5055 = vmatprep.subr.mxu0 0.0
  %5056 = vmatpush1.msra.mxu0 0.0
  %5057 = vmatprep.subr.mxu0 0.0
  %5058 = vmatpush1.msra.mxu0 0.0
  %5059 = vmatprep.subr.mxu0 0.0
  %5060 = vmatpush1.msra.mxu0 0.0
  %5061 = vmatprep.subr.mxu0 0.0
  %5062 = vmatpush1.msra.mxu0 0.0
  %5063 = vmatprep.subr.mxu0 0.0
  %5064 = vmatpush1.msra.mxu0 0.0
  %5065 = vmatprep.subr.mxu0 0.0
  %5066 = vmatpush1.msra.mxu0 0.0
  %5067 = vmatprep.subr.mxu0 0.0
  %5068 = vmatpush1.msra.mxu0 0.0
  %5069 = vmatprep.subr.mxu0 0.0
  %5070 = vmatpush1.msra.mxu0 0.0
  %5071 = vmatprep.subr.mxu0 0.0
  %5072 = vmatpush1.msra.mxu0 0.0
  %5073 = vmatprep.subr.mxu0 0.0
  %5074 = vmatpush1.msra.mxu0 0.0
  %5075 = vmatprep.subr.mxu0 0.0
  %5076 = vmatpush1.msra.mxu0 0.0
  %5077 = vmatprep.subr.mxu0 0.0
  %5078 = vmatpush1.msra.mxu0 0.0
  %5079 = vmatprep.subr.mxu0 0.0
  %5080 = vmatpush1.msra.mxu0 0.0
  %5081 = vmatprep.subr.mxu0 0.0
  %5082 = vmatpush1.msra.mxu0 0.0
  %5083 = vmatprep.subr.mxu0 0.0
  %5084 = vmatpush1.msra.mxu0 0.0
  %5085 = vmatprep.subr.mxu0 0.0
  %5086 = vmatpush1.msra.mxu0 0.0
  %5087 = vmatprep.subr.mxu0 0.0
  %5088 = vmatpush1.msra.mxu0 0.0
  %5089 = vmatprep.subr.mxu0 0.0
  %5090 = vmatpush1.msra.mxu0 0.0
  %5091 = vmatprep.subr.mxu0 0.0
  %5092 = vmatpush1.msra.mxu0 0.0
  %5093 = vmatprep.subr.mxu0 0.0
  %5094 = vmatpush1.msra.mxu0 0.0
  %5095 = vmatprep.subr.mxu0 0.0
  %5096 = vmatpush1.msra.mxu0 0.0
  %5097 = vmatprep.subr.mxu0 0.0
  %5098 = vmatpush1.msra.mxu0 0.0
  %5099 = vmatprep.mubr.f32.mxu0 0.0
  %5100 = vmatmul.mubr.f32.gmra.mrb[0].mxu0 %v4796
  %v5101 = vpop.f32.mrb[0].mxu0
  %v5102 = vadd.f32 0.0, %v5101
  %v5103 = vpop.f32.mrb[0].mxu0
  %5104 = vmatprep.mubr.f32.mxu0 0.0
  %5105 = vmatmul.mubr.f32.gmra.mrb[0].mxu0 %v4799
  %v5106 = vpop.f32.mrb[0].mxu0
  %v5107 = vadd.f32 0.0, %v5106
  %v5108 = vpop.f32.mrb[0].mxu0
  %5109 = vmatprep.mubr.f32.mxu0 0.0
  %5110 = vmatmul.mubr.f32.gmra.mrb[0].mxu0 %v4802
  %v5111 = vpop.f32.mrb[0].mxu0
  %v5112 = vadd.f32 0.0, %v5111
  %v5113 = vpop.f32.mrb[0].mxu0
  %5114 = vmatprep.mubr.f32.mxu0 0.0
  %5115 = vmatmul.mubr.f32.gmra.mrb[0].mxu0 %v4805
  %v5116 = vpop.f32.mrb[0].mxu0
  %v5117 = vadd.f32 0.0, %v5116
  %v5118 = vpop.f32.mrb[0].mxu0
  %5119 = vmatprep.mubr.f32.mxu0 0.0
  %5120 = vmatmul.mubr.f32.gmra.mrb[0].mxu0 %v4808
  %v5121 = vpop.f32.mrb[0].mxu0
  %v5122 = vadd.f32 0.0, %v5121
  %v5123 = vpop.f32.mrb[0].mxu0
  %5124 = vmatprep.mubr.f32.mxu0 0.0
  %5125 = vmatmul.mubr.f32.gmra.mrb[0].mxu0 %v4811
  %v5126 = vpop.f32.mrb[0].mxu0
  %v5127 = vadd.f32 0.0, %v5126
  %v5128 = vpop.f32.mrb[0].mxu0
  %5129 = vmatprep.mubr.f32.mxu0 0.0
  %5130 = vmatmul.mubr.f32.gmra.mrb[0].mxu0 %v4814
  %v5131 = vpop.f32.mrb[0].mxu0
  %v5132 = vadd.f32 0.0, %v5131
  %v5133 = vpop.f32.mrb[0].mxu0
  %5134 = vmatprep.mubr.f32.mxu0 0.0
  %5135 = vmatmul.mubr.f32.gmra.mrb[0].mxu0 %v4817
  %v5136 = vpop.f32.mrb[0].mxu0
  %v5137 = vadd.f32 0.0, %v5136
  %v5138 = vpop.f32.mrb[0].mxu0
  %5139 = vmatprep.mubr.f32.mxu0 0.0
  %5140 = vmatmul.mubr.f32.gmra.mrb[0].mxu0 %v4820
  %v5141 = vpop.f32.mrb[0].mxu0
  %v5142 = vadd.f32 0.0, %v5141
  %v5143 = vpop.f32.mrb[0].mxu0
  %5144 = vmatprep.mubr.f32.mxu0 0.0
  %5145 = vmatmul.mubr.f32.gmra.mrb[0].mxu0 %v4823
  %v5146 = vpop.f32.mrb[0].mxu0
  %v5147 = vadd.f32 0.0, %v5146
  %v5148 = vpop.f32.mrb[0].mxu0
  %5149 = vmatprep.mubr.f32.mxu0 0.0
  %5150 = vmatmul.mubr.f32.gmra.mrb[0].mxu0 %v4826
  %v5151 = vpop.f32.mrb[0].mxu0
  %v5152 = vadd.f32 0.0, %v5151
  %v5153 = vpop.f32.mrb[0].mxu0
  %5154 = vmatprep.mubr.f32.mxu0 0.0
  %5155 = vmatmul.mubr.f32.gmra.mrb[0].mxu0 %v4829
  %v5156 = vpop.f32.mrb[0].mxu0
  %v5157 = vadd.f32 0.0, %v5156
  %v5158 = vpop.f32.mrb[0].mxu0
  %5159 = vmatprep.mubr.f32.mxu0 0.0
  %5160 = vmatmul.mubr.f32.gmra.mrb[0].mxu0 %v4832
  %v5161 = vpop.f32.mrb[0].mxu0
  %v5162 = vadd.f32 0.0, %v5161
  %v5163 = vpop.f32.mrb[0].mxu0
  %5164 = vmatprep.mubr.f32.mxu0 0.0
  %5165 = vmatmul.mubr.f32.gmra.mrb[0].mxu0 %v4835
  %v5166 = vpop.f32.mrb[0].mxu0
  %v5167 = vadd.f32 0.0, %v5166
  %v5168 = vpop.f32.mrb[0].mxu0
  %5169 = vmatprep.mubr.f32.mxu0 0.0
  %5170 = vmatmul.mubr.f32.gmra.mrb[0].mxu0 %v4838
  %v5171 = vpop.f32.mrb[0].mxu0
  %v5172 = vadd.f32 0.0, %v5171
  %v5173 = vpop.f32.mrb[0].mxu0
  %5174 = vmatprep.mubr.f32.mxu0 0.0
  %5175 = vmatmul.mubr.f32.gmra.mrb[0].mxu0 %v4841
  %v5176 = vpop.f32.mrb[0].mxu0
  %v5177 = vadd.f32 0.0, %v5176
  %v5178 = vpop.f32.mrb[0].mxu0
  %5179 = vmatprep.mubr.f32.mxu0 0.0
  %5180 = vmatmul.mubr.f32.gmra.mrb[0].mxu0 %v4844
  %v5181 = vpop.f32.mrb[0].mxu0
  %v5182 = vadd.f32 0.0, %v5181
  %v5183 = vpop.f32.mrb[0].mxu0
  %5184 = vmatprep.mubr.f32.mxu0 0.0
  %5185 = vmatmul.mubr.f32.gmra.mrb[0].mxu0 %v4847
  %v5186 = vpop.f32.mrb[0].mxu0
  %v5187 = vadd.f32 0.0, %v5186
  %v5188 = vpop.f32.mrb[0].mxu0
  %5189 = vmatprep.mubr.f32.mxu0 0.0
  %5190 = vmatmul.mubr.f32.gmra.mrb[0].mxu0 %v4850
  %v5191 = vpop.f32.mrb[0].mxu0
  %v5192 = vadd.f32 0.0, %v5191
  %v5193 = vpop.f32.mrb[0].mxu0
  %5194 = vmatprep.mubr.f32.mxu0 0.0
  %5195 = vmatmul.mubr.f32.gmra.mrb[0].mxu0 %v4853
  %v5196 = vpop.f32.mrb[0].mxu0
  %v5197 = vadd.f32 0.0, %v5196
  %v5198 = vpop.f32.mrb[0].mxu0
  %5199 = vmatprep.mubr.f32.mxu0 0.0
  %5200 = vmatmul.mubr.f32.gmra.mrb[0].mxu0 %v4856
  %v5201 = vpop.f32.mrb[0].mxu0
  %v5202 = vadd.f32 0.0, %v5201
  %v5203 = vpop.f32.mrb[0].mxu0
  %5204 = vmatprep.mubr.f32.mxu0 0.0
  %5205 = vmatmul.mubr.f32.gmra.mrb[0].mxu0 %v4859
  %v5206 = vpop.f32.mrb[0].mxu0
  %v5207 = vadd.f32 0.0, %v5206
  %v5208 = vpop.f32.mrb[0].mxu0
  %5209 = vmatprep.mubr.f32.mxu0 0.0
  %5210 = vmatmul.mubr.f32.gmra.mrb[0].mxu0 %v4862
  %v5211 = vpop.f32.mrb[0].mxu0
  %v5212 = vadd.f32 0.0, %v5211
  %v5213 = vpop.f32.mrb[0].mxu0
  %5214 = vmatprep.mubr.f32.mxu0 0.0
  %5215 = vmatmul.mubr.f32.gmra.mrb[0].mxu0 %v4865
  %v5216 = vpop.f32.mrb[0].mxu0
  %v5217 = vadd.f32 0.0, %v5216
  %v5218 = vpop.f32.mrb[0].mxu0
  %5219 = vmatprep.mubr.f32.mxu0 0.0
  %5220 = vmatmul.mubr.f32.gmra.mrb[0].mxu0 %v4868
  %v5221 = vpop.f32.mrb[0].mxu0
  %v5222 = vadd.f32 0.0, %v5221
  %v5223 = vpop.f32.mrb[0].mxu0
  %5224 = vmatprep.mubr.f32.mxu0 0.0
  %5225 = vmatmul.mubr.f32.gmra.mrb[0].mxu0 %v4871
  %v5226 = vpop.f32.mrb[0].mxu0
  %v5227 = vadd.f32 0.0, %v5226
  %v5228 = vpop.f32.mrb[0].mxu0
  %5229 = vmatprep.mubr.f32.mxu0 0.0
  %5230 = vmatmul.mubr.f32.gmra.mrb[0].mxu0 %v4874
  %v5231 = vpop.f32.mrb[0].mxu0
  %v5232 = vadd.f32 0.0, %v5231
  %v5233 = vpop.f32.mrb[0].mxu0
  %5234 = vmatprep.mubr.f32.mxu0 0.0
  %5235 = vmatmul.mubr.f32.gmra.mrb[0].mxu0 %v4877
  %v5236 = vpop.f32.mrb[0].mxu0
  %v5237 = vadd.f32 0.0, %v5236
  %v5238 = vpop.f32.mrb[0].mxu0
  %5239 = vmatprep.mubr.f32.mxu0 0.0
  %5240 = vmatmul.mubr.f32.gmra.mrb[0].mxu0 %v4880
  %v5241 = vpop.f32.mrb[0].mxu0
  %v5242 = vadd.f32 0.0, %v5241
  %v5243 = vpop.f32.mrb[0].mxu0
  %5244 = vmatprep.mubr.f32.mxu0 0.0
  %5245 = vmatmul.mubr.f32.gmra.mrb[0].mxu0 %v4883
  %v5246 = vpop.f32.mrb[0].mxu0
  %v5247 = vadd.f32 0.0, %v5246
  %v5248 = vpop.f32.mrb[0].mxu0
  %5249 = vmatprep.mubr.f32.mxu0 0.0
  %5250 = vmatmul.mubr.f32.gmra.mrb[0].mxu0 %v4886
  %v5251 = vpop.f32.mrb[0].mxu0
  %v5252 = vadd.f32 0.0, %v5251
  %v5253 = vpop.f32.mrb[0].mxu0
  %5254 = vmatprep.mubr.f32.mxu0 0.0
  %5255 = vmatmul.mubr.f32.gmra.mrb[0].mxu0 %v4889
  %v5256 = vpop.f32.mrb[0].mxu0
  %v5257 = vadd.f32 0.0, %v5256
  %v5258 = vpop.f32.mrb[0].mxu0
  %5259 = vmatprep.mubr.f32.mxu0 0.0
  %5260 = vmatmul.mubr.f32.gmra.mrb[0].mxu0 %v4892
  %v5261 = vpop.f32.mrb[0].mxu0
  %v5262 = vadd.f32 0.0, %v5261
  %v5263 = vpop.f32.mrb[0].mxu0
  %5264 = vmatprep.mubr.f32.mxu0 0.0
  %5265 = vmatmul.mubr.f32.gmra.mrb[0].mxu0 %v4895
  %v5266 = vpop.f32.mrb[0].mxu0
  %v5267 = vadd.f32 0.0, %v5266
  %v5268 = vpop.f32.mrb[0].mxu0
  %5269 = vmatprep.mubr.f32.mxu0 0.0
  %5270 = vmatmul.mubr.f32.gmra.mrb[0].mxu0 %v4898
  %v5271 = vpop.f32.mrb[0].mxu0
  %v5272 = vadd.f32 0.0, %v5271
  %v5273 = vpop.f32.mrb[0].mxu0
  %5274 = vmatprep.mubr.f32.mxu0 0.0
  %5275 = vmatmul.mubr.f32.gmra.mrb[0].mxu0 %v4901
  %v5276 = vpop.f32.mrb[0].mxu0
  %v5277 = vadd.f32 0.0, %v5276
  %v5278 = vpop.f32.mrb[0].mxu0
  %5279 = vmatprep.mubr.f32.mxu0 0.0
  %5280 = vmatmul.mubr.f32.gmra.mrb[0].mxu0 %v4904
  %v5281 = vpop.f32.mrb[0].mxu0
  %v5282 = vadd.f32 0.0, %v5281
  %v5283 = vpop.f32.mrb[0].mxu0
  %5284 = vmatprep.mubr.f32.mxu0 0.0
  %5285 = vmatmul.mubr.f32.gmra.mrb[0].mxu0 %v4907
  %v5286 = vpop.f32.mrb[0].mxu0
  %v5287 = vadd.f32 0.0, %v5286
  %v5288 = vpop.f32.mrb[0].mxu0
  %5289 = vmatprep.mubr.f32.mxu0 0.0
  %5290 = vmatmul.mubr.f32.gmra.mrb[0].mxu0 %v4910
  %v5291 = vpop.f32.mrb[0].mxu0
  %v5292 = vadd.f32 0.0, %v5291
  %v5293 = vpop.f32.mrb[0].mxu0
  %5294 = vmatprep.mubr.f32.mxu0 0.0
  %5295 = vmatmul.mubr.f32.gmra.mrb[0].mxu0 %v4913
  %v5296 = vpop.f32.mrb[0].mxu0
  %v5297 = vadd.f32 0.0, %v5296
  %v5298 = vpop.f32.mrb[0].mxu0
  %5299 = vmatprep.mubr.f32.mxu0 0.0
  %5300 = vmatmul.mubr.f32.gmra.mrb[0].mxu0 %v4916
  %v5301 = vpop.f32.mrb[0].mxu0
  %v5302 = vadd.f32 0.0, %v5301
  %v5303 = vpop.f32.mrb[0].mxu0
  %5304 = vmatprep.mubr.f32.mxu0 0.0
  %5305 = vmatmul.mubr.f32.gmra.mrb[0].mxu0 %v4919
  %v5306 = vpop.f32.mrb[0].mxu0
  %v5307 = vadd.f32 0.0, %v5306
  %v5308 = vpop.f32.mrb[0].mxu0
  %5309 = vmatprep.mubr.f32.mxu0 0.0
  %5310 = vmatmul.mubr.f32.gmra.mrb[0].mxu0 %v4922
  %v5311 = vpop.f32.mrb[0].mxu0
  %v5312 = vadd.f32 0.0, %v5311
  %v5313 = vpop.f32.mrb[0].mxu0
  %5314 = vmatprep.mubr.f32.mxu0 0.0
  %5315 = vmatmul.mubr.f32.gmra.mrb[0].mxu0 %v4925
  %v5316 = vpop.f32.mrb[0].mxu0
  %v5317 = vadd.f32 0.0, %v5316
  %v5318 = vpop.f32.mrb[0].mxu0
  %5319 = vmatprep.mubr.f32.mxu0 0.0
  %5320 = vmatmul.mubr.f32.gmra.mrb[0].mxu0 %v4928
  %v5321 = vpop.f32.mrb[0].mxu0
  %v5322 = vadd.f32 0.0, %v5321
  %v5323 = vpop.f32.mrb[0].mxu0
  %5324 = vmatprep.mubr.f32.mxu0 0.0
  %5325 = vmatmul.mubr.f32.gmra.mrb[0].mxu0 %v4931
  %v5326 = vpop.f32.mrb[0].mxu0
  %v5327 = vadd.f32 0.0, %v5326
  %v5328 = vpop.f32.mrb[0].mxu0
  %5329 = vmatprep.mubr.f32.mxu0 0.0
  %5330 = vmatmul.mubr.f32.gmra.mrb[0].mxu0 %v4934
  %v5331 = vpop.f32.mrb[0].mxu0
  %v5332 = vadd.f32 0.0, %v5331
  %v5333 = vpop.f32.mrb[0].mxu0
  %5334 = vmatprep.mubr.f32.mxu0 0.0
  %5335 = vmatmul.mubr.f32.gmra.mrb[0].mxu0 %v4937
  %v5336 = vpop.f32.mrb[0].mxu0
  %v5337 = vadd.f32 0.0, %v5336
  %v5338 = vpop.f32.mrb[0].mxu0
  %5339 = vmatprep.mubr.f32.mxu0 0.0
  %5340 = vmatmul.mubr.f32.gmra.mrb[0].mxu0 %v4940
  %v5341 = vpop.f32.mrb[0].mxu0
  %v5342 = vadd.f32 0.0, %v5341
  %v5343 = vpop.f32.mrb[0].mxu0
  %5344 = vmatprep.mubr.f32.mxu0 0.0
  %5345 = vmatmul.mubr.f32.gmra.mrb[0].mxu0 %v4943
  %v5346 = vpop.f32.mrb[0].mxu0
  %v5347 = vadd.f32 0.0, %v5346
  %v5348 = vpop.f32.mrb[0].mxu0
  %5349 = vmatprep.mubr.f32.mxu0 0.0
  %5350 = vmatmul.mubr.f32.gmra.mrb[0].mxu0 %v4946
  %v5351 = vpop.f32.mrb[0].mxu0
  %v5352 = vadd.f32 0.0, %v5351
  %v5353 = vpop.f32.mrb[0].mxu0
  %5354 = vmatprep.mubr.f32.mxu0 0.0
  %5355 = vmatmul.mubr.f32.gmra.mrb[0].mxu0 %v4949
  %v5356 = vpop.f32.mrb[0].mxu0
  %v5357 = vadd.f32 0.0, %v5356
  %v5358 = vpop.f32.mrb[0].mxu0
  %5359 = vmatprep.mubr.f32.mxu0 0.0
  %5360 = vmatmul.mubr.f32.gmra.mrb[0].mxu0 %v4952
  %v5361 = vpop.f32.mrb[0].mxu0
  %v5362 = vadd.f32 0.0, %v5361
  %v5363 = vpop.f32.mrb[0].mxu0
  %5364 = vmatprep.mubr.f32.mxu0 0.0
  %5365 = vmatmul.mubr.f32.gmra.mrb[0].mxu0 %v4955
  %v5366 = vpop.f32.mrb[0].mxu0
  %v5367 = vadd.f32 0.0, %v5366
  %v5368 = vpop.f32.mrb[0].mxu0
  %5369 = vmatprep.mubr.f32.mxu0 0.0
  %5370 = vmatmul.mubr.f32.gmra.mrb[0].mxu0 %v4958
  %v5371 = vpop.f32.mrb[0].mxu0
  %v5372 = vadd.f32 0.0, %v5371
  %v5373 = vpop.f32.mrb[0].mxu0
  %5374 = vmatprep.mubr.f32.mxu0 0.0
  %5375 = vmatmul.mubr.f32.gmra.mrb[0].mxu0 %v4961
  %v5376 = vpop.f32.mrb[0].mxu0
  %v5377 = vadd.f32 0.0, %v5376
  %v5378 = vpop.f32.mrb[0].mxu0
  %5379 = vmatprep.mubr.f32.mxu0 0.0
  %5380 = vmatmul.mubr.f32.gmra.mrb[0].mxu0 %v4964
  %v5381 = vpop.f32.mrb[0].mxu0
  %v5382 = vadd.f32 0.0, %v5381
  %v5383 = vpop.f32.mrb[0].mxu0
  %5384 = vmatprep.mubr.f32.mxu0 0.0
  %5385 = vmatmul.mubr.f32.gmra.mrb[0].mxu0 %v4967
  %v5386 = vpop.f32.mrb[0].mxu0
  %v5387 = vadd.f32 0.0, %v5386
  %v5388 = vpop.f32.mrb[0].mxu0
  %5389 = vmatprep.mubr.f32.mxu0 0.0
  %5390 = vmatmul.mubr.f32.gmra.mrb[0].mxu0 %v4970
  %v5391 = vpop.f32.mrb[0].mxu0
  %v5392 = vadd.f32 0.0, %v5391
  %v5393 = vpop.f32.mrb[0].mxu0
  %5394 = vmatprep.mubr.f32.mxu0 0.0
  %5395 = vmatmul.mubr.f32.gmra.mrb[0].mxu0 %v4973
  %v5396 = vpop.f32.mrb[0].mxu0
  %v5397 = vadd.f32 0.0, %v5396
  %v5398 = vpop.f32.mrb[0].mxu0
  %5399 = vmatprep.mubr.f32.mxu0 0.0
  %5400 = vmatmul.mubr.f32.gmra.mrb[0].mxu0 %v4976
  %v5401 = vpop.f32.mrb[0].mxu0
  %v5402 = vadd.f32 0.0, %v5401
  %v5403 = vpop.f32.mrb[0].mxu0
  %5404 = vmatprep.mubr.f32.mxu0 0.0
  %5405 = vmatmul.mubr.f32.gmra.mrb[0].mxu0 %v4979
  %v5406 = vpop.f32.mrb[0].mxu0
  %v5407 = vadd.f32 0.0, %v5406
  %v5408 = vpop.f32.mrb[0].mxu0
  %5409 = vmatprep.mubr.f32.mxu0 0.0
  %5410 = vmatmul.mubr.f32.gmra.mrb[0].mxu0 %v4982
  %v5411 = vpop.f32.mrb[0].mxu0
  %v5412 = vadd.f32 0.0, %v5411
  %v5413 = vpop.f32.mrb[0].mxu0
  %5414 = vmatprep.mubr.f32.mxu0 0.0
  %5415 = vmatmul.mubr.f32.gmra.mrb[0].mxu0 %v4985
  %v5416 = vpop.f32.mrb[0].mxu0
  %v5417 = vadd.f32 0.0, %v5416
  %v5418 = vpop.f32.mrb[0].mxu0
  %5419 = vmatprep.mubr.f32.mxu0 0.0
  %5420 = vmatmul.mubr.f32.gmra.mrb[0].mxu0 %v4988
  %v5421 = vpop.f32.mrb[0].mxu0
  %v5422 = vadd.f32 0.0, %v5421
  %v5423 = vpop.f32.mrb[0].mxu0
  %5424 = vmatprep.mubr.f32.mxu0 0.0
  %5425 = vmatmul.mubr.f32.gmra.mrb[0].mxu0 %v4991
  %v5426 = vpop.f32.mrb[0].mxu0
  %v5427 = vadd.f32 0.0, %v5426
  %v5428 = vpop.f32.mrb[0].mxu0
  %5429 = vmatprep.mubr.f32.mxu0 0.0
  %5430 = vmatmul.mubr.f32.gmra.mrb[0].mxu0 %v4994
  %v5431 = vpop.f32.mrb[0].mxu0
  %v5432 = vadd.f32 0.0, %v5431
  %v5433 = vpop.f32.mrb[0].mxu0
  %5434 = vmatprep.mubr.f32.mxu0 0.0
  %5435 = vmatmul.mubr.f32.gmra.mrb[0].mxu0 %v4997
  %v5436 = vpop.f32.mrb[0].mxu0
  %v5437 = vadd.f32 0.0, %v5436
  %v5438 = vpop.f32.mrb[0].mxu0
  %5439 = vmatprep.mubr.f32.mxu0 0.0
  %5440 = vmatmul.mubr.f32.gmra.mrb[0].mxu0 %v5000
  %v5441 = vpop.f32.mrb[0].mxu0
  %v5442 = vadd.f32 0.0, %v5441
  %v5443 = vpop.f32.mrb[0].mxu0
  %5444 = vmatprep.mubr.f32.mxu0 0.0
  %5445 = vmatmul.mubr.f32.gmra.mrb[0].mxu0 %v5003
  %v5446 = vpop.f32.mrb[0].mxu0
  %v5447 = vadd.f32 0.0, %v5446
  %v5448 = vpop.f32.mrb[0].mxu0
  %5449 = vmatprep.mubr.f32.mxu0 0.0
  %5450 = vmatmul.mubr.f32.gmra.mrb[0].mxu0 %v5006
  %v5451 = vpop.f32.mrb[0].mxu0
  %v5452 = vadd.f32 0.0, %v5451
  %v5453 = vpop.f32.mrb[0].mxu0
  %5454 = vmatprep.mubr.f32.mxu0 0.0
  %5455 = vmatmul.mubr.f32.gmra.mrb[0].mxu0 %v5009
  %v5456 = vpop.f32.mrb[0].mxu0
  %v5457 = vadd.f32 0.0, %v5456
  %v5458 = vpop.f32.mrb[0].mxu0
  %5459 = vmatprep.mubr.f32.mxu0 0.0
  %5460 = vmatmul.mubr.f32.gmra.mrb[0].mxu0 %v5012
  %v5461 = vpop.f32.mrb[0].mxu0
  %v5462 = vadd.f32 0.0, %v5461
  %v5463 = vpop.f32.mrb[0].mxu0
  %5464 = vmatprep.mubr.f32.mxu0 0.0
  %5465 = vmatmul.mubr.f32.gmra.mrb[0].mxu0 %v5015
  %v5466 = vpop.f32.mrb[0].mxu0
  %v5467 = vadd.f32 0.0, %v5466
  %v5468 = vpop.f32.mrb[0].mxu0
  %5469 = vmatprep.mubr.f32.mxu0 0.0
  %5470 = vmatmul.mubr.f32.gmra.mrb[0].mxu0 %v5018
  %v5471 = vpop.f32.mrb[0].mxu0
  %v5472 = vadd.f32 0.0, %v5471
  %v5473 = vpop.f32.mrb[0].mxu0
  %5474 = vmatprep.mubr.f32.mxu0 0.0
  %5475 = vmatmul.mubr.f32.gmra.mrb[0].mxu0 %v5021
  %v5476 = vpop.f32.mrb[0].mxu0
  %v5477 = vadd.f32 0.0, %v5476
  %v5478 = vpop.f32.mrb[0].mxu0
  %5479 = vmatprep.mubr.f32.mxu0 0.0
  %5480 = vmatmul.mubr.f32.gmra.mrb[0].mxu0 %v5024
  %v5481 = vpop.f32.mrb[0].mxu0
  %v5482 = vadd.f32 0.0, %v5481
  %v5483 = vpop.f32.mrb[0].mxu0
  %5484 = vmatprep.mubr.f32.mxu0 0.0
  %5485 = vmatmul.mubr.f32.gmra.mrb[0].mxu0 %v5027
  %v5486 = vpop.f32.mrb[0].mxu0
  %v5487 = vadd.f32 0.0, %v5486
  %v5488 = vpop.f32.mrb[0].mxu0
  %5489 = vmatprep.mubr.f32.mxu0 0.0
  %5490 = vmatmul.mubr.f32.gmra.mrb[0].mxu0 %v5030
  %v5491 = vpop.f32.mrb[0].mxu0
  %v5492 = vadd.f32 0.0, %v5491
  %v5493 = vpop.f32.mrb[0].mxu0
  %5494 = vmatprep.mubr.f32.mxu0 0.0
  %5495 = vmatmul.mubr.f32.gmra.mrb[0].mxu0 %v5033
  %v5496 = vpop.f32.mrb[0].mxu0
  %v5497 = vadd.f32 0.0, %v5496
  %v5498 = vpop.f32.mrb[0].mxu0
  %5499 = vdwg.mxu0
  %v5500 = vld [vmem:[#allocation4] sm:$0xff]
  %v5501 = vld [vmem:[#allocation4 + $0x8] sm:$0xff]
  %v5502 = vld [vmem:[#allocation4 + $0x10] sm:$0xff]
  %v5503 = vld [vmem:[#allocation4 + $0x18] sm:$0xff]
  %v5504 = vld [vmem:[#allocation4 + $0x20] sm:$0xff]
  %v5505 = vld [vmem:[#allocation4 + $0x28] sm:$0xff]
  %v5506 = vld [vmem:[#allocation4 + $0x30] sm:$0xff]
  %v5507 = vld [vmem:[#allocation4 + $0x38] sm:$0xff]
  %v5508 = vld [vmem:[#allocation4 + $0x40] sm:$0xff]
  %v5509 = vld [vmem:[#allocation4 + $0x48] sm:$0xff]
  %v5510 = vld [vmem:[#allocation4 + $0x50] sm:$0xff]
  %v5511 = vld [vmem:[#allocation4 + $0x58] sm:$0xff]
  %v5512 = vld [vmem:[#allocation4 + $0x60] sm:$0xff]
  %v5513 = vld [vmem:[#allocation4 + $0x68] sm:$0xff]
  %v5514 = vld [vmem:[#allocation4 + $0x70] sm:$0xff]
  %v5515 = vld [vmem:[#allocation4 + $0x78] sm:$0xff]
  %v5516 = vld [vmem:[#allocation4 + $0x80] sm:$0xff]
  %v5517 = vld [vmem:[#allocation4 + $0x88] sm:$0xff]
  %v5518 = vld [vmem:[#allocation4 + $0x90] sm:$0xff]
  %v5519 = vld [vmem:[#allocation4 + $0x98] sm:$0xff]
  %v5520 = vld [vmem:[#allocation4 + $0xa0] sm:$0xff]
  %v5521 = vld [vmem:[#allocation4 + $0xa8] sm:$0xff]
  %v5522 = vld [vmem:[#allocation4 + $0xb0] sm:$0xff]
  %v5523 = vld [vmem:[#allocation4 + $0xb8] sm:$0xff]
  %v5524 = vld [vmem:[#allocation4 + $0xc0] sm:$0xff]
  %v5525 = vld [vmem:[#allocation4 + $0xc8] sm:$0xff]
  %v5526 = vld [vmem:[#allocation4 + $0xd0] sm:$0xff]
  %v5527 = vld [vmem:[#allocation4 + $0xd8] sm:$0xff]
  %v5528 = vld [vmem:[#allocation4 + $0xe0] sm:$0xff]
  %v5529 = vld [vmem:[#allocation4 + $0xe8] sm:$0xff]
  %v5530 = vld [vmem:[#allocation4 + $0xf0] sm:$0xff]
  %v5531 = vld [vmem:[#allocation4 + $0xf8] sm:$0xff]
  %v5532 = vld [vmem:[#allocation4 + $0x100] sm:$0xff]
  %v5533 = vld [vmem:[#allocation4 + $0x108] sm:$0xff]
  %v5534 = vld [vmem:[#allocation4 + $0x110] sm:$0xff]
  %v5535 = vld [vmem:[#allocation4 + $0x118] sm:$0xff]
  %v5536 = vld [vmem:[#allocation4 + $0x120] sm:$0xff]
  %v5537 = vld [vmem:[#allocation4 + $0x128] sm:$0xff]
  %v5538 = vld [vmem:[#allocation4 + $0x130] sm:$0xff]
  %v5539 = vld [vmem:[#allocation4 + $0x138] sm:$0xff]
  %v5540 = vld [vmem:[#allocation4 + $0x140] sm:$0xff]
  %v5541 = vld [vmem:[#allocation4 + $0x148] sm:$0xff]
  %v5542 = vld [vmem:[#allocation4 + $0x150] sm:$0xff]
  %v5543 = vld [vmem:[#allocation4 + $0x158] sm:$0xff]
  %v5544 = vld [vmem:[#allocation4 + $0x160] sm:$0xff]
  %v5545 = vld [vmem:[#allocation4 + $0x168] sm:$0xff]
  %v5546 = vld [vmem:[#allocation4 + $0x170] sm:$0xff]
  %v5547 = vld [vmem:[#allocation4 + $0x178] sm:$0xff]
  %v5548 = vld [vmem:[#allocation4 + $0x180] sm:$0xff]
  %v5549 = vld [vmem:[#allocation4 + $0x188] sm:$0xff]
  %v5550 = vld [vmem:[#allocation4 + $0x190] sm:$0xff]
  %v5551 = vld [vmem:[#allocation4 + $0x198] sm:$0xff]
  %v5552 = vld [vmem:[#allocation4 + $0x1a0] sm:$0xff]
  %v5553 = vld [vmem:[#allocation4 + $0x1a8] sm:$0xff]
  %v5554 = vld [vmem:[#allocation4 + $0x1b0] sm:$0xff]
  %v5555 = vld [vmem:[#allocation4 + $0x1b8] sm:$0xff]
  %v5556 = vld [vmem:[#allocation4 + $0x1c0] sm:$0xff]
  %v5557 = vld [vmem:[#allocation4 + $0x1c8] sm:$0xff]
  %v5558 = vld [vmem:[#allocation4 + $0x1d0] sm:$0xff]
  %v5559 = vld [vmem:[#allocation4 + $0x1d8] sm:$0xff]
  %v5560 = vld [vmem:[#allocation4 + $0x1e0] sm:$0xff]
  %v5561 = vld [vmem:[#allocation4 + $0x1e8] sm:$0xff]
  %v5562 = vld [vmem:[#allocation4 + $0x1f0] sm:$0xff]
  %v5563 = vld [vmem:[#allocation4 + $0x1f8] sm:$0xff]
  %v5564 = vld [vmem:[#allocation4 + $0x200] sm:$0xff]
  %v5565 = vld [vmem:[#allocation4 + $0x208] sm:$0xff]
  %v5566 = vld [vmem:[#allocation4 + $0x210] sm:$0xff]
  %v5567 = vld [vmem:[#allocation4 + $0x218] sm:$0xff]
  %v5568 = vld [vmem:[#allocation4 + $0x220] sm:$0xff]
  %v5569 = vld [vmem:[#allocation4 + $0x228] sm:$0xff]
  %v5570 = vld [vmem:[#allocation4 + $0x230] sm:$0xff]
  %v5571 = vld [vmem:[#allocation4 + $0x238] sm:$0xff]
  %v5572 = vld [vmem:[#allocation4 + $0x240] sm:$0xff]
  %v5573 = vld [vmem:[#allocation4 + $0x248] sm:$0xff]
  %v5574 = vld [vmem:[#allocation4 + $0x250] sm:$0xff]
  %v5575 = vld [vmem:[#allocation4 + $0x258] sm:$0xff]
  %v5576 = vld [vmem:[#allocation4 + $0x260] sm:$0xff]
  %v5577 = vld [vmem:[#allocation4 + $0x268] sm:$0xff]
  %v5578 = vld [vmem:[#allocation4 + $0x270] sm:$0xff]
  %v5579 = vld [vmem:[#allocation4 + $0x278] sm:$0xff]
  %v5580 = vld [vmem:[#allocation4 + $0x280] sm:$0xff]
  %v5581 = vld [vmem:[#allocation4 + $0x288] sm:$0xff]
  %v5582 = vld [vmem:[#allocation4 + $0x290] sm:$0xff]
  %v5583 = vld [vmem:[#allocation4 + $0x298] sm:$0xff]
  %v5584 = vld [vmem:[#allocation4 + $0x2a0] sm:$0xff]
  %v5585 = vld [vmem:[#allocation4 + $0x2a8] sm:$0xff]
  %v5586 = vld [vmem:[#allocation4 + $0x2b0] sm:$0xff]
  %v5587 = vld [vmem:[#allocation4 + $0x2b8] sm:$0xff]
  %v5588 = vld [vmem:[#allocation4 + $0x2c0] sm:$0xff]
  %v5589 = vld [vmem:[#allocation4 + $0x2c8] sm:$0xff]
  %v5590 = vld [vmem:[#allocation4 + $0x2d0] sm:$0xff]
  %v5591 = vld [vmem:[#allocation4 + $0x2d8] sm:$0xff]
  %v5592 = vld [vmem:[#allocation4 + $0x2e0] sm:$0xff]
  %v5593 = vld [vmem:[#allocation4 + $0x2e8] sm:$0xff]
  %v5594 = vld [vmem:[#allocation4 + $0x2f0] sm:$0xff]
  %v5595 = vld [vmem:[#allocation4 + $0x2f8] sm:$0xff]
  %v5596 = vld [vmem:[#allocation4 + $0x300] sm:$0xff]
  %v5597 = vld [vmem:[#allocation4 + $0x308] sm:$0xff]
  %v5598 = vld [vmem:[#allocation4 + $0x310] sm:$0xff]
  %v5599 = vld [vmem:[#allocation4 + $0x318] sm:$0xff]
  %v5600 = vld [vmem:[#allocation4 + $0x320] sm:$0xff]
  %v5601 = vld [vmem:[#allocation4 + $0x328] sm:$0xff]
  %v5602 = vld [vmem:[#allocation4 + $0x330] sm:$0xff]
  %v5603 = vld [vmem:[#allocation4 + $0x338] sm:$0xff]
  %v5604 = vld [vmem:[#allocation4 + $0x340] sm:$0xff]
  %v5605 = vld [vmem:[#allocation4 + $0x348] sm:$0xff]
  %v5606 = vld [vmem:[#allocation4 + $0x350] sm:$0xff]
  %v5607 = vld [vmem:[#allocation4 + $0x358] sm:$0xff]
  %v5608 = vld [vmem:[#allocation4 + $0x360] sm:$0xff]
  %v5609 = vld [vmem:[#allocation4 + $0x368] sm:$0xff]
  %v5610 = vld [vmem:[#allocation4 + $0x370] sm:$0xff]
  %v5611 = vld [vmem:[#allocation4 + $0x378] sm:$0xff]
  %v5612 = vld [vmem:[#allocation4 + $0x380] sm:$0xff]
  %v5613 = vld [vmem:[#allocation4 + $0x388] sm:$0xff]
  %v5614 = vld [vmem:[#allocation4 + $0x390] sm:$0xff]
  %v5615 = vld [vmem:[#allocation4 + $0x398] sm:$0xff]
  %v5616 = vld [vmem:[#allocation4 + $0x3a0] sm:$0xff]
  %v5617 = vld [vmem:[#allocation4 + $0x3a8] sm:$0xff]
  %v5618 = vld [vmem:[#allocation4 + $0x3b0] sm:$0xff]
  %v5619 = vld [vmem:[#allocation4 + $0x3b8] sm:$0xff]
  %v5620 = vld [vmem:[#allocation4 + $0x3c0] sm:$0xff]
  %v5621 = vld [vmem:[#allocation4 + $0x3c8] sm:$0xff]
  %v5622 = vld [vmem:[#allocation4 + $0x3d0] sm:$0xff]
  %v5623 = vld [vmem:[#allocation4 + $0x3d8] sm:$0xff]
  %v5624 = vld [vmem:[#allocation4 + $0x3e0] sm:$0xff]
  %v5625 = vld [vmem:[#allocation4 + $0x3e8] sm:$0xff]
  %v5626 = vld [vmem:[#allocation4 + $0x3f0] sm:$0xff]
  %v5627 = vld [vmem:[#allocation4 + $0x3f8] sm:$0xff]
  %v5628 = vld [vmem:[#allocation4 + $0x400] sm:$0xff]
  %v5629 = vld [vmem:[#allocation4 + $0x408] sm:$0xff]
  %v5630 = vld [vmem:[#allocation4 + $0x410] sm:$0xff]
  %v5631 = vld [vmem:[#allocation4 + $0x418] sm:$0xff]
  %v5632 = vld [vmem:[#allocation4 + $0x420] sm:$0xff]
  %v5633 = vld [vmem:[#allocation4 + $0x428] sm:$0xff]
  %v5634 = vld [vmem:[#allocation4 + $0x430] sm:$0xff]
  %v5635 = vld [vmem:[#allocation4 + $0x438] sm:$0xff]
  %v5636 = vld [vmem:[#allocation4 + $0x440] sm:$0xff]
  %v5637 = vld [vmem:[#allocation4 + $0x448] sm:$0xff]
  %v5638 = vld [vmem:[#allocation4 + $0x450] sm:$0xff]
  %v5639 = vld [vmem:[#allocation4 + $0x458] sm:$0xff]
  %v5640 = vld [vmem:[#allocation4 + $0x460] sm:$0xff]
  %v5641 = vld [vmem:[#allocation4 + $0x468] sm:$0xff]
  %v5642 = vld [vmem:[#allocation4 + $0x470] sm:$0xff]
  %v5643 = vld [vmem:[#allocation4 + $0x478] sm:$0xff]
  %v5644 = vld [vmem:[#allocation4 + $0x480] sm:$0xff]
  %v5645 = vld [vmem:[#allocation4 + $0x488] sm:$0xff]
  %v5646 = vld [vmem:[#allocation4 + $0x490] sm:$0xff]
  %v5647 = vld [vmem:[#allocation4 + $0x498] sm:$0xff]
  %v5648 = vld [vmem:[#allocation4 + $0x4a0] sm:$0xff]
  %v5649 = vld [vmem:[#allocation4 + $0x4a8] sm:$0xff]
  %v5650 = vld [vmem:[#allocation4 + $0x4b0] sm:$0xff]
  %v5651 = vld [vmem:[#allocation4 + $0x4b8] sm:$0xff]
  %v5652 = vld [vmem:[#allocation4 + $0x4c0] sm:$0xff]
  %v5653 = vld [vmem:[#allocation4 + $0x4c8] sm:$0xff]
  %v5654 = vld [vmem:[#allocation4 + $0x4d0] sm:$0xff]
  %v5655 = vld [vmem:[#allocation4 + $0x4d8] sm:$0xff]
  %v5656 = vld [vmem:[#allocation4 + $0x4e0] sm:$0xff]
  %v5657 = vld [vmem:[#allocation4 + $0x4e8] sm:$0xff]
  %v5658 = vld [vmem:[#allocation4 + $0x4f0] sm:$0xff]
  %v5659 = vld [vmem:[#allocation4 + $0x4f8] sm:$0xff]
  %s5660 = scalar_lea.vmem [#allocation5], 7
  %v5661 = vld [vmem:[%s5660] ss:$8 sm:$0x3]
  %v5663 = vlaneseq
  %v5664 = vshrl.u32 %v5663, 7
  %v5665 = vsub.s32 0, %v5664
  %v5666 = vrot.slane %v5661, %v5665
  %v5667 = vlaneseq
  %v5668 = vshrl.u32 %v5667, 7
  %v5669 = vsub.s32 1, %v5668
  %v5670 = vrot.slane %v5661, %v5669
  %5673 = vmatprep.subr.mxu0 %v5501
  %5674 = vmatpush1.msra.mxu0 %v5500
  %5675 = vmatprep.subr.mxu0 %v5503
  %5676 = vmatpush1.msra.mxu0 %v5502
  %5677 = vmatprep.subr.mxu0 %v5505
  %5678 = vmatpush1.msra.mxu0 %v5504
  %5679 = vmatprep.subr.mxu0 %v5507
  %5680 = vmatpush1.msra.mxu0 %v5506
  %5681 = vmatprep.subr.mxu0 %v5509
  %5682 = vmatpush1.msra.mxu0 %v5508
  %5683 = vmatprep.subr.mxu0 %v5511
  %5684 = vmatpush1.msra.mxu0 %v5510
  %5685 = vmatprep.subr.mxu0 %v5513
  %5686 = vmatpush1.msra.mxu0 %v5512
  %5687 = vmatprep.subr.mxu0 %v5515
  %5688 = vmatpush1.msra.mxu0 %v5514
  %5689 = vmatprep.subr.mxu0 %v5517
  %5690 = vmatpush1.msra.mxu0 %v5516
  %5691 = vmatprep.subr.mxu0 %v5519
  %5692 = vmatpush1.msra.mxu0 %v5518
  %5693 = vmatprep.subr.mxu0 %v5521
  %5694 = vmatpush1.msra.mxu0 %v5520
  %5695 = vmatprep.subr.mxu0 %v5523
  %5696 = vmatpush1.msra.mxu0 %v5522
  %5697 = vmatprep.subr.mxu0 %v5525
  %5698 = vmatpush1.msra.mxu0 %v5524
  %5699 = vmatprep.subr.mxu0 %v5527
  %5700 = vmatpush1.msra.mxu0 %v5526
  %5701 = vmatprep.subr.mxu0 %v5529
  %5702 = vmatpush1.msra.mxu0 %v5528
  %5703 = vmatprep.subr.mxu0 %v5531
  %5704 = vmatpush1.msra.mxu0 %v5530
  %5705 = vmatprep.subr.mxu0 %v5533
  %5706 = vmatpush1.msra.mxu0 %v5532
  %5707 = vmatprep.subr.mxu0 %v5535
  %5708 = vmatpush1.msra.mxu0 %v5534
  %5709 = vmatprep.subr.mxu0 %v5537
  %5710 = vmatpush1.msra.mxu0 %v5536
  %5711 = vmatprep.subr.mxu0 %v5539
  %5712 = vmatpush1.msra.mxu0 %v5538
  %5713 = vmatprep.subr.mxu0 %v5541
  %5714 = vmatpush1.msra.mxu0 %v5540
  %5715 = vmatprep.subr.mxu0 %v5543
  %5716 = vmatpush1.msra.mxu0 %v5542
  %5717 = vmatprep.subr.mxu0 %v5545
  %5718 = vmatpush1.msra.mxu0 %v5544
  %5719 = vmatprep.subr.mxu0 %v5547
  %5720 = vmatpush1.msra.mxu0 %v5546
  %5721 = vmatprep.subr.mxu0 %v5549
  %5722 = vmatpush1.msra.mxu0 %v5548
  %5723 = vmatprep.subr.mxu0 %v5551
  %5724 = vmatpush1.msra.mxu0 %v5550
  %5725 = vmatprep.subr.mxu0 %v5553
  %5726 = vmatpush1.msra.mxu0 %v5552
  %5727 = vmatprep.subr.mxu0 %v5555
  %5728 = vmatpush1.msra.mxu0 %v5554
  %5729 = vmatprep.subr.mxu0 %v5557
  %5730 = vmatpush1.msra.mxu0 %v5556
  %5731 = vmatprep.subr.mxu0 %v5559
  %5732 = vmatpush1.msra.mxu0 %v5558
  %5733 = vmatprep.subr.mxu0 %v5561
  %5734 = vmatpush1.msra.mxu0 %v5560
  %5735 = vmatprep.subr.mxu0 %v5563
  %5736 = vmatpush1.msra.mxu0 %v5562
  %5737 = vmatprep.mubr.f32.mxu0 %v5182
  %5738 = vmatmul.mubr.f32.gmra.mrb[0].mxu0 %v5102
  %v5739 = vpop.f32.mrb[0].mxu0
  %v5740 = vadd.f32 %v5666, %v5739
  %v5741 = vpop.f32.mrb[0].mxu0
  %v5742 = vadd.f32 %v5670, %v5741
  %5743 = vmatprep.mubr.f32.mxu0 %v5187
  %5744 = vmatmul.mubr.f32.gmra.mrb[0].mxu0 %v5107
  %v5745 = vpop.f32.mrb[0].mxu0
  %v5746 = vadd.f32 %v5666, %v5745
  %v5747 = vpop.f32.mrb[0].mxu0
  %v5748 = vadd.f32 %v5670, %v5747
  %5749 = vmatprep.mubr.f32.mxu0 %v5192
  %5750 = vmatmul.mubr.f32.gmra.mrb[0].mxu0 %v5112
  %v5751 = vpop.f32.mrb[0].mxu0
  %v5752 = vadd.f32 %v5666, %v5751
  %v5753 = vpop.f32.mrb[0].mxu0
  %v5754 = vadd.f32 %v5670, %v5753
  %5755 = vmatprep.mubr.f32.mxu0 %v5197
  %5756 = vmatmul.mubr.f32.gmra.mrb[0].mxu0 %v5117
  %v5757 = vpop.f32.mrb[0].mxu0
  %v5758 = vadd.f32 %v5666, %v5757
  %v5759 = vpop.f32.mrb[0].mxu0
  %v5760 = vadd.f32 %v5670, %v5759
  %5761 = vmatprep.mubr.f32.mxu0 %v5202
  %5762 = vmatmul.mubr.f32.gmra.mrb[0].mxu0 %v5122
  %v5763 = vpop.f32.mrb[0].mxu0
  %v5764 = vadd.f32 %v5666, %v5763
  %v5765 = vpop.f32.mrb[0].mxu0
  %v5766 = vadd.f32 %v5670, %v5765
  %5767 = vmatprep.mubr.f32.mxu0 %v5207
  %5768 = vmatmul.mubr.f32.gmra.mrb[0].mxu0 %v5127
  %v5769 = vpop.f32.mrb[0].mxu0
  %v5770 = vadd.f32 %v5666, %v5769
  %v5771 = vpop.f32.mrb[0].mxu0
  %v5772 = vadd.f32 %v5670, %v5771
  %5773 = vmatprep.mubr.f32.mxu0 %v5212
  %5774 = vmatmul.mubr.f32.gmra.mrb[0].mxu0 %v5132
  %v5775 = vpop.f32.mrb[0].mxu0
  %v5776 = vadd.f32 %v5666, %v5775
  %v5777 = vpop.f32.mrb[0].mxu0
  %v5778 = vadd.f32 %v5670, %v5777
  %5779 = vmatprep.mubr.f32.mxu0 %v5217
  %5780 = vmatmul.mubr.f32.gmra.mrb[0].mxu0 %v5137
  %v5781 = vpop.f32.mrb[0].mxu0
  %v5782 = vadd.f32 %v5666, %v5781
  %v5783 = vpop.f32.mrb[0].mxu0
  %v5784 = vadd.f32 %v5670, %v5783
  %5785 = vmatprep.mubr.f32.mxu0 %v5222
  %5786 = vmatmul.mubr.f32.gmra.mrb[0].mxu0 %v5142
  %v5787 = vpop.f32.mrb[0].mxu0
  %v5788 = vadd.f32 %v5666, %v5787
  %v5789 = vpop.f32.mrb[0].mxu0
  %v5790 = vadd.f32 %v5670, %v5789
  %5791 = vmatprep.mubr.f32.mxu0 %v5227
  %5792 = vmatmul.mubr.f32.gmra.mrb[0].mxu0 %v5147
  %v5793 = vpop.f32.mrb[0].mxu0
  %v5794 = vadd.f32 %v5666, %v5793
  %v5795 = vpop.f32.mrb[0].mxu0
  %v5796 = vadd.f32 %v5670, %v5795
  %5797 = vmatprep.mubr.f32.mxu0 %v5232
  %5798 = vmatmul.mubr.f32.gmra.mrb[0].mxu0 %v5152
  %v5799 = vpop.f32.mrb[0].mxu0
  %v5800 = vadd.f32 %v5666, %v5799
  %v5801 = vpop.f32.mrb[0].mxu0
  %v5802 = vadd.f32 %v5670, %v5801
  %5803 = vmatprep.mubr.f32.mxu0 %v5237
  %5804 = vmatmul.mubr.f32.gmra.mrb[0].mxu0 %v5157
  %v5805 = vpop.f32.mrb[0].mxu0
  %v5806 = vadd.f32 %v5666, %v5805
  %v5807 = vpop.f32.mrb[0].mxu0
  %v5808 = vadd.f32 %v5670, %v5807
  %5809 = vmatprep.mubr.f32.mxu0 %v5242
  %5810 = vmatmul.mubr.f32.gmra.mrb[0].mxu0 %v5162
  %v5811 = vpop.f32.mrb[0].mxu0
  %v5812 = vadd.f32 %v5666, %v5811
  %v5813 = vpop.f32.mrb[0].mxu0
  %v5814 = vadd.f32 %v5670, %v5813
  %5815 = vmatprep.mubr.f32.mxu0 %v5247
  %5816 = vmatmul.mubr.f32.gmra.mrb[0].mxu0 %v5167
  %v5817 = vpop.f32.mrb[0].mxu0
  %v5818 = vadd.f32 %v5666, %v5817
  %v5819 = vpop.f32.mrb[0].mxu0
  %v5820 = vadd.f32 %v5670, %v5819
  %5821 = vmatprep.mubr.f32.mxu0 %v5252
  %5822 = vmatmul.mubr.f32.gmra.mrb[0].mxu0 %v5172
  %v5823 = vpop.f32.mrb[0].mxu0
  %v5824 = vadd.f32 %v5666, %v5823
  %v5825 = vpop.f32.mrb[0].mxu0
  %v5826 = vadd.f32 %v5670, %v5825
  %5827 = vmatprep.mubr.f32.mxu0 %v5257
  %5828 = vmatmul.mubr.f32.gmra.mrb[0].mxu0 %v5177
  %v5829 = vpop.f32.mrb[0].mxu0
  %v5830 = vadd.f32 %v5666, %v5829
  %v5831 = vpop.f32.mrb[0].mxu0
  %v5832 = vadd.f32 %v5670, %v5831
  %5833 = vdwg.mxu0
  %5834 = vmatprep.subr.mxu0 %v5565
  %5835 = vmatpush1.msra.mxu0 %v5564
  %5836 = vmatprep.subr.mxu0 %v5567
  %5837 = vmatpush1.msra.mxu0 %v5566
  %5838 = vmatprep.subr.mxu0 %v5569
  %5839 = vmatpush1.msra.mxu0 %v5568
  %5840 = vmatprep.subr.mxu0 %v5571
  %5841 = vmatpush1.msra.mxu0 %v5570
  %5842 = vmatprep.subr.mxu0 %v5573
  %5843 = vmatpush1.msra.mxu0 %v5572
  %5844 = vmatprep.subr.mxu0 %v5575
  %5845 = vmatpush1.msra.mxu0 %v5574
  %5846 = vmatprep.subr.mxu0 %v5577
  %5847 = vmatpush1.msra.mxu0 %v5576
  %5848 = vmatprep.subr.mxu0 %v5579
  %5849 = vmatpush1.msra.mxu0 %v5578
  %5850 = vmatprep.subr.mxu0 %v5581
  %5851 = vmatpush1.msra.mxu0 %v5580
  %5852 = vmatprep.subr.mxu0 %v5583
  %5853 = vmatpush1.msra.mxu0 %v5582
  %5854 = vmatprep.subr.mxu0 %v5585
  %5855 = vmatpush1.msra.mxu0 %v5584
  %5856 = vmatprep.subr.mxu0 %v5587
  %5857 = vmatpush1.msra.mxu0 %v5586
  %5858 = vmatprep.subr.mxu0 %v5589
  %5859 = vmatpush1.msra.mxu0 %v5588
  %5860 = vmatprep.subr.mxu0 %v5591
  %5861 = vmatpush1.msra.mxu0 %v5590
  %5862 = vmatprep.subr.mxu0 %v5593
  %5863 = vmatpush1.msra.mxu0 %v5592
  %5864 = vmatprep.subr.mxu0 %v5595
  %5865 = vmatpush1.msra.mxu0 %v5594
  %5866 = vmatprep.subr.mxu0 %v5597
  %5867 = vmatpush1.msra.mxu0 %v5596
  %5868 = vmatprep.subr.mxu0 %v5599
  %5869 = vmatpush1.msra.mxu0 %v5598
  %5870 = vmatprep.subr.mxu0 %v5601
  %5871 = vmatpush1.msra.mxu0 %v5600
  %5872 = vmatprep.subr.mxu0 %v5603
  %5873 = vmatpush1.msra.mxu0 %v5602
  %5874 = vmatprep.subr.mxu0 %v5605
  %5875 = vmatpush1.msra.mxu0 %v5604
  %5876 = vmatprep.subr.mxu0 %v5607
  %5877 = vmatpush1.msra.mxu0 %v5606
  %5878 = vmatprep.subr.mxu0 %v5609
  %5879 = vmatpush1.msra.mxu0 %v5608
  %5880 = vmatprep.subr.mxu0 %v5611
  %5881 = vmatpush1.msra.mxu0 %v5610
  %5882 = vmatprep.subr.mxu0 %v5613
  %5883 = vmatpush1.msra.mxu0 %v5612
  %5884 = vmatprep.subr.mxu0 %v5615
  %5885 = vmatpush1.msra.mxu0 %v5614
  %5886 = vmatprep.subr.mxu0 %v5617
  %5887 = vmatpush1.msra.mxu0 %v5616
  %5888 = vmatprep.subr.mxu0 %v5619
  %5889 = vmatpush1.msra.mxu0 %v5618
  %5890 = vmatprep.subr.mxu0 %v5621
  %5891 = vmatpush1.msra.mxu0 %v5620
  %5892 = vmatprep.subr.mxu0 %v5623
  %5893 = vmatpush1.msra.mxu0 %v5622
  %5894 = vmatprep.subr.mxu0 %v5625
  %5895 = vmatpush1.msra.mxu0 %v5624
  %5896 = vmatprep.subr.mxu0 %v5627
  %5897 = vmatpush1.msra.mxu0 %v5626
  %5898 = vmatprep.mubr.f32.mxu0 %v5342
  %5899 = vmatmul.mubr.f32.gmra.mrb[0].mxu0 %v5262
  %v5900 = vpop.f32.mrb[0].mxu0
  %v5901 = vadd.f32 %v5740, %v5900
  %v5902 = vpop.f32.mrb[0].mxu0
  %v5903 = vadd.f32 %v5742, %v5902
  %5904 = vmatprep.mubr.f32.mxu0 %v5347
  %5905 = vmatmul.mubr.f32.gmra.mrb[0].mxu0 %v5267
  %v5906 = vpop.f32.mrb[0].mxu0
  %v5907 = vadd.f32 %v5746, %v5906
  %v5908 = vpop.f32.mrb[0].mxu0
  %v5909 = vadd.f32 %v5748, %v5908
  %5910 = vmatprep.mubr.f32.mxu0 %v5352
  %5911 = vmatmul.mubr.f32.gmra.mrb[0].mxu0 %v5272
  %v5912 = vpop.f32.mrb[0].mxu0
  %v5913 = vadd.f32 %v5752, %v5912
  %v5914 = vpop.f32.mrb[0].mxu0
  %v5915 = vadd.f32 %v5754, %v5914
  %5916 = vmatprep.mubr.f32.mxu0 %v5357
  %5917 = vmatmul.mubr.f32.gmra.mrb[0].mxu0 %v5277
  %v5918 = vpop.f32.mrb[0].mxu0
  %v5919 = vadd.f32 %v5758, %v5918
  %v5920 = vpop.f32.mrb[0].mxu0
  %v5921 = vadd.f32 %v5760, %v5920
  %5922 = vmatprep.mubr.f32.mxu0 %v5362
  %5923 = vmatmul.mubr.f32.gmra.mrb[0].mxu0 %v5282
  %v5924 = vpop.f32.mrb[0].mxu0
  %v5925 = vadd.f32 %v5764, %v5924
  %v5926 = vpop.f32.mrb[0].mxu0
  %v5927 = vadd.f32 %v5766, %v5926
  %5928 = vmatprep.mubr.f32.mxu0 %v5367
  %5929 = vmatmul.mubr.f32.gmra.mrb[0].mxu0 %v5287
  %v5930 = vpop.f32.mrb[0].mxu0
  %v5931 = vadd.f32 %v5770, %v5930
  %v5932 = vpop.f32.mrb[0].mxu0
  %v5933 = vadd.f32 %v5772, %v5932
  %5934 = vmatprep.mubr.f32.mxu0 %v5372
  %5935 = vmatmul.mubr.f32.gmra.mrb[0].mxu0 %v5292
  %v5936 = vpop.f32.mrb[0].mxu0
  %v5937 = vadd.f32 %v5776, %v5936
  %v5938 = vpop.f32.mrb[0].mxu0
  %v5939 = vadd.f32 %v5778, %v5938
  %5940 = vmatprep.mubr.f32.mxu0 %v5377
  %5941 = vmatmul.mubr.f32.gmra.mrb[0].mxu0 %v5297
  %v5942 = vpop.f32.mrb[0].mxu0
  %v5943 = vadd.f32 %v5782, %v5942
  %v5944 = vpop.f32.mrb[0].mxu0
  %v5945 = vadd.f32 %v5784, %v5944
  %5946 = vmatprep.mubr.f32.mxu0 %v5382
  %5947 = vmatmul.mubr.f32.gmra.mrb[0].mxu0 %v5302
  %v5948 = vpop.f32.mrb[0].mxu0
  %v5949 = vadd.f32 %v5788, %v5948
  %v5950 = vpop.f32.mrb[0].mxu0
  %v5951 = vadd.f32 %v5790, %v5950
  %5952 = vmatprep.mubr.f32.mxu0 %v5387
  %5953 = vmatmul.mubr.f32.gmra.mrb[0].mxu0 %v5307
  %v5954 = vpop.f32.mrb[0].mxu0
  %v5955 = vadd.f32 %v5794, %v5954
  %v5956 = vpop.f32.mrb[0].mxu0
  %v5957 = vadd.f32 %v5796, %v5956
  %5958 = vmatprep.mubr.f32.mxu0 %v5392
  %5959 = vmatmul.mubr.f32.gmra.mrb[0].mxu0 %v5312
  %v5960 = vpop.f32.mrb[0].mxu0
  %v5961 = vadd.f32 %v5800, %v5960
  %v5962 = vpop.f32.mrb[0].mxu0
  %v5963 = vadd.f32 %v5802, %v5962
  %5964 = vmatprep.mubr.f32.mxu0 %v5397
  %5965 = vmatmul.mubr.f32.gmra.mrb[0].mxu0 %v5317
  %v5966 = vpop.f32.mrb[0].mxu0
  %v5967 = vadd.f32 %v5806, %v5966
  %v5968 = vpop.f32.mrb[0].mxu0
  %v5969 = vadd.f32 %v5808, %v5968
  %5970 = vmatprep.mubr.f32.mxu0 %v5402
  %5971 = vmatmul.mubr.f32.gmra.mrb[0].mxu0 %v5322
  %v5972 = vpop.f32.mrb[0].mxu0
  %v5973 = vadd.f32 %v5812, %v5972
  %v5974 = vpop.f32.mrb[0].mxu0
  %v5975 = vadd.f32 %v5814, %v5974
  %5976 = vmatprep.mubr.f32.mxu0 %v5407
  %5977 = vmatmul.mubr.f32.gmra.mrb[0].mxu0 %v5327
  %v5978 = vpop.f32.mrb[0].mxu0
  %v5979 = vadd.f32 %v5818, %v5978
  %v5980 = vpop.f32.mrb[0].mxu0
  %v5981 = vadd.f32 %v5820, %v5980
  %5982 = vmatprep.mubr.f32.mxu0 %v5412
  %5983 = vmatmul.mubr.f32.gmra.mrb[0].mxu0 %v5332
  %v5984 = vpop.f32.mrb[0].mxu0
  %v5985 = vadd.f32 %v5824, %v5984
  %v5986 = vpop.f32.mrb[0].mxu0
  %v5987 = vadd.f32 %v5826, %v5986
  %5988 = vmatprep.mubr.f32.mxu0 %v5417
  %5989 = vmatmul.mubr.f32.gmra.mrb[0].mxu0 %v5337
  %v5990 = vpop.f32.mrb[0].mxu0
  %v5991 = vadd.f32 %v5830, %v5990
  %v5992 = vpop.f32.mrb[0].mxu0
  %v5993 = vadd.f32 %v5832, %v5992
  %5994 = vdwg.mxu0
  %5995 = vmatprep.subr.mxu0 %v5629
  %5996 = vmatpush1.msra.mxu0 %v5628
  %5997 = vmatprep.subr.mxu0 %v5631
  %5998 = vmatpush1.msra.mxu0 %v5630
  %5999 = vmatprep.subr.mxu0 %v5633
  %6000 = vmatpush1.msra.mxu0 %v5632
  %6001 = vmatprep.subr.mxu0 %v5635
  %6002 = vmatpush1.msra.mxu0 %v5634
  %6003 = vmatprep.subr.mxu0 %v5637
  %6004 = vmatpush1.msra.mxu0 %v5636
  %6005 = vmatprep.subr.mxu0 %v5639
  %6006 = vmatpush1.msra.mxu0 %v5638
  %6007 = vmatprep.subr.mxu0 %v5641
  %6008 = vmatpush1.msra.mxu0 %v5640
  %6009 = vmatprep.subr.mxu0 %v5643
  %6010 = vmatpush1.msra.mxu0 %v5642
  %6011 = vmatprep.subr.mxu0 %v5645
  %6012 = vmatpush1.msra.mxu0 %v5644
  %6013 = vmatprep.subr.mxu0 %v5647
  %6014 = vmatpush1.msra.mxu0 %v5646
  %6015 = vmatprep.subr.mxu0 %v5649
  %6016 = vmatpush1.msra.mxu0 %v5648
  %6017 = vmatprep.subr.mxu0 %v5651
  %6018 = vmatpush1.msra.mxu0 %v5650
  %6019 = vmatprep.subr.mxu0 %v5653
  %6020 = vmatpush1.msra.mxu0 %v5652
  %6021 = vmatprep.subr.mxu0 %v5655
  %6022 = vmatpush1.msra.mxu0 %v5654
  %6023 = vmatprep.subr.mxu0 %v5657
  %6024 = vmatpush1.msra.mxu0 %v5656
  %6025 = vmatprep.subr.mxu0 %v5659
  %6026 = vmatpush1.msra.mxu0 %v5658
  %6027 = vmatprep.subr.mxu0 0.0
  %6028 = vmatpush1.msra.mxu0 0.0
  %6029 = vmatprep.subr.mxu0 0.0
  %6030 = vmatpush1.msra.mxu0 0.0
  %6031 = vmatprep.subr.mxu0 0.0
  %6032 = vmatpush1.msra.mxu0 0.0
  %6033 = vmatprep.subr.mxu0 0.0
  %6034 = vmatpush1.msra.mxu0 0.0
  %6035 = vmatprep.subr.mxu0 0.0
  %6036 = vmatpush1.msra.mxu0 0.0
  %6037 = vmatprep.subr.mxu0 0.0
  %6038 = vmatpush1.msra.mxu0 0.0
  %6039 = vmatprep.subr.mxu0 0.0
  %6040 = vmatpush1.msra.mxu0 0.0
  %6041 = vmatprep.subr.mxu0 0.0
  %6042 = vmatpush1.msra.mxu0 0.0
  %6043 = vmatprep.subr.mxu0 0.0
  %6044 = vmatpush1.msra.mxu0 0.0
  %6045 = vmatprep.subr.mxu0 0.0
  %6046 = vmatpush1.msra.mxu0 0.0
  %6047 = vmatprep.subr.mxu0 0.0
  %6048 = vmatpush1.msra.mxu0 0.0
  %6049 = vmatprep.subr.mxu0 0.0
  %6050 = vmatpush1.msra.mxu0 0.0
  %6051 = vmatprep.subr.mxu0 0.0
  %6052 = vmatpush1.msra.mxu0 0.0
  %6053 = vmatprep.subr.mxu0 0.0
  %6054 = vmatpush1.msra.mxu0 0.0
  %6055 = vmatprep.subr.mxu0 0.0
  %6056 = vmatpush1.msra.mxu0 0.0
  %6057 = vmatprep.subr.mxu0 0.0
  %6058 = vmatpush1.msra.mxu0 0.0
  %6059 = vmatprep.mubr.f32.mxu0 0.0
  %6060 = vmatmul.mubr.f32.gmra.mrb[0].mxu0 %v5422
  %v6061 = vpop.f32.mrb[0].mxu0
  %v6062 = vadd.f32 %v5901, %v6061
  %v6063 = vpop.f32.mrb[0].mxu0
  %v6064 = vadd.f32 %v5903, %v6063
  %6065 = vmatprep.mubr.f32.mxu0 0.0
  %6066 = vmatmul.mubr.f32.gmra.mrb[0].mxu0 %v5427
  %v6067 = vpop.f32.mrb[0].mxu0
  %v6068 = vadd.f32 %v5907, %v6067
  %v6069 = vpop.f32.mrb[0].mxu0
  %v6070 = vadd.f32 %v5909, %v6069
  %6071 = vmatprep.mubr.f32.mxu0 0.0
  %6072 = vmatmul.mubr.f32.gmra.mrb[0].mxu0 %v5432
  %v6073 = vpop.f32.mrb[0].mxu0
  %v6074 = vadd.f32 %v5913, %v6073
  %v6075 = vpop.f32.mrb[0].mxu0
  %v6076 = vadd.f32 %v5915, %v6075
  %6077 = vmatprep.mubr.f32.mxu0 0.0
  %6078 = vmatmul.mubr.f32.gmra.mrb[0].mxu0 %v5437
  %v6079 = vpop.f32.mrb[0].mxu0
  %v6080 = vadd.f32 %v5919, %v6079
  %v6081 = vpop.f32.mrb[0].mxu0
  %v6082 = vadd.f32 %v5921, %v6081
  %6083 = vmatprep.mubr.f32.mxu0 0.0
  %6084 = vmatmul.mubr.f32.gmra.mrb[0].mxu0 %v5442
  %v6085 = vpop.f32.mrb[0].mxu0
  %v6086 = vadd.f32 %v5925, %v6085
  %v6087 = vpop.f32.mrb[0].mxu0
  %v6088 = vadd.f32 %v5927, %v6087
  %6089 = vmatprep.mubr.f32.mxu0 0.0
  %6090 = vmatmul.mubr.f32.gmra.mrb[0].mxu0 %v5447
  %v6091 = vpop.f32.mrb[0].mxu0
  %v6092 = vadd.f32 %v5931, %v6091
  %v6093 = vpop.f32.mrb[0].mxu0
  %v6094 = vadd.f32 %v5933, %v6093
  %6095 = vmatprep.mubr.f32.mxu0 0.0
  %6096 = vmatmul.mubr.f32.gmra.mrb[0].mxu0 %v5452
  %v6097 = vpop.f32.mrb[0].mxu0
  %v6098 = vadd.f32 %v5937, %v6097
  %v6099 = vpop.f32.mrb[0].mxu0
  %v6100 = vadd.f32 %v5939, %v6099
  %6101 = vmatprep.mubr.f32.mxu0 0.0
  %6102 = vmatmul.mubr.f32.gmra.mrb[0].mxu0 %v5457
  %v6103 = vpop.f32.mrb[0].mxu0
  %v6104 = vadd.f32 %v5943, %v6103
  %v6105 = vpop.f32.mrb[0].mxu0
  %v6106 = vadd.f32 %v5945, %v6105
  %6107 = vmatprep.mubr.f32.mxu0 0.0
  %6108 = vmatmul.mubr.f32.gmra.mrb[0].mxu0 %v5462
  %v6109 = vpop.f32.mrb[0].mxu0
  %v6110 = vadd.f32 %v5949, %v6109
  %v6111 = vpop.f32.mrb[0].mxu0
  %v6112 = vadd.f32 %v5951, %v6111
  %6113 = vmatprep.mubr.f32.mxu0 0.0
  %6114 = vmatmul.mubr.f32.gmra.mrb[0].mxu0 %v5467
  %v6115 = vpop.f32.mrb[0].mxu0
  %v6116 = vadd.f32 %v5955, %v6115
  %v6117 = vpop.f32.mrb[0].mxu0
  %v6118 = vadd.f32 %v5957, %v6117
  %6119 = vmatprep.mubr.f32.mxu0 0.0
  %6120 = vmatmul.mubr.f32.gmra.mrb[0].mxu0 %v5472
  %v6121 = vpop.f32.mrb[0].mxu0
  %v6122 = vadd.f32 %v5961, %v6121
  %v6123 = vpop.f32.mrb[0].mxu0
  %v6124 = vadd.f32 %v5963, %v6123
  %6125 = vmatprep.mubr.f32.mxu0 0.0
  %6126 = vmatmul.mubr.f32.gmra.mrb[0].mxu0 %v5477
  %v6127 = vpop.f32.mrb[0].mxu0
  %v6128 = vadd.f32 %v5967, %v6127
  %v6129 = vpop.f32.mrb[0].mxu0
  %v6130 = vadd.f32 %v5969, %v6129
  %6131 = vmatprep.mubr.f32.mxu0 0.0
  %6132 = vmatmul.mubr.f32.gmra.mrb[0].mxu0 %v5482
  %v6133 = vpop.f32.mrb[0].mxu0
  %v6134 = vadd.f32 %v5973, %v6133
  %v6135 = vpop.f32.mrb[0].mxu0
  %v6136 = vadd.f32 %v5975, %v6135
  %6137 = vmatprep.mubr.f32.mxu0 0.0
  %6138 = vmatmul.mubr.f32.gmra.mrb[0].mxu0 %v5487
  %v6139 = vpop.f32.mrb[0].mxu0
  %v6140 = vadd.f32 %v5979, %v6139
  %v6141 = vpop.f32.mrb[0].mxu0
  %v6142 = vadd.f32 %v5981, %v6141
  %6143 = vmatprep.mubr.f32.mxu0 0.0
  %6144 = vmatmul.mubr.f32.gmra.mrb[0].mxu0 %v5492
  %v6145 = vpop.f32.mrb[0].mxu0
  %v6146 = vadd.f32 %v5985, %v6145
  %v6147 = vpop.f32.mrb[0].mxu0
  %v6148 = vadd.f32 %v5987, %v6147
  %6149 = vmatprep.mubr.f32.mxu0 0.0
  %6150 = vmatmul.mubr.f32.gmra.mrb[0].mxu0 %v5497
  %v6151 = vpop.f32.mrb[0].mxu0
  %v6152 = vadd.f32 %v5991, %v6151
  %v6153 = vpop.f32.mrb[0].mxu0
  %v6154 = vadd.f32 %v5993, %v6153
  %6155 = vdwg.mxu0
  %6156 = vst [vmem:[%s5] sm:$0xff] %v6062
  %6157 = vst [vmem:[%s5 + $0x8] sm:$0xff] %v6064
  %6158 = vst [vmem:[%s5 + $0x10] sm:$0xff] %v6068
  %6159 = vst [vmem:[%s5 + $0x18] sm:$0xff] %v6070
  %6160 = vst [vmem:[%s5 + $0x20] sm:$0xff] %v6074
  %6161 = vst [vmem:[%s5 + $0x28] sm:$0xff] %v6076
  %6162 = vst [vmem:[%s5 + $0x30] sm:$0xff] %v6080
  %6163 = vst [vmem:[%s5 + $0x38] sm:$0xff] %v6082
  %6164 = vst [vmem:[%s5 + $0x40] sm:$0xff] %v6086
  %6165 = vst [vmem:[%s5 + $0x48] sm:$0xff] %v6088
  %6166 = vst [vmem:[%s5 + $0x50] sm:$0xff] %v6092
  %6167 = vst [vmem:[%s5 + $0x58] sm:$0xff] %v6094
  %6168 = vst [vmem:[%s5 + $0x60] sm:$0xff] %v6098
  %6169 = vst [vmem:[%s5 + $0x68] sm:$0xff] %v6100
  %6170 = vst [vmem:[%s5 + $0x70] sm:$0xff] %v6104
  %6171 = vst [vmem:[%s5 + $0x78] sm:$0xff] %v6106
  %6172 = vst [vmem:[%s5 + $0x80] sm:$0xff] %v6110
  %6173 = vst [vmem:[%s5 + $0x88] sm:$0xff] %v6112
  %6174 = vst [vmem:[%s5 + $0x90] sm:$0xff] %v6116
  %6175 = vst [vmem:[%s5 + $0x98] sm:$0xff] %v6118
  %6176 = vst [vmem:[%s5 + $0xa0] sm:$0xff] %v6122
  %6177 = vst [vmem:[%s5 + $0xa8] sm:$0xff] %v6124
  %6178 = vst [vmem:[%s5 + $0xb0] sm:$0xff] %v6128
  %6179 = vst [vmem:[%s5 + $0xb8] sm:$0xff] %v6130
  %6180 = vst [vmem:[%s5 + $0xc0] sm:$0xff] %v6134
  %6181 = vst [vmem:[%s5 + $0xc8] sm:$0xff] %v6136
  %6182 = vst [vmem:[%s5 + $0xd0] sm:$0xff] %v6140
  %6183 = vst [vmem:[%s5 + $0xd8] sm:$0xff] %v6142
  %6184 = vst [vmem:[%s5 + $0xe0] sm:$0xff] %v6146
  %6185 = vst [vmem:[%s5 + $0xe8] sm:$0xff] %v6148
  %6186 = vst [vmem:[%s5 + $0xf0] sm:$0xff] %v6152
  %6187 = vst [vmem:[%s5 + $0xf8] sm:$0xff] %v6154
  // Predicated region
  $region74: #{_lambda_.1} parent=0 // pred_check
    _
  $region75: #{_lambda_.1} parent=0 // pred_check_branch
    %6189 = sbr.rel (0) target = $region77
  $region76: #{_lambda_.1} parent=0 // pred_region
    _
  $region77: #{_lambda_.1} parent=0 // pred_fallthru
    _
  // Predicated region
  $region78: #{_lambda_.1} parent=0 // pred_check
    _
  $region79: #{_lambda_.1} parent=0 // pred_check_branch
    %6191 = sbr.rel (0) target = $region81
  $region80: #{_lambda_.1} parent=0 // pred_region
    _
  $region81: #{_lambda_.1} parent=0 // pred_fallthru
    _
  %6192 = vsyncmov [#allocation6]
  %s6193 = vpop.sfrf %6192
  %p6194 = scmp.eq.s32.totalorder %s6193, 0
  %p6195 = pneg %p6194
  %6197 = shalt.err (%p6195)
  %s6198 = scalar_lea.sflag [#allocation6], 1
  %6199 = vsyncmov %s6198
  %s6200 = vpop.sfrf %6199
  %p6201 = scmp.eq.s32.totalorder %s6200, 0
  %p6202 = pneg %p6201
  %6204 = shalt.err (%p6202)
  %s6205 = scalar_lea.sflag [#allocation6], 2
  %6206 = vsyncmov %s6205
  %s6207 = vpop.sfrf %6206
  %p6208 = scmp.eq.s32.totalorder %s6207, 0
  %p6209 = pneg %p6208
  %6211 = shalt.err (%p6209)
  %s6212 = scalar_lea.sflag [#allocation6], 3
  %6213 = vsyncmov %s6212
  %s6214 = vpop.sfrf %6213
  %p6215 = scmp.eq.s32.totalorder %s6214, 0
  %p6216 = pneg %p6215
  %6218 = shalt.err (%p6216)
  %s6219 = scalar_lea.sflag [#allocation6], 4
  %6220 = vsyncmov %s6219
  %s6221 = vpop.sfrf %6220
  %p6222 = scmp.eq.s32.totalorder %s6221, 0
  %p6223 = pneg %p6222
  %6225 = shalt.err (%p6223)
  %s6226 = scalar_lea.sflag [#allocation6], 5
  %6227 = vsyncmov %s6226
  %s6228 = vpop.sfrf %6227
  %p6229 = scmp.eq.s32.totalorder %s6228, 0
  %p6230 = pneg %p6229
  %6232 = shalt.err (%p6230)
  %s6233 = scalar_lea.sflag [#allocation6], 6
  %6234 = vsyncmov %s6233
  %s6235 = vpop.sfrf %6234
  %p6236 = scmp.eq.s32.totalorder %s6235, 0
  %p6237 = pneg %p6236
  %6239 = shalt.err (%p6237)
  %s6240 = scalar_lea.sflag [#allocation6], 7
  %6241 = vsyncmov %s6240
  %s6242 = vpop.sfrf %6241
  %p6243 = scmp.eq.s32.totalorder %s6242, 0
  %p6244 = pneg %p6243
  %6246 = shalt.err (%p6244)
  %s6247 = scalar_lea.sflag [#allocation6], 8
  %6248 = vsyncmov %s6247
  %s6249 = vpop.sfrf %6248
  %p6250 = scmp.eq.s32.totalorder %s6249, 0
  %p6251 = pneg %p6250
  %6253 = shalt.err (%p6251)
  %s6254 = scalar_lea.sflag [#allocation6], 9
  %6255 = vsyncmov %s6254
  %s6256 = vpop.sfrf %6255
  %p6257 = scmp.eq.s32.totalorder %s6256, 0
  %p6258 = pneg %p6257
  %6260 = shalt.err (%p6258)
  %s6261 = scalar_lea.sflag [#allocation6], 10
  %6262 = vsyncmov %s6261
  %s6263 = vpop.sfrf %6262
  %p6264 = scmp.eq.s32.totalorder %s6263, 0
  %p6265 = pneg %p6264
  %6267 = shalt.err (%p6265)
  %s6268 = scalar_lea.sflag [#allocation6], 11
  %6269 = vsyncmov %s6268
  %s6270 = vpop.sfrf %6269
  %p6271 = scmp.eq.s32.totalorder %s6270, 0
  %p6272 = pneg %p6271
  %6274 = shalt.err (%p6272)
  %s6275 = scalar_lea.sflag [#allocation6], 12
  %6276 = vsyncmov %s6275
  %s6277 = vpop.sfrf %6276
  %p6278 = scmp.eq.s32.totalorder %s6277, 0
  %p6279 = pneg %p6278
  %6281 = shalt.err (%p6279)
  %s6282 = scalar_lea.sflag [#allocation6], 13
  %6283 = vsyncmov %s6282
  %s6284 = vpop.sfrf %6283
  %p6285 = scmp.eq.s32.totalorder %s6284, 0
  %p6286 = pneg %p6285
  %6288 = shalt.err (%p6286)
  %s6289 = scalar_lea.sflag [#allocation6], 14
  %6290 = vsyncmov %s6289
  %s6291 = vpop.sfrf %6290
  %p6292 = scmp.eq.s32.totalorder %s6291, 0
  %p6293 = pneg %p6292
  %6295 = shalt.err (%p6293)
  %s6296 = scalar_lea.sflag [#allocation6], 15
  %6297 = vsyncmov %s6296
  %s6298 = vpop.sfrf %6297
  %p6299 = scmp.eq.s32.totalorder %s6298, 0
  %p6300 = pneg %p6299
  %6302 = shalt.err (%p6300)
  %6303 = vsyncmov [#allocation7]
  %s6304 = vpop.sfrf %6303
  %p6305 = scmp.eq.s32.totalorder %s6304, 0
  %p6306 = pneg %p6305
  %6308 = shalt.err (%p6306)

</llo_original>
